<compile_context>
chip_gen: v7x
topology: tpu7x:2x2x1
jax: 0.10.0
libtpu: 0.0.40
codegen_flags: <defaults>
</compile_context>

<pallas_src>
import jax
import jax.numpy as jnp
from jax.experimental import pallas as pl
from jax.experimental.pallas import tpu as pltpu


# ----------------------------------------------------------------------------
# Tiling helpers
# ----------------------------------------------------------------------------
def _tile_m(M):
    """Pick an M (row) tile.

    Large blocks (up to 512 rows) amortise the ~0.35us per-grid-step overhead,
    but for big M we keep >=2 grid steps on the 'parallel' axis so both v7x
    TensorCores get work.  Worst case VMEM per input buffer here is
    512 x 1728 x 2B (bf16) ~= 1.7 MiB, well inside every generation's budget
    (v7x: 64 MiB physical / 32 MiB scoped default).
    """
    if M <= 256:
        return M
    if M >= 1024 and M % 512 == 0:
        return 512
    return 256


def _pad_rows(x, tm):
    """Pad the leading (row) dim of a 2-D array up to a multiple of tm."""
    M = x.shape[0]
    Mp = ((M + tm - 1) // tm) * tm
    if Mp != M:
        x = jnp.pad(x, ((0, Mp - M), (0, 0)))
    return x, M, Mp


# ----------------------------------------------------------------------------
# Pallas kernels
# ----------------------------------------------------------------------------
def _conv_stats_kernel(x_ref, w_ref, y_ref, stat_ref):
    # bf16 x bf16 -> f32 accumulation on the MXU.
    acc = jnp.dot(x_ref[...], w_ref[...], preferred_element_type=jnp.float32)
    y_ref[...] = acc
    # Per-block partial BatchNorm statistics so the wrapper never re-reads the
    # full activation from HBM to compute mean/var.
    psum = jnp.sum(acc, axis=0, keepdims=True)        # (1, C)
    pssq = jnp.sum(acc * acc, axis=0, keepdims=True)  # (1, C)
    stat_ref[...] = jnp.concatenate([psum, pssq], axis=0)[None]  # (1, 2, C)


def _matmul_bias_kernel(x_ref, w_ref, b_ref, o_ref):
    acc = jnp.dot(x_ref[...], w_ref[...], preferred_element_type=jnp.float32)
    o_ref[...] = acc + b_ref[...]


def _affine_relu_kernel(x_ref, s_ref, b_ref, o_ref):
    o_ref[...] = jnp.maximum(x_ref[...] * s_ref[...] + b_ref[...], 0.0)


def conv_matmul_stats(patches, w):
    """y = patches @ w (bf16 MXU, f32 accum) plus per-block (sum, sum^2).

    patches:(M,K) w:(K,C)  ->  y:(M,C) f32, stats:(grid,2,C) f32.
    """
    M, K = patches.shape
    _, C = w.shape
    tm = _tile_m(M)
    xp, M0, Mp = _pad_rows(patches, tm)   # zero rows: neutral for the sums
    grid = Mp // tm
    y, stats = pl.pallas_call(
        _conv_stats_kernel,
        out_shape=(jax.ShapeDtypeStruct((Mp, C), jnp.float32),
                   jax.ShapeDtypeStruct((grid, 2, C), jnp.float32)),
        grid_spec=pltpu.PrefetchScalarGridSpec(
            num_scalar_prefetch=0,
            grid=(grid,),
            in_specs=[
                pl.BlockSpec((tm, K), lambda i: (i, 0)),
                pl.BlockSpec((K, C), lambda i: (0, 0)),
            ],
            out_specs=[
                pl.BlockSpec((tm, C), lambda i: (i, 0)),
                pl.BlockSpec((1, 2, C), lambda i: (i, 0, 0)),
            ],
        ),
        compiler_params=pltpu.CompilerParams(dimension_semantics=("parallel",)),
    )(xp.astype(jnp.bfloat16), w.astype(jnp.bfloat16))
    if Mp != M0:
        y = y[:M0]
    return y, stats


def matmul_bias(x, w, b):
    """y = x @ w + b.  x:(M,K) w:(K,N) b:(N,) -> (M,N) f32.  bf16 MXU inputs."""
    M, K = x.shape
    _, N = w.shape
    tm = _tile_m(M)
    xp, M0, Mp = _pad_rows(x, tm)
    grid = Mp // tm
    y = pl.pallas_call(
        _matmul_bias_kernel,
        out_shape=jax.ShapeDtypeStruct((Mp, N), jnp.float32),
        grid_spec=pltpu.PrefetchScalarGridSpec(
            num_scalar_prefetch=0,
            grid=(grid,),
            in_specs=[
                pl.BlockSpec((tm, K), lambda i: (i, 0)),
                pl.BlockSpec((K, N), lambda i: (0, 0)),
                pl.BlockSpec((1, N), lambda i: (0, 0)),
            ],
            out_specs=pl.BlockSpec((tm, N), lambda i: (i, 0)),
        ),
        compiler_params=pltpu.CompilerParams(dimension_semantics=("parallel",)),
    )(xp.astype(jnp.bfloat16), w.astype(jnp.bfloat16),
      b.reshape(1, N).astype(jnp.float32))
    if Mp != M0:
        y = y[:M0]
    return y


def affine_relu(x, scale, shift):
    """relu(x * scale + shift) with per-channel scale/shift.  x:(M,C) f32."""
    M, C = x.shape
    tm = _tile_m(M)
    xp, M0, Mp = _pad_rows(x, tm)
    grid = Mp // tm
    y = pl.pallas_call(
        _affine_relu_kernel,
        out_shape=jax.ShapeDtypeStruct((Mp, C), jnp.float32),
        grid_spec=pltpu.PrefetchScalarGridSpec(
            num_scalar_prefetch=0,
            grid=(grid,),
            in_specs=[
                pl.BlockSpec((tm, C), lambda i: (i, 0)),
                pl.BlockSpec((1, C), lambda i: (0, 0)),
                pl.BlockSpec((1, C), lambda i: (0, 0)),
            ],
            out_specs=pl.BlockSpec((tm, C), lambda i: (i, 0)),
        ),
        compiler_params=pltpu.CompilerParams(dimension_semantics=("parallel",)),
    )(xp, scale.reshape(1, C).astype(jnp.float32),
      shift.reshape(1, C).astype(jnp.float32))
    if Mp != M0:
        y = y[:M0]
    return y


# ----------------------------------------------------------------------------
# Layer helpers (glue around the Pallas kernels)
# ----------------------------------------------------------------------------
def im2col_3x3(x):
    """x:(N,H,W,C) -> (N*H*W, 9*C), patch order (dy, dx, c), padding=1."""
    N, H, W, C = x.shape
    xp = jnp.pad(x, ((0, 0), (1, 1), (1, 1), (0, 0)))
    cols = [xp[:, dy:dy + H, dx:dx + W, :] for dy in range(3) for dx in range(3)]
    return jnp.concatenate(cols, axis=-1).reshape(N * H * W, 9 * C)
    # TODO(synk): at realistic H,W replace the HBM im2col with an in-kernel
    # 9-tap grid reduction to avoid writing/reading 9x the activation volume.


def conv_bn_relu(x, w, gamma, beta, eps=1e-5):
    """3x3 conv (pad=1) -> BatchNorm2d (train-mode batch stats) -> ReLU.

    The conv bias is intentionally not added: the training-mode BatchNorm mean
    subtraction cancels it exactly, so it cannot affect the output.
    """
    N, H, W, Cin = x.shape
    Cout = w.shape[-1]
    patches = im2col_3x3(x)
    M = N * H * W
    y, stats = conv_matmul_stats(patches, w.reshape(9 * Cin, Cout))
    total = jnp.sum(stats[:, 0, :], axis=0)
    total_sq = jnp.sum(stats[:, 1, :], axis=0)
    mean = total / M
    var = jnp.maximum(total_sq / M - mean * mean, 0.0)   # biased var, like torch
    s = gamma * jax.lax.rsqrt(var + eps)
    sh = beta - mean * s
    y = affine_relu(y, s, sh)
    return y.reshape(N, H, W, Cout)


def conv_block(x, p):
    x = conv_bn_relu(x, p["w1"], p["g1"], p["be1"])
    x = conv_bn_relu(x, p["w2"], p["g2"], p["be2"])
    return x


def max_pool2(x):
    # 2x2 max pool, stride 2 (pure data movement, kept as XLA glue).
    N, H, W, C = x.shape
    return x.reshape(N, H // 2, 2, W // 2, 2, C).max(axis=(2, 4))


def conv_transpose2x2(x, w, b):
    """ConvTranspose2d(k=2, s=2), 4 taps fused into one wide matmul.

    x:(N,H,W,Cin), w:(2,2,Cin,Cout) -> (N,2H,2W,Cout).
    """
    N, H, W, Cin = x.shape
    Cout = w.shape[-1]
    w4 = jnp.transpose(w, (2, 0, 1, 3)).reshape(Cin, 4 * Cout)  # cols: (dy,dx,c)
    b4 = jnp.tile(b, 4)
    y = matmul_bias(x.reshape(N * H * W, Cin), w4, b4)          # (M, 4*Cout)
    y = y.reshape(N, H, W, 2, 2, Cout)
    y = jnp.transpose(y, (0, 1, 3, 2, 4, 5)).reshape(N, 2 * H, 2 * W, Cout)
    return y


def _bilinear_matrix(out_size, in_size):
    """Dense (out,in) interpolation matrix, torch align_corners=False rule."""
    scale = in_size / out_size
    dst = jnp.arange(out_size, dtype=jnp.float32)
    src = jnp.maximum((dst + 0.5) * scale - 0.5, 0.0)
    i0 = jnp.minimum(jnp.floor(src).astype(jnp.int32), in_size - 1)
    i1 = jnp.minimum(i0 + 1, in_size - 1)
    lam1 = src - i0.astype(jnp.float32)
    lam0 = 1.0 - lam1
    return (lam0[:, None] * jax.nn.one_hot(i0, in_size, dtype=jnp.float32)
            + lam1[:, None] * jax.nn.one_hot(i1, in_size, dtype=jnp.float32))


def conv1x1_and_resize(x, w, b, out_h, out_w):
    """1x1 conv (Cout=1) + bilinear resize, returned as NCHW.

    Kept in plain XLA on purpose: with a single output channel a Pallas matmul
    would use 1 of 128/256 MXU lanes and emit 1-lane masked stores, and the
    two tiny resize contractions are pure launch overhead.
    """
    y = jnp.einsum('nhwc,co->nhwo', x, w) + b              # (N, h, w, Cout)
    Lh = _bilinear_matrix(out_h, y.shape[1])
    Lw = _bilinear_matrix(out_w, y.shape[2])
    yc = jnp.transpose(y, (0, 3, 1, 2))                    # (N, C, h, w)
    return jnp.einsum('Hh,nchw,Ww->ncHW', Lh, yc, Lw)      # (N, C, out_h, out_w)


# ----------------------------------------------------------------------------
# UNet forward
# ----------------------------------------------------------------------------
def unet_forward(x_nchw, params):
    x = jnp.transpose(x_nchw, (0, 2, 3, 1)).astype(jnp.float32)  # -> NHWC
    N, H, W, _ = x.shape

    e1 = conv_block(x, params["enc1"])
    e2 = conv_block(max_pool2(e1), params["enc2"])
    e3 = conv_block(max_pool2(e2), params["enc3"])
    m = conv_block(max_pool2(e3), params["middle"])

    d2 = conv_transpose2x2(m, params["up2_w"], params["up2_b"])
    d2 = jnp.concatenate([d2, e3], axis=-1)
    d2 = conv_block(d2, params["dec2"])

    d1 = conv_transpose2x2(d2, params["up1_w"], params["up1_b"])
    d1 = jnp.concatenate([d1, e2], axis=-1)
    d1 = conv_block(d1, params["dec1"])

    out = conv1x1_and_resize(d1, params["out_w"], params["out_b"], H, W)
    return out                                               # (N, out_ch, H, W)


# ----------------------------------------------------------------------------
# Deterministic parameter init (synthetic weights, torch-equivalent shapes)
# ----------------------------------------------------------------------------
def init_params(key, in_ch=3, out_ch=1, base=32):
    keys = iter(jax.random.split(key, 128))

    def conv_w(cin, cout, k=3):
        return 0.1 * jax.random.normal(next(keys), (k, k, cin, cout), jnp.float32)

    def vec(cout, scale=0.1, offset=0.0):
        return offset + scale * jax.random.normal(next(keys), (cout,), jnp.float32)

    def block(cin, cout):
        # NOTE: conv biases (b1/b2) are created to mirror the torch parameter
        # set but are unused: training-mode BatchNorm cancels them exactly.
        return dict(
            w1=conv_w(cin, cout), b1=vec(cout),
            g1=vec(cout, offset=1.0), be1=vec(cout),
            w2=conv_w(cout, cout), b2=vec(cout),
            g2=vec(cout, offset=1.0), be2=vec(cout),
        )

    return dict(
        enc1=block(in_ch, base),
        enc2=block(base, base * 2),
        enc3=block(base * 2, base * 4),
        middle=block(base * 4, base * 4),
        up2_w=0.1 * jax.random.normal(next(keys), (2, 2, base * 4, base * 2), jnp.float32),
        up2_b=vec(base * 2),
        dec2=block(base * 4 + base * 2, base * 2),
        up1_w=0.1 * jax.random.normal(next(keys), (2, 2, base * 2, base), jnp.float32),
        up1_b=vec(base),
        dec1=block(base * 2 + base, base),
        out_w=0.1 * jax.random.normal(next(keys), (base, out_ch), jnp.float32),
        out_b=vec(out_ch),
    )


if __name__ == "__main__":
    key = jax.random.PRNGKey(0)
    pkey, xkey = jax.random.split(key)
    params = init_params(pkey, in_ch=3, out_ch=1, base=32)
    x = jax.random.normal(xkey, (2, 3, 16, 16), jnp.float32)  # NCHW like torch

    fwd = jax.jit(lambda inp: unet_forward(inp, params))
    out = jax.block_until_ready(fwd(x))

    assert out.shape == (2, 1, 16, 16), out.shape
    assert bool(jnp.all(jnp.isfinite(out)))
    print("KERNEL_OK")
</pallas_src>

<mosaic_0001>
module attributes {stable_mosaic.version = 11 : i64} {
  func.func @_conv_stats_kernel(%arg0: i32, %arg1: memref<256x27xbf16, #tpu.memory_space<vmem>>, %arg2: memref<27x32xbf16, #tpu.memory_space<vmem>>, %arg3: memref<256x32xf32, #tpu.memory_space<vmem>>, %arg4: memref<1x2x32xf32, #tpu.memory_space<vmem>>) attributes {dimension_semantics = [#tpu.dimension_semantics<parallel>], iteration_bounds = array<i64: 2>, scalar_prefetch = 0 : i64, scratch_operands = 0 : i64, tpu.core_type = #tpu.core_type<tc>, window_params = [{transform_indices = @transform_0, window_bounds = array<i64: 256, 27>}, {pipeline_mode = #tpu.pipeline_mode<synchronous>, transform_indices = @transform_1, window_bounds = array<i64: 27, 32>}, {transform_indices = @transform_2, window_bounds = array<i64: 256, 32>}, {transform_indices = @transform_3, window_bounds = array<i64: 1, 2, 32>}]} {
    %c0 = arith.constant 0 : index
    %c0_0 = arith.constant 0 : index
    %0 = vector.load %arg1[%c0, %c0_0] : memref<256x27xbf16, #tpu.memory_space<vmem>>, vector<256x27xbf16>
    %c0_1 = arith.constant 0 : index
    %c0_2 = arith.constant 0 : index
    %1 = vector.load %arg2[%c0_1, %c0_2] : memref<27x32xbf16, #tpu.memory_space<vmem>>, vector<27x32xbf16>
    %cst = arith.constant dense<0.000000e+00> : vector<256x32xf32>
    %2 = tpu.matmul %0, %1, %cst {dimension_numbers = #tpu.dot_dimension_numbers<[1], [0], [0], [1], [0, 0, 1, 1], [], []>} : vector<256x27xbf16>, vector<27x32xbf16>, vector<256x32xf32> -> vector<256x32xf32>
    %c0_3 = arith.constant 0 : index
    %c0_4 = arith.constant 0 : index
    %3 = vector.load %arg3[%c0_3, %c0_4] : memref<256x32xf32, #tpu.memory_space<vmem>>, vector<256x32xf32>
    tpu.vector_store %arg3[%c0_3, %c0_4], %2 {strides = array<i32>} : memref<256x32xf32, #tpu.memory_space<vmem>>, vector<256x32xf32>,
    %cst_5 = arith.constant dense<0.000000e+00> : vector<32xf32>
    %4 = vector.multi_reduction <add>, %2, %cst_5 [0] : vector<256x32xf32> to vector<32xf32>
    %5 = vector.shape_cast %4 : vector<32xf32> to vector<1x32xf32>
    %6 = arith.mulf %2, %2 : vector<256x32xf32>
    %cst_6 = arith.constant dense<0.000000e+00> : vector<32xf32>
    %7 = vector.multi_reduction <add>, %6, %cst_6 [0] : vector<256x32xf32> to vector<32xf32>
    %8 = vector.shape_cast %7 : vector<32xf32> to vector<1x32xf32>
    %9 = tpu.concatenate %5, %8 in 0 : vector<1x32xf32>, vector<1x32xf32> -> vector<2x32xf32>
    %10 = vector.shape_cast %9 : vector<2x32xf32> to vector<1x2x32xf32>
    %c0_7 = arith.constant 0 : index
    %c0_8 = arith.constant 0 : index
    %c0_9 = arith.constant 0 : index
    %11 = vector.load %arg4[%c0_7, %c0_8, %c0_9] : memref<1x2x32xf32, #tpu.memory_space<vmem>>, vector<1x2x32xf32>
    tpu.vector_store %arg4[%c0_7, %c0_8, %c0_9], %10 {strides = array<i32>} : memref<1x2x32xf32, #tpu.memory_space<vmem>>, vector<1x2x32xf32>,
    return
  }
  func.func @transform_0(%arg0: i32) -> (i32, i32) {
    %c0_i32 = arith.constant 0 : i32
    %c0_i32_0 = arith.constant 0 : i32
    return %arg0, %c0_i32 : i32, i32
  }
  func.func @transform_1(%arg0: i32) -> (i32, i32) {
    %c0_i32 = arith.constant 0 : i32
    %c0_i32_0 = arith.constant 0 : i32
    %c0_i32_1 = arith.constant 0 : i32
    return %c0_i32, %c0_i32_0 : i32, i32
  }
  func.func @transform_2(%arg0: i32) -> (i32, i32) {
    %c0_i32 = arith.constant 0 : i32
    %c0_i32_0 = arith.constant 0 : i32
    return %arg0, %c0_i32 : i32, i32
  }
  func.func @transform_3(%arg0: i32) -> (i32, i32, i32) {
    %c0_i32 = arith.constant 0 : i32
    %c0_i32_0 = arith.constant 0 : i32
    %c0_i32_1 = arith.constant 0 : i32
    return %arg0, %c0_i32, %c0_i32_0 : i32, i32, i32
  }
}

module attributes {stable_mosaic.version = 11 : i64} {
  func.func @_affine_relu_kernel(%arg0: i32, %arg1: memref<256x32xf32, #tpu.memory_space<vmem>>, %arg2: memref<1x32xf32, #tpu.memory_space<vmem>>, %arg3: memref<1x32xf32, #tpu.memory_space<vmem>>, %arg4: memref<256x32xf32, #tpu.memory_space<vmem>>) attributes {dimension_semantics = [#tpu.dimension_semantics<parallel>], iteration_bounds = array<i64: 2>, scalar_prefetch = 0 : i64, scratch_operands = 0 : i64, tpu.core_type = #tpu.core_type<tc>, window_params = [{transform_indices = @transform_0, window_bounds = array<i64: 256, 32>}, {pipeline_mode = #tpu.pipeline_mode<synchronous>, transform_indices = @transform_1, window_bounds = array<i64: 1, 32>}, {pipeline_mode = #tpu.pipeline_mode<synchronous>, transform_indices = @transform_2, window_bounds = array<i64: 1, 32>}, {transform_indices = @transform_3, window_bounds = array<i64: 256, 32>}]} {
    %c0 = arith.constant 0 : index
    %c0_0 = arith.constant 0 : index
    %0 = vector.load %arg1[%c0, %c0_0] : memref<256x32xf32, #tpu.memory_space<vmem>>, vector<256x32xf32>
    %c0_1 = arith.constant 0 : index
    %c0_2 = arith.constant 0 : index
    %1 = vector.load %arg2[%c0_1, %c0_2] : memref<1x32xf32, #tpu.memory_space<vmem>>, vector<1x32xf32>
    %2 = vector.broadcast %1 : vector<1x32xf32> to vector<256x32xf32>
    %3 = arith.mulf %0, %2 : vector<256x32xf32>
    %c0_3 = arith.constant 0 : index
    %c0_4 = arith.constant 0 : index
    %4 = vector.load %arg3[%c0_3, %c0_4] : memref<1x32xf32, #tpu.memory_space<vmem>>, vector<1x32xf32>
    %5 = vector.broadcast %4 : vector<1x32xf32> to vector<256x32xf32>
    %6 = arith.addf %3, %5 : vector<256x32xf32>
    %cst = arith.constant 0.000000e+00 : f32
    %7 = vector.broadcast %cst : f32 to vector<256x32xf32>
    %8 = arith.maximumf %6, %7 : vector<256x32xf32>
    %c0_5 = arith.constant 0 : index
    %c0_6 = arith.constant 0 : index
    %9 = vector.load %arg4[%c0_5, %c0_6] : memref<256x32xf32, #tpu.memory_space<vmem>>, vector<256x32xf32>
    tpu.vector_store %arg4[%c0_5, %c0_6], %8 {strides = array<i32>} : memref<256x32xf32, #tpu.memory_space<vmem>>, vector<256x32xf32>,
    return
  }
  func.func @transform_0(%arg0: i32) -> (i32, i32) {
    %c0_i32 = arith.constant 0 : i32
    %c0_i32_0 = arith.constant 0 : i32
    return %arg0, %c0_i32 : i32, i32
  }
  func.func @transform_1(%arg0: i32) -> (i32, i32) {
    %c0_i32 = arith.constant 0 : i32
    %c0_i32_0 = arith.constant 0 : i32
    %c0_i32_1 = arith.constant 0 : i32
    return %c0_i32, %c0_i32_0 : i32, i32
  }
  func.func @transform_2(%arg0: i32) -> (i32, i32) {
    %c0_i32 = arith.constant 0 : i32
    %c0_i32_0 = arith.constant 0 : i32
    %c0_i32_1 = arith.constant 0 : i32
    return %c0_i32, %c0_i32_0 : i32, i32
  }
  func.func @transform_3(%arg0: i32) -> (i32, i32) {
    %c0_i32 = arith.constant 0 : i32
    %c0_i32_0 = arith.constant 0 : i32
    return %arg0, %c0_i32 : i32, i32
  }
}

module attributes {stable_mosaic.version = 11 : i64} {
  func.func @_conv_stats_kernel(%arg0: i32, %arg1: memref<256x288xbf16, #tpu.memory_space<vmem>>, %arg2: memref<288x32xbf16, #tpu.memory_space<vmem>>, %arg3: memref<256x32xf32, #tpu.memory_space<vmem>>, %arg4: memref<1x2x32xf32, #tpu.memory_space<vmem>>) attributes {dimension_semantics = [#tpu.dimension_semantics<parallel>], iteration_bounds = array<i64: 2>, scalar_prefetch = 0 : i64, scratch_operands = 0 : i64, tpu.core_type = #tpu.core_type<tc>, window_params = [{transform_indices = @transform_0, window_bounds = array<i64: 256, 288>}, {pipeline_mode = #tpu.pipeline_mode<synchronous>, transform_indices = @transform_1, window_bounds = array<i64: 288, 32>}, {transform_indices = @transform_2, window_bounds = array<i64: 256, 32>}, {transform_indices = @transform_3, window_bounds = array<i64: 1, 2, 32>}]} {
    %c0 = arith.constant 0 : index
    %c0_0 = arith.constant 0 : index
    %0 = vector.load %arg1[%c0, %c0_0] : memref<256x288xbf16, #tpu.memory_space<vmem>>, vector<256x288xbf16>
    %c0_1 = arith.constant 0 : index
    %c0_2 = arith.constant 0 : index
    %1 = vector.load %arg2[%c0_1, %c0_2] : memref<288x32xbf16, #tpu.memory_space<vmem>>, vector<288x32xbf16>
    %cst = arith.constant dense<0.000000e+00> : vector<256x32xf32>
    %2 = tpu.matmul %0, %1, %cst {dimension_numbers = #tpu.dot_dimension_numbers<[1], [0], [0], [1], [0, 0, 1, 1], [], []>} : vector<256x288xbf16>, vector<288x32xbf16>, vector<256x32xf32> -> vector<256x32xf32>
    %c0_3 = arith.constant 0 : index
    %c0_4 = arith.constant 0 : index
    %3 = vector.load %arg3[%c0_3, %c0_4] : memref<256x32xf32, #tpu.memory_space<vmem>>, vector<256x32xf32>
    tpu.vector_store %arg3[%c0_3, %c0_4], %2 {strides = array<i32>} : memref<256x32xf32, #tpu.memory_space<vmem>>, vector<256x32xf32>,
    %cst_5 = arith.constant dense<0.000000e+00> : vector<32xf32>
    %4 = vector.multi_reduction <add>, %2, %cst_5 [0] : vector<256x32xf32> to vector<32xf32>
    %5 = vector.shape_cast %4 : vector<32xf32> to vector<1x32xf32>
    %6 = arith.mulf %2, %2 : vector<256x32xf32>
    %cst_6 = arith.constant dense<0.000000e+00> : vector<32xf32>
    %7 = vector.multi_reduction <add>, %6, %cst_6 [0] : vector<256x32xf32> to vector<32xf32>
    %8 = vector.shape_cast %7 : vector<32xf32> to vector<1x32xf32>
    %9 = tpu.concatenate %5, %8 in 0 : vector<1x32xf32>, vector<1x32xf32> -> vector<2x32xf32>
    %10 = vector.shape_cast %9 : vector<2x32xf32> to vector<1x2x32xf32>
    %c0_7 = arith.constant 0 : index
    %c0_8 = arith.constant 0 : index
    %c0_9 = arith.constant 0 : index
    %11 = vector.load %arg4[%c0_7, %c0_8, %c0_9] : memref<1x2x32xf32, #tpu.memory_space<vmem>>, vector<1x2x32xf32>
    tpu.vector_store %arg4[%c0_7, %c0_8, %c0_9], %10 {strides = array<i32>} : memref<1x2x32xf32, #tpu.memory_space<vmem>>, vector<1x2x32xf32>,
    return
  }
  func.func @transform_0(%arg0: i32) -> (i32, i32) {
    %c0_i32 = arith.constant 0 : i32
    %c0_i32_0 = arith.constant 0 : i32
    return %arg0, %c0_i32 : i32, i32
  }
  func.func @transform_1(%arg0: i32) -> (i32, i32) {
    %c0_i32 = arith.constant 0 : i32
    %c0_i32_0 = arith.constant 0 : i32
    %c0_i32_1 = arith.constant 0 : i32
    return %c0_i32, %c0_i32_0 : i32, i32
  }
  func.func @transform_2(%arg0: i32) -> (i32, i32) {
    %c0_i32 = arith.constant 0 : i32
    %c0_i32_0 = arith.constant 0 : i32
    return %arg0, %c0_i32 : i32, i32
  }
  func.func @transform_3(%arg0: i32) -> (i32, i32, i32) {
    %c0_i32 = arith.constant 0 : i32
    %c0_i32_0 = arith.constant 0 : i32
    %c0_i32_1 = arith.constant 0 : i32
    return %arg0, %c0_i32, %c0_i32_0 : i32, i32, i32
  }
}

module attributes {stable_mosaic.version = 11 : i64} {
  func.func @_conv_stats_kernel(%arg0: i32, %arg1: memref<128x288xbf16, #tpu.memory_space<vmem>>, %arg2: memref<288x64xbf16, #tpu.memory_space<vmem>>, %arg3: memref<128x64xf32, #tpu.memory_space<vmem>>, %arg4: memref<1x2x64xf32, #tpu.memory_space<vmem>>) attributes {dimension_semantics = [#tpu.dimension_semantics<parallel>], iteration_bounds = array<i64: 1>, scalar_prefetch = 0 : i64, scratch_operands = 0 : i64, tpu.core_type = #tpu.core_type<tc>, window_params = [{transform_indices = @transform_0, window_bounds = array<i64: 128, 288>}, {pipeline_mode = #tpu.pipeline_mode<synchronous>, transform_indices = @transform_1, window_bounds = array<i64: 288, 64>}, {transform_indices = @transform_2, window_bounds = array<i64: 128, 64>}, {transform_indices = @transform_3, window_bounds = array<i64: 1, 2, 64>}]} {
    %c0 = arith.constant 0 : index
    %c0_0 = arith.constant 0 : index
    %0 = vector.load %arg1[%c0, %c0_0] : memref<128x288xbf16, #tpu.memory_space<vmem>>, vector<128x288xbf16>
    %c0_1 = arith.constant 0 : index
    %c0_2 = arith.constant 0 : index
    %1 = vector.load %arg2[%c0_1, %c0_2] : memref<288x64xbf16, #tpu.memory_space<vmem>>, vector<288x64xbf16>
    %cst = arith.constant dense<0.000000e+00> : vector<128x64xf32>
    %2 = tpu.matmul %0, %1, %cst {dimension_numbers = #tpu.dot_dimension_numbers<[1], [0], [0], [1], [0, 0, 1, 1], [], []>} : vector<128x288xbf16>, vector<288x64xbf16>, vector<128x64xf32> -> vector<128x64xf32>
    %c0_3 = arith.constant 0 : index
    %c0_4 = arith.constant 0 : index
    %3 = vector.load %arg3[%c0_3, %c0_4] : memref<128x64xf32, #tpu.memory_space<vmem>>, vector<128x64xf32>
    tpu.vector_store %arg3[%c0_3, %c0_4], %2 {strides = array<i32>} : memref<128x64xf32, #tpu.memory_space<vmem>>, vector<128x64xf32>,
    %cst_5 = arith.constant dense<0.000000e+00> : vector<64xf32>
    %4 = vector.multi_reduction <add>, %2, %cst_5 [0] : vector<128x64xf32> to vector<64xf32>
    %5 = vector.shape_cast %4 : vector<64xf32> to vector<1x64xf32>
    %6 = arith.mulf %2, %2 : vector<128x64xf32>
    %cst_6 = arith.constant dense<0.000000e+00> : vector<64xf32>
    %7 = vector.multi_reduction <add>, %6, %cst_6 [0] : vector<128x64xf32> to vector<64xf32>
    %8 = vector.shape_cast %7 : vector<64xf32> to vector<1x64xf32>
    %9 = tpu.concatenate %5, %8 in 0 : vector<1x64xf32>, vector<1x64xf32> -> vector<2x64xf32>
    %10 = vector.shape_cast %9 : vector<2x64xf32> to vector<1x2x64xf32>
    %c0_7 = arith.constant 0 : index
    %c0_8 = arith.constant 0 : index
    %c0_9 = arith.constant 0 : index
    %11 = vector.load %arg4[%c0_7, %c0_8, %c0_9] : memref<1x2x64xf32, #tpu.memory_space<vmem>>, vector<1x2x64xf32>
    tpu.vector_store %arg4[%c0_7, %c0_8, %c0_9], %10 {strides = array<i32>} : memref<1x2x64xf32, #tpu.memory_space<vmem>>, vector<1x2x64xf32>,
    return
  }
  func.func @transform_0(%arg0: i32) -> (i32, i32) {
    %c0_i32 = arith.constant 0 : i32
    %c0_i32_0 = arith.constant 0 : i32
    return %arg0, %c0_i32 : i32, i32
  }
  func.func @transform_1(%arg0: i32) -> (i32, i32) {
    %c0_i32 = arith.constant 0 : i32
    %c0_i32_0 = arith.constant 0 : i32
    %c0_i32_1 = arith.constant 0 : i32
    return %c0_i32, %c0_i32_0 : i32, i32
  }
  func.func @transform_2(%arg0: i32) -> (i32, i32) {
    %c0_i32 = arith.constant 0 : i32
    %c0_i32_0 = arith.constant 0 : i32
    return %arg0, %c0_i32 : i32, i32
  }
  func.func @transform_3(%arg0: i32) -> (i32, i32, i32) {
    %c0_i32 = arith.constant 0 : i32
    %c0_i32_0 = arith.constant 0 : i32
    %c0_i32_1 = arith.constant 0 : i32
    return %arg0, %c0_i32, %c0_i32_0 : i32, i32, i32
  }
}

module attributes {stable_mosaic.version = 11 : i64} {
  func.func @_affine_relu_kernel(%arg0: i32, %arg1: memref<128x64xf32, #tpu.memory_space<vmem>>, %arg2: memref<1x64xf32, #tpu.memory_space<vmem>>, %arg3: memref<1x64xf32, #tpu.memory_space<vmem>>, %arg4: memref<128x64xf32, #tpu.memory_space<vmem>>) attributes {dimension_semantics = [#tpu.dimension_semantics<parallel>], iteration_bounds = array<i64: 1>, scalar_prefetch = 0 : i64, scratch_operands = 0 : i64, tpu.core_type = #tpu.core_type<tc>, window_params = [{transform_indices = @transform_0, window_bounds = array<i64: 128, 64>}, {pipeline_mode = #tpu.pipeline_mode<synchronous>, transform_indices = @transform_1, window_bounds = array<i64: 1, 64>}, {pipeline_mode = #tpu.pipeline_mode<synchronous>, transform_indices = @transform_2, window_bounds = array<i64: 1, 64>}, {transform_indices = @transform_3, window_bounds = array<i64: 128, 64>}]} {
    %c0 = arith.constant 0 : index
    %c0_0 = arith.constant 0 : index
    %0 = vector.load %arg1[%c0, %c0_0] : memref<128x64xf32, #tpu.memory_space<vmem>>, vector<128x64xf32>
    %c0_1 = arith.constant 0 : index
    %c0_2 = arith.constant 0 : index
    %1 = vector.load %arg2[%c0_1, %c0_2] : memref<1x64xf32, #tpu.memory_space<vmem>>, vector<1x64xf32>
    %2 = vector.broadcast %1 : vector<1x64xf32> to vector<128x64xf32>
    %3 = arith.mulf %0, %2 : vector<128x64xf32>
    %c0_3 = arith.constant 0 : index
    %c0_4 = arith.constant 0 : index
    %4 = vector.load %arg3[%c0_3, %c0_4] : memref<1x64xf32, #tpu.memory_space<vmem>>, vector<1x64xf32>
    %5 = vector.broadcast %4 : vector<1x64xf32> to vector<128x64xf32>
    %6 = arith.addf %3, %5 : vector<128x64xf32>
    %cst = arith.constant 0.000000e+00 : f32
    %7 = vector.broadcast %cst : f32 to vector<128x64xf32>
    %8 = arith.maximumf %6, %7 : vector<128x64xf32>
    %c0_5 = arith.constant 0 : index
    %c0_6 = arith.constant 0 : index
    %9 = vector.load %arg4[%c0_5, %c0_6] : memref<128x64xf32, #tpu.memory_space<vmem>>, vector<128x64xf32>
    tpu.vector_store %arg4[%c0_5, %c0_6], %8 {strides = array<i32>} : memref<128x64xf32, #tpu.memory_space<vmem>>, vector<128x64xf32>,
    return
  }
  func.func @transform_0(%arg0: i32) -> (i32, i32) {
    %c0_i32 = arith.constant 0 : i32
    %c0_i32_0 = arith.constant 0 : i32
    return %arg0, %c0_i32 : i32, i32
  }
  func.func @transform_1(%arg0: i32) -> (i32, i32) {
    %c0_i32 = arith.constant 0 : i32
    %c0_i32_0 = arith.constant 0 : i32
    %c0_i32_1 = arith.constant 0 : i32
    return %c0_i32, %c0_i32_0 : i32, i32
  }
  func.func @transform_2(%arg0: i32) -> (i32, i32) {
    %c0_i32 = arith.constant 0 : i32
    %c0_i32_0 = arith.constant 0 : i32
    %c0_i32_1 = arith.constant 0 : i32
    return %c0_i32, %c0_i32_0 : i32, i32
  }
  func.func @transform_3(%arg0: i32) -> (i32, i32) {
    %c0_i32 = arith.constant 0 : i32
    %c0_i32_0 = arith.constant 0 : i32
    return %arg0, %c0_i32 : i32, i32
  }
}

module attributes {stable_mosaic.version = 11 : i64} {
  func.func @_conv_stats_kernel(%arg0: i32, %arg1: memref<128x576xbf16, #tpu.memory_space<vmem>>, %arg2: memref<576x64xbf16, #tpu.memory_space<vmem>>, %arg3: memref<128x64xf32, #tpu.memory_space<vmem>>, %arg4: memref<1x2x64xf32, #tpu.memory_space<vmem>>) attributes {dimension_semantics = [#tpu.dimension_semantics<parallel>], iteration_bounds = array<i64: 1>, scalar_prefetch = 0 : i64, scratch_operands = 0 : i64, tpu.core_type = #tpu.core_type<tc>, window_params = [{transform_indices = @transform_0, window_bounds = array<i64: 128, 576>}, {pipeline_mode = #tpu.pipeline_mode<synchronous>, transform_indices = @transform_1, window_bounds = array<i64: 576, 64>}, {transform_indices = @transform_2, window_bounds = array<i64: 128, 64>}, {transform_indices = @transform_3, window_bounds = array<i64: 1, 2, 64>}]} {
    %c0 = arith.constant 0 : index
    %c0_0 = arith.constant 0 : index
    %0 = vector.load %arg1[%c0, %c0_0] : memref<128x576xbf16, #tpu.memory_space<vmem>>, vector<128x576xbf16>
    %c0_1 = arith.constant 0 : index
    %c0_2 = arith.constant 0 : index
    %1 = vector.load %arg2[%c0_1, %c0_2] : memref<576x64xbf16, #tpu.memory_space<vmem>>, vector<576x64xbf16>
    %cst = arith.constant dense<0.000000e+00> : vector<128x64xf32>
    %2 = tpu.matmul %0, %1, %cst {dimension_numbers = #tpu.dot_dimension_numbers<[1], [0], [0], [1], [0, 0, 1, 1], [], []>} : vector<128x576xbf16>, vector<576x64xbf16>, vector<128x64xf32> -> vector<128x64xf32>
    %c0_3 = arith.constant 0 : index
    %c0_4 = arith.constant 0 : index
    %3 = vector.load %arg3[%c0_3, %c0_4] : memref<128x64xf32, #tpu.memory_space<vmem>>, vector<128x64xf32>
    tpu.vector_store %arg3[%c0_3, %c0_4], %2 {strides = array<i32>} : memref<128x64xf32, #tpu.memory_space<vmem>>, vector<128x64xf32>,
    %cst_5 = arith.constant dense<0.000000e+00> : vector<64xf32>
    %4 = vector.multi_reduction <add>, %2, %cst_5 [0] : vector<128x64xf32> to vector<64xf32>
    %5 = vector.shape_cast %4 : vector<64xf32> to vector<1x64xf32>
    %6 = arith.mulf %2, %2 : vector<128x64xf32>
    %cst_6 = arith.constant dense<0.000000e+00> : vector<64xf32>
    %7 = vector.multi_reduction <add>, %6, %cst_6 [0] : vector<128x64xf32> to vector<64xf32>
    %8 = vector.shape_cast %7 : vector<64xf32> to vector<1x64xf32>
    %9 = tpu.concatenate %5, %8 in 0 : vector<1x64xf32>, vector<1x64xf32> -> vector<2x64xf32>
    %10 = vector.shape_cast %9 : vector<2x64xf32> to vector<1x2x64xf32>
    %c0_7 = arith.constant 0 : index
    %c0_8 = arith.constant 0 : index
    %c0_9 = arith.constant 0 : index
    %11 = vector.load %arg4[%c0_7, %c0_8, %c0_9] : memref<1x2x64xf32, #tpu.memory_space<vmem>>, vector<1x2x64xf32>
    tpu.vector_store %arg4[%c0_7, %c0_8, %c0_9], %10 {strides = array<i32>} : memref<1x2x64xf32, #tpu.memory_space<vmem>>, vector<1x2x64xf32>,
    return
  }
  func.func @transform_0(%arg0: i32) -> (i32, i32) {
    %c0_i32 = arith.constant 0 : i32
    %c0_i32_0 = arith.constant 0 : i32
    return %arg0, %c0_i32 : i32, i32
  }
  func.func @transform_1(%arg0: i32) -> (i32, i32) {
    %c0_i32 = arith.constant 0 : i32
    %c0_i32_0 = arith.constant 0 : i32
    %c0_i32_1 = arith.constant 0 : i32
    return %c0_i32, %c0_i32_0 : i32, i32
  }
  func.func @transform_2(%arg0: i32) -> (i32, i32) {
    %c0_i32 = arith.constant 0 : i32
    %c0_i32_0 = arith.constant 0 : i32
    return %arg0, %c0_i32 : i32, i32
  }
  func.func @transform_3(%arg0: i32) -> (i32, i32, i32) {
    %c0_i32 = arith.constant 0 : i32
    %c0_i32_0 = arith.constant 0 : i32
    %c0_i32_1 = arith.constant 0 : i32
    return %arg0, %c0_i32, %c0_i32_0 : i32, i32, i32
  }
}

module attributes {stable_mosaic.version = 11 : i64} {
  func.func @_conv_stats_kernel(%arg0: i32, %arg1: memref<32x576xbf16, #tpu.memory_space<vmem>>, %arg2: memref<576x128xbf16, #tpu.memory_space<vmem>>, %arg3: memref<32x128xf32, #tpu.memory_space<vmem>>, %arg4: memref<1x2x128xf32, #tpu.memory_space<vmem>>) attributes {dimension_semantics = [#tpu.dimension_semantics<parallel>], iteration_bounds = array<i64: 1>, scalar_prefetch = 0 : i64, scratch_operands = 0 : i64, tpu.core_type = #tpu.core_type<tc>, window_params = [{transform_indices = @transform_0, window_bounds = array<i64: 32, 576>}, {pipeline_mode = #tpu.pipeline_mode<synchronous>, transform_indices = @transform_1, window_bounds = array<i64: 576, 128>}, {transform_indices = @transform_2, window_bounds = array<i64: 32, 128>}, {transform_indices = @transform_3, window_bounds = array<i64: 1, 2, 128>}]} {
    %c0 = arith.constant 0 : index
    %c0_0 = arith.constant 0 : index
    %0 = vector.load %arg1[%c0, %c0_0] : memref<32x576xbf16, #tpu.memory_space<vmem>>, vector<32x576xbf16>
    %c0_1 = arith.constant 0 : index
    %c0_2 = arith.constant 0 : index
    %1 = vector.load %arg2[%c0_1, %c0_2] : memref<576x128xbf16, #tpu.memory_space<vmem>>, vector<576x128xbf16>
    %cst = arith.constant dense<0.000000e+00> : vector<32x128xf32>
    %2 = tpu.matmul %0, %1, %cst {dimension_numbers = #tpu.dot_dimension_numbers<[1], [0], [0], [1], [0, 0, 1, 1], [], []>} : vector<32x576xbf16>, vector<576x128xbf16>, vector<32x128xf32> -> vector<32x128xf32>
    %c0_3 = arith.constant 0 : index
    %c0_4 = arith.constant 0 : index
    %3 = vector.load %arg3[%c0_3, %c0_4] : memref<32x128xf32, #tpu.memory_space<vmem>>, vector<32x128xf32>
    tpu.vector_store %arg3[%c0_3, %c0_4], %2 {strides = array<i32>} : memref<32x128xf32, #tpu.memory_space<vmem>>, vector<32x128xf32>,
    %cst_5 = arith.constant dense<0.000000e+00> : vector<128xf32>
    %4 = vector.multi_reduction <add>, %2, %cst_5 [0] : vector<32x128xf32> to vector<128xf32>
    %5 = vector.shape_cast %4 : vector<128xf32> to vector<1x128xf32>
    %6 = arith.mulf %2, %2 : vector<32x128xf32>
    %cst_6 = arith.constant dense<0.000000e+00> : vector<128xf32>
    %7 = vector.multi_reduction <add>, %6, %cst_6 [0] : vector<32x128xf32> to vector<128xf32>
    %8 = vector.shape_cast %7 : vector<128xf32> to vector<1x128xf32>
    %9 = tpu.concatenate %5, %8 in 0 : vector<1x128xf32>, vector<1x128xf32> -> vector<2x128xf32>
    %10 = vector.shape_cast %9 : vector<2x128xf32> to vector<1x2x128xf32>
    %c0_7 = arith.constant 0 : index
    %c0_8 = arith.constant 0 : index
    %c0_9 = arith.constant 0 : index
    %11 = vector.load %arg4[%c0_7, %c0_8, %c0_9] : memref<1x2x128xf32, #tpu.memory_space<vmem>>, vector<1x2x128xf32>
    tpu.vector_store %arg4[%c0_7, %c0_8, %c0_9], %10 {strides = array<i32>} : memref<1x2x128xf32, #tpu.memory_space<vmem>>, vector<1x2x128xf32>,
    return
  }
  func.func @transform_0(%arg0: i32) -> (i32, i32) {
    %c0_i32 = arith.constant 0 : i32
    %c0_i32_0 = arith.constant 0 : i32
    return %arg0, %c0_i32 : i32, i32
  }
  func.func @transform_1(%arg0: i32) -> (i32, i32) {
    %c0_i32 = arith.constant 0 : i32
    %c0_i32_0 = arith.constant 0 : i32
    %c0_i32_1 = arith.constant 0 : i32
    return %c0_i32, %c0_i32_0 : i32, i32
  }
  func.func @transform_2(%arg0: i32) -> (i32, i32) {
    %c0_i32 = arith.constant 0 : i32
    %c0_i32_0 = arith.constant 0 : i32
    return %arg0, %c0_i32 : i32, i32
  }
  func.func @transform_3(%arg0: i32) -> (i32, i32, i32) {
    %c0_i32 = arith.constant 0 : i32
    %c0_i32_0 = arith.constant 0 : i32
    %c0_i32_1 = arith.constant 0 : i32
    return %arg0, %c0_i32, %c0_i32_0 : i32, i32, i32
  }
}

module attributes {stable_mosaic.version = 11 : i64} {
  func.func @_affine_relu_kernel(%arg0: i32, %arg1: memref<32x128xf32, #tpu.memory_space<vmem>>, %arg2: memref<1x128xf32, #tpu.memory_space<vmem>>, %arg3: memref<1x128xf32, #tpu.memory_space<vmem>>, %arg4: memref<32x128xf32, #tpu.memory_space<vmem>>) attributes {dimension_semantics = [#tpu.dimension_semantics<parallel>], iteration_bounds = array<i64: 1>, scalar_prefetch = 0 : i64, scratch_operands = 0 : i64, tpu.core_type = #tpu.core_type<tc>, window_params = [{transform_indices = @transform_0, window_bounds = array<i64: 32, 128>}, {pipeline_mode = #tpu.pipeline_mode<synchronous>, transform_indices = @transform_1, window_bounds = array<i64: 1, 128>}, {pipeline_mode = #tpu.pipeline_mode<synchronous>, transform_indices = @transform_2, window_bounds = array<i64: 1, 128>}, {transform_indices = @transform_3, window_bounds = array<i64: 32, 128>}]} {
    %c0 = arith.constant 0 : index
    %c0_0 = arith.constant 0 : index
    %0 = vector.load %arg1[%c0, %c0_0] : memref<32x128xf32, #tpu.memory_space<vmem>>, vector<32x128xf32>
    %c0_1 = arith.constant 0 : index
    %c0_2 = arith.constant 0 : index
    %1 = vector.load %arg2[%c0_1, %c0_2] : memref<1x128xf32, #tpu.memory_space<vmem>>, vector<1x128xf32>
    %2 = vector.broadcast %1 : vector<1x128xf32> to vector<32x128xf32>
    %3 = arith.mulf %0, %2 : vector<32x128xf32>
    %c0_3 = arith.constant 0 : index
    %c0_4 = arith.constant 0 : index
    %4 = vector.load %arg3[%c0_3, %c0_4] : memref<1x128xf32, #tpu.memory_space<vmem>>, vector<1x128xf32>
    %5 = vector.broadcast %4 : vector<1x128xf32> to vector<32x128xf32>
    %6 = arith.addf %3, %5 : vector<32x128xf32>
    %cst = arith.constant 0.000000e+00 : f32
    %7 = vector.broadcast %cst : f32 to vector<32x128xf32>
    %8 = arith.maximumf %6, %7 : vector<32x128xf32>
    %c0_5 = arith.constant 0 : index
    %c0_6 = arith.constant 0 : index
    %9 = vector.load %arg4[%c0_5, %c0_6] : memref<32x128xf32, #tpu.memory_space<vmem>>, vector<32x128xf32>
    tpu.vector_store %arg4[%c0_5, %c0_6], %8 {strides = array<i32>} : memref<32x128xf32, #tpu.memory_space<vmem>>, vector<32x128xf32>,
    return
  }
  func.func @transform_0(%arg0: i32) -> (i32, i32) {
    %c0_i32 = arith.constant 0 : i32
    %c0_i32_0 = arith.constant 0 : i32
    return %arg0, %c0_i32 : i32, i32
  }
  func.func @transform_1(%arg0: i32) -> (i32, i32) {
    %c0_i32 = arith.constant 0 : i32
    %c0_i32_0 = arith.constant 0 : i32
    %c0_i32_1 = arith.constant 0 : i32
    return %c0_i32, %c0_i32_0 : i32, i32
  }
  func.func @transform_2(%arg0: i32) -> (i32, i32) {
    %c0_i32 = arith.constant 0 : i32
    %c0_i32_0 = arith.constant 0 : i32
    %c0_i32_1 = arith.constant 0 : i32
    return %c0_i32, %c0_i32_0 : i32, i32
  }
  func.func @transform_3(%arg0: i32) -> (i32, i32) {
    %c0_i32 = arith.constant 0 : i32
    %c0_i32_0 = arith.constant 0 : i32
    return %arg0, %c0_i32 : i32, i32
  }
}

module attributes {stable_mosaic.version = 11 : i64} {
  func.func @_conv_stats_kernel(%arg0: i32, %arg1: memref<32x1152xbf16, #tpu.memory_space<vmem>>, %arg2: memref<1152x128xbf16, #tpu.memory_space<vmem>>, %arg3: memref<32x128xf32, #tpu.memory_space<vmem>>, %arg4: memref<1x2x128xf32, #tpu.memory_space<vmem>>) attributes {dimension_semantics = [#tpu.dimension_semantics<parallel>], iteration_bounds = array<i64: 1>, scalar_prefetch = 0 : i64, scratch_operands = 0 : i64, tpu.core_type = #tpu.core_type<tc>, window_params = [{transform_indices = @transform_0, window_bounds = array<i64: 32, 1152>}, {pipeline_mode = #tpu.pipeline_mode<synchronous>, transform_indices = @transform_1, window_bounds = array<i64: 1152, 128>}, {transform_indices = @transform_2, window_bounds = array<i64: 32, 128>}, {transform_indices = @transform_3, window_bounds = array<i64: 1, 2, 128>}]} {
    %c0 = arith.constant 0 : index
    %c0_0 = arith.constant 0 : index
    %0 = vector.load %arg1[%c0, %c0_0] : memref<32x1152xbf16, #tpu.memory_space<vmem>>, vector<32x1152xbf16>
    %c0_1 = arith.constant 0 : index
    %c0_2 = arith.constant 0 : index
    %1 = vector.load %arg2[%c0_1, %c0_2] : memref<1152x128xbf16, #tpu.memory_space<vmem>>, vector<1152x128xbf16>
    %cst = arith.constant dense<0.000000e+00> : vector<32x128xf32>
    %2 = tpu.matmul %0, %1, %cst {dimension_numbers = #tpu.dot_dimension_numbers<[1], [0], [0], [1], [0, 0, 1, 1], [], []>} : vector<32x1152xbf16>, vector<1152x128xbf16>, vector<32x128xf32> -> vector<32x128xf32>
    %c0_3 = arith.constant 0 : index
    %c0_4 = arith.constant 0 : index
    %3 = vector.load %arg3[%c0_3, %c0_4] : memref<32x128xf32, #tpu.memory_space<vmem>>, vector<32x128xf32>
    tpu.vector_store %arg3[%c0_3, %c0_4], %2 {strides = array<i32>} : memref<32x128xf32, #tpu.memory_space<vmem>>, vector<32x128xf32>,
    %cst_5 = arith.constant dense<0.000000e+00> : vector<128xf32>
    %4 = vector.multi_reduction <add>, %2, %cst_5 [0] : vector<32x128xf32> to vector<128xf32>
    %5 = vector.shape_cast %4 : vector<128xf32> to vector<1x128xf32>
    %6 = arith.mulf %2, %2 : vector<32x128xf32>
    %cst_6 = arith.constant dense<0.000000e+00> : vector<128xf32>
    %7 = vector.multi_reduction <add>, %6, %cst_6 [0] : vector<32x128xf32> to vector<128xf32>
    %8 = vector.shape_cast %7 : vector<128xf32> to vector<1x128xf32>
    %9 = tpu.concatenate %5, %8 in 0 : vector<1x128xf32>, vector<1x128xf32> -> vector<2x128xf32>
    %10 = vector.shape_cast %9 : vector<2x128xf32> to vector<1x2x128xf32>
    %c0_7 = arith.constant 0 : index
    %c0_8 = arith.constant 0 : index
    %c0_9 = arith.constant 0 : index
    %11 = vector.load %arg4[%c0_7, %c0_8, %c0_9] : memref<1x2x128xf32, #tpu.memory_space<vmem>>, vector<1x2x128xf32>
    tpu.vector_store %arg4[%c0_7, %c0_8, %c0_9], %10 {strides = array<i32>} : memref<1x2x128xf32, #tpu.memory_space<vmem>>, vector<1x2x128xf32>,
    return
  }
  func.func @transform_0(%arg0: i32) -> (i32, i32) {
    %c0_i32 = arith.constant 0 : i32
    %c0_i32_0 = arith.constant 0 : i32
    return %arg0, %c0_i32 : i32, i32
  }
  func.func @transform_1(%arg0: i32) -> (i32, i32) {
    %c0_i32 = arith.constant 0 : i32
    %c0_i32_0 = arith.constant 0 : i32
    %c0_i32_1 = arith.constant 0 : i32
    return %c0_i32, %c0_i32_0 : i32, i32
  }
  func.func @transform_2(%arg0: i32) -> (i32, i32) {
    %c0_i32 = arith.constant 0 : i32
    %c0_i32_0 = arith.constant 0 : i32
    return %arg0, %c0_i32 : i32, i32
  }
  func.func @transform_3(%arg0: i32) -> (i32, i32, i32) {
    %c0_i32 = arith.constant 0 : i32
    %c0_i32_0 = arith.constant 0 : i32
    %c0_i32_1 = arith.constant 0 : i32
    return %arg0, %c0_i32, %c0_i32_0 : i32, i32, i32
  }
}

module attributes {stable_mosaic.version = 11 : i64} {
  func.func @_affine_relu_kernel(%arg0: i32, %arg1: memref<8x128xf32, #tpu.memory_space<vmem>>, %arg2: memref<1x128xf32, #tpu.memory_space<vmem>>, %arg3: memref<1x128xf32, #tpu.memory_space<vmem>>, %arg4: memref<8x128xf32, #tpu.memory_space<vmem>>) attributes {dimension_semantics = [#tpu.dimension_semantics<parallel>], iteration_bounds = array<i64: 1>, scalar_prefetch = 0 : i64, scratch_operands = 0 : i64, tpu.core_type = #tpu.core_type<tc>, window_params = [{transform_indices = @transform_0, window_bounds = array<i64: 8, 128>}, {pipeline_mode = #tpu.pipeline_mode<synchronous>, transform_indices = @transform_1, window_bounds = array<i64: 1, 128>}, {pipeline_mode = #tpu.pipeline_mode<synchronous>, transform_indices = @transform_2, window_bounds = array<i64: 1, 128>}, {transform_indices = @transform_3, window_bounds = array<i64: 8, 128>}]} {
    %c0 = arith.constant 0 : index
    %c0_0 = arith.constant 0 : index
    %0 = vector.load %arg1[%c0, %c0_0] : memref<8x128xf32, #tpu.memory_space<vmem>>, vector<8x128xf32>
    %c0_1 = arith.constant 0 : index
    %c0_2 = arith.constant 0 : index
    %1 = vector.load %arg2[%c0_1, %c0_2] : memref<1x128xf32, #tpu.memory_space<vmem>>, vector<1x128xf32>
    %2 = vector.broadcast %1 : vector<1x128xf32> to vector<8x128xf32>
    %3 = arith.mulf %0, %2 : vector<8x128xf32>
    %c0_3 = arith.constant 0 : index
    %c0_4 = arith.constant 0 : index
    %4 = vector.load %arg3[%c0_3, %c0_4] : memref<1x128xf32, #tpu.memory_space<vmem>>, vector<1x128xf32>
    %5 = vector.broadcast %4 : vector<1x128xf32> to vector<8x128xf32>
    %6 = arith.addf %3, %5 : vector<8x128xf32>
    %cst = arith.constant 0.000000e+00 : f32
    %7 = vector.broadcast %cst : f32 to vector<8x128xf32>
    %8 = arith.maximumf %6, %7 : vector<8x128xf32>
    %c0_5 = arith.constant 0 : index
    %c0_6 = arith.constant 0 : index
    %9 = vector.load %arg4[%c0_5, %c0_6] : memref<8x128xf32, #tpu.memory_space<vmem>>, vector<8x128xf32>
    tpu.vector_store %arg4[%c0_5, %c0_6], %8 {strides = array<i32>} : memref<8x128xf32, #tpu.memory_space<vmem>>, vector<8x128xf32>,
    return
  }
  func.func @transform_0(%arg0: i32) -> (i32, i32) {
    %c0_i32 = arith.constant 0 : i32
    %c0_i32_0 = arith.constant 0 : i32
    return %arg0, %c0_i32 : i32, i32
  }
  func.func @transform_1(%arg0: i32) -> (i32, i32) {
    %c0_i32 = arith.constant 0 : i32
    %c0_i32_0 = arith.constant 0 : i32
    %c0_i32_1 = arith.constant 0 : i32
    return %c0_i32, %c0_i32_0 : i32, i32
  }
  func.func @transform_2(%arg0: i32) -> (i32, i32) {
    %c0_i32 = arith.constant 0 : i32
    %c0_i32_0 = arith.constant 0 : i32
    %c0_i32_1 = arith.constant 0 : i32
    return %c0_i32, %c0_i32_0 : i32, i32
  }
  func.func @transform_3(%arg0: i32) -> (i32, i32) {
    %c0_i32 = arith.constant 0 : i32
    %c0_i32_0 = arith.constant 0 : i32
    return %arg0, %c0_i32 : i32, i32
  }
}

module attributes {stable_mosaic.version = 11 : i64} {
  func.func @_conv_stats_kernel(%arg0: i32, %arg1: memref<8x1152xbf16, #tpu.memory_space<vmem>>, %arg2: memref<1152x128xbf16, #tpu.memory_space<vmem>>, %arg3: memref<8x128xf32, #tpu.memory_space<vmem>>, %arg4: memref<1x2x128xf32, #tpu.memory_space<vmem>>) attributes {dimension_semantics = [#tpu.dimension_semantics<parallel>], iteration_bounds = array<i64: 1>, scalar_prefetch = 0 : i64, scratch_operands = 0 : i64, tpu.core_type = #tpu.core_type<tc>, window_params = [{transform_indices = @transform_0, window_bounds = array<i64: 8, 1152>}, {pipeline_mode = #tpu.pipeline_mode<synchronous>, transform_indices = @transform_1, window_bounds = array<i64: 1152, 128>}, {transform_indices = @transform_2, window_bounds = array<i64: 8, 128>}, {transform_indices = @transform_3, window_bounds = array<i64: 1, 2, 128>}]} {
    %c0 = arith.constant 0 : index
    %c0_0 = arith.constant 0 : index
    %0 = vector.load %arg1[%c0, %c0_0] : memref<8x1152xbf16, #tpu.memory_space<vmem>>, vector<8x1152xbf16>
    %c0_1 = arith.constant 0 : index
    %c0_2 = arith.constant 0 : index
    %1 = vector.load %arg2[%c0_1, %c0_2] : memref<1152x128xbf16, #tpu.memory_space<vmem>>, vector<1152x128xbf16>
    %cst = arith.constant dense<0.000000e+00> : vector<8x128xf32>
    %2 = tpu.matmul %0, %1, %cst {dimension_numbers = #tpu.dot_dimension_numbers<[1], [0], [0], [1], [0, 0, 1, 1], [], []>} : vector<8x1152xbf16>, vector<1152x128xbf16>, vector<8x128xf32> -> vector<8x128xf32>
    %c0_3 = arith.constant 0 : index
    %c0_4 = arith.constant 0 : index
    %3 = vector.load %arg3[%c0_3, %c0_4] : memref<8x128xf32, #tpu.memory_space<vmem>>, vector<8x128xf32>
    tpu.vector_store %arg3[%c0_3, %c0_4], %2 {strides = array<i32>} : memref<8x128xf32, #tpu.memory_space<vmem>>, vector<8x128xf32>,
    %cst_5 = arith.constant dense<0.000000e+00> : vector<128xf32>
    %4 = vector.multi_reduction <add>, %2, %cst_5 [0] : vector<8x128xf32> to vector<128xf32>
    %5 = vector.shape_cast %4 : vector<128xf32> to vector<1x128xf32>
    %6 = arith.mulf %2, %2 : vector<8x128xf32>
    %cst_6 = arith.constant dense<0.000000e+00> : vector<128xf32>
    %7 = vector.multi_reduction <add>, %6, %cst_6 [0] : vector<8x128xf32> to vector<128xf32>
    %8 = vector.shape_cast %7 : vector<128xf32> to vector<1x128xf32>
    %9 = tpu.concatenate %5, %8 in 0 : vector<1x128xf32>, vector<1x128xf32> -> vector<2x128xf32>
    %10 = vector.shape_cast %9 : vector<2x128xf32> to vector<1x2x128xf32>
    %c0_7 = arith.constant 0 : index
    %c0_8 = arith.constant 0 : index
    %c0_9 = arith.constant 0 : index
    %11 = vector.load %arg4[%c0_7, %c0_8, %c0_9] : memref<1x2x128xf32, #tpu.memory_space<vmem>>, vector<1x2x128xf32>
    tpu.vector_store %arg4[%c0_7, %c0_8, %c0_9], %10 {strides = array<i32>} : memref<1x2x128xf32, #tpu.memory_space<vmem>>, vector<1x2x128xf32>,
    return
  }
  func.func @transform_0(%arg0: i32) -> (i32, i32) {
    %c0_i32 = arith.constant 0 : i32
    %c0_i32_0 = arith.constant 0 : i32
    return %arg0, %c0_i32 : i32, i32
  }
  func.func @transform_1(%arg0: i32) -> (i32, i32) {
    %c0_i32 = arith.constant 0 : i32
    %c0_i32_0 = arith.constant 0 : i32
    %c0_i32_1 = arith.constant 0 : i32
    return %c0_i32, %c0_i32_0 : i32, i32
  }
  func.func @transform_2(%arg0: i32) -> (i32, i32) {
    %c0_i32 = arith.constant 0 : i32
    %c0_i32_0 = arith.constant 0 : i32
    return %arg0, %c0_i32 : i32, i32
  }
  func.func @transform_3(%arg0: i32) -> (i32, i32, i32) {
    %c0_i32 = arith.constant 0 : i32
    %c0_i32_0 = arith.constant 0 : i32
    %c0_i32_1 = arith.constant 0 : i32
    return %arg0, %c0_i32, %c0_i32_0 : i32, i32, i32
  }
}

module attributes {stable_mosaic.version = 11 : i64} {
  func.func @_matmul_bias_kernel(%arg0: i32, %arg1: memref<8x128xbf16, #tpu.memory_space<vmem>>, %arg2: memref<128x256xbf16, #tpu.memory_space<vmem>>, %arg3: memref<1x256xf32, #tpu.memory_space<vmem>>, %arg4: memref<8x256xf32, #tpu.memory_space<vmem>>) attributes {dimension_semantics = [#tpu.dimension_semantics<parallel>], iteration_bounds = array<i64: 1>, scalar_prefetch = 0 : i64, scratch_operands = 0 : i64, tpu.core_type = #tpu.core_type<tc>, window_params = [{transform_indices = @transform_0, window_bounds = array<i64: 8, 128>}, {pipeline_mode = #tpu.pipeline_mode<synchronous>, transform_indices = @transform_1, window_bounds = array<i64: 128, 256>}, {pipeline_mode = #tpu.pipeline_mode<synchronous>, transform_indices = @transform_2, window_bounds = array<i64: 1, 256>}, {transform_indices = @transform_3, window_bounds = array<i64: 8, 256>}]} {
    %c0 = arith.constant 0 : index
    %c0_0 = arith.constant 0 : index
    %0 = vector.load %arg1[%c0, %c0_0] : memref<8x128xbf16, #tpu.memory_space<vmem>>, vector<8x128xbf16>
    %c0_1 = arith.constant 0 : index
    %c0_2 = arith.constant 0 : index
    %1 = vector.load %arg2[%c0_1, %c0_2] : memref<128x256xbf16, #tpu.memory_space<vmem>>, vector<128x256xbf16>
    %cst = arith.constant dense<0.000000e+00> : vector<8x256xf32>
    %2 = tpu.matmul %0, %1, %cst {dimension_numbers = #tpu.dot_dimension_numbers<[1], [0], [0], [1], [0, 0, 1, 1], [], []>} : vector<8x128xbf16>, vector<128x256xbf16>, vector<8x256xf32> -> vector<8x256xf32>
    %c0_3 = arith.constant 0 : index
    %c0_4 = arith.constant 0 : index
    %3 = vector.load %arg3[%c0_3, %c0_4] : memref<1x256xf32, #tpu.memory_space<vmem>>, vector<1x256xf32>
    %4 = vector.broadcast %3 : vector<1x256xf32> to vector<8x256xf32>
    %5 = arith.addf %2, %4 : vector<8x256xf32>
    %c0_5 = arith.constant 0 : index
    %c0_6 = arith.constant 0 : index
    %6 = vector.load %arg4[%c0_5, %c0_6] : memref<8x256xf32, #tpu.memory_space<vmem>>, vector<8x256xf32>
    tpu.vector_store %arg4[%c0_5, %c0_6], %5 {strides = array<i32>} : memref<8x256xf32, #tpu.memory_space<vmem>>, vector<8x256xf32>,
    return
  }
  func.func @transform_0(%arg0: i32) -> (i32, i32) {
    %c0_i32 = arith.constant 0 : i32
    %c0_i32_0 = arith.constant 0 : i32
    return %arg0, %c0_i32 : i32, i32
  }
  func.func @transform_1(%arg0: i32) -> (i32, i32) {
    %c0_i32 = arith.constant 0 : i32
    %c0_i32_0 = arith.constant 0 : i32
    %c0_i32_1 = arith.constant 0 : i32
    return %c0_i32, %c0_i32_0 : i32, i32
  }
  func.func @transform_2(%arg0: i32) -> (i32, i32) {
    %c0_i32 = arith.constant 0 : i32
    %c0_i32_0 = arith.constant 0 : i32
    %c0_i32_1 = arith.constant 0 : i32
    return %c0_i32, %c0_i32_0 : i32, i32
  }
  func.func @transform_3(%arg0: i32) -> (i32, i32) {
    %c0_i32 = arith.constant 0 : i32
    %c0_i32_0 = arith.constant 0 : i32
    return %arg0, %c0_i32 : i32, i32
  }
}

module attributes {stable_mosaic.version = 11 : i64} {
  func.func @_conv_stats_kernel(%arg0: i32, %arg1: memref<32x1728xbf16, #tpu.memory_space<vmem>>, %arg2: memref<1728x64xbf16, #tpu.memory_space<vmem>>, %arg3: memref<32x64xf32, #tpu.memory_space<vmem>>, %arg4: memref<1x2x64xf32, #tpu.memory_space<vmem>>) attributes {dimension_semantics = [#tpu.dimension_semantics<parallel>], iteration_bounds = array<i64: 1>, scalar_prefetch = 0 : i64, scratch_operands = 0 : i64, tpu.core_type = #tpu.core_type<tc>, window_params = [{transform_indices = @transform_0, window_bounds = array<i64: 32, 1728>}, {pipeline_mode = #tpu.pipeline_mode<synchronous>, transform_indices = @transform_1, window_bounds = array<i64: 1728, 64>}, {transform_indices = @transform_2, window_bounds = array<i64: 32, 64>}, {transform_indices = @transform_3, window_bounds = array<i64: 1, 2, 64>}]} {
    %c0 = arith.constant 0 : index
    %c0_0 = arith.constant 0 : index
    %0 = vector.load %arg1[%c0, %c0_0] : memref<32x1728xbf16, #tpu.memory_space<vmem>>, vector<32x1728xbf16>
    %c0_1 = arith.constant 0 : index
    %c0_2 = arith.constant 0 : index
    %1 = vector.load %arg2[%c0_1, %c0_2] : memref<1728x64xbf16, #tpu.memory_space<vmem>>, vector<1728x64xbf16>
    %cst = arith.constant dense<0.000000e+00> : vector<32x64xf32>
    %2 = tpu.matmul %0, %1, %cst {dimension_numbers = #tpu.dot_dimension_numbers<[1], [0], [0], [1], [0, 0, 1, 1], [], []>} : vector<32x1728xbf16>, vector<1728x64xbf16>, vector<32x64xf32> -> vector<32x64xf32>
    %c0_3 = arith.constant 0 : index
    %c0_4 = arith.constant 0 : index
    %3 = vector.load %arg3[%c0_3, %c0_4] : memref<32x64xf32, #tpu.memory_space<vmem>>, vector<32x64xf32>
    tpu.vector_store %arg3[%c0_3, %c0_4], %2 {strides = array<i32>} : memref<32x64xf32, #tpu.memory_space<vmem>>, vector<32x64xf32>,
    %cst_5 = arith.constant dense<0.000000e+00> : vector<64xf32>
    %4 = vector.multi_reduction <add>, %2, %cst_5 [0] : vector<32x64xf32> to vector<64xf32>
    %5 = vector.shape_cast %4 : vector<64xf32> to vector<1x64xf32>
    %6 = arith.mulf %2, %2 : vector<32x64xf32>
    %cst_6 = arith.constant dense<0.000000e+00> : vector<64xf32>
    %7 = vector.multi_reduction <add>, %6, %cst_6 [0] : vector<32x64xf32> to vector<64xf32>
    %8 = vector.shape_cast %7 : vector<64xf32> to vector<1x64xf32>
    %9 = tpu.concatenate %5, %8 in 0 : vector<1x64xf32>, vector<1x64xf32> -> vector<2x64xf32>
    %10 = vector.shape_cast %9 : vector<2x64xf32> to vector<1x2x64xf32>
    %c0_7 = arith.constant 0 : index
    %c0_8 = arith.constant 0 : index
    %c0_9 = arith.constant 0 : index
    %11 = vector.load %arg4[%c0_7, %c0_8, %c0_9] : memref<1x2x64xf32, #tpu.memory_space<vmem>>, vector<1x2x64xf32>
    tpu.vector_store %arg4[%c0_7, %c0_8, %c0_9], %10 {strides = array<i32>} : memref<1x2x64xf32, #tpu.memory_space<vmem>>, vector<1x2x64xf32>,
    return
  }
  func.func @transform_0(%arg0: i32) -> (i32, i32) {
    %c0_i32 = arith.constant 0 : i32
    %c0_i32_0 = arith.constant 0 : i32
    return %arg0, %c0_i32 : i32, i32
  }
  func.func @transform_1(%arg0: i32) -> (i32, i32) {
    %c0_i32 = arith.constant 0 : i32
    %c0_i32_0 = arith.constant 0 : i32
    %c0_i32_1 = arith.constant 0 : i32
    return %c0_i32, %c0_i32_0 : i32, i32
  }
  func.func @transform_2(%arg0: i32) -> (i32, i32) {
    %c0_i32 = arith.constant 0 : i32
    %c0_i32_0 = arith.constant 0 : i32
    return %arg0, %c0_i32 : i32, i32
  }
  func.func @transform_3(%arg0: i32) -> (i32, i32, i32) {
    %c0_i32 = arith.constant 0 : i32
    %c0_i32_0 = arith.constant 0 : i32
    %c0_i32_1 = arith.constant 0 : i32
    return %arg0, %c0_i32, %c0_i32_0 : i32, i32, i32
  }
}

module attributes {stable_mosaic.version = 11 : i64} {
  func.func @_affine_relu_kernel(%arg0: i32, %arg1: memref<32x64xf32, #tpu.memory_space<vmem>>, %arg2: memref<1x64xf32, #tpu.memory_space<vmem>>, %arg3: memref<1x64xf32, #tpu.memory_space<vmem>>, %arg4: memref<32x64xf32, #tpu.memory_space<vmem>>) attributes {dimension_semantics = [#tpu.dimension_semantics<parallel>], iteration_bounds = array<i64: 1>, scalar_prefetch = 0 : i64, scratch_operands = 0 : i64, tpu.core_type = #tpu.core_type<tc>, window_params = [{transform_indices = @transform_0, window_bounds = array<i64: 32, 64>}, {pipeline_mode = #tpu.pipeline_mode<synchronous>, transform_indices = @transform_1, window_bounds = array<i64: 1, 64>}, {pipeline_mode = #tpu.pipeline_mode<synchronous>, transform_indices = @transform_2, window_bounds = array<i64: 1, 64>}, {transform_indices = @transform_3, window_bounds = array<i64: 32, 64>}]} {
    %c0 = arith.constant 0 : index
    %c0_0 = arith.constant 0 : index
    %0 = vector.load %arg1[%c0, %c0_0] : memref<32x64xf32, #tpu.memory_space<vmem>>, vector<32x64xf32>
    %c0_1 = arith.constant 0 : index
    %c0_2 = arith.constant 0 : index
    %1 = vector.load %arg2[%c0_1, %c0_2] : memref<1x64xf32, #tpu.memory_space<vmem>>, vector<1x64xf32>
    %2 = vector.broadcast %1 : vector<1x64xf32> to vector<32x64xf32>
    %3 = arith.mulf %0, %2 : vector<32x64xf32>
    %c0_3 = arith.constant 0 : index
    %c0_4 = arith.constant 0 : index
    %4 = vector.load %arg3[%c0_3, %c0_4] : memref<1x64xf32, #tpu.memory_space<vmem>>, vector<1x64xf32>
    %5 = vector.broadcast %4 : vector<1x64xf32> to vector<32x64xf32>
    %6 = arith.addf %3, %5 : vector<32x64xf32>
    %cst = arith.constant 0.000000e+00 : f32
    %7 = vector.broadcast %cst : f32 to vector<32x64xf32>
    %8 = arith.maximumf %6, %7 : vector<32x64xf32>
    %c0_5 = arith.constant 0 : index
    %c0_6 = arith.constant 0 : index
    %9 = vector.load %arg4[%c0_5, %c0_6] : memref<32x64xf32, #tpu.memory_space<vmem>>, vector<32x64xf32>
    tpu.vector_store %arg4[%c0_5, %c0_6], %8 {strides = array<i32>} : memref<32x64xf32, #tpu.memory_space<vmem>>, vector<32x64xf32>,
    return
  }
  func.func @transform_0(%arg0: i32) -> (i32, i32) {
    %c0_i32 = arith.constant 0 : i32
    %c0_i32_0 = arith.constant 0 : i32
    return %arg0, %c0_i32 : i32, i32
  }
  func.func @transform_1(%arg0: i32) -> (i32, i32) {
    %c0_i32 = arith.constant 0 : i32
    %c0_i32_0 = arith.constant 0 : i32
    %c0_i32_1 = arith.constant 0 : i32
    return %c0_i32, %c0_i32_0 : i32, i32
  }
  func.func @transform_2(%arg0: i32) -> (i32, i32) {
    %c0_i32 = arith.constant 0 : i32
    %c0_i32_0 = arith.constant 0 : i32
    %c0_i32_1 = arith.constant 0 : i32
    return %c0_i32, %c0_i32_0 : i32, i32
  }
  func.func @transform_3(%arg0: i32) -> (i32, i32) {
    %c0_i32 = arith.constant 0 : i32
    %c0_i32_0 = arith.constant 0 : i32
    return %arg0, %c0_i32 : i32, i32
  }
}

module attributes {stable_mosaic.version = 11 : i64} {
  func.func @_conv_stats_kernel(%arg0: i32, %arg1: memref<32x576xbf16, #tpu.memory_space<vmem>>, %arg2: memref<576x64xbf16, #tpu.memory_space<vmem>>, %arg3: memref<32x64xf32, #tpu.memory_space<vmem>>, %arg4: memref<1x2x64xf32, #tpu.memory_space<vmem>>) attributes {dimension_semantics = [#tpu.dimension_semantics<parallel>], iteration_bounds = array<i64: 1>, scalar_prefetch = 0 : i64, scratch_operands = 0 : i64, tpu.core_type = #tpu.core_type<tc>, window_params = [{transform_indices = @transform_0, window_bounds = array<i64: 32, 576>}, {pipeline_mode = #tpu.pipeline_mode<synchronous>, transform_indices = @transform_1, window_bounds = array<i64: 576, 64>}, {transform_indices = @transform_2, window_bounds = array<i64: 32, 64>}, {transform_indices = @transform_3, window_bounds = array<i64: 1, 2, 64>}]} {
    %c0 = arith.constant 0 : index
    %c0_0 = arith.constant 0 : index
    %0 = vector.load %arg1[%c0, %c0_0] : memref<32x576xbf16, #tpu.memory_space<vmem>>, vector<32x576xbf16>
    %c0_1 = arith.constant 0 : index
    %c0_2 = arith.constant 0 : index
    %1 = vector.load %arg2[%c0_1, %c0_2] : memref<576x64xbf16, #tpu.memory_space<vmem>>, vector<576x64xbf16>
    %cst = arith.constant dense<0.000000e+00> : vector<32x64xf32>
    %2 = tpu.matmul %0, %1, %cst {dimension_numbers = #tpu.dot_dimension_numbers<[1], [0], [0], [1], [0, 0, 1, 1], [], []>} : vector<32x576xbf16>, vector<576x64xbf16>, vector<32x64xf32> -> vector<32x64xf32>
    %c0_3 = arith.constant 0 : index
    %c0_4 = arith.constant 0 : index
    %3 = vector.load %arg3[%c0_3, %c0_4] : memref<32x64xf32, #tpu.memory_space<vmem>>, vector<32x64xf32>
    tpu.vector_store %arg3[%c0_3, %c0_4], %2 {strides = array<i32>} : memref<32x64xf32, #tpu.memory_space<vmem>>, vector<32x64xf32>,
    %cst_5 = arith.constant dense<0.000000e+00> : vector<64xf32>
    %4 = vector.multi_reduction <add>, %2, %cst_5 [0] : vector<32x64xf32> to vector<64xf32>
    %5 = vector.shape_cast %4 : vector<64xf32> to vector<1x64xf32>
    %6 = arith.mulf %2, %2 : vector<32x64xf32>
    %cst_6 = arith.constant dense<0.000000e+00> : vector<64xf32>
    %7 = vector.multi_reduction <add>, %6, %cst_6 [0] : vector<32x64xf32> to vector<64xf32>
    %8 = vector.shape_cast %7 : vector<64xf32> to vector<1x64xf32>
    %9 = tpu.concatenate %5, %8 in 0 : vector<1x64xf32>, vector<1x64xf32> -> vector<2x64xf32>
    %10 = vector.shape_cast %9 : vector<2x64xf32> to vector<1x2x64xf32>
    %c0_7 = arith.constant 0 : index
    %c0_8 = arith.constant 0 : index
    %c0_9 = arith.constant 0 : index
    %11 = vector.load %arg4[%c0_7, %c0_8, %c0_9] : memref<1x2x64xf32, #tpu.memory_space<vmem>>, vector<1x2x64xf32>
    tpu.vector_store %arg4[%c0_7, %c0_8, %c0_9], %10 {strides = array<i32>} : memref<1x2x64xf32, #tpu.memory_space<vmem>>, vector<1x2x64xf32>,
    return
  }
  func.func @transform_0(%arg0: i32) -> (i32, i32) {
    %c0_i32 = arith.constant 0 : i32
    %c0_i32_0 = arith.constant 0 : i32
    return %arg0, %c0_i32 : i32, i32
  }
  func.func @transform_1(%arg0: i32) -> (i32, i32) {
    %c0_i32 = arith.constant 0 : i32
    %c0_i32_0 = arith.constant 0 : i32
    %c0_i32_1 = arith.constant 0 : i32
    return %c0_i32, %c0_i32_0 : i32, i32
  }
  func.func @transform_2(%arg0: i32) -> (i32, i32) {
    %c0_i32 = arith.constant 0 : i32
    %c0_i32_0 = arith.constant 0 : i32
    return %arg0, %c0_i32 : i32, i32
  }
  func.func @transform_3(%arg0: i32) -> (i32, i32, i32) {
    %c0_i32 = arith.constant 0 : i32
    %c0_i32_0 = arith.constant 0 : i32
    %c0_i32_1 = arith.constant 0 : i32
    return %arg0, %c0_i32, %c0_i32_0 : i32, i32, i32
  }
}

module attributes {stable_mosaic.version = 11 : i64} {
  func.func @_matmul_bias_kernel(%arg0: i32, %arg1: memref<32x64xbf16, #tpu.memory_space<vmem>>, %arg2: memref<64x128xbf16, #tpu.memory_space<vmem>>, %arg3: memref<1x128xf32, #tpu.memory_space<vmem>>, %arg4: memref<32x128xf32, #tpu.memory_space<vmem>>) attributes {dimension_semantics = [#tpu.dimension_semantics<parallel>], iteration_bounds = array<i64: 1>, scalar_prefetch = 0 : i64, scratch_operands = 0 : i64, tpu.core_type = #tpu.core_type<tc>, window_params = [{transform_indices = @transform_0, window_bounds = array<i64: 32, 64>}, {pipeline_mode = #tpu.pipeline_mode<synchronous>, transform_indices = @transform_1, window_bounds = array<i64: 64, 128>}, {pipeline_mode = #tpu.pipeline_mode<synchronous>, transform_indices = @transform_2, window_bounds = array<i64: 1, 128>}, {transform_indices = @transform_3, window_bounds = array<i64: 32, 128>}]} {
    %c0 = arith.constant 0 : index
    %c0_0 = arith.constant 0 : index
    %0 = vector.load %arg1[%c0, %c0_0] : memref<32x64xbf16, #tpu.memory_space<vmem>>, vector<32x64xbf16>
    %c0_1 = arith.constant 0 : index
    %c0_2 = arith.constant 0 : index
    %1 = vector.load %arg2[%c0_1, %c0_2] : memref<64x128xbf16, #tpu.memory_space<vmem>>, vector<64x128xbf16>
    %cst = arith.constant dense<0.000000e+00> : vector<32x128xf32>
    %2 = tpu.matmul %0, %1, %cst {dimension_numbers = #tpu.dot_dimension_numbers<[1], [0], [0], [1], [0, 0, 1, 1], [], []>} : vector<32x64xbf16>, vector<64x128xbf16>, vector<32x128xf32> -> vector<32x128xf32>
    %c0_3 = arith.constant 0 : index
    %c0_4 = arith.constant 0 : index
    %3 = vector.load %arg3[%c0_3, %c0_4] : memref<1x128xf32, #tpu.memory_space<vmem>>, vector<1x128xf32>
    %4 = vector.broadcast %3 : vector<1x128xf32> to vector<32x128xf32>
    %5 = arith.addf %2, %4 : vector<32x128xf32>
    %c0_5 = arith.constant 0 : index
    %c0_6 = arith.constant 0 : index
    %6 = vector.load %arg4[%c0_5, %c0_6] : memref<32x128xf32, #tpu.memory_space<vmem>>, vector<32x128xf32>
    tpu.vector_store %arg4[%c0_5, %c0_6], %5 {strides = array<i32>} : memref<32x128xf32, #tpu.memory_space<vmem>>, vector<32x128xf32>,
    return
  }
  func.func @transform_0(%arg0: i32) -> (i32, i32) {
    %c0_i32 = arith.constant 0 : i32
    %c0_i32_0 = arith.constant 0 : i32
    return %arg0, %c0_i32 : i32, i32
  }
  func.func @transform_1(%arg0: i32) -> (i32, i32) {
    %c0_i32 = arith.constant 0 : i32
    %c0_i32_0 = arith.constant 0 : i32
    %c0_i32_1 = arith.constant 0 : i32
    return %c0_i32, %c0_i32_0 : i32, i32
  }
  func.func @transform_2(%arg0: i32) -> (i32, i32) {
    %c0_i32 = arith.constant 0 : i32
    %c0_i32_0 = arith.constant 0 : i32
    %c0_i32_1 = arith.constant 0 : i32
    return %c0_i32, %c0_i32_0 : i32, i32
  }
  func.func @transform_3(%arg0: i32) -> (i32, i32) {
    %c0_i32 = arith.constant 0 : i32
    %c0_i32_0 = arith.constant 0 : i32
    return %arg0, %c0_i32 : i32, i32
  }
}

module attributes {stable_mosaic.version = 11 : i64} {
  func.func @_conv_stats_kernel(%arg0: i32, %arg1: memref<128x864xbf16, #tpu.memory_space<vmem>>, %arg2: memref<864x32xbf16, #tpu.memory_space<vmem>>, %arg3: memref<128x32xf32, #tpu.memory_space<vmem>>, %arg4: memref<1x2x32xf32, #tpu.memory_space<vmem>>) attributes {dimension_semantics = [#tpu.dimension_semantics<parallel>], iteration_bounds = array<i64: 1>, scalar_prefetch = 0 : i64, scratch_operands = 0 : i64, tpu.core_type = #tpu.core_type<tc>, window_params = [{transform_indices = @transform_0, window_bounds = array<i64: 128, 864>}, {pipeline_mode = #tpu.pipeline_mode<synchronous>, transform_indices = @transform_1, window_bounds = array<i64: 864, 32>}, {transform_indices = @transform_2, window_bounds = array<i64: 128, 32>}, {transform_indices = @transform_3, window_bounds = array<i64: 1, 2, 32>}]} {
    %c0 = arith.constant 0 : index
    %c0_0 = arith.constant 0 : index
    %0 = vector.load %arg1[%c0, %c0_0] : memref<128x864xbf16, #tpu.memory_space<vmem>>, vector<128x864xbf16>
    %c0_1 = arith.constant 0 : index
    %c0_2 = arith.constant 0 : index
    %1 = vector.load %arg2[%c0_1, %c0_2] : memref<864x32xbf16, #tpu.memory_space<vmem>>, vector<864x32xbf16>
    %cst = arith.constant dense<0.000000e+00> : vector<128x32xf32>
    %2 = tpu.matmul %0, %1, %cst {dimension_numbers = #tpu.dot_dimension_numbers<[1], [0], [0], [1], [0, 0, 1, 1], [], []>} : vector<128x864xbf16>, vector<864x32xbf16>, vector<128x32xf32> -> vector<128x32xf32>
    %c0_3 = arith.constant 0 : index
    %c0_4 = arith.constant 0 : index
    %3 = vector.load %arg3[%c0_3, %c0_4] : memref<128x32xf32, #tpu.memory_space<vmem>>, vector<128x32xf32>
    tpu.vector_store %arg3[%c0_3, %c0_4], %2 {strides = array<i32>} : memref<128x32xf32, #tpu.memory_space<vmem>>, vector<128x32xf32>,
    %cst_5 = arith.constant dense<0.000000e+00> : vector<32xf32>
    %4 = vector.multi_reduction <add>, %2, %cst_5 [0] : vector<128x32xf32> to vector<32xf32>
    %5 = vector.shape_cast %4 : vector<32xf32> to vector<1x32xf32>
    %6 = arith.mulf %2, %2 : vector<128x32xf32>
    %cst_6 = arith.constant dense<0.000000e+00> : vector<32xf32>
    %7 = vector.multi_reduction <add>, %6, %cst_6 [0] : vector<128x32xf32> to vector<32xf32>
    %8 = vector.shape_cast %7 : vector<32xf32> to vector<1x32xf32>
    %9 = tpu.concatenate %5, %8 in 0 : vector<1x32xf32>, vector<1x32xf32> -> vector<2x32xf32>
    %10 = vector.shape_cast %9 : vector<2x32xf32> to vector<1x2x32xf32>
    %c0_7 = arith.constant 0 : index
    %c0_8 = arith.constant 0 : index
    %c0_9 = arith.constant 0 : index
    %11 = vector.load %arg4[%c0_7, %c0_8, %c0_9] : memref<1x2x32xf32, #tpu.memory_space<vmem>>, vector<1x2x32xf32>
    tpu.vector_store %arg4[%c0_7, %c0_8, %c0_9], %10 {strides = array<i32>} : memref<1x2x32xf32, #tpu.memory_space<vmem>>, vector<1x2x32xf32>,
    return
  }
  func.func @transform_0(%arg0: i32) -> (i32, i32) {
    %c0_i32 = arith.constant 0 : i32
    %c0_i32_0 = arith.constant 0 : i32
    return %arg0, %c0_i32 : i32, i32
  }
  func.func @transform_1(%arg0: i32) -> (i32, i32) {
    %c0_i32 = arith.constant 0 : i32
    %c0_i32_0 = arith.constant 0 : i32
    %c0_i32_1 = arith.constant 0 : i32
    return %c0_i32, %c0_i32_0 : i32, i32
  }
  func.func @transform_2(%arg0: i32) -> (i32, i32) {
    %c0_i32 = arith.constant 0 : i32
    %c0_i32_0 = arith.constant 0 : i32
    return %arg0, %c0_i32 : i32, i32
  }
  func.func @transform_3(%arg0: i32) -> (i32, i32, i32) {
    %c0_i32 = arith.constant 0 : i32
    %c0_i32_0 = arith.constant 0 : i32
    %c0_i32_1 = arith.constant 0 : i32
    return %arg0, %c0_i32, %c0_i32_0 : i32, i32, i32
  }
}

module attributes {stable_mosaic.version = 11 : i64} {
  func.func @_affine_relu_kernel(%arg0: i32, %arg1: memref<128x32xf32, #tpu.memory_space<vmem>>, %arg2: memref<1x32xf32, #tpu.memory_space<vmem>>, %arg3: memref<1x32xf32, #tpu.memory_space<vmem>>, %arg4: memref<128x32xf32, #tpu.memory_space<vmem>>) attributes {dimension_semantics = [#tpu.dimension_semantics<parallel>], iteration_bounds = array<i64: 1>, scalar_prefetch = 0 : i64, scratch_operands = 0 : i64, tpu.core_type = #tpu.core_type<tc>, window_params = [{transform_indices = @transform_0, window_bounds = array<i64: 128, 32>}, {pipeline_mode = #tpu.pipeline_mode<synchronous>, transform_indices = @transform_1, window_bounds = array<i64: 1, 32>}, {pipeline_mode = #tpu.pipeline_mode<synchronous>, transform_indices = @transform_2, window_bounds = array<i64: 1, 32>}, {transform_indices = @transform_3, window_bounds = array<i64: 128, 32>}]} {
    %c0 = arith.constant 0 : index
    %c0_0 = arith.constant 0 : index
    %0 = vector.load %arg1[%c0, %c0_0] : memref<128x32xf32, #tpu.memory_space<vmem>>, vector<128x32xf32>
    %c0_1 = arith.constant 0 : index
    %c0_2 = arith.constant 0 : index
    %1 = vector.load %arg2[%c0_1, %c0_2] : memref<1x32xf32, #tpu.memory_space<vmem>>, vector<1x32xf32>
    %2 = vector.broadcast %1 : vector<1x32xf32> to vector<128x32xf32>
    %3 = arith.mulf %0, %2 : vector<128x32xf32>
    %c0_3 = arith.constant 0 : index
    %c0_4 = arith.constant 0 : index
    %4 = vector.load %arg3[%c0_3, %c0_4] : memref<1x32xf32, #tpu.memory_space<vmem>>, vector<1x32xf32>
    %5 = vector.broadcast %4 : vector<1x32xf32> to vector<128x32xf32>
    %6 = arith.addf %3, %5 : vector<128x32xf32>
    %cst = arith.constant 0.000000e+00 : f32
    %7 = vector.broadcast %cst : f32 to vector<128x32xf32>
    %8 = arith.maximumf %6, %7 : vector<128x32xf32>
    %c0_5 = arith.constant 0 : index
    %c0_6 = arith.constant 0 : index
    %9 = vector.load %arg4[%c0_5, %c0_6] : memref<128x32xf32, #tpu.memory_space<vmem>>, vector<128x32xf32>
    tpu.vector_store %arg4[%c0_5, %c0_6], %8 {strides = array<i32>} : memref<128x32xf32, #tpu.memory_space<vmem>>, vector<128x32xf32>,
    return
  }
  func.func @transform_0(%arg0: i32) -> (i32, i32) {
    %c0_i32 = arith.constant 0 : i32
    %c0_i32_0 = arith.constant 0 : i32
    return %arg0, %c0_i32 : i32, i32
  }
  func.func @transform_1(%arg0: i32) -> (i32, i32) {
    %c0_i32 = arith.constant 0 : i32
    %c0_i32_0 = arith.constant 0 : i32
    %c0_i32_1 = arith.constant 0 : i32
    return %c0_i32, %c0_i32_0 : i32, i32
  }
  func.func @transform_2(%arg0: i32) -> (i32, i32) {
    %c0_i32 = arith.constant 0 : i32
    %c0_i32_0 = arith.constant 0 : i32
    %c0_i32_1 = arith.constant 0 : i32
    return %c0_i32, %c0_i32_0 : i32, i32
  }
  func.func @transform_3(%arg0: i32) -> (i32, i32) {
    %c0_i32 = arith.constant 0 : i32
    %c0_i32_0 = arith.constant 0 : i32
    return %arg0, %c0_i32 : i32, i32
  }
}

module attributes {stable_mosaic.version = 11 : i64} {
  func.func @_conv_stats_kernel(%arg0: i32, %arg1: memref<128x288xbf16, #tpu.memory_space<vmem>>, %arg2: memref<288x32xbf16, #tpu.memory_space<vmem>>, %arg3: memref<128x32xf32, #tpu.memory_space<vmem>>, %arg4: memref<1x2x32xf32, #tpu.memory_space<vmem>>) attributes {dimension_semantics = [#tpu.dimension_semantics<parallel>], iteration_bounds = array<i64: 1>, scalar_prefetch = 0 : i64, scratch_operands = 0 : i64, tpu.core_type = #tpu.core_type<tc>, window_params = [{transform_indices = @transform_0, window_bounds = array<i64: 128, 288>}, {pipeline_mode = #tpu.pipeline_mode<synchronous>, transform_indices = @transform_1, window_bounds = array<i64: 288, 32>}, {transform_indices = @transform_2, window_bounds = array<i64: 128, 32>}, {transform_indices = @transform_3, window_bounds = array<i64: 1, 2, 32>}]} {
    %c0 = arith.constant 0 : index
    %c0_0 = arith.constant 0 : index
    %0 = vector.load %arg1[%c0, %c0_0] : memref<128x288xbf16, #tpu.memory_space<vmem>>, vector<128x288xbf16>
    %c0_1 = arith.constant 0 : index
    %c0_2 = arith.constant 0 : index
    %1 = vector.load %arg2[%c0_1, %c0_2] : memref<288x32xbf16, #tpu.memory_space<vmem>>, vector<288x32xbf16>
    %cst = arith.constant dense<0.000000e+00> : vector<128x32xf32>
    %2 = tpu.matmul %0, %1, %cst {dimension_numbers = #tpu.dot_dimension_numbers<[1], [0], [0], [1], [0, 0, 1, 1], [], []>} : vector<128x288xbf16>, vector<288x32xbf16>, vector<128x32xf32> -> vector<128x32xf32>
    %c0_3 = arith.constant 0 : index
    %c0_4 = arith.constant 0 : index
    %3 = vector.load %arg3[%c0_3, %c0_4] : memref<128x32xf32, #tpu.memory_space<vmem>>, vector<128x32xf32>
    tpu.vector_store %arg3[%c0_3, %c0_4], %2 {strides = array<i32>} : memref<128x32xf32, #tpu.memory_space<vmem>>, vector<128x32xf32>,
    %cst_5 = arith.constant dense<0.000000e+00> : vector<32xf32>
    %4 = vector.multi_reduction <add>, %2, %cst_5 [0] : vector<128x32xf32> to vector<32xf32>
    %5 = vector.shape_cast %4 : vector<32xf32> to vector<1x32xf32>
    %6 = arith.mulf %2, %2 : vector<128x32xf32>
    %cst_6 = arith.constant dense<0.000000e+00> : vector<32xf32>
    %7 = vector.multi_reduction <add>, %6, %cst_6 [0] : vector<128x32xf32> to vector<32xf32>
    %8 = vector.shape_cast %7 : vector<32xf32> to vector<1x32xf32>
    %9 = tpu.concatenate %5, %8 in 0 : vector<1x32xf32>, vector<1x32xf32> -> vector<2x32xf32>
    %10 = vector.shape_cast %9 : vector<2x32xf32> to vector<1x2x32xf32>
    %c0_7 = arith.constant 0 : index
    %c0_8 = arith.constant 0 : index
    %c0_9 = arith.constant 0 : index
    %11 = vector.load %arg4[%c0_7, %c0_8, %c0_9] : memref<1x2x32xf32, #tpu.memory_space<vmem>>, vector<1x2x32xf32>
    tpu.vector_store %arg4[%c0_7, %c0_8, %c0_9], %10 {strides = array<i32>} : memref<1x2x32xf32, #tpu.memory_space<vmem>>, vector<1x2x32xf32>,
    return
  }
  func.func @transform_0(%arg0: i32) -> (i32, i32) {
    %c0_i32 = arith.constant 0 : i32
    %c0_i32_0 = arith.constant 0 : i32
    return %arg0, %c0_i32 : i32, i32
  }
  func.func @transform_1(%arg0: i32) -> (i32, i32) {
    %c0_i32 = arith.constant 0 : i32
    %c0_i32_0 = arith.constant 0 : i32
    %c0_i32_1 = arith.constant 0 : i32
    return %c0_i32, %c0_i32_0 : i32, i32
  }
  func.func @transform_2(%arg0: i32) -> (i32, i32) {
    %c0_i32 = arith.constant 0 : i32
    %c0_i32_0 = arith.constant 0 : i32
    return %arg0, %c0_i32 : i32, i32
  }
  func.func @transform_3(%arg0: i32) -> (i32, i32, i32) {
    %c0_i32 = arith.constant 0 : i32
    %c0_i32_0 = arith.constant 0 : i32
    %c0_i32_1 = arith.constant 0 : i32
    return %arg0, %c0_i32, %c0_i32_0 : i32, i32, i32
  }
}

</mosaic_0001>

<llo_original>
// kernel: _lambda_.27
$region0: #{_lambda_.27}
  #allocation0 [shape = 'u32[]', space=smem, size = 0x4, offset = 0x4, fixed_abs, tag = 'smem constant byte address 0x4 - core index']
  #allocation1 [shape = 'u32[144,128]{1,0:T(1,128)}', space=vmem, size = 0x12000, scoped, tag = 'internal scratch']
  %s0 = inlined_call_operand.vmem [shape: f32[512,32], index: 0, kind: input, shape index: {}]
  %s1 = inlined_call_operand.vmem [shape: f32[1,32], index: 1, kind: input, shape index: {}]
  %s2 = inlined_call_operand.vmem [shape: f32[1,32], index: 2, kind: input, shape index: {}]
  %s3 = inlined_call_operand.vmem [shape: f32[512,32], index: 3, kind: output, shape index: {}]
  %s4 = sld [smem:[#allocation0]]
  $region45: #{_lambda_.27} parent=0
    _
  %s6 = ssub.s32 1, %s4
  %s7 = scalar_select 0, %s6, %s4
  loop: start=0, step=1, limit=4
  $region2: #{_lambda_.27} parent=0 // loop_pre_header
    _
  $region3: #{_lambda_.27} parent=0 // loop_header
    %s9 = sphi 0, %s13
    %p10 = scmp.ge.s32.totalorder %s9, 4
    %s19 = sphi 0, %s21
    %s22 = sphi 0, %s19
    %s23 = sphi 0, %s22
    %s39 = sphi 0, %s23
    %s43 = sphi 0, %s43
    %s45 = sphi 0, %s43
    %s46 = sphi 0, %s45
    %s60 = sphi 0, %s46
    %s64 = sphi 0, %s64
    %s66 = sphi 0, %s64
    %s67 = sphi 0, %s66
    %s81 = sphi 0, %s67
    %s87 = sphi 0, %s89
    %s90 = sphi 0, %s87
    %s91 = sphi 0, %s90
    %s107 = sphi 0, %s91
  $region4: #{_lambda_.27} parent=0 // loop_header_branch
    %12 = sbr.rel (%p10) target = $region8
  $region5: #{_lambda_.27} parent=0 // loop_body
    %s14 = ssub.s32 %s9, 1
    %s15 = ssub.s32 %s9, 2
    %s16 = sadd.s32 %s9, 1
    %s17 = ssub.s32 %s9, %s16
    %p18 = scmp.eq.s32.totalorder %s17, 0
    %s20 = sadd.s32 %s19, 1
    %s21 = scalar_select %p18, %s19, %s20
    %p24 = pneg %p18
    %p25 = scmp.eq.s32.totalorder %s9, 1
    %p26 = por %p24, %p25
    %p27 = scmp.ne.s32.totalorder %s19, %s22
    %p28 = scmp.eq.s32.totalorder %s9, 0
    %p29 = por %p27, %p28
    %p30 = scmp.ne.s32.totalorder %s19, %s22
    %p31 = scmp.eq.s32.totalorder %s14, 1
    %p32 = por %p30, %p31
    %p33 = scmp.ne.s32.totalorder %s22, %s23
    %p34 = scmp.eq.s32.totalorder %s14, 0
    %p35 = por %p33, %p34
    %p36 = scmp.ne.s32.totalorder %s22, %s23
    %p37 = scmp.eq.s32.totalorder %s15, 1
    %p38 = por %p36, %p37
    %p40 = scmp.ne.s32.totalorder %s23, %s39
    %p41 = scmp.eq.s32.totalorder %s15, 0
    %p42 = por %p40, %p41
    %s44 = sadd.s32 %s43, 1
    %p47 = scmp.eq.s32.totalorder %s9, 1
    %p48 = scmp.ne.s32.totalorder %s43, %s45
    %p49 = scmp.eq.s32.totalorder %s9, 0
    %p50 = por %p48, %p49
    %p51 = scmp.ne.s32.totalorder %s43, %s45
    %p52 = scmp.eq.s32.totalorder %s14, 1
    %p53 = por %p51, %p52
    %p54 = scmp.ne.s32.totalorder %s45, %s46
    %p55 = scmp.eq.s32.totalorder %s14, 0
    %p56 = por %p54, %p55
    %p57 = scmp.ne.s32.totalorder %s45, %s46
    %p58 = scmp.eq.s32.totalorder %s15, 1
    %p59 = por %p57, %p58
    %p61 = scmp.ne.s32.totalorder %s46, %s60
    %p62 = scmp.eq.s32.totalorder %s15, 0
    %p63 = por %p61, %p62
    %s65 = sadd.s32 %s64, 1
    %p68 = scmp.eq.s32.totalorder %s9, 1
    %p69 = scmp.ne.s32.totalorder %s64, %s66
    %p70 = scmp.eq.s32.totalorder %s9, 0
    %p71 = por %p69, %p70
    %p72 = scmp.ne.s32.totalorder %s64, %s66
    %p73 = scmp.eq.s32.totalorder %s14, 1
    %p74 = por %p72, %p73
    %p75 = scmp.ne.s32.totalorder %s66, %s67
    %p76 = scmp.eq.s32.totalorder %s14, 0
    %p77 = por %p75, %p76
    %p78 = scmp.ne.s32.totalorder %s66, %s67
    %p79 = scmp.eq.s32.totalorder %s15, 1
    %p80 = por %p78, %p79
    %p82 = scmp.ne.s32.totalorder %s67, %s81
    %p83 = scmp.eq.s32.totalorder %s15, 0
    %p84 = por %p82, %p83
    %s85 = ssub.s32 %s9, %s16
    %p86 = scmp.eq.s32.totalorder %s85, 0
    %s88 = sadd.s32 %s87, 1
    %s89 = scalar_select %p86, %s87, %s88
    %p92 = pneg %p86
    %p93 = scmp.eq.s32.totalorder %s9, 1
    %p94 = por %p92, %p93
    %p95 = scmp.ne.s32.totalorder %s87, %s90
    %p96 = scmp.eq.s32.totalorder %s9, 0
    %p97 = por %p95, %p96
    %p98 = scmp.ne.s32.totalorder %s87, %s90
    %p99 = scmp.eq.s32.totalorder %s14, 1
    %p100 = por %p98, %p99
    %p101 = scmp.ne.s32.totalorder %s90, %s91
    %p102 = scmp.eq.s32.totalorder %s14, 0
    %p103 = por %p101, %p102
    %p104 = scmp.ne.s32.totalorder %s90, %s91
    %p105 = scmp.eq.s32.totalorder %s15, 1
    %p106 = por %p104, %p105
    %p108 = scmp.ne.s32.totalorder %s91, %s107
    %p109 = scmp.eq.s32.totalorder %s15, 0
    %p110 = por %p108, %p109
    %p111 = scmp.le.s32.totalorder 1, %s9
    %p112 = scmp.lt.s32.totalorder %s9, 3
    %p113 = pnand %p111, %p112
    %p114 = pneg %p113
    // Predicated region
    $region9: #{_lambda_.27} parent=5 // pred_check
      _
    $region10: #{_lambda_.27} parent=5 // pred_check_branch
      %116 = sbr.rel (%p113) target = $region12
    $region11: #{_lambda_.27} parent=5 // pred_region
      %s117 = ssub.s32 %s9, 1
      // Predicated region
      $region13: #{_lambda_.27} parent=11 // pred_check
        %p118 = pneg %p56
      $region14: #{_lambda_.27} parent=11 // pred_check_branch
        %120 = sbr.rel (%p118) target = $region16
      $region15: #{_lambda_.27} parent=11 // pred_region
        _
      $region16: #{_lambda_.27} parent=11 // pred_fallthru
        _
      // Predicated region
      $region17: #{_lambda_.27} parent=11 // pred_check
        %p121 = pneg %p77
      $region18: #{_lambda_.27} parent=11 // pred_check_branch
        %123 = sbr.rel (%p121) target = $region20
      $region19: #{_lambda_.27} parent=11 // pred_region
        _
      $region20: #{_lambda_.27} parent=11 // pred_fallthru
        _
    $region12: #{_lambda_.27} parent=5 // pred_fallthru
      _
    %p124 = scmp.lt.s32.totalorder %s9, 2
    // Predicated region
    $region21: #{_lambda_.27} parent=5 // pred_check
      %p125 = pneg %p124
    $region22: #{_lambda_.27} parent=5 // pred_check_branch
      %127 = sbr.rel (%p125) target = $region24
    $region23: #{_lambda_.27} parent=5 // pred_region
      // Predicated region
      $region25: #{_lambda_.27} parent=23 // pred_check
        %p128 = pneg %p29
      $region26: #{_lambda_.27} parent=23 // pred_check_branch
        %130 = sbr.rel (%p128) target = $region28
      $region27: #{_lambda_.27} parent=23 // pred_region
        %s131 = smul.u32 32, %s9
        %p132 = scmp.lt.s32.totalorder %s131, 63
        %s133 = scalar_select %p132, %s131, 63
        %s134 = smul.addr %s133, 8
        %s135 = scalar_lea.vmem %s0, %s134
        %s136 = smul.u32 32, %s9
      $region28: #{_lambda_.27} parent=23 // pred_fallthru
        _
    $region24: #{_lambda_.27} parent=5 // pred_fallthru
      _
    %p137 = scmp.le.s32.totalorder 1, %s9
    %p138 = scmp.lt.s32.totalorder %s9, 3
    %p139 = pnand %p137, %p138
    %p140 = pneg %p139
    // Predicated region
    $region29: #{_lambda_.27} parent=5 // pred_check
      _
    $region30: #{_lambda_.27} parent=5 // pred_check_branch
      %142 = sbr.rel (%p139) target = $region32
    $region31: #{_lambda_.27} parent=5 // pred_region
      %s143 = ssub.s32 %s9, 1
      %s144 = smul.u32 32, %s14
      %p145 = scmp.lt.s32.totalorder %s144, 63
      %s146 = scalar_select %p145, %s144, 63
      %s147 = smul.addr %s146, 8
      %s148 = scalar_lea.vmem %s0, %s147
      %p149 = pneg %p35
      %p150 = pneg %p32
      %p151 = pneg %p56
      %p152 = pneg %p53
      %p153 = pneg %p77
      %p154 = pneg %p74
      %p155 = pneg %p103
      %p156 = pneg %p100
      %s157 = smul.u32 32, %s14
      %p158 = scmp.lt.s32.totalorder %s157, 63
      %s159 = scalar_select %p158, %s157, 63
      %s160 = smul.addr %s159, 8
      %s161 = scalar_lea.vmem %s3, %s160
      %s162 = smul.u32 32, %s14
      %p163 = scmp.lt.s32.totalorder %s162, 63
      %s164 = scalar_select %p163, %s162, 63
      %s165 = smul.addr %s164, 8
      %s166 = scalar_lea.vmem %s0, %s165
      %s167 = smul.u32 32, %s14
      %s168 = smul.u32 32, %s14
      %p169 = scmp.lt.s32.totalorder %s168, 63
      %s170 = scalar_select %p169, %s168, 63
      %s171 = smul.addr %s170, 8
      %s172 = scalar_lea.vmem %s3, %s171
      %s173 = smul.u32 32, %s14
      %v174 = vld [vmem:[%s166] sm:$0xff]
      %v175 = vld [vmem:[%s166 + $0x8] sm:$0xff]
      %v176 = vld [vmem:[%s166 + $0x10] sm:$0xff]
      %v177 = vld [vmem:[%s166 + $0x18] sm:$0xff]
      %v178 = vld [vmem:[%s166 + $0x20] sm:$0xff]
      %v179 = vld [vmem:[%s166 + $0x28] sm:$0xff]
      %v180 = vld [vmem:[%s166 + $0x30] sm:$0xff]
      %v181 = vld [vmem:[%s166 + $0x38] sm:$0xff]
      %v182 = vld [vmem:[%s166 + $0x40] sm:$0xff]
      %v183 = vld [vmem:[%s166 + $0x48] sm:$0xff]
      %v184 = vld [vmem:[%s166 + $0x50] sm:$0xff]
      %v185 = vld [vmem:[%s166 + $0x58] sm:$0xff]
      %v186 = vld [vmem:[%s166 + $0x60] sm:$0xff]
      %v187 = vld [vmem:[%s166 + $0x68] sm:$0xff]
      %v188 = vld [vmem:[%s166 + $0x70] sm:$0xff]
      %v189 = vld [vmem:[%s166 + $0x78] sm:$0xff]
      %v190 = vld [vmem:[%s166 + $0x80] sm:$0xff]
      %v191 = vld [vmem:[%s166 + $0x88] sm:$0xff]
      %v192 = vld [vmem:[%s166 + $0x90] sm:$0xff]
      %v193 = vld [vmem:[%s166 + $0x98] sm:$0xff]
      %v194 = vld [vmem:[%s166 + $0xa0] sm:$0xff]
      %v195 = vld [vmem:[%s166 + $0xa8] sm:$0xff]
      %v196 = vld [vmem:[%s166 + $0xb0] sm:$0xff]
      %v197 = vld [vmem:[%s166 + $0xb8] sm:$0xff]
      %v198 = vld [vmem:[%s166 + $0xc0] sm:$0xff]
      %v199 = vld [vmem:[%s166 + $0xc8] sm:$0xff]
      %v200 = vld [vmem:[%s166 + $0xd0] sm:$0xff]
      %v201 = vld [vmem:[%s166 + $0xd8] sm:$0xff]
      %v202 = vld [vmem:[%s166 + $0xe0] sm:$0xff]
      %v203 = vld [vmem:[%s166 + $0xe8] sm:$0xff]
      %v204 = vld [vmem:[%s166 + $0xf0] sm:$0xff]
      %v205 = vld [vmem:[%s166 + $0xf8] sm:$0xff]
      %v206 = vld [vmem:[%s1] sm:$0x1]
      %v208 = vlaneseq
      %v209 = vshrl.u32 %v208, 7
      %v210 = vsub.s32 0, %v209
      %v211 = vrot.slane %v206, %v210
      %v213 = vmul.f32 %v174, %v211
      %v214 = vmul.f32 %v175, %v211
      %v215 = vmul.f32 %v176, %v211
      %v216 = vmul.f32 %v177, %v211
      %v217 = vmul.f32 %v178, %v211
      %v218 = vmul.f32 %v179, %v211
      %v219 = vmul.f32 %v180, %v211
      %v220 = vmul.f32 %v181, %v211
      %v221 = vmul.f32 %v182, %v211
      %v222 = vmul.f32 %v183, %v211
      %v223 = vmul.f32 %v184, %v211
      %v224 = vmul.f32 %v185, %v211
      %v225 = vmul.f32 %v186, %v211
      %v226 = vmul.f32 %v187, %v211
      %v227 = vmul.f32 %v188, %v211
      %v228 = vmul.f32 %v189, %v211
      %v229 = vmul.f32 %v190, %v211
      %v230 = vmul.f32 %v191, %v211
      %v231 = vmul.f32 %v192, %v211
      %v232 = vmul.f32 %v193, %v211
      %v233 = vmul.f32 %v194, %v211
      %v234 = vmul.f32 %v195, %v211
      %v235 = vmul.f32 %v196, %v211
      %v236 = vmul.f32 %v197, %v211
      %v237 = vmul.f32 %v198, %v211
      %v238 = vmul.f32 %v199, %v211
      %v239 = vmul.f32 %v200, %v211
      %v240 = vmul.f32 %v201, %v211
      %v241 = vmul.f32 %v202, %v211
      %v242 = vmul.f32 %v203, %v211
      %v243 = vmul.f32 %v204, %v211
      %v244 = vmul.f32 %v205, %v211
      %v245 = vld [vmem:[%s2] sm:$0x1]
      %v247 = vlaneseq
      %v248 = vshrl.u32 %v247, 7
      %v249 = vsub.s32 0, %v248
      %v250 = vrot.slane %v245, %v249
      %v252 = vadd.f32 %v213, %v250
      %v253 = vadd.f32 %v214, %v250
      %v254 = vadd.f32 %v215, %v250
      %v255 = vadd.f32 %v216, %v250
      %v256 = vadd.f32 %v217, %v250
      %v257 = vadd.f32 %v218, %v250
      %v258 = vadd.f32 %v219, %v250
      %v259 = vadd.f32 %v220, %v250
      %v260 = vadd.f32 %v221, %v250
      %v261 = vadd.f32 %v222, %v250
      %v262 = vadd.f32 %v223, %v250
      %v263 = vadd.f32 %v224, %v250
      %v264 = vadd.f32 %v225, %v250
      %v265 = vadd.f32 %v226, %v250
      %v266 = vadd.f32 %v227, %v250
      %v267 = vadd.f32 %v228, %v250
      %v268 = vadd.f32 %v229, %v250
      %v269 = vadd.f32 %v230, %v250
      %v270 = vadd.f32 %v231, %v250
      %v271 = vadd.f32 %v232, %v250
      %v272 = vadd.f32 %v233, %v250
      %v273 = vadd.f32 %v234, %v250
      %v274 = vadd.f32 %v235, %v250
      %v275 = vadd.f32 %v236, %v250
      %v276 = vadd.f32 %v237, %v250
      %v277 = vadd.f32 %v238, %v250
      %v278 = vadd.f32 %v239, %v250
      %v279 = vadd.f32 %v240, %v250
      %v280 = vadd.f32 %v241, %v250
      %v281 = vadd.f32 %v242, %v250
      %v282 = vadd.f32 %v243, %v250
      %v283 = vadd.f32 %v244, %v250
      %v284 = vmax.f32 %v252, 0.0
      %v285 = vmax.f32 %v253, 0.0
      %v286 = vmax.f32 %v254, 0.0
      %v287 = vmax.f32 %v255, 0.0
      %v288 = vmax.f32 %v256, 0.0
      %v289 = vmax.f32 %v257, 0.0
      %v290 = vmax.f32 %v258, 0.0
      %v291 = vmax.f32 %v259, 0.0
      %v292 = vmax.f32 %v260, 0.0
      %v293 = vmax.f32 %v261, 0.0
      %v294 = vmax.f32 %v262, 0.0
      %v295 = vmax.f32 %v263, 0.0
      %v296 = vmax.f32 %v264, 0.0
      %v297 = vmax.f32 %v265, 0.0
      %v298 = vmax.f32 %v266, 0.0
      %v299 = vmax.f32 %v267, 0.0
      %v300 = vmax.f32 %v268, 0.0
      %v301 = vmax.f32 %v269, 0.0
      %v302 = vmax.f32 %v270, 0.0
      %v303 = vmax.f32 %v271, 0.0
      %v304 = vmax.f32 %v272, 0.0
      %v305 = vmax.f32 %v273, 0.0
      %v306 = vmax.f32 %v274, 0.0
      %v307 = vmax.f32 %v275, 0.0
      %v308 = vmax.f32 %v276, 0.0
      %v309 = vmax.f32 %v277, 0.0
      %v310 = vmax.f32 %v278, 0.0
      %v311 = vmax.f32 %v279, 0.0
      %v312 = vmax.f32 %v280, 0.0
      %v313 = vmax.f32 %v281, 0.0
      %v314 = vmax.f32 %v282, 0.0
      %v315 = vmax.f32 %v283, 0.0
      %vm316 = vcmask 261120
      %317 = vst.msk [vmem:[%s172] sm:$0xff] %vm316, %v284
      %318 = vst.msk [vmem:[%s172 + $0x8] sm:$0xff] %vm316, %v285
      %319 = vst.msk [vmem:[%s172 + $0x10] sm:$0xff] %vm316, %v286
      %320 = vst.msk [vmem:[%s172 + $0x18] sm:$0xff] %vm316, %v287
      %321 = vst.msk [vmem:[%s172 + $0x20] sm:$0xff] %vm316, %v288
      %322 = vst.msk [vmem:[%s172 + $0x28] sm:$0xff] %vm316, %v289
      %323 = vst.msk [vmem:[%s172 + $0x30] sm:$0xff] %vm316, %v290
      %324 = vst.msk [vmem:[%s172 + $0x38] sm:$0xff] %vm316, %v291
      %325 = vst.msk [vmem:[%s172 + $0x40] sm:$0xff] %vm316, %v292
      %326 = vst.msk [vmem:[%s172 + $0x48] sm:$0xff] %vm316, %v293
      %327 = vst.msk [vmem:[%s172 + $0x50] sm:$0xff] %vm316, %v294
      %328 = vst.msk [vmem:[%s172 + $0x58] sm:$0xff] %vm316, %v295
      %329 = vst.msk [vmem:[%s172 + $0x60] sm:$0xff] %vm316, %v296
      %330 = vst.msk [vmem:[%s172 + $0x68] sm:$0xff] %vm316, %v297
      %331 = vst.msk [vmem:[%s172 + $0x70] sm:$0xff] %vm316, %v298
      %332 = vst.msk [vmem:[%s172 + $0x78] sm:$0xff] %vm316, %v299
      %333 = vst.msk [vmem:[%s172 + $0x80] sm:$0xff] %vm316, %v300
      %334 = vst.msk [vmem:[%s172 + $0x88] sm:$0xff] %vm316, %v301
      %335 = vst.msk [vmem:[%s172 + $0x90] sm:$0xff] %vm316, %v302
      %336 = vst.msk [vmem:[%s172 + $0x98] sm:$0xff] %vm316, %v303
      %337 = vst.msk [vmem:[%s172 + $0xa0] sm:$0xff] %vm316, %v304
      %338 = vst.msk [vmem:[%s172 + $0xa8] sm:$0xff] %vm316, %v305
      %339 = vst.msk [vmem:[%s172 + $0xb0] sm:$0xff] %vm316, %v306
      %340 = vst.msk [vmem:[%s172 + $0xb8] sm:$0xff] %vm316, %v307
      %341 = vst.msk [vmem:[%s172 + $0xc0] sm:$0xff] %vm316, %v308
      %342 = vst.msk [vmem:[%s172 + $0xc8] sm:$0xff] %vm316, %v309
      %343 = vst.msk [vmem:[%s172 + $0xd0] sm:$0xff] %vm316, %v310
      %344 = vst.msk [vmem:[%s172 + $0xd8] sm:$0xff] %vm316, %v311
      %345 = vst.msk [vmem:[%s172 + $0xe0] sm:$0xff] %vm316, %v312
      %346 = vst.msk [vmem:[%s172 + $0xe8] sm:$0xff] %vm316, %v313
      %347 = vst.msk [vmem:[%s172 + $0xf0] sm:$0xff] %vm316, %v314
      %348 = vst.msk [vmem:[%s172 + $0xf8] sm:$0xff] %vm316, %v315
      %s349 = smul.u32 32, %s14
      %p350 = scmp.lt.s32.totalorder %s349, 63
      %s351 = scalar_select %p350, %s349, 63
      %s352 = smul.addr %s351, 8
      %s353 = scalar_lea.vmem %s3, %s352
      // Predicated region
      $region33: #{_lambda_.27} parent=31 // pred_check
        %p354 = pneg %p100
      $region34: #{_lambda_.27} parent=31 // pred_check_branch
        %356 = sbr.rel (%p354) target = $region36
      $region35: #{_lambda_.27} parent=31 // pred_region
        %s357 = smul.u32 32, %s14
      $region36: #{_lambda_.27} parent=31 // pred_fallthru
        _
    $region32: #{_lambda_.27} parent=5 // pred_fallthru
      _
    %p358 = scmp.le.s32.totalorder 2, %s9
    // Predicated region
    $region37: #{_lambda_.27} parent=5 // pred_check
      %p359 = pneg %p358
    $region38: #{_lambda_.27} parent=5 // pred_check_branch
      %361 = sbr.rel (%p359) target = $region40
    $region39: #{_lambda_.27} parent=5 // pred_region
      %s362 = ssub.s32 %s9, 2
      // Predicated region
      $region41: #{_lambda_.27} parent=39 // pred_check
        %p363 = pneg %p106
      $region42: #{_lambda_.27} parent=39 // pred_check_branch
        %365 = sbr.rel (%p363) target = $region44
      $region43: #{_lambda_.27} parent=39 // pred_region
        %s366 = smul.u32 32, %s15
        %p367 = scmp.lt.s32.totalorder %s366, 63
        %s368 = scalar_select %p367, %s366, 63
        %s369 = smul.addr %s368, 8
        %s370 = scalar_lea.vmem %s3, %s369
      $region44: #{_lambda_.27} parent=39 // pred_fallthru
        _
    $region40: #{_lambda_.27} parent=5 // pred_fallthru
      _
  $region6: #{_lambda_.27} parent=0 // loop_footer
    %s13 = sadd.s32 1, %s9
  $region7: #{_lambda_.27} parent=0 // loop_footer_branch
    %8 = sbr.rel target = $region3
  $region8: #{_lambda_.27} parent=0 // loop_exit
    _

// kernel: _lambda_.26
$region0: #{_lambda_.26}
  #allocation0 [shape = 'u32[]', space=smem, size = 0x4, offset = 0x4, fixed_abs, tag = 'smem constant byte address 0x4 - core index']
  #allocation1 [shape = 'u32[144,128]{1,0:T(1,128)}', space=vmem, size = 0x12000, scoped, tag = 'internal scratch']
  %s0 = inlined_call_operand.vmem [shape: bf16[512,27], index: 0, kind: input, shape index: {}]
  %s1 = inlined_call_operand.vmem [shape: bf16[27,32], index: 1, kind: input, shape index: {}]
  %s2 = inlined_call_operand.vmem [shape: f32[512,32], index: 2, kind: output, shape index: {0}]
  %s3 = inlined_call_operand.vmem [shape: f32[2,2,32], index: 3, kind: output, shape index: {1}]
  %4 = xla_tuple %s2, %s3
  %s5 = sld [smem:[#allocation0]]
  $region49: #{_lambda_.26} parent=0
    _
  %s7 = ssub.s32 1, %s5
  %s8 = scalar_select 0, %s7, %s5
  loop: start=0, step=1, limit=4
  $region2: #{_lambda_.26} parent=0 // loop_pre_header
    _
  $region3: #{_lambda_.26} parent=0 // loop_header
    %s10 = sphi 0, %s14
    %p11 = scmp.ge.s32.totalorder %s10, 4
    %s20 = sphi 0, %s22
    %s23 = sphi 0, %s20
    %s24 = sphi 0, %s23
    %s40 = sphi 0, %s24
    %s44 = sphi 0, %s44
    %s46 = sphi 0, %s44
    %s47 = sphi 0, %s46
    %s61 = sphi 0, %s47
    %s67 = sphi 0, %s69
    %s70 = sphi 0, %s67
    %s71 = sphi 0, %s70
    %s87 = sphi 0, %s71
    %s93 = sphi 0, %s95
    %s96 = sphi 0, %s93
    %s97 = sphi 0, %s96
    %s113 = sphi 0, %s97
  $region4: #{_lambda_.26} parent=0 // loop_header_branch
    %13 = sbr.rel (%p11) target = $region8
  $region5: #{_lambda_.26} parent=0 // loop_body
    %s15 = ssub.s32 %s10, 1
    %s16 = ssub.s32 %s10, 2
    %s17 = sadd.s32 %s10, 1
    %s18 = ssub.s32 %s10, %s17
    %p19 = scmp.eq.s32.totalorder %s18, 0
    %s21 = sadd.s32 %s20, 1
    %s22 = scalar_select %p19, %s20, %s21
    %p25 = pneg %p19
    %p26 = scmp.eq.s32.totalorder %s10, 1
    %p27 = por %p25, %p26
    %p28 = scmp.ne.s32.totalorder %s20, %s23
    %p29 = scmp.eq.s32.totalorder %s10, 0
    %p30 = por %p28, %p29
    %p31 = scmp.ne.s32.totalorder %s20, %s23
    %p32 = scmp.eq.s32.totalorder %s15, 1
    %p33 = por %p31, %p32
    %p34 = scmp.ne.s32.totalorder %s23, %s24
    %p35 = scmp.eq.s32.totalorder %s15, 0
    %p36 = por %p34, %p35
    %p37 = scmp.ne.s32.totalorder %s23, %s24
    %p38 = scmp.eq.s32.totalorder %s16, 1
    %p39 = por %p37, %p38
    %p41 = scmp.ne.s32.totalorder %s24, %s40
    %p42 = scmp.eq.s32.totalorder %s16, 0
    %p43 = por %p41, %p42
    %s45 = sadd.s32 %s44, 1
    %p48 = scmp.eq.s32.totalorder %s10, 1
    %p49 = scmp.ne.s32.totalorder %s44, %s46
    %p50 = scmp.eq.s32.totalorder %s10, 0
    %p51 = por %p49, %p50
    %p52 = scmp.ne.s32.totalorder %s44, %s46
    %p53 = scmp.eq.s32.totalorder %s15, 1
    %p54 = por %p52, %p53
    %p55 = scmp.ne.s32.totalorder %s46, %s47
    %p56 = scmp.eq.s32.totalorder %s15, 0
    %p57 = por %p55, %p56
    %p58 = scmp.ne.s32.totalorder %s46, %s47
    %p59 = scmp.eq.s32.totalorder %s16, 1
    %p60 = por %p58, %p59
    %p62 = scmp.ne.s32.totalorder %s47, %s61
    %p63 = scmp.eq.s32.totalorder %s16, 0
    %p64 = por %p62, %p63
    %s65 = ssub.s32 %s10, %s17
    %p66 = scmp.eq.s32.totalorder %s65, 0
    %s68 = sadd.s32 %s67, 1
    %s69 = scalar_select %p66, %s67, %s68
    %p72 = pneg %p66
    %p73 = scmp.eq.s32.totalorder %s10, 1
    %p74 = por %p72, %p73
    %p75 = scmp.ne.s32.totalorder %s67, %s70
    %p76 = scmp.eq.s32.totalorder %s10, 0
    %p77 = por %p75, %p76
    %p78 = scmp.ne.s32.totalorder %s67, %s70
    %p79 = scmp.eq.s32.totalorder %s15, 1
    %p80 = por %p78, %p79
    %p81 = scmp.ne.s32.totalorder %s70, %s71
    %p82 = scmp.eq.s32.totalorder %s15, 0
    %p83 = por %p81, %p82
    %p84 = scmp.ne.s32.totalorder %s70, %s71
    %p85 = scmp.eq.s32.totalorder %s16, 1
    %p86 = por %p84, %p85
    %p88 = scmp.ne.s32.totalorder %s71, %s87
    %p89 = scmp.eq.s32.totalorder %s16, 0
    %p90 = por %p88, %p89
    %s91 = ssub.s32 %s10, %s17
    %p92 = scmp.eq.s32.totalorder %s91, 0
    %s94 = sadd.s32 %s93, 1
    %s95 = scalar_select %p92, %s93, %s94
    %p98 = pneg %p92
    %p99 = scmp.eq.s32.totalorder %s10, 1
    %p100 = por %p98, %p99
    %p101 = scmp.ne.s32.totalorder %s93, %s96
    %p102 = scmp.eq.s32.totalorder %s10, 0
    %p103 = por %p101, %p102
    %p104 = scmp.ne.s32.totalorder %s93, %s96
    %p105 = scmp.eq.s32.totalorder %s15, 1
    %p106 = por %p104, %p105
    %p107 = scmp.ne.s32.totalorder %s96, %s97
    %p108 = scmp.eq.s32.totalorder %s15, 0
    %p109 = por %p107, %p108
    %p110 = scmp.ne.s32.totalorder %s96, %s97
    %p111 = scmp.eq.s32.totalorder %s16, 1
    %p112 = por %p110, %p111
    %p114 = scmp.ne.s32.totalorder %s97, %s113
    %p115 = scmp.eq.s32.totalorder %s16, 0
    %p116 = por %p114, %p115
    %p117 = scmp.le.s32.totalorder 1, %s10
    %p118 = scmp.lt.s32.totalorder %s10, 3
    %p119 = pnand %p117, %p118
    %p120 = pneg %p119
    // Predicated region
    $region9: #{_lambda_.26} parent=5 // pred_check
      _
    $region10: #{_lambda_.26} parent=5 // pred_check_branch
      %122 = sbr.rel (%p119) target = $region12
    $region11: #{_lambda_.26} parent=5 // pred_region
      %s123 = ssub.s32 %s10, 1
      // Predicated region
      $region13: #{_lambda_.26} parent=11 // pred_check
        %p124 = pneg %p57
      $region14: #{_lambda_.26} parent=11 // pred_check_branch
        %126 = sbr.rel (%p124) target = $region16
      $region15: #{_lambda_.26} parent=11 // pred_region
        _
      $region16: #{_lambda_.26} parent=11 // pred_fallthru
        _
    $region12: #{_lambda_.26} parent=5 // pred_fallthru
      _
    %p127 = scmp.lt.s32.totalorder %s10, 2
    // Predicated region
    $region17: #{_lambda_.26} parent=5 // pred_check
      %p128 = pneg %p127
    $region18: #{_lambda_.26} parent=5 // pred_check_branch
      %130 = sbr.rel (%p128) target = $region20
    $region19: #{_lambda_.26} parent=5 // pred_region
      // Predicated region
      $region21: #{_lambda_.26} parent=19 // pred_check
        %p131 = pneg %p30
      $region22: #{_lambda_.26} parent=19 // pred_check_branch
        %133 = sbr.rel (%p131) target = $region24
      $region23: #{_lambda_.26} parent=19 // pred_region
        %s134 = smul.u32 32, %s10
        %p135 = scmp.lt.s32.totalorder %s134, 63
        %s136 = scalar_select %p135, %s134, 63
        %s137 = smul.addr %s136, 4
        %s138 = scalar_lea.vmem %s0, %s137
        %s139 = smul.u32 32, %s10
      $region24: #{_lambda_.26} parent=19 // pred_fallthru
        _
    $region20: #{_lambda_.26} parent=5 // pred_fallthru
      _
    %p140 = scmp.le.s32.totalorder 1, %s10
    %p141 = scmp.lt.s32.totalorder %s10, 3
    %p142 = pnand %p140, %p141
    %p143 = pneg %p142
    // Predicated region
    $region25: #{_lambda_.26} parent=5 // pred_check
      _
    $region26: #{_lambda_.26} parent=5 // pred_check_branch
      %145 = sbr.rel (%p142) target = $region28
    $region27: #{_lambda_.26} parent=5 // pred_region
      %s146 = ssub.s32 %s10, 1
      %s147 = smul.u32 32, %s15
      %p148 = scmp.lt.s32.totalorder %s147, 63
      %s149 = scalar_select %p148, %s147, 63
      %s150 = smul.addr %s149, 4
      %s151 = scalar_lea.vmem %s0, %s150
      %p152 = pneg %p36
      %p153 = pneg %p33
      %p154 = pneg %p57
      %p155 = pneg %p54
      %p156 = pneg %p83
      %p157 = pneg %p80
      %s158 = smul.u32 32, %s15
      %p159 = scmp.lt.s32.totalorder %s158, 63
      %s160 = scalar_select %p159, %s158, 63
      %s161 = smul.addr %s160, 8
      %s162 = scalar_lea.vmem %s2, %s161
      %p163 = pneg %p109
      %p164 = pneg %p106
      %p165 = scmp.lt.s32.totalorder %s15, 1
      %s166 = scalar_select %p165, %s15, 1
      %s167 = smul.addr %s166, 2
      %s168 = scalar_lea.vmem %s3, %s167
      %s169 = smul.u32 32, %s15
      %p170 = scmp.lt.s32.totalorder %s169, 63
      %s171 = scalar_select %p170, %s169, 63
      %s172 = smul.addr %s171, 4
      %s173 = scalar_lea.vmem %s0, %s172
      %s174 = smul.u32 32, %s15
      %s175 = smul.u32 32, %s15
      %p176 = scmp.lt.s32.totalorder %s175, 63
      %s177 = scalar_select %p176, %s175, 63
      %s178 = smul.addr %s177, 8
      %s179 = scalar_lea.vmem %s2, %s178
      %s180 = smul.u32 32, %s15
      %p181 = scmp.lt.s32.totalorder %s15, 1
      %s182 = scalar_select %p181, %s15, 1
      %s183 = smul.addr %s182, 2
      %s184 = scalar_lea.vmem %s3, %s183
      %v186 = vld [vmem:[%s173] sm:$0xf]
      %v187 = vld [vmem:[%s173 + $0x4] sm:$0xf]
      %v188 = vld [vmem:[%s173 + $0x8] sm:$0xf]
      %v189 = vld [vmem:[%s173 + $0xc] sm:$0xf]
      %v190 = vld [vmem:[%s173 + $0x10] sm:$0xf]
      %v191 = vld [vmem:[%s173 + $0x14] sm:$0xf]
      %v192 = vld [vmem:[%s173 + $0x18] sm:$0xf]
      %v193 = vld [vmem:[%s173 + $0x1c] sm:$0xf]
      %v194 = vld [vmem:[%s173 + $0x20] sm:$0xf]
      %v195 = vld [vmem:[%s173 + $0x24] sm:$0xf]
      %v196 = vld [vmem:[%s173 + $0x28] sm:$0xf]
      %v197 = vld [vmem:[%s173 + $0x2c] sm:$0xf]
      %v198 = vld [vmem:[%s173 + $0x30] sm:$0xf]
      %v199 = vld [vmem:[%s173 + $0x34] sm:$0xf]
      %v200 = vld [vmem:[%s173 + $0x38] sm:$0xf]
      %v201 = vld [vmem:[%s173 + $0x3c] sm:$0xf]
      %v202 = vld [vmem:[%s173 + $0x40] sm:$0xf]
      %v203 = vld [vmem:[%s173 + $0x44] sm:$0xf]
      %v204 = vld [vmem:[%s173 + $0x48] sm:$0xf]
      %v205 = vld [vmem:[%s173 + $0x4c] sm:$0xf]
      %v206 = vld [vmem:[%s173 + $0x50] sm:$0xf]
      %v207 = vld [vmem:[%s173 + $0x54] sm:$0xf]
      %v208 = vld [vmem:[%s173 + $0x58] sm:$0xf]
      %v209 = vld [vmem:[%s173 + $0x5c] sm:$0xf]
      %v210 = vld [vmem:[%s173 + $0x60] sm:$0xf]
      %v211 = vld [vmem:[%s173 + $0x64] sm:$0xf]
      %v212 = vld [vmem:[%s173 + $0x68] sm:$0xf]
      %v213 = vld [vmem:[%s173 + $0x6c] sm:$0xf]
      %v214 = vld [vmem:[%s173 + $0x70] sm:$0xf]
      %v215 = vld [vmem:[%s173 + $0x74] sm:$0xf]
      %v216 = vld [vmem:[%s173 + $0x78] sm:$0xf]
      %v217 = vld [vmem:[%s173 + $0x7c] sm:$0xf]
      %v218 = vld [vmem:[%s1] sm:$0xf]
      %v219 = vld [vmem:[%s1 + $0x4] sm:$0xf]
      %v220 = vld [vmem:[%s1 + $0x8] sm:$0xf]
      %v221 = vld [vmem:[%s1 + $0xc] sm:$0x3]
      %v254 = vunpack.c.l.b16 %v186
      %v255 = vunpack.c.l.b16 %v187
      %v256 = vunpack.c.l.b16 %v188
      %v257 = vunpack.c.l.b16 %v189
      %v258 = vunpack.c.l.b16 %v190
      %v259 = vunpack.c.l.b16 %v191
      %v260 = vunpack.c.l.b16 %v192
      %v261 = vunpack.c.l.b16 %v193
      %v262 = vunpack.c.l.b16 %v194
      %v263 = vunpack.c.l.b16 %v195
      %v264 = vunpack.c.l.b16 %v196
      %v265 = vunpack.c.l.b16 %v197
      %v266 = vunpack.c.l.b16 %v198
      %v267 = vunpack.c.l.b16 %v199
      %v268 = vunpack.c.l.b16 %v200
      %v269 = vunpack.c.l.b16 %v201
      %v270 = vunpack.c.l.b16 %v202
      %v271 = vunpack.c.l.b16 %v203
      %v272 = vunpack.c.l.b16 %v204
      %v273 = vunpack.c.l.b16 %v205
      %v274 = vunpack.c.l.b16 %v206
      %v275 = vunpack.c.l.b16 %v207
      %v276 = vunpack.c.l.b16 %v208
      %v277 = vunpack.c.l.b16 %v209
      %v278 = vunpack.c.l.b16 %v210
      %v279 = vunpack.c.l.b16 %v211
      %v280 = vunpack.c.l.b16 %v212
      %v281 = vunpack.c.l.b16 %v213
      %v282 = vunpack.c.l.b16 %v214
      %v283 = vunpack.c.l.b16 %v215
      %v284 = vunpack.c.l.b16 %v216
      %v285 = vunpack.c.l.b16 %v217
      %v286 = vpack.c.b16 %v255, %v254
      %v287 = vpack.c.b16 %v257, %v256
      %v288 = vpack.c.b16 %v259, %v258
      %v289 = vpack.c.b16 %v261, %v260
      %v290 = vpack.c.b16 %v263, %v262
      %v291 = vpack.c.b16 %v265, %v264
      %v292 = vpack.c.b16 %v267, %v266
      %v293 = vpack.c.b16 %v269, %v268
      %v294 = vpack.c.b16 %v271, %v270
      %v295 = vpack.c.b16 %v273, %v272
      %v296 = vpack.c.b16 %v275, %v274
      %v297 = vpack.c.b16 %v277, %v276
      %v298 = vpack.c.b16 %v279, %v278
      %v299 = vpack.c.b16 %v281, %v280
      %v300 = vpack.c.b16 %v283, %v282
      %v301 = vpack.c.b16 %v285, %v284
      %v306 = vunpack.c.l.b16 %v218
      %v307 = vunpack.c.l.b16 %v219
      %v308 = vunpack.c.l.b16 %v220
      %v309 = vunpack.c.l.b16 %v221
      %v310 = vpack.c.b16 %v307, %v306
      %v311 = vpack.c.b16 %v309, %v308
      %vm313 = vcmask 220160
      %v315 = vsel %vm313, %v286, 0
      %v318 = vsel %vm313, %v287, 0
      %v321 = vsel %vm313, %v288, 0
      %v324 = vsel %vm313, %v289, 0
      %v327 = vsel %vm313, %v290, 0
      %v330 = vsel %vm313, %v291, 0
      %v333 = vsel %vm313, %v292, 0
      %v336 = vsel %vm313, %v293, 0
      %v339 = vsel %vm313, %v294, 0
      %v342 = vsel %vm313, %v295, 0
      %v345 = vsel %vm313, %v296, 0
      %v348 = vsel %vm313, %v297, 0
      %v351 = vsel %vm313, %v298, 0
      %v354 = vsel %vm313, %v299, 0
      %v357 = vsel %vm313, %v300, 0
      %v360 = vsel %vm313, %v301, 0
      %vm362 = vcmask 1044480
      %vm363 = vcmask 1045504
      %v364 = vsel %vm362, 4294967295, 65535
      %v365 = vsel %vm363, %v364, 0
      %v367 = vand.u32 %v311, %v365
      %369 = vmatprep.subr.bf16.mxu0 0
      %370 = vmatpush1.bf16.msra.mxu0 %v310
      %371 = vmatprep.subr.bf16.mxu0 0
      %372 = vmatpush1.bf16.msra.mxu0 %v367
      %373 = vmatprep.subr.bf16.mxu0 0
      %374 = vmatpush1.bf16.msra.mxu0 0
      %375 = vmatprep.subr.bf16.mxu0 0
      %376 = vmatpush1.bf16.msra.mxu0 0
      %377 = vmatprep.subr.bf16.mxu0 0
      %378 = vmatpush1.bf16.msra.mxu0 0
      %379 = vmatprep.subr.bf16.mxu0 0
      %380 = vmatpush1.bf16.msra.mxu0 0
      %381 = vmatprep.subr.bf16.mxu0 0
      %382 = vmatpush1.bf16.msra.mxu0 0
      %383 = vmatprep.subr.bf16.mxu0 0
      %384 = vmatpush1.bf16.msra.mxu0 0
      %385 = vmatprep.subr.bf16.mxu0 0
      %386 = vmatpush1.bf16.msra.mxu0 0
      %387 = vmatprep.subr.bf16.mxu0 0
      %388 = vmatpush1.bf16.msra.mxu0 0
      %389 = vmatprep.subr.bf16.mxu0 0
      %390 = vmatpush1.bf16.msra.mxu0 0
      %391 = vmatprep.subr.bf16.mxu0 0
      %392 = vmatpush1.bf16.msra.mxu0 0
      %393 = vmatprep.subr.bf16.mxu0 0
      %394 = vmatpush1.bf16.msra.mxu0 0
      %395 = vmatprep.subr.bf16.mxu0 0
      %396 = vmatpush1.bf16.msra.mxu0 0
      %397 = vmatprep.subr.bf16.mxu0 0
      %398 = vmatpush1.bf16.msra.mxu0 0
      %399 = vmatprep.subr.bf16.mxu0 0
      %400 = vmatpush1.bf16.msra.mxu0 0
      %401 = vmatprep.mubr.bf16.mxu0 0
      %402 = vmatmul.mubr.bf16.gmra.mrb[0].mxu0 %v315
      %v403 = vpop.f32.mrb[0].mxu0
      %v404 = vadd.f32 0.0, %v403
      %v405 = vpop.f32.mrb[0].mxu0
      %v406 = vpop.f32.mrb[0].mxu0
      %v407 = vadd.f32 0.0, %v406
      %v408 = vpop.f32.mrb[0].mxu0
      %409 = vmatprep.mubr.bf16.mxu0 0
      %410 = vmatmul.mubr.bf16.gmra.mrb[0].mxu0 %v318
      %v411 = vpop.f32.mrb[0].mxu0
      %v412 = vadd.f32 0.0, %v411
      %v413 = vpop.f32.mrb[0].mxu0
      %v414 = vpop.f32.mrb[0].mxu0
      %v415 = vadd.f32 0.0, %v414
      %v416 = vpop.f32.mrb[0].mxu0
      %417 = vmatprep.mubr.bf16.mxu0 0
      %418 = vmatmul.mubr.bf16.gmra.mrb[0].mxu0 %v321
      %v419 = vpop.f32.mrb[0].mxu0
      %v420 = vadd.f32 0.0, %v419
      %v421 = vpop.f32.mrb[0].mxu0
      %v422 = vpop.f32.mrb[0].mxu0
      %v423 = vadd.f32 0.0, %v422
      %v424 = vpop.f32.mrb[0].mxu0
      %425 = vmatprep.mubr.bf16.mxu0 0
      %426 = vmatmul.mubr.bf16.gmra.mrb[0].mxu0 %v324
      %v427 = vpop.f32.mrb[0].mxu0
      %v428 = vadd.f32 0.0, %v427
      %v429 = vpop.f32.mrb[0].mxu0
      %v430 = vpop.f32.mrb[0].mxu0
      %v431 = vadd.f32 0.0, %v430
      %v432 = vpop.f32.mrb[0].mxu0
      %433 = vmatprep.mubr.bf16.mxu0 0
      %434 = vmatmul.mubr.bf16.gmra.mrb[0].mxu0 %v327
      %v435 = vpop.f32.mrb[0].mxu0
      %v436 = vadd.f32 0.0, %v435
      %v437 = vpop.f32.mrb[0].mxu0
      %v438 = vpop.f32.mrb[0].mxu0
      %v439 = vadd.f32 0.0, %v438
      %v440 = vpop.f32.mrb[0].mxu0
      %441 = vmatprep.mubr.bf16.mxu0 0
      %442 = vmatmul.mubr.bf16.gmra.mrb[0].mxu0 %v330
      %v443 = vpop.f32.mrb[0].mxu0
      %v444 = vadd.f32 0.0, %v443
      %v445 = vpop.f32.mrb[0].mxu0
      %v446 = vpop.f32.mrb[0].mxu0
      %v447 = vadd.f32 0.0, %v446
      %v448 = vpop.f32.mrb[0].mxu0
      %449 = vmatprep.mubr.bf16.mxu0 0
      %450 = vmatmul.mubr.bf16.gmra.mrb[0].mxu0 %v333
      %v451 = vpop.f32.mrb[0].mxu0
      %v452 = vadd.f32 0.0, %v451
      %v453 = vpop.f32.mrb[0].mxu0
      %v454 = vpop.f32.mrb[0].mxu0
      %v455 = vadd.f32 0.0, %v454
      %v456 = vpop.f32.mrb[0].mxu0
      %457 = vmatprep.mubr.bf16.mxu0 0
      %458 = vmatmul.mubr.bf16.gmra.mrb[0].mxu0 %v336
      %v459 = vpop.f32.mrb[0].mxu0
      %v460 = vadd.f32 0.0, %v459
      %v461 = vpop.f32.mrb[0].mxu0
      %v462 = vpop.f32.mrb[0].mxu0
      %v463 = vadd.f32 0.0, %v462
      %v464 = vpop.f32.mrb[0].mxu0
      %465 = vmatprep.mubr.bf16.mxu0 0
      %466 = vmatmul.mubr.bf16.gmra.mrb[0].mxu0 %v339
      %v467 = vpop.f32.mrb[0].mxu0
      %v468 = vadd.f32 0.0, %v467
      %v469 = vpop.f32.mrb[0].mxu0
      %v470 = vpop.f32.mrb[0].mxu0
      %v471 = vadd.f32 0.0, %v470
      %v472 = vpop.f32.mrb[0].mxu0
      %473 = vmatprep.mubr.bf16.mxu0 0
      %474 = vmatmul.mubr.bf16.gmra.mrb[0].mxu0 %v342
      %v475 = vpop.f32.mrb[0].mxu0
      %v476 = vadd.f32 0.0, %v475
      %v477 = vpop.f32.mrb[0].mxu0
      %v478 = vpop.f32.mrb[0].mxu0
      %v479 = vadd.f32 0.0, %v478
      %v480 = vpop.f32.mrb[0].mxu0
      %481 = vmatprep.mubr.bf16.mxu0 0
      %482 = vmatmul.mubr.bf16.gmra.mrb[0].mxu0 %v345
      %v483 = vpop.f32.mrb[0].mxu0
      %v484 = vadd.f32 0.0, %v483
      %v485 = vpop.f32.mrb[0].mxu0
      %v486 = vpop.f32.mrb[0].mxu0
      %v487 = vadd.f32 0.0, %v486
      %v488 = vpop.f32.mrb[0].mxu0
      %489 = vmatprep.mubr.bf16.mxu0 0
      %490 = vmatmul.mubr.bf16.gmra.mrb[0].mxu0 %v348
      %v491 = vpop.f32.mrb[0].mxu0
      %v492 = vadd.f32 0.0, %v491
      %v493 = vpop.f32.mrb[0].mxu0
      %v494 = vpop.f32.mrb[0].mxu0
      %v495 = vadd.f32 0.0, %v494
      %v496 = vpop.f32.mrb[0].mxu0
      %497 = vmatprep.mubr.bf16.mxu0 0
      %498 = vmatmul.mubr.bf16.gmra.mrb[0].mxu0 %v351
      %v499 = vpop.f32.mrb[0].mxu0
      %v500 = vadd.f32 0.0, %v499
      %v501 = vpop.f32.mrb[0].mxu0
      %v502 = vpop.f32.mrb[0].mxu0
      %v503 = vadd.f32 0.0, %v502
      %v504 = vpop.f32.mrb[0].mxu0
      %505 = vmatprep.mubr.bf16.mxu0 0
      %506 = vmatmul.mubr.bf16.gmra.mrb[0].mxu0 %v354
      %v507 = vpop.f32.mrb[0].mxu0
      %v508 = vadd.f32 0.0, %v507
      %v509 = vpop.f32.mrb[0].mxu0
      %v510 = vpop.f32.mrb[0].mxu0
      %v511 = vadd.f32 0.0, %v510
      %v512 = vpop.f32.mrb[0].mxu0
      %513 = vmatprep.mubr.bf16.mxu0 0
      %514 = vmatmul.mubr.bf16.gmra.mrb[0].mxu0 %v357
      %v515 = vpop.f32.mrb[0].mxu0
      %v516 = vadd.f32 0.0, %v515
      %v517 = vpop.f32.mrb[0].mxu0
      %v518 = vpop.f32.mrb[0].mxu0
      %v519 = vadd.f32 0.0, %v518
      %v520 = vpop.f32.mrb[0].mxu0
      %521 = vmatprep.mubr.bf16.mxu0 0
      %522 = vmatmul.mubr.bf16.gmra.mrb[0].mxu0 %v360
      %v523 = vpop.f32.mrb[0].mxu0
      %v524 = vadd.f32 0.0, %v523
      %v525 = vpop.f32.mrb[0].mxu0
      %v526 = vpop.f32.mrb[0].mxu0
      %v527 = vadd.f32 0.0, %v526
      %v528 = vpop.f32.mrb[0].mxu0
      %529 = vdwg.mxu0
      %vm530 = vcmask 261120
      %531 = vst.msk [vmem:[%s179] sm:$0xff] %vm530, %v404
      %532 = vst.msk [vmem:[%s179 + $0x8] sm:$0xff] %vm530, %v407
      %533 = vst.msk [vmem:[%s179 + $0x10] sm:$0xff] %vm530, %v412
      %534 = vst.msk [vmem:[%s179 + $0x18] sm:$0xff] %vm530, %v415
      %535 = vst.msk [vmem:[%s179 + $0x20] sm:$0xff] %vm530, %v420
      %536 = vst.msk [vmem:[%s179 + $0x28] sm:$0xff] %vm530, %v423
      %537 = vst.msk [vmem:[%s179 + $0x30] sm:$0xff] %vm530, %v428
      %538 = vst.msk [vmem:[%s179 + $0x38] sm:$0xff] %vm530, %v431
      %539 = vst.msk [vmem:[%s179 + $0x40] sm:$0xff] %vm530, %v436
      %540 = vst.msk [vmem:[%s179 + $0x48] sm:$0xff] %vm530, %v439
      %541 = vst.msk [vmem:[%s179 + $0x50] sm:$0xff] %vm530, %v444
      %542 = vst.msk [vmem:[%s179 + $0x58] sm:$0xff] %vm530, %v447
      %543 = vst.msk [vmem:[%s179 + $0x60] sm:$0xff] %vm530, %v452
      %544 = vst.msk [vmem:[%s179 + $0x68] sm:$0xff] %vm530, %v455
      %545 = vst.msk [vmem:[%s179 + $0x70] sm:$0xff] %vm530, %v460
      %546 = vst.msk [vmem:[%s179 + $0x78] sm:$0xff] %vm530, %v463
      %547 = vst.msk [vmem:[%s179 + $0x80] sm:$0xff] %vm530, %v468
      %548 = vst.msk [vmem:[%s179 + $0x88] sm:$0xff] %vm530, %v471
      %549 = vst.msk [vmem:[%s179 + $0x90] sm:$0xff] %vm530, %v476
      %550 = vst.msk [vmem:[%s179 + $0x98] sm:$0xff] %vm530, %v479
      %551 = vst.msk [vmem:[%s179 + $0xa0] sm:$0xff] %vm530, %v484
      %552 = vst.msk [vmem:[%s179 + $0xa8] sm:$0xff] %vm530, %v487
      %553 = vst.msk [vmem:[%s179 + $0xb0] sm:$0xff] %vm530, %v492
      %554 = vst.msk [vmem:[%s179 + $0xb8] sm:$0xff] %vm530, %v495
      %555 = vst.msk [vmem:[%s179 + $0xc0] sm:$0xff] %vm530, %v500
      %556 = vst.msk [vmem:[%s179 + $0xc8] sm:$0xff] %vm530, %v503
      %557 = vst.msk [vmem:[%s179 + $0xd0] sm:$0xff] %vm530, %v508
      %558 = vst.msk [vmem:[%s179 + $0xd8] sm:$0xff] %vm530, %v511
      %559 = vst.msk [vmem:[%s179 + $0xe0] sm:$0xff] %vm530, %v516
      %560 = vst.msk [vmem:[%s179 + $0xe8] sm:$0xff] %vm530, %v519
      %561 = vst.msk [vmem:[%s179 + $0xf0] sm:$0xff] %vm530, %v524
      %562 = vst.msk [vmem:[%s179 + $0xf8] sm:$0xff] %vm530, %v527
      %v563 = vsel %vm530, %v404, 0.0
      %v564 = vsel %vm530, %v407, 0.0
      %v565 = vadd.f32 %v563, %v564
      %v566 = vsel %vm530, %v412, 0.0
      %v567 = vadd.f32 %v565, %v566
      %v568 = vsel %vm530, %v415, 0.0
      %v569 = vadd.f32 %v567, %v568
      %v570 = vsel %vm530, %v420, 0.0
      %v571 = vadd.f32 %v569, %v570
      %v572 = vsel %vm530, %v423, 0.0
      %v573 = vadd.f32 %v571, %v572
      %v574 = vsel %vm530, %v428, 0.0
      %v575 = vadd.f32 %v573, %v574
      %v576 = vsel %vm530, %v431, 0.0
      %v577 = vadd.f32 %v575, %v576
      %v578 = vsel %vm530, %v436, 0.0
      %v579 = vadd.f32 %v577, %v578
      %v580 = vsel %vm530, %v439, 0.0
      %v581 = vadd.f32 %v579, %v580
      %v582 = vsel %vm530, %v444, 0.0
      %v583 = vadd.f32 %v581, %v582
      %v584 = vsel %vm530, %v447, 0.0
      %v585 = vadd.f32 %v583, %v584
      %v586 = vsel %vm530, %v452, 0.0
      %v587 = vadd.f32 %v585, %v586
      %v588 = vsel %vm530, %v455, 0.0
      %v589 = vadd.f32 %v587, %v588
      %v590 = vsel %vm530, %v460, 0.0
      %v591 = vadd.f32 %v589, %v590
      %v592 = vsel %vm530, %v463, 0.0
      %v593 = vadd.f32 %v591, %v592
      %v594 = vsel %vm530, %v468, 0.0
      %v595 = vadd.f32 %v593, %v594
      %v596 = vsel %vm530, %v471, 0.0
      %v597 = vadd.f32 %v595, %v596
      %v598 = vsel %vm530, %v476, 0.0
      %v599 = vadd.f32 %v597, %v598
      %v600 = vsel %vm530, %v479, 0.0
      %v601 = vadd.f32 %v599, %v600
      %v602 = vsel %vm530, %v484, 0.0
      %v603 = vadd.f32 %v601, %v602
      %v604 = vsel %vm530, %v487, 0.0
      %v605 = vadd.f32 %v603, %v604
      %v606 = vsel %vm530, %v492, 0.0
      %v607 = vadd.f32 %v605, %v606
      %v608 = vsel %vm530, %v495, 0.0
      %v609 = vadd.f32 %v607, %v608
      %v610 = vsel %vm530, %v500, 0.0
      %v611 = vadd.f32 %v609, %v610
      %v612 = vsel %vm530, %v503, 0.0
      %v613 = vadd.f32 %v611, %v612
      %v614 = vsel %vm530, %v508, 0.0
      %v615 = vadd.f32 %v613, %v614
      %v616 = vsel %vm530, %v511, 0.0
      %v617 = vadd.f32 %v615, %v616
      %v618 = vsel %vm530, %v516, 0.0
      %v619 = vadd.f32 %v617, %v618
      %v620 = vsel %vm530, %v519, 0.0
      %v621 = vadd.f32 %v619, %v620
      %v622 = vsel %vm530, %v524, 0.0
      %v623 = vadd.f32 %v621, %v622
      %v624 = vsel %vm530, %v527, 0.0
      %v625 = vadd.f32 %v623, %v624
      %v626 = vrot.slane %v625, 4
      %v627 = vadd.f32 %v625, %v626
      %v628 = vrot.slane %v627, 2
      %v629 = vadd.f32 %v627, %v628
      %v630 = vrot.slane %v629, 1
      %v631 = vadd.f32 %v629, %v630
      %v632 = vmul.f32 %v404, %v404
      %v633 = vmul.f32 %v407, %v407
      %v634 = vmul.f32 %v412, %v412
      %v635 = vmul.f32 %v415, %v415
      %v636 = vmul.f32 %v420, %v420
      %v637 = vmul.f32 %v423, %v423
      %v638 = vmul.f32 %v428, %v428
      %v639 = vmul.f32 %v431, %v431
      %v640 = vmul.f32 %v436, %v436
      %v641 = vmul.f32 %v439, %v439
      %v642 = vmul.f32 %v444, %v444
      %v643 = vmul.f32 %v447, %v447
      %v644 = vmul.f32 %v452, %v452
      %v645 = vmul.f32 %v455, %v455
      %v646 = vmul.f32 %v460, %v460
      %v647 = vmul.f32 %v463, %v463
      %v648 = vmul.f32 %v468, %v468
      %v649 = vmul.f32 %v471, %v471
      %v650 = vmul.f32 %v476, %v476
      %v651 = vmul.f32 %v479, %v479
      %v652 = vmul.f32 %v484, %v484
      %v653 = vmul.f32 %v487, %v487
      %v654 = vmul.f32 %v492, %v492
      %v655 = vmul.f32 %v495, %v495
      %v656 = vmul.f32 %v500, %v500
      %v657 = vmul.f32 %v503, %v503
      %v658 = vmul.f32 %v508, %v508
      %v659 = vmul.f32 %v511, %v511
      %v660 = vmul.f32 %v516, %v516
      %v661 = vmul.f32 %v519, %v519
      %v662 = vmul.f32 %v524, %v524
      %v663 = vmul.f32 %v527, %v527
      %v664 = vsel %vm530, %v632, 0.0
      %v665 = vsel %vm530, %v633, 0.0
      %v666 = vadd.f32 %v664, %v665
      %v667 = vsel %vm530, %v634, 0.0
      %v668 = vadd.f32 %v666, %v667
      %v669 = vsel %vm530, %v635, 0.0
      %v670 = vadd.f32 %v668, %v669
      %v671 = vsel %vm530, %v636, 0.0
      %v672 = vadd.f32 %v670, %v671
      %v673 = vsel %vm530, %v637, 0.0
      %v674 = vadd.f32 %v672, %v673
      %v675 = vsel %vm530, %v638, 0.0
      %v676 = vadd.f32 %v674, %v675
      %v677 = vsel %vm530, %v639, 0.0
      %v678 = vadd.f32 %v676, %v677
      %v679 = vsel %vm530, %v640, 0.0
      %v680 = vadd.f32 %v678, %v679
      %v681 = vsel %vm530, %v641, 0.0
      %v682 = vadd.f32 %v680, %v681
      %v683 = vsel %vm530, %v642, 0.0
      %v684 = vadd.f32 %v682, %v683
      %v685 = vsel %vm530, %v643, 0.0
      %v686 = vadd.f32 %v684, %v685
      %v687 = vsel %vm530, %v644, 0.0
      %v688 = vadd.f32 %v686, %v687
      %v689 = vsel %vm530, %v645, 0.0
      %v690 = vadd.f32 %v688, %v689
      %v691 = vsel %vm530, %v646, 0.0
      %v692 = vadd.f32 %v690, %v691
      %v693 = vsel %vm530, %v647, 0.0
      %v694 = vadd.f32 %v692, %v693
      %v695 = vsel %vm530, %v648, 0.0
      %v696 = vadd.f32 %v694, %v695
      %v697 = vsel %vm530, %v649, 0.0
      %v698 = vadd.f32 %v696, %v697
      %v699 = vsel %vm530, %v650, 0.0
      %v700 = vadd.f32 %v698, %v699
      %v701 = vsel %vm530, %v651, 0.0
      %v702 = vadd.f32 %v700, %v701
      %v703 = vsel %vm530, %v652, 0.0
      %v704 = vadd.f32 %v702, %v703
      %v705 = vsel %vm530, %v653, 0.0
      %v706 = vadd.f32 %v704, %v705
      %v707 = vsel %vm530, %v654, 0.0
      %v708 = vadd.f32 %v706, %v707
      %v709 = vsel %vm530, %v655, 0.0
      %v710 = vadd.f32 %v708, %v709
      %v711 = vsel %vm530, %v656, 0.0
      %v712 = vadd.f32 %v710, %v711
      %v713 = vsel %vm530, %v657, 0.0
      %v714 = vadd.f32 %v712, %v713
      %v715 = vsel %vm530, %v658, 0.0
      %v716 = vadd.f32 %v714, %v715
      %v717 = vsel %vm530, %v659, 0.0
      %v718 = vadd.f32 %v716, %v717
      %v719 = vsel %vm530, %v660, 0.0
      %v720 = vadd.f32 %v718, %v719
      %v721 = vsel %vm530, %v661, 0.0
      %v722 = vadd.f32 %v720, %v721
      %v723 = vsel %vm530, %v662, 0.0
      %v724 = vadd.f32 %v722, %v723
      %v725 = vsel %vm530, %v663, 0.0
      %v726 = vadd.f32 %v724, %v725
      %v727 = vrot.slane %v726, 4
      %v728 = vadd.f32 %v726, %v727
      %v729 = vrot.slane %v728, 2
      %v730 = vadd.f32 %v728, %v729
      %v731 = vrot.slane %v730, 1
      %v732 = vadd.f32 %v730, %v731
      %vm733 = vcmask 1040384
      %v734 = vsel %vm733, %v631, %v732
      %vm735 = vcmask 254976
      %736 = vst.msk [vmem:[%s184] sm:$0x3] %vm735, %v734
      %s737 = smul.u32 32, %s15
      %p738 = scmp.lt.s32.totalorder %s737, 63
      %s739 = scalar_select %p738, %s737, 63
      %s740 = smul.addr %s739, 8
      %s741 = scalar_lea.vmem %s2, %s740
      %p742 = scmp.lt.s32.totalorder %s15, 1
      %s743 = scalar_select %p742, %s15, 1
      %s744 = smul.addr %s743, 2
      %s745 = scalar_lea.vmem %s3, %s744
      // Predicated region
      $region29: #{_lambda_.26} parent=27 // pred_check
        %p746 = pneg %p80
      $region30: #{_lambda_.26} parent=27 // pred_check_branch
        %748 = sbr.rel (%p746) target = $region32
      $region31: #{_lambda_.26} parent=27 // pred_region
        %s749 = smul.u32 32, %s15
      $region32: #{_lambda_.26} parent=27 // pred_fallthru
        _
      // Predicated region
      $region33: #{_lambda_.26} parent=27 // pred_check
        %p750 = pneg %p106
      $region34: #{_lambda_.26} parent=27 // pred_check_branch
        %752 = sbr.rel (%p750) target = $region36
      $region35: #{_lambda_.26} parent=27 // pred_region
        _
      $region36: #{_lambda_.26} parent=27 // pred_fallthru
        _
    $region28: #{_lambda_.26} parent=5 // pred_fallthru
      _
    %p753 = scmp.le.s32.totalorder 2, %s10
    // Predicated region
    $region37: #{_lambda_.26} parent=5 // pred_check
      %p754 = pneg %p753
    $region38: #{_lambda_.26} parent=5 // pred_check_branch
      %756 = sbr.rel (%p754) target = $region40
    $region39: #{_lambda_.26} parent=5 // pred_region
      %s757 = ssub.s32 %s10, 2
      // Predicated region
      $region41: #{_lambda_.26} parent=39 // pred_check
        %p758 = pneg %p86
      $region42: #{_lambda_.26} parent=39 // pred_check_branch
        %760 = sbr.rel (%p758) target = $region44
      $region43: #{_lambda_.26} parent=39 // pred_region
        %s761 = smul.u32 32, %s16
        %p762 = scmp.lt.s32.totalorder %s761, 63
        %s763 = scalar_select %p762, %s761, 63
        %s764 = smul.addr %s763, 8
        %s765 = scalar_lea.vmem %s2, %s764
      $region44: #{_lambda_.26} parent=39 // pred_fallthru
        _
      // Predicated region
      $region45: #{_lambda_.26} parent=39 // pred_check
        %p766 = pneg %p112
      $region46: #{_lambda_.26} parent=39 // pred_check_branch
        %768 = sbr.rel (%p766) target = $region48
      $region47: #{_lambda_.26} parent=39 // pred_region
        %p769 = scmp.lt.s32.totalorder %s16, 1
        %s770 = scalar_select %p769, %s16, 1
        %s771 = smul.addr %s770, 2
        %s772 = scalar_lea.vmem %s3, %s771
      $region48: #{_lambda_.26} parent=39 // pred_fallthru
        _
    $region40: #{_lambda_.26} parent=5 // pred_fallthru
      _
  $region6: #{_lambda_.26} parent=0 // loop_footer
    %s14 = sadd.s32 1, %s10
  $region7: #{_lambda_.26} parent=0 // loop_footer_branch
    %9 = sbr.rel target = $region3
  $region8: #{_lambda_.26} parent=0 // loop_exit
    _

// kernel: _lambda_.28
$region0: #{_lambda_.28}
  #allocation0 [shape = 'u32[]', space=smem, size = 0x4, offset = 0x4, fixed_abs, tag = 'smem constant byte address 0x4 - core index']
  #allocation1 [shape = 'u32[144,128]{1,0:T(1,128)}', space=vmem, size = 0x12000, scoped, tag = 'internal scratch']
  %s0 = inlined_call_operand.vmem [shape: bf16[512,288], index: 0, kind: input, shape index: {}]
  %s1 = inlined_call_operand.vmem [shape: bf16[288,32], index: 1, kind: input, shape index: {}]
  %s2 = inlined_call_operand.vmem [shape: f32[512,32], index: 2, kind: output, shape index: {0}]
  %s3 = inlined_call_operand.vmem [shape: f32[2,2,32], index: 3, kind: output, shape index: {1}]
  %4 = xla_tuple %s2, %s3
  %s5 = sld [smem:[#allocation0]]
  $region49: #{_lambda_.28} parent=0
    _
  %s7 = ssub.s32 1, %s5
  %s8 = scalar_select 0, %s7, %s5
  loop: start=0, step=1, limit=4
  $region2: #{_lambda_.28} parent=0 // loop_pre_header
    _
  $region3: #{_lambda_.28} parent=0 // loop_header
    %s10 = sphi 0, %s14
    %p11 = scmp.ge.s32.totalorder %s10, 4
    %s20 = sphi 0, %s22
    %s23 = sphi 0, %s20
    %s24 = sphi 0, %s23
    %s40 = sphi 0, %s24
    %s44 = sphi 0, %s44
    %s46 = sphi 0, %s44
    %s47 = sphi 0, %s46
    %s61 = sphi 0, %s47
    %s67 = sphi 0, %s69
    %s70 = sphi 0, %s67
    %s71 = sphi 0, %s70
    %s87 = sphi 0, %s71
    %s93 = sphi 0, %s95
    %s96 = sphi 0, %s93
    %s97 = sphi 0, %s96
    %s113 = sphi 0, %s97
  $region4: #{_lambda_.28} parent=0 // loop_header_branch
    %13 = sbr.rel (%p11) target = $region8
  $region5: #{_lambda_.28} parent=0 // loop_body
    %s15 = ssub.s32 %s10, 1
    %s16 = ssub.s32 %s10, 2
    %s17 = sadd.s32 %s10, 1
    %s18 = ssub.s32 %s10, %s17
    %p19 = scmp.eq.s32.totalorder %s18, 0
    %s21 = sadd.s32 %s20, 1
    %s22 = scalar_select %p19, %s20, %s21
    %p25 = pneg %p19
    %p26 = scmp.eq.s32.totalorder %s10, 1
    %p27 = por %p25, %p26
    %p28 = scmp.ne.s32.totalorder %s20, %s23
    %p29 = scmp.eq.s32.totalorder %s10, 0
    %p30 = por %p28, %p29
    %p31 = scmp.ne.s32.totalorder %s20, %s23
    %p32 = scmp.eq.s32.totalorder %s15, 1
    %p33 = por %p31, %p32
    %p34 = scmp.ne.s32.totalorder %s23, %s24
    %p35 = scmp.eq.s32.totalorder %s15, 0
    %p36 = por %p34, %p35
    %p37 = scmp.ne.s32.totalorder %s23, %s24
    %p38 = scmp.eq.s32.totalorder %s16, 1
    %p39 = por %p37, %p38
    %p41 = scmp.ne.s32.totalorder %s24, %s40
    %p42 = scmp.eq.s32.totalorder %s16, 0
    %p43 = por %p41, %p42
    %s45 = sadd.s32 %s44, 1
    %p48 = scmp.eq.s32.totalorder %s10, 1
    %p49 = scmp.ne.s32.totalorder %s44, %s46
    %p50 = scmp.eq.s32.totalorder %s10, 0
    %p51 = por %p49, %p50
    %p52 = scmp.ne.s32.totalorder %s44, %s46
    %p53 = scmp.eq.s32.totalorder %s15, 1
    %p54 = por %p52, %p53
    %p55 = scmp.ne.s32.totalorder %s46, %s47
    %p56 = scmp.eq.s32.totalorder %s15, 0
    %p57 = por %p55, %p56
    %p58 = scmp.ne.s32.totalorder %s46, %s47
    %p59 = scmp.eq.s32.totalorder %s16, 1
    %p60 = por %p58, %p59
    %p62 = scmp.ne.s32.totalorder %s47, %s61
    %p63 = scmp.eq.s32.totalorder %s16, 0
    %p64 = por %p62, %p63
    %s65 = ssub.s32 %s10, %s17
    %p66 = scmp.eq.s32.totalorder %s65, 0
    %s68 = sadd.s32 %s67, 1
    %s69 = scalar_select %p66, %s67, %s68
    %p72 = pneg %p66
    %p73 = scmp.eq.s32.totalorder %s10, 1
    %p74 = por %p72, %p73
    %p75 = scmp.ne.s32.totalorder %s67, %s70
    %p76 = scmp.eq.s32.totalorder %s10, 0
    %p77 = por %p75, %p76
    %p78 = scmp.ne.s32.totalorder %s67, %s70
    %p79 = scmp.eq.s32.totalorder %s15, 1
    %p80 = por %p78, %p79
    %p81 = scmp.ne.s32.totalorder %s70, %s71
    %p82 = scmp.eq.s32.totalorder %s15, 0
    %p83 = por %p81, %p82
    %p84 = scmp.ne.s32.totalorder %s70, %s71
    %p85 = scmp.eq.s32.totalorder %s16, 1
    %p86 = por %p84, %p85
    %p88 = scmp.ne.s32.totalorder %s71, %s87
    %p89 = scmp.eq.s32.totalorder %s16, 0
    %p90 = por %p88, %p89
    %s91 = ssub.s32 %s10, %s17
    %p92 = scmp.eq.s32.totalorder %s91, 0
    %s94 = sadd.s32 %s93, 1
    %s95 = scalar_select %p92, %s93, %s94
    %p98 = pneg %p92
    %p99 = scmp.eq.s32.totalorder %s10, 1
    %p100 = por %p98, %p99
    %p101 = scmp.ne.s32.totalorder %s93, %s96
    %p102 = scmp.eq.s32.totalorder %s10, 0
    %p103 = por %p101, %p102
    %p104 = scmp.ne.s32.totalorder %s93, %s96
    %p105 = scmp.eq.s32.totalorder %s15, 1
    %p106 = por %p104, %p105
    %p107 = scmp.ne.s32.totalorder %s96, %s97
    %p108 = scmp.eq.s32.totalorder %s15, 0
    %p109 = por %p107, %p108
    %p110 = scmp.ne.s32.totalorder %s96, %s97
    %p111 = scmp.eq.s32.totalorder %s16, 1
    %p112 = por %p110, %p111
    %p114 = scmp.ne.s32.totalorder %s97, %s113
    %p115 = scmp.eq.s32.totalorder %s16, 0
    %p116 = por %p114, %p115
    %p117 = scmp.le.s32.totalorder 1, %s10
    %p118 = scmp.lt.s32.totalorder %s10, 3
    %p119 = pnand %p117, %p118
    %p120 = pneg %p119
    // Predicated region
    $region9: #{_lambda_.28} parent=5 // pred_check
      _
    $region10: #{_lambda_.28} parent=5 // pred_check_branch
      %122 = sbr.rel (%p119) target = $region12
    $region11: #{_lambda_.28} parent=5 // pred_region
      %s123 = ssub.s32 %s10, 1
      // Predicated region
      $region13: #{_lambda_.28} parent=11 // pred_check
        %p124 = pneg %p57
      $region14: #{_lambda_.28} parent=11 // pred_check_branch
        %126 = sbr.rel (%p124) target = $region16
      $region15: #{_lambda_.28} parent=11 // pred_region
        _
      $region16: #{_lambda_.28} parent=11 // pred_fallthru
        _
    $region12: #{_lambda_.28} parent=5 // pred_fallthru
      _
    %p127 = scmp.lt.s32.totalorder %s10, 2
    // Predicated region
    $region17: #{_lambda_.28} parent=5 // pred_check
      %p128 = pneg %p127
    $region18: #{_lambda_.28} parent=5 // pred_check_branch
      %130 = sbr.rel (%p128) target = $region20
    $region19: #{_lambda_.28} parent=5 // pred_region
      // Predicated region
      $region21: #{_lambda_.28} parent=19 // pred_check
        %p131 = pneg %p30
      $region22: #{_lambda_.28} parent=19 // pred_check_branch
        %133 = sbr.rel (%p131) target = $region24
      $region23: #{_lambda_.28} parent=19 // pred_region
        %s134 = smul.u32 32, %s10
        %p135 = scmp.lt.s32.totalorder %s134, 63
        %s136 = scalar_select %p135, %s134, 63
        %s137 = smul.addr %s136, 3
        %s138 = smul.addr %s137, 4
        %s139 = scalar_lea.vmem %s0, %s138
        %s140 = smul.u32 32, %s10
      $region24: #{_lambda_.28} parent=19 // pred_fallthru
        _
    $region20: #{_lambda_.28} parent=5 // pred_fallthru
      _
    %p141 = scmp.le.s32.totalorder 1, %s10
    %p142 = scmp.lt.s32.totalorder %s10, 3
    %p143 = pnand %p141, %p142
    %p144 = pneg %p143
    // Predicated region
    $region25: #{_lambda_.28} parent=5 // pred_check
      _
    $region26: #{_lambda_.28} parent=5 // pred_check_branch
      %146 = sbr.rel (%p143) target = $region28
    $region27: #{_lambda_.28} parent=5 // pred_region
      %s147 = ssub.s32 %s10, 1
      %s148 = smul.u32 32, %s15
      %p149 = scmp.lt.s32.totalorder %s148, 63
      %s150 = scalar_select %p149, %s148, 63
      %s151 = smul.addr %s150, 3
      %s152 = smul.addr %s151, 4
      %s153 = scalar_lea.vmem %s0, %s152
      %p154 = pneg %p36
      %p155 = pneg %p33
      %p156 = pneg %p57
      %p157 = pneg %p54
      %p158 = pneg %p83
      %p159 = pneg %p80
      %s160 = smul.u32 32, %s15
      %p161 = scmp.lt.s32.totalorder %s160, 63
      %s162 = scalar_select %p161, %s160, 63
      %s163 = smul.addr %s162, 8
      %s164 = scalar_lea.vmem %s2, %s163
      %p165 = pneg %p109
      %p166 = pneg %p106
      %p167 = scmp.lt.s32.totalorder %s15, 1
      %s168 = scalar_select %p167, %s15, 1
      %s169 = smul.addr %s168, 2
      %s170 = scalar_lea.vmem %s3, %s169
      %s171 = smul.u32 32, %s15
      %p172 = scmp.lt.s32.totalorder %s171, 63
      %s173 = scalar_select %p172, %s171, 63
      %s174 = smul.addr %s173, 3
      %s175 = smul.addr %s174, 4
      %s176 = scalar_lea.vmem %s0, %s175
      %s177 = smul.u32 32, %s15
      %s178 = smul.u32 32, %s15
      %p179 = scmp.lt.s32.totalorder %s178, 63
      %s180 = scalar_select %p179, %s178, 63
      %s181 = smul.addr %s180, 8
      %s182 = scalar_lea.vmem %s2, %s181
      %s183 = smul.u32 32, %s15
      %p184 = scmp.lt.s32.totalorder %s15, 1
      %s185 = scalar_select %p184, %s15, 1
      %s186 = smul.addr %s185, 2
      %s187 = scalar_lea.vmem %s3, %s186
      %v189 = vld [vmem:[%s176] sm:$0xff]
      %v190 = vld [vmem:[%s176 + $0x8] sm:$0xf]
      %v191 = vld [vmem:[%s176 + $0xc] sm:$0xff]
      %v192 = vld [vmem:[%s176 + $0x14] sm:$0xf]
      %v193 = vld [vmem:[%s176 + $0x18] sm:$0xff]
      %v194 = vld [vmem:[%s176 + $0x20] sm:$0xf]
      %v195 = vld [vmem:[%s176 + $0x24] sm:$0xff]
      %v196 = vld [vmem:[%s176 + $0x2c] sm:$0xf]
      %v197 = vld [vmem:[%s176 + $0x30] sm:$0xff]
      %v198 = vld [vmem:[%s176 + $0x38] sm:$0xf]
      %v199 = vld [vmem:[%s176 + $0x3c] sm:$0xff]
      %v200 = vld [vmem:[%s176 + $0x44] sm:$0xf]
      %v201 = vld [vmem:[%s176 + $0x48] sm:$0xff]
      %v202 = vld [vmem:[%s176 + $0x50] sm:$0xf]
      %v203 = vld [vmem:[%s176 + $0x54] sm:$0xff]
      %v204 = vld [vmem:[%s176 + $0x5c] sm:$0xf]
      %v205 = vld [vmem:[%s176 + $0x60] sm:$0xff]
      %v206 = vld [vmem:[%s176 + $0x68] sm:$0xf]
      %v207 = vld [vmem:[%s176 + $0x6c] sm:$0xff]
      %v208 = vld [vmem:[%s176 + $0x74] sm:$0xf]
      %v209 = vld [vmem:[%s176 + $0x78] sm:$0xff]
      %v210 = vld [vmem:[%s176 + $0x80] sm:$0xf]
      %v211 = vld [vmem:[%s176 + $0x84] sm:$0xff]
      %v212 = vld [vmem:[%s176 + $0x8c] sm:$0xf]
      %v213 = vld [vmem:[%s176 + $0x90] sm:$0xff]
      %v214 = vld [vmem:[%s176 + $0x98] sm:$0xf]
      %v215 = vld [vmem:[%s176 + $0x9c] sm:$0xff]
      %v216 = vld [vmem:[%s176 + $0xa4] sm:$0xf]
      %v217 = vld [vmem:[%s176 + $0xa8] sm:$0xff]
      %v218 = vld [vmem:[%s176 + $0xb0] sm:$0xf]
      %v219 = vld [vmem:[%s176 + $0xb4] sm:$0xff]
      %v220 = vld [vmem:[%s176 + $0xbc] sm:$0xf]
      %v221 = vld [vmem:[%s176 + $0xc0] sm:$0xff]
      %v222 = vld [vmem:[%s176 + $0xc8] sm:$0xf]
      %v223 = vld [vmem:[%s176 + $0xcc] sm:$0xff]
      %v224 = vld [vmem:[%s176 + $0xd4] sm:$0xf]
      %v225 = vld [vmem:[%s176 + $0xd8] sm:$0xff]
      %v226 = vld [vmem:[%s176 + $0xe0] sm:$0xf]
      %v227 = vld [vmem:[%s176 + $0xe4] sm:$0xff]
      %v228 = vld [vmem:[%s176 + $0xec] sm:$0xf]
      %v229 = vld [vmem:[%s176 + $0xf0] sm:$0xff]
      %v230 = vld [vmem:[%s176 + $0xf8] sm:$0xf]
      %v231 = vld [vmem:[%s176 + $0xfc] sm:$0xff]
      %v232 = vld [vmem:[%s176 + $0x104] sm:$0xf]
      %v233 = vld [vmem:[%s176 + $0x108] sm:$0xff]
      %v234 = vld [vmem:[%s176 + $0x110] sm:$0xf]
      %v235 = vld [vmem:[%s176 + $0x114] sm:$0xff]
      %v236 = vld [vmem:[%s176 + $0x11c] sm:$0xf]
      %v237 = vld [vmem:[%s176 + $0x120] sm:$0xff]
      %v238 = vld [vmem:[%s176 + $0x128] sm:$0xf]
      %v239 = vld [vmem:[%s176 + $0x12c] sm:$0xff]
      %v240 = vld [vmem:[%s176 + $0x134] sm:$0xf]
      %v241 = vld [vmem:[%s176 + $0x138] sm:$0xff]
      %v242 = vld [vmem:[%s176 + $0x140] sm:$0xf]
      %v243 = vld [vmem:[%s176 + $0x144] sm:$0xff]
      %v244 = vld [vmem:[%s176 + $0x14c] sm:$0xf]
      %v245 = vld [vmem:[%s176 + $0x150] sm:$0xff]
      %v246 = vld [vmem:[%s176 + $0x158] sm:$0xf]
      %v247 = vld [vmem:[%s176 + $0x15c] sm:$0xff]
      %v248 = vld [vmem:[%s176 + $0x164] sm:$0xf]
      %v249 = vld [vmem:[%s176 + $0x168] sm:$0xff]
      %v250 = vld [vmem:[%s176 + $0x170] sm:$0xf]
      %v251 = vld [vmem:[%s176 + $0x174] sm:$0xff]
      %v252 = vld [vmem:[%s176 + $0x17c] sm:$0xf]
      %v253 = vld [vmem:[%s1] sm:$0xf]
      %v254 = vld [vmem:[%s1 + $0x4] sm:$0xf]
      %v255 = vld [vmem:[%s1 + $0x8] sm:$0xf]
      %v256 = vld [vmem:[%s1 + $0xc] sm:$0xf]
      %v257 = vld [vmem:[%s1 + $0x10] sm:$0xf]
      %v258 = vld [vmem:[%s1 + $0x14] sm:$0xf]
      %v259 = vld [vmem:[%s1 + $0x18] sm:$0xf]
      %v260 = vld [vmem:[%s1 + $0x1c] sm:$0xf]
      %v261 = vld [vmem:[%s1 + $0x20] sm:$0xf]
      %v262 = vld [vmem:[%s1 + $0x24] sm:$0xf]
      %v263 = vld [vmem:[%s1 + $0x28] sm:$0xf]
      %v264 = vld [vmem:[%s1 + $0x2c] sm:$0xf]
      %v265 = vld [vmem:[%s1 + $0x30] sm:$0xf]
      %v266 = vld [vmem:[%s1 + $0x34] sm:$0xf]
      %v267 = vld [vmem:[%s1 + $0x38] sm:$0xf]
      %v268 = vld [vmem:[%s1 + $0x3c] sm:$0xf]
      %v269 = vld [vmem:[%s1 + $0x40] sm:$0xf]
      %v270 = vld [vmem:[%s1 + $0x44] sm:$0xf]
      %v271 = vld [vmem:[%s1 + $0x48] sm:$0xf]
      %v272 = vld [vmem:[%s1 + $0x4c] sm:$0xf]
      %v273 = vld [vmem:[%s1 + $0x50] sm:$0xf]
      %v274 = vld [vmem:[%s1 + $0x54] sm:$0xf]
      %v275 = vld [vmem:[%s1 + $0x58] sm:$0xf]
      %v276 = vld [vmem:[%s1 + $0x5c] sm:$0xf]
      %v277 = vld [vmem:[%s1 + $0x60] sm:$0xf]
      %v278 = vld [vmem:[%s1 + $0x64] sm:$0xf]
      %v279 = vld [vmem:[%s1 + $0x68] sm:$0xf]
      %v280 = vld [vmem:[%s1 + $0x6c] sm:$0xf]
      %v281 = vld [vmem:[%s1 + $0x70] sm:$0xf]
      %v282 = vld [vmem:[%s1 + $0x74] sm:$0xf]
      %v283 = vld [vmem:[%s1 + $0x78] sm:$0xf]
      %v284 = vld [vmem:[%s1 + $0x7c] sm:$0xf]
      %v285 = vld [vmem:[%s1 + $0x80] sm:$0xf]
      %v286 = vld [vmem:[%s1 + $0x84] sm:$0xf]
      %v287 = vld [vmem:[%s1 + $0x88] sm:$0xf]
      %v288 = vld [vmem:[%s1 + $0x8c] sm:$0xf]
      %v353 = vunpack.c.l.b16 %v189
      %v354 = vunpack.c.h.b16 %v189
      %v355 = vunpack.c.l.b16 %v190
      %v356 = vunpack.c.l.b16 %v191
      %v357 = vunpack.c.h.b16 %v191
      %v358 = vunpack.c.l.b16 %v192
      %v359 = vunpack.c.l.b16 %v193
      %v360 = vunpack.c.h.b16 %v193
      %v361 = vunpack.c.l.b16 %v194
      %v362 = vunpack.c.l.b16 %v195
      %v363 = vunpack.c.h.b16 %v195
      %v364 = vunpack.c.l.b16 %v196
      %v365 = vunpack.c.l.b16 %v197
      %v366 = vunpack.c.h.b16 %v197
      %v367 = vunpack.c.l.b16 %v198
      %v368 = vunpack.c.l.b16 %v199
      %v369 = vunpack.c.h.b16 %v199
      %v370 = vunpack.c.l.b16 %v200
      %v371 = vunpack.c.l.b16 %v201
      %v372 = vunpack.c.h.b16 %v201
      %v373 = vunpack.c.l.b16 %v202
      %v374 = vunpack.c.l.b16 %v203
      %v375 = vunpack.c.h.b16 %v203
      %v376 = vunpack.c.l.b16 %v204
      %v377 = vunpack.c.l.b16 %v205
      %v378 = vunpack.c.h.b16 %v205
      %v379 = vunpack.c.l.b16 %v206
      %v380 = vunpack.c.l.b16 %v207
      %v381 = vunpack.c.h.b16 %v207
      %v382 = vunpack.c.l.b16 %v208
      %v383 = vunpack.c.l.b16 %v209
      %v384 = vunpack.c.h.b16 %v209
      %v385 = vunpack.c.l.b16 %v210
      %v386 = vunpack.c.l.b16 %v211
      %v387 = vunpack.c.h.b16 %v211
      %v388 = vunpack.c.l.b16 %v212
      %v389 = vunpack.c.l.b16 %v213
      %v390 = vunpack.c.h.b16 %v213
      %v391 = vunpack.c.l.b16 %v214
      %v392 = vunpack.c.l.b16 %v215
      %v393 = vunpack.c.h.b16 %v215
      %v394 = vunpack.c.l.b16 %v216
      %v395 = vunpack.c.l.b16 %v217
      %v396 = vunpack.c.h.b16 %v217
      %v397 = vunpack.c.l.b16 %v218
      %v398 = vunpack.c.l.b16 %v219
      %v399 = vunpack.c.h.b16 %v219
      %v400 = vunpack.c.l.b16 %v220
      %v401 = vunpack.c.l.b16 %v221
      %v402 = vunpack.c.h.b16 %v221
      %v403 = vunpack.c.l.b16 %v222
      %v404 = vunpack.c.l.b16 %v223
      %v405 = vunpack.c.h.b16 %v223
      %v406 = vunpack.c.l.b16 %v224
      %v407 = vunpack.c.l.b16 %v225
      %v408 = vunpack.c.h.b16 %v225
      %v409 = vunpack.c.l.b16 %v226
      %v410 = vunpack.c.l.b16 %v227
      %v411 = vunpack.c.h.b16 %v227
      %v412 = vunpack.c.l.b16 %v228
      %v413 = vunpack.c.l.b16 %v229
      %v414 = vunpack.c.h.b16 %v229
      %v415 = vunpack.c.l.b16 %v230
      %v416 = vunpack.c.l.b16 %v231
      %v417 = vunpack.c.h.b16 %v231
      %v418 = vunpack.c.l.b16 %v232
      %v419 = vunpack.c.l.b16 %v233
      %v420 = vunpack.c.h.b16 %v233
      %v421 = vunpack.c.l.b16 %v234
      %v422 = vunpack.c.l.b16 %v235
      %v423 = vunpack.c.h.b16 %v235
      %v424 = vunpack.c.l.b16 %v236
      %v425 = vunpack.c.l.b16 %v237
      %v426 = vunpack.c.h.b16 %v237
      %v427 = vunpack.c.l.b16 %v238
      %v428 = vunpack.c.l.b16 %v239
      %v429 = vunpack.c.h.b16 %v239
      %v430 = vunpack.c.l.b16 %v240
      %v431 = vunpack.c.l.b16 %v241
      %v432 = vunpack.c.h.b16 %v241
      %v433 = vunpack.c.l.b16 %v242
      %v434 = vunpack.c.l.b16 %v243
      %v435 = vunpack.c.h.b16 %v243
      %v436 = vunpack.c.l.b16 %v244
      %v437 = vunpack.c.l.b16 %v245
      %v438 = vunpack.c.h.b16 %v245
      %v439 = vunpack.c.l.b16 %v246
      %v440 = vunpack.c.l.b16 %v247
      %v441 = vunpack.c.h.b16 %v247
      %v442 = vunpack.c.l.b16 %v248
      %v443 = vunpack.c.l.b16 %v249
      %v444 = vunpack.c.h.b16 %v249
      %v445 = vunpack.c.l.b16 %v250
      %v446 = vunpack.c.l.b16 %v251
      %v447 = vunpack.c.h.b16 %v251
      %v448 = vunpack.c.l.b16 %v252
      %v449 = vpack.c.b16 %v356, %v353
      %v450 = vpack.c.b16 %v357, %v354
      %v451 = vpack.c.b16 %v358, %v355
      %v452 = vpack.c.b16 %v362, %v359
      %v453 = vpack.c.b16 %v363, %v360
      %v454 = vpack.c.b16 %v364, %v361
      %v455 = vpack.c.b16 %v368, %v365
      %v456 = vpack.c.b16 %v369, %v366
      %v457 = vpack.c.b16 %v370, %v367
      %v458 = vpack.c.b16 %v374, %v371
      %v459 = vpack.c.b16 %v375, %v372
      %v460 = vpack.c.b16 %v376, %v373
      %v461 = vpack.c.b16 %v380, %v377
      %v462 = vpack.c.b16 %v381, %v378
      %v463 = vpack.c.b16 %v382, %v379
      %v464 = vpack.c.b16 %v386, %v383
      %v465 = vpack.c.b16 %v387, %v384
      %v466 = vpack.c.b16 %v388, %v385
      %v467 = vpack.c.b16 %v392, %v389
      %v468 = vpack.c.b16 %v393, %v390
      %v469 = vpack.c.b16 %v394, %v391
      %v470 = vpack.c.b16 %v398, %v395
      %v471 = vpack.c.b16 %v399, %v396
      %v472 = vpack.c.b16 %v400, %v397
      %v473 = vpack.c.b16 %v404, %v401
      %v474 = vpack.c.b16 %v405, %v402
      %v475 = vpack.c.b16 %v406, %v403
      %v476 = vpack.c.b16 %v410, %v407
      %v477 = vpack.c.b16 %v411, %v408
      %v478 = vpack.c.b16 %v412, %v409
      %v479 = vpack.c.b16 %v416, %v413
      %v480 = vpack.c.b16 %v417, %v414
      %v481 = vpack.c.b16 %v418, %v415
      %v482 = vpack.c.b16 %v422, %v419
      %v483 = vpack.c.b16 %v423, %v420
      %v484 = vpack.c.b16 %v424, %v421
      %v485 = vpack.c.b16 %v428, %v425
      %v486 = vpack.c.b16 %v429, %v426
      %v487 = vpack.c.b16 %v430, %v427
      %v488 = vpack.c.b16 %v434, %v431
      %v489 = vpack.c.b16 %v435, %v432
      %v490 = vpack.c.b16 %v436, %v433
      %v491 = vpack.c.b16 %v440, %v437
      %v492 = vpack.c.b16 %v441, %v438
      %v493 = vpack.c.b16 %v442, %v439
      %v494 = vpack.c.b16 %v446, %v443
      %v495 = vpack.c.b16 %v447, %v444
      %v496 = vpack.c.b16 %v448, %v445
      %v565 = vunpack.c.l.b16 %v253
      %v566 = vunpack.c.l.b16 %v254
      %v567 = vunpack.c.l.b16 %v255
      %v568 = vunpack.c.l.b16 %v256
      %v569 = vunpack.c.l.b16 %v257
      %v570 = vunpack.c.l.b16 %v258
      %v571 = vunpack.c.l.b16 %v259
      %v572 = vunpack.c.l.b16 %v260
      %v573 = vunpack.c.l.b16 %v261
      %v574 = vunpack.c.l.b16 %v262
      %v575 = vunpack.c.l.b16 %v263
      %v576 = vunpack.c.l.b16 %v264
      %v577 = vunpack.c.l.b16 %v265
      %v578 = vunpack.c.l.b16 %v266
      %v579 = vunpack.c.l.b16 %v267
      %v580 = vunpack.c.l.b16 %v268
      %v581 = vunpack.c.l.b16 %v269
      %v582 = vunpack.c.l.b16 %v270
      %v583 = vunpack.c.l.b16 %v271
      %v584 = vunpack.c.l.b16 %v272
      %v585 = vunpack.c.l.b16 %v273
      %v586 = vunpack.c.l.b16 %v274
      %v587 = vunpack.c.l.b16 %v275
      %v588 = vunpack.c.l.b16 %v276
      %v589 = vunpack.c.l.b16 %v277
      %v590 = vunpack.c.l.b16 %v278
      %v591 = vunpack.c.l.b16 %v279
      %v592 = vunpack.c.l.b16 %v280
      %v593 = vunpack.c.l.b16 %v281
      %v594 = vunpack.c.l.b16 %v282
      %v595 = vunpack.c.l.b16 %v283
      %v596 = vunpack.c.l.b16 %v284
      %v597 = vunpack.c.l.b16 %v285
      %v598 = vunpack.c.l.b16 %v286
      %v599 = vunpack.c.l.b16 %v287
      %v600 = vunpack.c.l.b16 %v288
      %v601 = vpack.c.b16 %v566, %v565
      %v602 = vpack.c.b16 %v568, %v567
      %v603 = vpack.c.b16 %v570, %v569
      %v604 = vpack.c.b16 %v572, %v571
      %v605 = vpack.c.b16 %v574, %v573
      %v606 = vpack.c.b16 %v576, %v575
      %v607 = vpack.c.b16 %v578, %v577
      %v608 = vpack.c.b16 %v580, %v579
      %v609 = vpack.c.b16 %v582, %v581
      %v610 = vpack.c.b16 %v584, %v583
      %v611 = vpack.c.b16 %v586, %v585
      %v612 = vpack.c.b16 %v588, %v587
      %v613 = vpack.c.b16 %v590, %v589
      %v614 = vpack.c.b16 %v592, %v591
      %v615 = vpack.c.b16 %v594, %v593
      %v616 = vpack.c.b16 %v596, %v595
      %v617 = vpack.c.b16 %v598, %v597
      %v618 = vpack.c.b16 %v600, %v599
      %vm637 = vcmask 261120
      %v639 = vsel %vm637, %v451, 0
      %v642 = vsel %vm637, %v454, 0
      %v645 = vsel %vm637, %v457, 0
      %v648 = vsel %vm637, %v460, 0
      %v651 = vsel %vm637, %v463, 0
      %v654 = vsel %vm637, %v466, 0
      %v657 = vsel %vm637, %v469, 0
      %v660 = vsel %vm637, %v472, 0
      %v663 = vsel %vm637, %v475, 0
      %v666 = vsel %vm637, %v478, 0
      %v669 = vsel %vm637, %v481, 0
      %v672 = vsel %vm637, %v484, 0
      %v675 = vsel %vm637, %v487, 0
      %v678 = vsel %vm637, %v490, 0
      %v681 = vsel %vm637, %v493, 0
      %v684 = vsel %vm637, %v496, 0
      %686 = vmatprep.subr.bf16.mxu0 0
      %687 = vmatpush1.bf16.msra.mxu0 %v601
      %688 = vmatprep.subr.bf16.mxu0 0
      %689 = vmatpush1.bf16.msra.mxu0 %v602
      %690 = vmatprep.subr.bf16.mxu0 0
      %691 = vmatpush1.bf16.msra.mxu0 %v603
      %692 = vmatprep.subr.bf16.mxu0 0
      %693 = vmatpush1.bf16.msra.mxu0 %v604
      %694 = vmatprep.subr.bf16.mxu0 0
      %695 = vmatpush1.bf16.msra.mxu0 %v605
      %696 = vmatprep.subr.bf16.mxu0 0
      %697 = vmatpush1.bf16.msra.mxu0 %v606
      %698 = vmatprep.subr.bf16.mxu0 0
      %699 = vmatpush1.bf16.msra.mxu0 %v607
      %700 = vmatprep.subr.bf16.mxu0 0
      %701 = vmatpush1.bf16.msra.mxu0 %v608
      %702 = vmatprep.subr.bf16.mxu0 0
      %703 = vmatpush1.bf16.msra.mxu0 %v609
      %704 = vmatprep.subr.bf16.mxu0 0
      %705 = vmatpush1.bf16.msra.mxu0 %v610
      %706 = vmatprep.subr.bf16.mxu0 0
      %707 = vmatpush1.bf16.msra.mxu0 %v611
      %708 = vmatprep.subr.bf16.mxu0 0
      %709 = vmatpush1.bf16.msra.mxu0 %v612
      %710 = vmatprep.subr.bf16.mxu0 0
      %711 = vmatpush1.bf16.msra.mxu0 %v613
      %712 = vmatprep.subr.bf16.mxu0 0
      %713 = vmatpush1.bf16.msra.mxu0 %v614
      %714 = vmatprep.subr.bf16.mxu0 0
      %715 = vmatpush1.bf16.msra.mxu0 %v615
      %716 = vmatprep.subr.bf16.mxu0 0
      %717 = vmatpush1.bf16.msra.mxu0 %v616
      %718 = vmatprep.mubr.bf16.mxu0 %v450
      %719 = vmatmul.mubr.bf16.gmra.mrb[0].mxu0 %v449
      %v720 = vpop.f32.mrb[0].mxu0
      %v721 = vadd.f32 0.0, %v720
      %v722 = vpop.f32.mrb[0].mxu0
      %v723 = vpop.f32.mrb[0].mxu0
      %v724 = vadd.f32 0.0, %v723
      %v725 = vpop.f32.mrb[0].mxu0
      %726 = vmatprep.mubr.bf16.mxu0 %v453
      %727 = vmatmul.mubr.bf16.gmra.mrb[0].mxu0 %v452
      %v728 = vpop.f32.mrb[0].mxu0
      %v729 = vadd.f32 0.0, %v728
      %v730 = vpop.f32.mrb[0].mxu0
      %v731 = vpop.f32.mrb[0].mxu0
      %v732 = vadd.f32 0.0, %v731
      %v733 = vpop.f32.mrb[0].mxu0
      %734 = vmatprep.mubr.bf16.mxu0 %v456
      %735 = vmatmul.mubr.bf16.gmra.mrb[0].mxu0 %v455
      %v736 = vpop.f32.mrb[0].mxu0
      %v737 = vadd.f32 0.0, %v736
      %v738 = vpop.f32.mrb[0].mxu0
      %v739 = vpop.f32.mrb[0].mxu0
      %v740 = vadd.f32 0.0, %v739
      %v741 = vpop.f32.mrb[0].mxu0
      %742 = vmatprep.mubr.bf16.mxu0 %v459
      %743 = vmatmul.mubr.bf16.gmra.mrb[0].mxu0 %v458
      %v744 = vpop.f32.mrb[0].mxu0
      %v745 = vadd.f32 0.0, %v744
      %v746 = vpop.f32.mrb[0].mxu0
      %v747 = vpop.f32.mrb[0].mxu0
      %v748 = vadd.f32 0.0, %v747
      %v749 = vpop.f32.mrb[0].mxu0
      %750 = vmatprep.mubr.bf16.mxu0 %v462
      %751 = vmatmul.mubr.bf16.gmra.mrb[0].mxu0 %v461
      %v752 = vpop.f32.mrb[0].mxu0
      %v753 = vadd.f32 0.0, %v752
      %v754 = vpop.f32.mrb[0].mxu0
      %v755 = vpop.f32.mrb[0].mxu0
      %v756 = vadd.f32 0.0, %v755
      %v757 = vpop.f32.mrb[0].mxu0
      %758 = vmatprep.mubr.bf16.mxu0 %v465
      %759 = vmatmul.mubr.bf16.gmra.mrb[0].mxu0 %v464
      %v760 = vpop.f32.mrb[0].mxu0
      %v761 = vadd.f32 0.0, %v760
      %v762 = vpop.f32.mrb[0].mxu0
      %v763 = vpop.f32.mrb[0].mxu0
      %v764 = vadd.f32 0.0, %v763
      %v765 = vpop.f32.mrb[0].mxu0
      %766 = vmatprep.mubr.bf16.mxu0 %v468
      %767 = vmatmul.mubr.bf16.gmra.mrb[0].mxu0 %v467
      %v768 = vpop.f32.mrb[0].mxu0
      %v769 = vadd.f32 0.0, %v768
      %v770 = vpop.f32.mrb[0].mxu0
      %v771 = vpop.f32.mrb[0].mxu0
      %v772 = vadd.f32 0.0, %v771
      %v773 = vpop.f32.mrb[0].mxu0
      %774 = vmatprep.mubr.bf16.mxu0 %v471
      %775 = vmatmul.mubr.bf16.gmra.mrb[0].mxu0 %v470
      %v776 = vpop.f32.mrb[0].mxu0
      %v777 = vadd.f32 0.0, %v776
      %v778 = vpop.f32.mrb[0].mxu0
      %v779 = vpop.f32.mrb[0].mxu0
      %v780 = vadd.f32 0.0, %v779
      %v781 = vpop.f32.mrb[0].mxu0
      %782 = vmatprep.mubr.bf16.mxu0 %v474
      %783 = vmatmul.mubr.bf16.gmra.mrb[0].mxu0 %v473
      %v784 = vpop.f32.mrb[0].mxu0
      %v785 = vadd.f32 0.0, %v784
      %v786 = vpop.f32.mrb[0].mxu0
      %v787 = vpop.f32.mrb[0].mxu0
      %v788 = vadd.f32 0.0, %v787
      %v789 = vpop.f32.mrb[0].mxu0
      %790 = vmatprep.mubr.bf16.mxu0 %v477
      %791 = vmatmul.mubr.bf16.gmra.mrb[0].mxu0 %v476
      %v792 = vpop.f32.mrb[0].mxu0
      %v793 = vadd.f32 0.0, %v792
      %v794 = vpop.f32.mrb[0].mxu0
      %v795 = vpop.f32.mrb[0].mxu0
      %v796 = vadd.f32 0.0, %v795
      %v797 = vpop.f32.mrb[0].mxu0
      %798 = vmatprep.mubr.bf16.mxu0 %v480
      %799 = vmatmul.mubr.bf16.gmra.mrb[0].mxu0 %v479
      %v800 = vpop.f32.mrb[0].mxu0
      %v801 = vadd.f32 0.0, %v800
      %v802 = vpop.f32.mrb[0].mxu0
      %v803 = vpop.f32.mrb[0].mxu0
      %v804 = vadd.f32 0.0, %v803
      %v805 = vpop.f32.mrb[0].mxu0
      %806 = vmatprep.mubr.bf16.mxu0 %v483
      %807 = vmatmul.mubr.bf16.gmra.mrb[0].mxu0 %v482
      %v808 = vpop.f32.mrb[0].mxu0
      %v809 = vadd.f32 0.0, %v808
      %v810 = vpop.f32.mrb[0].mxu0
      %v811 = vpop.f32.mrb[0].mxu0
      %v812 = vadd.f32 0.0, %v811
      %v813 = vpop.f32.mrb[0].mxu0
      %814 = vmatprep.mubr.bf16.mxu0 %v486
      %815 = vmatmul.mubr.bf16.gmra.mrb[0].mxu0 %v485
      %v816 = vpop.f32.mrb[0].mxu0
      %v817 = vadd.f32 0.0, %v816
      %v818 = vpop.f32.mrb[0].mxu0
      %v819 = vpop.f32.mrb[0].mxu0
      %v820 = vadd.f32 0.0, %v819
      %v821 = vpop.f32.mrb[0].mxu0
      %822 = vmatprep.mubr.bf16.mxu0 %v489
      %823 = vmatmul.mubr.bf16.gmra.mrb[0].mxu0 %v488
      %v824 = vpop.f32.mrb[0].mxu0
      %v825 = vadd.f32 0.0, %v824
      %v826 = vpop.f32.mrb[0].mxu0
      %v827 = vpop.f32.mrb[0].mxu0
      %v828 = vadd.f32 0.0, %v827
      %v829 = vpop.f32.mrb[0].mxu0
      %830 = vmatprep.mubr.bf16.mxu0 %v492
      %831 = vmatmul.mubr.bf16.gmra.mrb[0].mxu0 %v491
      %v832 = vpop.f32.mrb[0].mxu0
      %v833 = vadd.f32 0.0, %v832
      %v834 = vpop.f32.mrb[0].mxu0
      %v835 = vpop.f32.mrb[0].mxu0
      %v836 = vadd.f32 0.0, %v835
      %v837 = vpop.f32.mrb[0].mxu0
      %838 = vmatprep.mubr.bf16.mxu0 %v495
      %839 = vmatmul.mubr.bf16.gmra.mrb[0].mxu0 %v494
      %v840 = vpop.f32.mrb[0].mxu0
      %v841 = vadd.f32 0.0, %v840
      %v842 = vpop.f32.mrb[0].mxu0
      %v843 = vpop.f32.mrb[0].mxu0
      %v844 = vadd.f32 0.0, %v843
      %v845 = vpop.f32.mrb[0].mxu0
      %846 = vdwg.mxu0
      %847 = vmatprep.subr.bf16.mxu0 0
      %848 = vmatpush1.bf16.msra.mxu0 %v617
      %849 = vmatprep.subr.bf16.mxu0 0
      %850 = vmatpush1.bf16.msra.mxu0 %v618
      %851 = vmatprep.subr.bf16.mxu0 0
      %852 = vmatpush1.bf16.msra.mxu0 0
      %853 = vmatprep.subr.bf16.mxu0 0
      %854 = vmatpush1.bf16.msra.mxu0 0
      %855 = vmatprep.subr.bf16.mxu0 0
      %856 = vmatpush1.bf16.msra.mxu0 0
      %857 = vmatprep.subr.bf16.mxu0 0
      %858 = vmatpush1.bf16.msra.mxu0 0
      %859 = vmatprep.subr.bf16.mxu0 0
      %860 = vmatpush1.bf16.msra.mxu0 0
      %861 = vmatprep.subr.bf16.mxu0 0
      %862 = vmatpush1.bf16.msra.mxu0 0
      %863 = vmatprep.subr.bf16.mxu0 0
      %864 = vmatpush1.bf16.msra.mxu0 0
      %865 = vmatprep.subr.bf16.mxu0 0
      %866 = vmatpush1.bf16.msra.mxu0 0
      %867 = vmatprep.subr.bf16.mxu0 0
      %868 = vmatpush1.bf16.msra.mxu0 0
      %869 = vmatprep.subr.bf16.mxu0 0
      %870 = vmatpush1.bf16.msra.mxu0 0
      %871 = vmatprep.subr.bf16.mxu0 0
      %872 = vmatpush1.bf16.msra.mxu0 0
      %873 = vmatprep.subr.bf16.mxu0 0
      %874 = vmatpush1.bf16.msra.mxu0 0
      %875 = vmatprep.subr.bf16.mxu0 0
      %876 = vmatpush1.bf16.msra.mxu0 0
      %877 = vmatprep.subr.bf16.mxu0 0
      %878 = vmatpush1.bf16.msra.mxu0 0
      %879 = vmatprep.mubr.bf16.mxu0 0
      %880 = vmatmul.mubr.bf16.gmra.mrb[0].mxu0 %v639
      %v881 = vpop.f32.mrb[0].mxu0
      %v882 = vadd.f32 %v721, %v881
      %v883 = vpop.f32.mrb[0].mxu0
      %v884 = vpop.f32.mrb[0].mxu0
      %v885 = vadd.f32 %v724, %v884
      %v886 = vpop.f32.mrb[0].mxu0
      %887 = vmatprep.mubr.bf16.mxu0 0
      %888 = vmatmul.mubr.bf16.gmra.mrb[0].mxu0 %v642
      %v889 = vpop.f32.mrb[0].mxu0
      %v890 = vadd.f32 %v729, %v889
      %v891 = vpop.f32.mrb[0].mxu0
      %v892 = vpop.f32.mrb[0].mxu0
      %v893 = vadd.f32 %v732, %v892
      %v894 = vpop.f32.mrb[0].mxu0
      %895 = vmatprep.mubr.bf16.mxu0 0
      %896 = vmatmul.mubr.bf16.gmra.mrb[0].mxu0 %v645
      %v897 = vpop.f32.mrb[0].mxu0
      %v898 = vadd.f32 %v737, %v897
      %v899 = vpop.f32.mrb[0].mxu0
      %v900 = vpop.f32.mrb[0].mxu0
      %v901 = vadd.f32 %v740, %v900
      %v902 = vpop.f32.mrb[0].mxu0
      %903 = vmatprep.mubr.bf16.mxu0 0
      %904 = vmatmul.mubr.bf16.gmra.mrb[0].mxu0 %v648
      %v905 = vpop.f32.mrb[0].mxu0
      %v906 = vadd.f32 %v745, %v905
      %v907 = vpop.f32.mrb[0].mxu0
      %v908 = vpop.f32.mrb[0].mxu0
      %v909 = vadd.f32 %v748, %v908
      %v910 = vpop.f32.mrb[0].mxu0
      %911 = vmatprep.mubr.bf16.mxu0 0
      %912 = vmatmul.mubr.bf16.gmra.mrb[0].mxu0 %v651
      %v913 = vpop.f32.mrb[0].mxu0
      %v914 = vadd.f32 %v753, %v913
      %v915 = vpop.f32.mrb[0].mxu0
      %v916 = vpop.f32.mrb[0].mxu0
      %v917 = vadd.f32 %v756, %v916
      %v918 = vpop.f32.mrb[0].mxu0
      %919 = vmatprep.mubr.bf16.mxu0 0
      %920 = vmatmul.mubr.bf16.gmra.mrb[0].mxu0 %v654
      %v921 = vpop.f32.mrb[0].mxu0
      %v922 = vadd.f32 %v761, %v921
      %v923 = vpop.f32.mrb[0].mxu0
      %v924 = vpop.f32.mrb[0].mxu0
      %v925 = vadd.f32 %v764, %v924
      %v926 = vpop.f32.mrb[0].mxu0
      %927 = vmatprep.mubr.bf16.mxu0 0
      %928 = vmatmul.mubr.bf16.gmra.mrb[0].mxu0 %v657
      %v929 = vpop.f32.mrb[0].mxu0
      %v930 = vadd.f32 %v769, %v929
      %v931 = vpop.f32.mrb[0].mxu0
      %v932 = vpop.f32.mrb[0].mxu0
      %v933 = vadd.f32 %v772, %v932
      %v934 = vpop.f32.mrb[0].mxu0
      %935 = vmatprep.mubr.bf16.mxu0 0
      %936 = vmatmul.mubr.bf16.gmra.mrb[0].mxu0 %v660
      %v937 = vpop.f32.mrb[0].mxu0
      %v938 = vadd.f32 %v777, %v937
      %v939 = vpop.f32.mrb[0].mxu0
      %v940 = vpop.f32.mrb[0].mxu0
      %v941 = vadd.f32 %v780, %v940
      %v942 = vpop.f32.mrb[0].mxu0
      %943 = vmatprep.mubr.bf16.mxu0 0
      %944 = vmatmul.mubr.bf16.gmra.mrb[0].mxu0 %v663
      %v945 = vpop.f32.mrb[0].mxu0
      %v946 = vadd.f32 %v785, %v945
      %v947 = vpop.f32.mrb[0].mxu0
      %v948 = vpop.f32.mrb[0].mxu0
      %v949 = vadd.f32 %v788, %v948
      %v950 = vpop.f32.mrb[0].mxu0
      %951 = vmatprep.mubr.bf16.mxu0 0
      %952 = vmatmul.mubr.bf16.gmra.mrb[0].mxu0 %v666
      %v953 = vpop.f32.mrb[0].mxu0
      %v954 = vadd.f32 %v793, %v953
      %v955 = vpop.f32.mrb[0].mxu0
      %v956 = vpop.f32.mrb[0].mxu0
      %v957 = vadd.f32 %v796, %v956
      %v958 = vpop.f32.mrb[0].mxu0
      %959 = vmatprep.mubr.bf16.mxu0 0
      %960 = vmatmul.mubr.bf16.gmra.mrb[0].mxu0 %v669
      %v961 = vpop.f32.mrb[0].mxu0
      %v962 = vadd.f32 %v801, %v961
      %v963 = vpop.f32.mrb[0].mxu0
      %v964 = vpop.f32.mrb[0].mxu0
      %v965 = vadd.f32 %v804, %v964
      %v966 = vpop.f32.mrb[0].mxu0
      %967 = vmatprep.mubr.bf16.mxu0 0
      %968 = vmatmul.mubr.bf16.gmra.mrb[0].mxu0 %v672
      %v969 = vpop.f32.mrb[0].mxu0
      %v970 = vadd.f32 %v809, %v969
      %v971 = vpop.f32.mrb[0].mxu0
      %v972 = vpop.f32.mrb[0].mxu0
      %v973 = vadd.f32 %v812, %v972
      %v974 = vpop.f32.mrb[0].mxu0
      %975 = vmatprep.mubr.bf16.mxu0 0
      %976 = vmatmul.mubr.bf16.gmra.mrb[0].mxu0 %v675
      %v977 = vpop.f32.mrb[0].mxu0
      %v978 = vadd.f32 %v817, %v977
      %v979 = vpop.f32.mrb[0].mxu0
      %v980 = vpop.f32.mrb[0].mxu0
      %v981 = vadd.f32 %v820, %v980
      %v982 = vpop.f32.mrb[0].mxu0
      %983 = vmatprep.mubr.bf16.mxu0 0
      %984 = vmatmul.mubr.bf16.gmra.mrb[0].mxu0 %v678
      %v985 = vpop.f32.mrb[0].mxu0
      %v986 = vadd.f32 %v825, %v985
      %v987 = vpop.f32.mrb[0].mxu0
      %v988 = vpop.f32.mrb[0].mxu0
      %v989 = vadd.f32 %v828, %v988
      %v990 = vpop.f32.mrb[0].mxu0
      %991 = vmatprep.mubr.bf16.mxu0 0
      %992 = vmatmul.mubr.bf16.gmra.mrb[0].mxu0 %v681
      %v993 = vpop.f32.mrb[0].mxu0
      %v994 = vadd.f32 %v833, %v993
      %v995 = vpop.f32.mrb[0].mxu0
      %v996 = vpop.f32.mrb[0].mxu0
      %v997 = vadd.f32 %v836, %v996
      %v998 = vpop.f32.mrb[0].mxu0
      %999 = vmatprep.mubr.bf16.mxu0 0
      %1000 = vmatmul.mubr.bf16.gmra.mrb[0].mxu0 %v684
      %v1001 = vpop.f32.mrb[0].mxu0
      %v1002 = vadd.f32 %v841, %v1001
      %v1003 = vpop.f32.mrb[0].mxu0
      %v1004 = vpop.f32.mrb[0].mxu0
      %v1005 = vadd.f32 %v844, %v1004
      %v1006 = vpop.f32.mrb[0].mxu0
      %1007 = vdwg.mxu0
      %1008 = vst.msk [vmem:[%s182] sm:$0xff] %vm637, %v882
      %1009 = vst.msk [vmem:[%s182 + $0x8] sm:$0xff] %vm637, %v885
      %1010 = vst.msk [vmem:[%s182 + $0x10] sm:$0xff] %vm637, %v890
      %1011 = vst.msk [vmem:[%s182 + $0x18] sm:$0xff] %vm637, %v893
      %1012 = vst.msk [vmem:[%s182 + $0x20] sm:$0xff] %vm637, %v898
      %1013 = vst.msk [vmem:[%s182 + $0x28] sm:$0xff] %vm637, %v901
      %1014 = vst.msk [vmem:[%s182 + $0x30] sm:$0xff] %vm637, %v906
      %1015 = vst.msk [vmem:[%s182 + $0x38] sm:$0xff] %vm637, %v909
      %1016 = vst.msk [vmem:[%s182 + $0x40] sm:$0xff] %vm637, %v914
      %1017 = vst.msk [vmem:[%s182 + $0x48] sm:$0xff] %vm637, %v917
      %1018 = vst.msk [vmem:[%s182 + $0x50] sm:$0xff] %vm637, %v922
      %1019 = vst.msk [vmem:[%s182 + $0x58] sm:$0xff] %vm637, %v925
      %1020 = vst.msk [vmem:[%s182 + $0x60] sm:$0xff] %vm637, %v930
      %1021 = vst.msk [vmem:[%s182 + $0x68] sm:$0xff] %vm637, %v933
      %1022 = vst.msk [vmem:[%s182 + $0x70] sm:$0xff] %vm637, %v938
      %1023 = vst.msk [vmem:[%s182 + $0x78] sm:$0xff] %vm637, %v941
      %1024 = vst.msk [vmem:[%s182 + $0x80] sm:$0xff] %vm637, %v946
      %1025 = vst.msk [vmem:[%s182 + $0x88] sm:$0xff] %vm637, %v949
      %1026 = vst.msk [vmem:[%s182 + $0x90] sm:$0xff] %vm637, %v954
      %1027 = vst.msk [vmem:[%s182 + $0x98] sm:$0xff] %vm637, %v957
      %1028 = vst.msk [vmem:[%s182 + $0xa0] sm:$0xff] %vm637, %v962
      %1029 = vst.msk [vmem:[%s182 + $0xa8] sm:$0xff] %vm637, %v965
      %1030 = vst.msk [vmem:[%s182 + $0xb0] sm:$0xff] %vm637, %v970
      %1031 = vst.msk [vmem:[%s182 + $0xb8] sm:$0xff] %vm637, %v973
      %1032 = vst.msk [vmem:[%s182 + $0xc0] sm:$0xff] %vm637, %v978
      %1033 = vst.msk [vmem:[%s182 + $0xc8] sm:$0xff] %vm637, %v981
      %1034 = vst.msk [vmem:[%s182 + $0xd0] sm:$0xff] %vm637, %v986
      %1035 = vst.msk [vmem:[%s182 + $0xd8] sm:$0xff] %vm637, %v989
      %1036 = vst.msk [vmem:[%s182 + $0xe0] sm:$0xff] %vm637, %v994
      %1037 = vst.msk [vmem:[%s182 + $0xe8] sm:$0xff] %vm637, %v997
      %1038 = vst.msk [vmem:[%s182 + $0xf0] sm:$0xff] %vm637, %v1002
      %1039 = vst.msk [vmem:[%s182 + $0xf8] sm:$0xff] %vm637, %v1005
      %v1040 = vsel %vm637, %v882, 0.0
      %v1041 = vsel %vm637, %v885, 0.0
      %v1042 = vadd.f32 %v1040, %v1041
      %v1043 = vsel %vm637, %v890, 0.0
      %v1044 = vadd.f32 %v1042, %v1043
      %v1045 = vsel %vm637, %v893, 0.0
      %v1046 = vadd.f32 %v1044, %v1045
      %v1047 = vsel %vm637, %v898, 0.0
      %v1048 = vadd.f32 %v1046, %v1047
      %v1049 = vsel %vm637, %v901, 0.0
      %v1050 = vadd.f32 %v1048, %v1049
      %v1051 = vsel %vm637, %v906, 0.0
      %v1052 = vadd.f32 %v1050, %v1051
      %v1053 = vsel %vm637, %v909, 0.0
      %v1054 = vadd.f32 %v1052, %v1053
      %v1055 = vsel %vm637, %v914, 0.0
      %v1056 = vadd.f32 %v1054, %v1055
      %v1057 = vsel %vm637, %v917, 0.0
      %v1058 = vadd.f32 %v1056, %v1057
      %v1059 = vsel %vm637, %v922, 0.0
      %v1060 = vadd.f32 %v1058, %v1059
      %v1061 = vsel %vm637, %v925, 0.0
      %v1062 = vadd.f32 %v1060, %v1061
      %v1063 = vsel %vm637, %v930, 0.0
      %v1064 = vadd.f32 %v1062, %v1063
      %v1065 = vsel %vm637, %v933, 0.0
      %v1066 = vadd.f32 %v1064, %v1065
      %v1067 = vsel %vm637, %v938, 0.0
      %v1068 = vadd.f32 %v1066, %v1067
      %v1069 = vsel %vm637, %v941, 0.0
      %v1070 = vadd.f32 %v1068, %v1069
      %v1071 = vsel %vm637, %v946, 0.0
      %v1072 = vadd.f32 %v1070, %v1071
      %v1073 = vsel %vm637, %v949, 0.0
      %v1074 = vadd.f32 %v1072, %v1073
      %v1075 = vsel %vm637, %v954, 0.0
      %v1076 = vadd.f32 %v1074, %v1075
      %v1077 = vsel %vm637, %v957, 0.0
      %v1078 = vadd.f32 %v1076, %v1077
      %v1079 = vsel %vm637, %v962, 0.0
      %v1080 = vadd.f32 %v1078, %v1079
      %v1081 = vsel %vm637, %v965, 0.0
      %v1082 = vadd.f32 %v1080, %v1081
      %v1083 = vsel %vm637, %v970, 0.0
      %v1084 = vadd.f32 %v1082, %v1083
      %v1085 = vsel %vm637, %v973, 0.0
      %v1086 = vadd.f32 %v1084, %v1085
      %v1087 = vsel %vm637, %v978, 0.0
      %v1088 = vadd.f32 %v1086, %v1087
      %v1089 = vsel %vm637, %v981, 0.0
      %v1090 = vadd.f32 %v1088, %v1089
      %v1091 = vsel %vm637, %v986, 0.0
      %v1092 = vadd.f32 %v1090, %v1091
      %v1093 = vsel %vm637, %v989, 0.0
      %v1094 = vadd.f32 %v1092, %v1093
      %v1095 = vsel %vm637, %v994, 0.0
      %v1096 = vadd.f32 %v1094, %v1095
      %v1097 = vsel %vm637, %v997, 0.0
      %v1098 = vadd.f32 %v1096, %v1097
      %v1099 = vsel %vm637, %v1002, 0.0
      %v1100 = vadd.f32 %v1098, %v1099
      %v1101 = vsel %vm637, %v1005, 0.0
      %v1102 = vadd.f32 %v1100, %v1101
      %v1103 = vrot.slane %v1102, 4
      %v1104 = vadd.f32 %v1102, %v1103
      %v1105 = vrot.slane %v1104, 2
      %v1106 = vadd.f32 %v1104, %v1105
      %v1107 = vrot.slane %v1106, 1
      %v1108 = vadd.f32 %v1106, %v1107
      %v1109 = vmul.f32 %v882, %v882
      %v1110 = vmul.f32 %v885, %v885
      %v1111 = vmul.f32 %v890, %v890
      %v1112 = vmul.f32 %v893, %v893
      %v1113 = vmul.f32 %v898, %v898
      %v1114 = vmul.f32 %v901, %v901
      %v1115 = vmul.f32 %v906, %v906
      %v1116 = vmul.f32 %v909, %v909
      %v1117 = vmul.f32 %v914, %v914
      %v1118 = vmul.f32 %v917, %v917
      %v1119 = vmul.f32 %v922, %v922
      %v1120 = vmul.f32 %v925, %v925
      %v1121 = vmul.f32 %v930, %v930
      %v1122 = vmul.f32 %v933, %v933
      %v1123 = vmul.f32 %v938, %v938
      %v1124 = vmul.f32 %v941, %v941
      %v1125 = vmul.f32 %v946, %v946
      %v1126 = vmul.f32 %v949, %v949
      %v1127 = vmul.f32 %v954, %v954
      %v1128 = vmul.f32 %v957, %v957
      %v1129 = vmul.f32 %v962, %v962
      %v1130 = vmul.f32 %v965, %v965
      %v1131 = vmul.f32 %v970, %v970
      %v1132 = vmul.f32 %v973, %v973
      %v1133 = vmul.f32 %v978, %v978
      %v1134 = vmul.f32 %v981, %v981
      %v1135 = vmul.f32 %v986, %v986
      %v1136 = vmul.f32 %v989, %v989
      %v1137 = vmul.f32 %v994, %v994
      %v1138 = vmul.f32 %v997, %v997
      %v1139 = vmul.f32 %v1002, %v1002
      %v1140 = vmul.f32 %v1005, %v1005
      %v1141 = vsel %vm637, %v1109, 0.0
      %v1142 = vsel %vm637, %v1110, 0.0
      %v1143 = vadd.f32 %v1141, %v1142
      %v1144 = vsel %vm637, %v1111, 0.0
      %v1145 = vadd.f32 %v1143, %v1144
      %v1146 = vsel %vm637, %v1112, 0.0
      %v1147 = vadd.f32 %v1145, %v1146
      %v1148 = vsel %vm637, %v1113, 0.0
      %v1149 = vadd.f32 %v1147, %v1148
      %v1150 = vsel %vm637, %v1114, 0.0
      %v1151 = vadd.f32 %v1149, %v1150
      %v1152 = vsel %vm637, %v1115, 0.0
      %v1153 = vadd.f32 %v1151, %v1152
      %v1154 = vsel %vm637, %v1116, 0.0
      %v1155 = vadd.f32 %v1153, %v1154
      %v1156 = vsel %vm637, %v1117, 0.0
      %v1157 = vadd.f32 %v1155, %v1156
      %v1158 = vsel %vm637, %v1118, 0.0
      %v1159 = vadd.f32 %v1157, %v1158
      %v1160 = vsel %vm637, %v1119, 0.0
      %v1161 = vadd.f32 %v1159, %v1160
      %v1162 = vsel %vm637, %v1120, 0.0
      %v1163 = vadd.f32 %v1161, %v1162
      %v1164 = vsel %vm637, %v1121, 0.0
      %v1165 = vadd.f32 %v1163, %v1164
      %v1166 = vsel %vm637, %v1122, 0.0
      %v1167 = vadd.f32 %v1165, %v1166
      %v1168 = vsel %vm637, %v1123, 0.0
      %v1169 = vadd.f32 %v1167, %v1168
      %v1170 = vsel %vm637, %v1124, 0.0
      %v1171 = vadd.f32 %v1169, %v1170
      %v1172 = vsel %vm637, %v1125, 0.0
      %v1173 = vadd.f32 %v1171, %v1172
      %v1174 = vsel %vm637, %v1126, 0.0
      %v1175 = vadd.f32 %v1173, %v1174
      %v1176 = vsel %vm637, %v1127, 0.0
      %v1177 = vadd.f32 %v1175, %v1176
      %v1178 = vsel %vm637, %v1128, 0.0
      %v1179 = vadd.f32 %v1177, %v1178
      %v1180 = vsel %vm637, %v1129, 0.0
      %v1181 = vadd.f32 %v1179, %v1180
      %v1182 = vsel %vm637, %v1130, 0.0
      %v1183 = vadd.f32 %v1181, %v1182
      %v1184 = vsel %vm637, %v1131, 0.0
      %v1185 = vadd.f32 %v1183, %v1184
      %v1186 = vsel %vm637, %v1132, 0.0
      %v1187 = vadd.f32 %v1185, %v1186
      %v1188 = vsel %vm637, %v1133, 0.0
      %v1189 = vadd.f32 %v1187, %v1188
      %v1190 = vsel %vm637, %v1134, 0.0
      %v1191 = vadd.f32 %v1189, %v1190
      %v1192 = vsel %vm637, %v1135, 0.0
      %v1193 = vadd.f32 %v1191, %v1192
      %v1194 = vsel %vm637, %v1136, 0.0
      %v1195 = vadd.f32 %v1193, %v1194
      %v1196 = vsel %vm637, %v1137, 0.0
      %v1197 = vadd.f32 %v1195, %v1196
      %v1198 = vsel %vm637, %v1138, 0.0
      %v1199 = vadd.f32 %v1197, %v1198
      %v1200 = vsel %vm637, %v1139, 0.0
      %v1201 = vadd.f32 %v1199, %v1200
      %v1202 = vsel %vm637, %v1140, 0.0
      %v1203 = vadd.f32 %v1201, %v1202
      %v1204 = vrot.slane %v1203, 4
      %v1205 = vadd.f32 %v1203, %v1204
      %v1206 = vrot.slane %v1205, 2
      %v1207 = vadd.f32 %v1205, %v1206
      %v1208 = vrot.slane %v1207, 1
      %v1209 = vadd.f32 %v1207, %v1208
      %vm1210 = vcmask 1040384
      %v1211 = vsel %vm1210, %v1108, %v1209
      %vm1212 = vcmask 254976
      %1213 = vst.msk [vmem:[%s187] sm:$0x3] %vm1212, %v1211
      %s1214 = smul.u32 32, %s15
      %p1215 = scmp.lt.s32.totalorder %s1214, 63
      %s1216 = scalar_select %p1215, %s1214, 63
      %s1217 = smul.addr %s1216, 8
      %s1218 = scalar_lea.vmem %s2, %s1217
      %p1219 = scmp.lt.s32.totalorder %s15, 1
      %s1220 = scalar_select %p1219, %s15, 1
      %s1221 = smul.addr %s1220, 2
      %s1222 = scalar_lea.vmem %s3, %s1221
      // Predicated region
      $region29: #{_lambda_.28} parent=27 // pred_check
        %p1223 = pneg %p80
      $region30: #{_lambda_.28} parent=27 // pred_check_branch
        %1225 = sbr.rel (%p1223) target = $region32
      $region31: #{_lambda_.28} parent=27 // pred_region
        %s1226 = smul.u32 32, %s15
      $region32: #{_lambda_.28} parent=27 // pred_fallthru
        _
      // Predicated region
      $region33: #{_lambda_.28} parent=27 // pred_check
        %p1227 = pneg %p106
      $region34: #{_lambda_.28} parent=27 // pred_check_branch
        %1229 = sbr.rel (%p1227) target = $region36
      $region35: #{_lambda_.28} parent=27 // pred_region
        _
      $region36: #{_lambda_.28} parent=27 // pred_fallthru
        _
    $region28: #{_lambda_.28} parent=5 // pred_fallthru
      _
    %p1230 = scmp.le.s32.totalorder 2, %s10
    // Predicated region
    $region37: #{_lambda_.28} parent=5 // pred_check
      %p1231 = pneg %p1230
    $region38: #{_lambda_.28} parent=5 // pred_check_branch
      %1233 = sbr.rel (%p1231) target = $region40
    $region39: #{_lambda_.28} parent=5 // pred_region
      %s1234 = ssub.s32 %s10, 2
      // Predicated region
      $region41: #{_lambda_.28} parent=39 // pred_check
        %p1235 = pneg %p86
      $region42: #{_lambda_.28} parent=39 // pred_check_branch
        %1237 = sbr.rel (%p1235) target = $region44
      $region43: #{_lambda_.28} parent=39 // pred_region
        %s1238 = smul.u32 32, %s16
        %p1239 = scmp.lt.s32.totalorder %s1238, 63
        %s1240 = scalar_select %p1239, %s1238, 63
        %s1241 = smul.addr %s1240, 8
        %s1242 = scalar_lea.vmem %s2, %s1241
      $region44: #{_lambda_.28} parent=39 // pred_fallthru
        _
      // Predicated region
      $region45: #{_lambda_.28} parent=39 // pred_check
        %p1243 = pneg %p112
      $region46: #{_lambda_.28} parent=39 // pred_check_branch
        %1245 = sbr.rel (%p1243) target = $region48
      $region47: #{_lambda_.28} parent=39 // pred_region
        %p1246 = scmp.lt.s32.totalorder %s16, 1
        %s1247 = scalar_select %p1246, %s16, 1
        %s1248 = smul.addr %s1247, 2
        %s1249 = scalar_lea.vmem %s3, %s1248
      $region48: #{_lambda_.28} parent=39 // pred_fallthru
        _
    $region40: #{_lambda_.28} parent=5 // pred_fallthru
      _
  $region6: #{_lambda_.28} parent=0 // loop_footer
    %s14 = sadd.s32 1, %s10
  $region7: #{_lambda_.28} parent=0 // loop_footer_branch
    %9 = sbr.rel target = $region3
  $region8: #{_lambda_.28} parent=0 // loop_exit
    _

// kernel: _lambda_.31
$region0: #{_lambda_.31}
  #allocation0 [shape = 'u32[]', space=smem, size = 0x4, offset = 0x4, fixed_abs, tag = 'smem constant byte address 0x4 - core index']
  #allocation1 [shape = 'u32[144,128]{1,0:T(1,128)}', space=vmem, size = 0x12000, scoped, tag = 'internal scratch']
  %s0 = inlined_call_operand.vmem [shape: f32[128,64], index: 0, kind: input, shape index: {}]
  %s1 = inlined_call_operand.vmem [shape: f32[1,64], index: 1, kind: input, shape index: {}]
  %s2 = inlined_call_operand.vmem [shape: f32[1,64], index: 2, kind: input, shape index: {}]
  %s3 = inlined_call_operand.vmem [shape: f32[128,64], index: 3, kind: output, shape index: {}]
  %s4 = sld [smem:[#allocation0]]
  $region22: #{_lambda_.31} parent=0
    _
  %s6 = ssub.s32 1, %s4
  %s7 = scalar_select 0, %s6, %s4
  // Predicated region
  $region2: #{_lambda_.31} parent=0 // pred_check
    _
  $region3: #{_lambda_.31} parent=0 // pred_check_branch
    %9 = sbr.rel (0) target = $region5
  $region4: #{_lambda_.31} parent=0 // pred_region
    _
  $region5: #{_lambda_.31} parent=0 // pred_fallthru
    _
  // Predicated region
  $region6: #{_lambda_.31} parent=0 // pred_check
    _
  $region7: #{_lambda_.31} parent=0 // pred_check_branch
    %11 = sbr.rel (0) target = $region9
  $region8: #{_lambda_.31} parent=0 // pred_region
    _
  $region9: #{_lambda_.31} parent=0 // pred_fallthru
    _
  // Predicated region
  $region10: #{_lambda_.31} parent=0 // pred_check
    _
  $region11: #{_lambda_.31} parent=0 // pred_check_branch
    %13 = sbr.rel (0) target = $region13
  $region12: #{_lambda_.31} parent=0 // pred_region
    _
  $region13: #{_lambda_.31} parent=0 // pred_fallthru
    _
  %v14 = vld [vmem:[%s0] sm:$0xff]
  %v15 = vld [vmem:[%s0 + $0x8] sm:$0xff]
  %v16 = vld [vmem:[%s0 + $0x10] sm:$0xff]
  %v17 = vld [vmem:[%s0 + $0x18] sm:$0xff]
  %v18 = vld [vmem:[%s0 + $0x20] sm:$0xff]
  %v19 = vld [vmem:[%s0 + $0x28] sm:$0xff]
  %v20 = vld [vmem:[%s0 + $0x30] sm:$0xff]
  %v21 = vld [vmem:[%s0 + $0x38] sm:$0xff]
  %v22 = vld [vmem:[%s0 + $0x40] sm:$0xff]
  %v23 = vld [vmem:[%s0 + $0x48] sm:$0xff]
  %v24 = vld [vmem:[%s0 + $0x50] sm:$0xff]
  %v25 = vld [vmem:[%s0 + $0x58] sm:$0xff]
  %v26 = vld [vmem:[%s0 + $0x60] sm:$0xff]
  %v27 = vld [vmem:[%s0 + $0x68] sm:$0xff]
  %v28 = vld [vmem:[%s0 + $0x70] sm:$0xff]
  %v29 = vld [vmem:[%s0 + $0x78] sm:$0xff]
  %v30 = vld [vmem:[%s1] sm:$0x1]
  %v32 = vlaneseq
  %v33 = vshrl.u32 %v32, 7
  %v34 = vsub.s32 0, %v33
  %v35 = vrot.slane %v30, %v34
  %v37 = vmul.f32 %v14, %v35
  %v38 = vmul.f32 %v15, %v35
  %v39 = vmul.f32 %v16, %v35
  %v40 = vmul.f32 %v17, %v35
  %v41 = vmul.f32 %v18, %v35
  %v42 = vmul.f32 %v19, %v35
  %v43 = vmul.f32 %v20, %v35
  %v44 = vmul.f32 %v21, %v35
  %v45 = vmul.f32 %v22, %v35
  %v46 = vmul.f32 %v23, %v35
  %v47 = vmul.f32 %v24, %v35
  %v48 = vmul.f32 %v25, %v35
  %v49 = vmul.f32 %v26, %v35
  %v50 = vmul.f32 %v27, %v35
  %v51 = vmul.f32 %v28, %v35
  %v52 = vmul.f32 %v29, %v35
  %v53 = vld [vmem:[%s2] sm:$0x1]
  %v55 = vlaneseq
  %v56 = vshrl.u32 %v55, 7
  %v57 = vsub.s32 0, %v56
  %v58 = vrot.slane %v53, %v57
  %v60 = vadd.f32 %v37, %v58
  %v61 = vadd.f32 %v38, %v58
  %v62 = vadd.f32 %v39, %v58
  %v63 = vadd.f32 %v40, %v58
  %v64 = vadd.f32 %v41, %v58
  %v65 = vadd.f32 %v42, %v58
  %v66 = vadd.f32 %v43, %v58
  %v67 = vadd.f32 %v44, %v58
  %v68 = vadd.f32 %v45, %v58
  %v69 = vadd.f32 %v46, %v58
  %v70 = vadd.f32 %v47, %v58
  %v71 = vadd.f32 %v48, %v58
  %v72 = vadd.f32 %v49, %v58
  %v73 = vadd.f32 %v50, %v58
  %v74 = vadd.f32 %v51, %v58
  %v75 = vadd.f32 %v52, %v58
  %v76 = vmax.f32 %v60, 0.0
  %v77 = vmax.f32 %v61, 0.0
  %v78 = vmax.f32 %v62, 0.0
  %v79 = vmax.f32 %v63, 0.0
  %v80 = vmax.f32 %v64, 0.0
  %v81 = vmax.f32 %v65, 0.0
  %v82 = vmax.f32 %v66, 0.0
  %v83 = vmax.f32 %v67, 0.0
  %v84 = vmax.f32 %v68, 0.0
  %v85 = vmax.f32 %v69, 0.0
  %v86 = vmax.f32 %v70, 0.0
  %v87 = vmax.f32 %v71, 0.0
  %v88 = vmax.f32 %v72, 0.0
  %v89 = vmax.f32 %v73, 0.0
  %v90 = vmax.f32 %v74, 0.0
  %v91 = vmax.f32 %v75, 0.0
  %vm92 = vcmask 523264
  %93 = vst.msk [vmem:[%s3] sm:$0xff] %vm92, %v76
  %94 = vst.msk [vmem:[%s3 + $0x8] sm:$0xff] %vm92, %v77
  %95 = vst.msk [vmem:[%s3 + $0x10] sm:$0xff] %vm92, %v78
  %96 = vst.msk [vmem:[%s3 + $0x18] sm:$0xff] %vm92, %v79
  %97 = vst.msk [vmem:[%s3 + $0x20] sm:$0xff] %vm92, %v80
  %98 = vst.msk [vmem:[%s3 + $0x28] sm:$0xff] %vm92, %v81
  %99 = vst.msk [vmem:[%s3 + $0x30] sm:$0xff] %vm92, %v82
  %100 = vst.msk [vmem:[%s3 + $0x38] sm:$0xff] %vm92, %v83
  %101 = vst.msk [vmem:[%s3 + $0x40] sm:$0xff] %vm92, %v84
  %102 = vst.msk [vmem:[%s3 + $0x48] sm:$0xff] %vm92, %v85
  %103 = vst.msk [vmem:[%s3 + $0x50] sm:$0xff] %vm92, %v86
  %104 = vst.msk [vmem:[%s3 + $0x58] sm:$0xff] %vm92, %v87
  %105 = vst.msk [vmem:[%s3 + $0x60] sm:$0xff] %vm92, %v88
  %106 = vst.msk [vmem:[%s3 + $0x68] sm:$0xff] %vm92, %v89
  %107 = vst.msk [vmem:[%s3 + $0x70] sm:$0xff] %vm92, %v90
  %108 = vst.msk [vmem:[%s3 + $0x78] sm:$0xff] %vm92, %v91
  // Predicated region
  $region14: #{_lambda_.31} parent=0 // pred_check
    _
  $region15: #{_lambda_.31} parent=0 // pred_check_branch
    %110 = sbr.rel (0) target = $region17
  $region16: #{_lambda_.31} parent=0 // pred_region
    _
  $region17: #{_lambda_.31} parent=0 // pred_fallthru
    _
  // Predicated region
  $region18: #{_lambda_.31} parent=0 // pred_check
    _
  $region19: #{_lambda_.31} parent=0 // pred_check_branch
    %112 = sbr.rel (0) target = $region21
  $region20: #{_lambda_.31} parent=0 // pred_region
    _
  $region21: #{_lambda_.31} parent=0 // pred_fallthru
    _

// kernel: _lambda_.30
$region0: #{_lambda_.30}
  #allocation0 [shape = 'u32[]', space=smem, size = 0x4, offset = 0x4, fixed_abs, tag = 'smem constant byte address 0x4 - core index']
  #allocation1 [shape = 'u32[144,128]{1,0:T(1,128)}', space=vmem, size = 0x12000, scoped, tag = 'internal scratch']
  %s0 = inlined_call_operand.vmem [shape: bf16[128,288], index: 0, kind: input, shape index: {}]
  %s1 = inlined_call_operand.vmem [shape: bf16[288,64], index: 1, kind: input, shape index: {}]
  %s2 = inlined_call_operand.vmem [shape: f32[128,64], index: 2, kind: output, shape index: {0}]
  %s3 = inlined_call_operand.vmem [shape: f32[1,2,64], index: 3, kind: output, shape index: {1}]
  %4 = xla_tuple %s2, %s3
  %s5 = sld [smem:[#allocation0]]
  $region26: #{_lambda_.30} parent=0
    _
  %s7 = ssub.s32 1, %s5
  %s8 = scalar_select 0, %s7, %s5
  // Predicated region
  $region2: #{_lambda_.30} parent=0 // pred_check
    _
  $region3: #{_lambda_.30} parent=0 // pred_check_branch
    %10 = sbr.rel (0) target = $region5
  $region4: #{_lambda_.30} parent=0 // pred_region
    _
  $region5: #{_lambda_.30} parent=0 // pred_fallthru
    _
  // Predicated region
  $region6: #{_lambda_.30} parent=0 // pred_check
    _
  $region7: #{_lambda_.30} parent=0 // pred_check_branch
    %12 = sbr.rel (0) target = $region9
  $region8: #{_lambda_.30} parent=0 // pred_region
    _
  $region9: #{_lambda_.30} parent=0 // pred_fallthru
    _
  %v14 = vld [vmem:[%s0] sm:$0xff]
  %v15 = vld [vmem:[%s0 + $0x8] sm:$0xf]
  %v16 = vld [vmem:[%s0 + $0xc] sm:$0xff]
  %v17 = vld [vmem:[%s0 + $0x14] sm:$0xf]
  %v18 = vld [vmem:[%s0 + $0x18] sm:$0xff]
  %v19 = vld [vmem:[%s0 + $0x20] sm:$0xf]
  %v20 = vld [vmem:[%s0 + $0x24] sm:$0xff]
  %v21 = vld [vmem:[%s0 + $0x2c] sm:$0xf]
  %v22 = vld [vmem:[%s0 + $0x30] sm:$0xff]
  %v23 = vld [vmem:[%s0 + $0x38] sm:$0xf]
  %v24 = vld [vmem:[%s0 + $0x3c] sm:$0xff]
  %v25 = vld [vmem:[%s0 + $0x44] sm:$0xf]
  %v26 = vld [vmem:[%s0 + $0x48] sm:$0xff]
  %v27 = vld [vmem:[%s0 + $0x50] sm:$0xf]
  %v28 = vld [vmem:[%s0 + $0x54] sm:$0xff]
  %v29 = vld [vmem:[%s0 + $0x5c] sm:$0xf]
  %v30 = vld [vmem:[%s0 + $0x60] sm:$0xff]
  %v31 = vld [vmem:[%s0 + $0x68] sm:$0xf]
  %v32 = vld [vmem:[%s0 + $0x6c] sm:$0xff]
  %v33 = vld [vmem:[%s0 + $0x74] sm:$0xf]
  %v34 = vld [vmem:[%s0 + $0x78] sm:$0xff]
  %v35 = vld [vmem:[%s0 + $0x80] sm:$0xf]
  %v36 = vld [vmem:[%s0 + $0x84] sm:$0xff]
  %v37 = vld [vmem:[%s0 + $0x8c] sm:$0xf]
  %v38 = vld [vmem:[%s0 + $0x90] sm:$0xff]
  %v39 = vld [vmem:[%s0 + $0x98] sm:$0xf]
  %v40 = vld [vmem:[%s0 + $0x9c] sm:$0xff]
  %v41 = vld [vmem:[%s0 + $0xa4] sm:$0xf]
  %v42 = vld [vmem:[%s0 + $0xa8] sm:$0xff]
  %v43 = vld [vmem:[%s0 + $0xb0] sm:$0xf]
  %v44 = vld [vmem:[%s0 + $0xb4] sm:$0xff]
  %v45 = vld [vmem:[%s0 + $0xbc] sm:$0xf]
  %v46 = vld [vmem:[%s1] sm:$0xf]
  %v47 = vld [vmem:[%s1 + $0x4] sm:$0xf]
  %v48 = vld [vmem:[%s1 + $0x8] sm:$0xf]
  %v49 = vld [vmem:[%s1 + $0xc] sm:$0xf]
  %v50 = vld [vmem:[%s1 + $0x10] sm:$0xf]
  %v51 = vld [vmem:[%s1 + $0x14] sm:$0xf]
  %v52 = vld [vmem:[%s1 + $0x18] sm:$0xf]
  %v53 = vld [vmem:[%s1 + $0x1c] sm:$0xf]
  %v54 = vld [vmem:[%s1 + $0x20] sm:$0xf]
  %v55 = vld [vmem:[%s1 + $0x24] sm:$0xf]
  %v56 = vld [vmem:[%s1 + $0x28] sm:$0xf]
  %v57 = vld [vmem:[%s1 + $0x2c] sm:$0xf]
  %v58 = vld [vmem:[%s1 + $0x30] sm:$0xf]
  %v59 = vld [vmem:[%s1 + $0x34] sm:$0xf]
  %v60 = vld [vmem:[%s1 + $0x38] sm:$0xf]
  %v61 = vld [vmem:[%s1 + $0x3c] sm:$0xf]
  %v62 = vld [vmem:[%s1 + $0x40] sm:$0xf]
  %v63 = vld [vmem:[%s1 + $0x44] sm:$0xf]
  %v64 = vld [vmem:[%s1 + $0x48] sm:$0xf]
  %v65 = vld [vmem:[%s1 + $0x4c] sm:$0xf]
  %v66 = vld [vmem:[%s1 + $0x50] sm:$0xf]
  %v67 = vld [vmem:[%s1 + $0x54] sm:$0xf]
  %v68 = vld [vmem:[%s1 + $0x58] sm:$0xf]
  %v69 = vld [vmem:[%s1 + $0x5c] sm:$0xf]
  %v70 = vld [vmem:[%s1 + $0x60] sm:$0xf]
  %v71 = vld [vmem:[%s1 + $0x64] sm:$0xf]
  %v72 = vld [vmem:[%s1 + $0x68] sm:$0xf]
  %v73 = vld [vmem:[%s1 + $0x6c] sm:$0xf]
  %v74 = vld [vmem:[%s1 + $0x70] sm:$0xf]
  %v75 = vld [vmem:[%s1 + $0x74] sm:$0xf]
  %v76 = vld [vmem:[%s1 + $0x78] sm:$0xf]
  %v77 = vld [vmem:[%s1 + $0x7c] sm:$0xf]
  %v78 = vld [vmem:[%s1 + $0x80] sm:$0xf]
  %v79 = vld [vmem:[%s1 + $0x84] sm:$0xf]
  %v80 = vld [vmem:[%s1 + $0x88] sm:$0xf]
  %v81 = vld [vmem:[%s1 + $0x8c] sm:$0xf]
  %v114 = vunpack.c.l.b16 %v14
  %v115 = vunpack.c.h.b16 %v14
  %v116 = vunpack.c.l.b16 %v15
  %v117 = vunpack.c.l.b16 %v16
  %v118 = vunpack.c.h.b16 %v16
  %v119 = vunpack.c.l.b16 %v17
  %v120 = vunpack.c.l.b16 %v18
  %v121 = vunpack.c.h.b16 %v18
  %v122 = vunpack.c.l.b16 %v19
  %v123 = vunpack.c.l.b16 %v20
  %v124 = vunpack.c.h.b16 %v20
  %v125 = vunpack.c.l.b16 %v21
  %v126 = vunpack.c.l.b16 %v22
  %v127 = vunpack.c.h.b16 %v22
  %v128 = vunpack.c.l.b16 %v23
  %v129 = vunpack.c.l.b16 %v24
  %v130 = vunpack.c.h.b16 %v24
  %v131 = vunpack.c.l.b16 %v25
  %v132 = vunpack.c.l.b16 %v26
  %v133 = vunpack.c.h.b16 %v26
  %v134 = vunpack.c.l.b16 %v27
  %v135 = vunpack.c.l.b16 %v28
  %v136 = vunpack.c.h.b16 %v28
  %v137 = vunpack.c.l.b16 %v29
  %v138 = vunpack.c.l.b16 %v30
  %v139 = vunpack.c.h.b16 %v30
  %v140 = vunpack.c.l.b16 %v31
  %v141 = vunpack.c.l.b16 %v32
  %v142 = vunpack.c.h.b16 %v32
  %v143 = vunpack.c.l.b16 %v33
  %v144 = vunpack.c.l.b16 %v34
  %v145 = vunpack.c.h.b16 %v34
  %v146 = vunpack.c.l.b16 %v35
  %v147 = vunpack.c.l.b16 %v36
  %v148 = vunpack.c.h.b16 %v36
  %v149 = vunpack.c.l.b16 %v37
  %v150 = vunpack.c.l.b16 %v38
  %v151 = vunpack.c.h.b16 %v38
  %v152 = vunpack.c.l.b16 %v39
  %v153 = vunpack.c.l.b16 %v40
  %v154 = vunpack.c.h.b16 %v40
  %v155 = vunpack.c.l.b16 %v41
  %v156 = vunpack.c.l.b16 %v42
  %v157 = vunpack.c.h.b16 %v42
  %v158 = vunpack.c.l.b16 %v43
  %v159 = vunpack.c.l.b16 %v44
  %v160 = vunpack.c.h.b16 %v44
  %v161 = vunpack.c.l.b16 %v45
  %v162 = vpack.c.b16 %v117, %v114
  %v163 = vpack.c.b16 %v118, %v115
  %v164 = vpack.c.b16 %v119, %v116
  %v165 = vpack.c.b16 %v123, %v120
  %v166 = vpack.c.b16 %v124, %v121
  %v167 = vpack.c.b16 %v125, %v122
  %v168 = vpack.c.b16 %v129, %v126
  %v169 = vpack.c.b16 %v130, %v127
  %v170 = vpack.c.b16 %v131, %v128
  %v171 = vpack.c.b16 %v135, %v132
  %v172 = vpack.c.b16 %v136, %v133
  %v173 = vpack.c.b16 %v137, %v134
  %v174 = vpack.c.b16 %v141, %v138
  %v175 = vpack.c.b16 %v142, %v139
  %v176 = vpack.c.b16 %v143, %v140
  %v177 = vpack.c.b16 %v147, %v144
  %v178 = vpack.c.b16 %v148, %v145
  %v179 = vpack.c.b16 %v149, %v146
  %v180 = vpack.c.b16 %v153, %v150
  %v181 = vpack.c.b16 %v154, %v151
  %v182 = vpack.c.b16 %v155, %v152
  %v183 = vpack.c.b16 %v159, %v156
  %v184 = vpack.c.b16 %v160, %v157
  %v185 = vpack.c.b16 %v161, %v158
  %v238 = vunpack.c.l.b16 %v46
  %v239 = vunpack.c.l.b16 %v47
  %v240 = vunpack.c.l.b16 %v48
  %v241 = vunpack.c.l.b16 %v49
  %v242 = vunpack.c.l.b16 %v50
  %v243 = vunpack.c.l.b16 %v51
  %v244 = vunpack.c.l.b16 %v52
  %v245 = vunpack.c.l.b16 %v53
  %v246 = vunpack.c.l.b16 %v54
  %v247 = vunpack.c.l.b16 %v55
  %v248 = vunpack.c.l.b16 %v56
  %v249 = vunpack.c.l.b16 %v57
  %v250 = vunpack.c.l.b16 %v58
  %v251 = vunpack.c.l.b16 %v59
  %v252 = vunpack.c.l.b16 %v60
  %v253 = vunpack.c.l.b16 %v61
  %v254 = vunpack.c.l.b16 %v62
  %v255 = vunpack.c.l.b16 %v63
  %v256 = vunpack.c.l.b16 %v64
  %v257 = vunpack.c.l.b16 %v65
  %v258 = vunpack.c.l.b16 %v66
  %v259 = vunpack.c.l.b16 %v67
  %v260 = vunpack.c.l.b16 %v68
  %v261 = vunpack.c.l.b16 %v69
  %v262 = vunpack.c.l.b16 %v70
  %v263 = vunpack.c.l.b16 %v71
  %v264 = vunpack.c.l.b16 %v72
  %v265 = vunpack.c.l.b16 %v73
  %v266 = vunpack.c.l.b16 %v74
  %v267 = vunpack.c.l.b16 %v75
  %v268 = vunpack.c.l.b16 %v76
  %v269 = vunpack.c.l.b16 %v77
  %v270 = vunpack.c.l.b16 %v78
  %v271 = vunpack.c.l.b16 %v79
  %v272 = vunpack.c.l.b16 %v80
  %v273 = vunpack.c.l.b16 %v81
  %v274 = vpack.c.b16 %v239, %v238
  %v275 = vpack.c.b16 %v241, %v240
  %v276 = vpack.c.b16 %v243, %v242
  %v277 = vpack.c.b16 %v245, %v244
  %v278 = vpack.c.b16 %v247, %v246
  %v279 = vpack.c.b16 %v249, %v248
  %v280 = vpack.c.b16 %v251, %v250
  %v281 = vpack.c.b16 %v253, %v252
  %v282 = vpack.c.b16 %v255, %v254
  %v283 = vpack.c.b16 %v257, %v256
  %v284 = vpack.c.b16 %v259, %v258
  %v285 = vpack.c.b16 %v261, %v260
  %v286 = vpack.c.b16 %v263, %v262
  %v287 = vpack.c.b16 %v265, %v264
  %v288 = vpack.c.b16 %v267, %v266
  %v289 = vpack.c.b16 %v269, %v268
  %v290 = vpack.c.b16 %v271, %v270
  %v291 = vpack.c.b16 %v273, %v272
  %vm310 = vcmask 261120
  %v312 = vsel %vm310, %v164, 0
  %v315 = vsel %vm310, %v167, 0
  %v318 = vsel %vm310, %v170, 0
  %v321 = vsel %vm310, %v173, 0
  %v324 = vsel %vm310, %v176, 0
  %v327 = vsel %vm310, %v179, 0
  %v330 = vsel %vm310, %v182, 0
  %v333 = vsel %vm310, %v185, 0
  %335 = vmatprep.subr.bf16.mxu0 0
  %336 = vmatpush1.bf16.msra.mxu0 %v274
  %337 = vmatprep.subr.bf16.mxu0 0
  %338 = vmatpush1.bf16.msra.mxu0 %v275
  %339 = vmatprep.subr.bf16.mxu0 0
  %340 = vmatpush1.bf16.msra.mxu0 %v276
  %341 = vmatprep.subr.bf16.mxu0 0
  %342 = vmatpush1.bf16.msra.mxu0 %v277
  %343 = vmatprep.subr.bf16.mxu0 0
  %344 = vmatpush1.bf16.msra.mxu0 %v278
  %345 = vmatprep.subr.bf16.mxu0 0
  %346 = vmatpush1.bf16.msra.mxu0 %v279
  %347 = vmatprep.subr.bf16.mxu0 0
  %348 = vmatpush1.bf16.msra.mxu0 %v280
  %349 = vmatprep.subr.bf16.mxu0 0
  %350 = vmatpush1.bf16.msra.mxu0 %v281
  %351 = vmatprep.subr.bf16.mxu0 0
  %352 = vmatpush1.bf16.msra.mxu0 %v282
  %353 = vmatprep.subr.bf16.mxu0 0
  %354 = vmatpush1.bf16.msra.mxu0 %v283
  %355 = vmatprep.subr.bf16.mxu0 0
  %356 = vmatpush1.bf16.msra.mxu0 %v284
  %357 = vmatprep.subr.bf16.mxu0 0
  %358 = vmatpush1.bf16.msra.mxu0 %v285
  %359 = vmatprep.subr.bf16.mxu0 0
  %360 = vmatpush1.bf16.msra.mxu0 %v286
  %361 = vmatprep.subr.bf16.mxu0 0
  %362 = vmatpush1.bf16.msra.mxu0 %v287
  %363 = vmatprep.subr.bf16.mxu0 0
  %364 = vmatpush1.bf16.msra.mxu0 %v288
  %365 = vmatprep.subr.bf16.mxu0 0
  %366 = vmatpush1.bf16.msra.mxu0 %v289
  %367 = vmatprep.mubr.bf16.mxu0 %v163
  %368 = vmatmul.mubr.bf16.gmra.mrb[0].mxu0 %v162
  %v369 = vpop.f32.mrb[0].mxu0
  %v370 = vadd.f32 0.0, %v369
  %v371 = vpop.f32.mrb[0].mxu0
  %v372 = vpop.f32.mrb[0].mxu0
  %v373 = vadd.f32 0.0, %v372
  %v374 = vpop.f32.mrb[0].mxu0
  %375 = vmatprep.mubr.bf16.mxu0 %v166
  %376 = vmatmul.mubr.bf16.gmra.mrb[0].mxu0 %v165
  %v377 = vpop.f32.mrb[0].mxu0
  %v378 = vadd.f32 0.0, %v377
  %v379 = vpop.f32.mrb[0].mxu0
  %v380 = vpop.f32.mrb[0].mxu0
  %v381 = vadd.f32 0.0, %v380
  %v382 = vpop.f32.mrb[0].mxu0
  %383 = vmatprep.mubr.bf16.mxu0 %v169
  %384 = vmatmul.mubr.bf16.gmra.mrb[0].mxu0 %v168
  %v385 = vpop.f32.mrb[0].mxu0
  %v386 = vadd.f32 0.0, %v385
  %v387 = vpop.f32.mrb[0].mxu0
  %v388 = vpop.f32.mrb[0].mxu0
  %v389 = vadd.f32 0.0, %v388
  %v390 = vpop.f32.mrb[0].mxu0
  %391 = vmatprep.mubr.bf16.mxu0 %v172
  %392 = vmatmul.mubr.bf16.gmra.mrb[0].mxu0 %v171
  %v393 = vpop.f32.mrb[0].mxu0
  %v394 = vadd.f32 0.0, %v393
  %v395 = vpop.f32.mrb[0].mxu0
  %v396 = vpop.f32.mrb[0].mxu0
  %v397 = vadd.f32 0.0, %v396
  %v398 = vpop.f32.mrb[0].mxu0
  %399 = vmatprep.mubr.bf16.mxu0 %v175
  %400 = vmatmul.mubr.bf16.gmra.mrb[0].mxu0 %v174
  %v401 = vpop.f32.mrb[0].mxu0
  %v402 = vadd.f32 0.0, %v401
  %v403 = vpop.f32.mrb[0].mxu0
  %v404 = vpop.f32.mrb[0].mxu0
  %v405 = vadd.f32 0.0, %v404
  %v406 = vpop.f32.mrb[0].mxu0
  %407 = vmatprep.mubr.bf16.mxu0 %v178
  %408 = vmatmul.mubr.bf16.gmra.mrb[0].mxu0 %v177
  %v409 = vpop.f32.mrb[0].mxu0
  %v410 = vadd.f32 0.0, %v409
  %v411 = vpop.f32.mrb[0].mxu0
  %v412 = vpop.f32.mrb[0].mxu0
  %v413 = vadd.f32 0.0, %v412
  %v414 = vpop.f32.mrb[0].mxu0
  %415 = vmatprep.mubr.bf16.mxu0 %v181
  %416 = vmatmul.mubr.bf16.gmra.mrb[0].mxu0 %v180
  %v417 = vpop.f32.mrb[0].mxu0
  %v418 = vadd.f32 0.0, %v417
  %v419 = vpop.f32.mrb[0].mxu0
  %v420 = vpop.f32.mrb[0].mxu0
  %v421 = vadd.f32 0.0, %v420
  %v422 = vpop.f32.mrb[0].mxu0
  %423 = vmatprep.mubr.bf16.mxu0 %v184
  %424 = vmatmul.mubr.bf16.gmra.mrb[0].mxu0 %v183
  %v425 = vpop.f32.mrb[0].mxu0
  %v426 = vadd.f32 0.0, %v425
  %v427 = vpop.f32.mrb[0].mxu0
  %v428 = vpop.f32.mrb[0].mxu0
  %v429 = vadd.f32 0.0, %v428
  %v430 = vpop.f32.mrb[0].mxu0
  %431 = vdwg.mxu0
  %432 = vmatprep.subr.bf16.mxu0 0
  %433 = vmatpush1.bf16.msra.mxu0 %v290
  %434 = vmatprep.subr.bf16.mxu0 0
  %435 = vmatpush1.bf16.msra.mxu0 %v291
  %436 = vmatprep.subr.bf16.mxu0 0
  %437 = vmatpush1.bf16.msra.mxu0 0
  %438 = vmatprep.subr.bf16.mxu0 0
  %439 = vmatpush1.bf16.msra.mxu0 0
  %440 = vmatprep.subr.bf16.mxu0 0
  %441 = vmatpush1.bf16.msra.mxu0 0
  %442 = vmatprep.subr.bf16.mxu0 0
  %443 = vmatpush1.bf16.msra.mxu0 0
  %444 = vmatprep.subr.bf16.mxu0 0
  %445 = vmatpush1.bf16.msra.mxu0 0
  %446 = vmatprep.subr.bf16.mxu0 0
  %447 = vmatpush1.bf16.msra.mxu0 0
  %448 = vmatprep.subr.bf16.mxu0 0
  %449 = vmatpush1.bf16.msra.mxu0 0
  %450 = vmatprep.subr.bf16.mxu0 0
  %451 = vmatpush1.bf16.msra.mxu0 0
  %452 = vmatprep.subr.bf16.mxu0 0
  %453 = vmatpush1.bf16.msra.mxu0 0
  %454 = vmatprep.subr.bf16.mxu0 0
  %455 = vmatpush1.bf16.msra.mxu0 0
  %456 = vmatprep.subr.bf16.mxu0 0
  %457 = vmatpush1.bf16.msra.mxu0 0
  %458 = vmatprep.subr.bf16.mxu0 0
  %459 = vmatpush1.bf16.msra.mxu0 0
  %460 = vmatprep.subr.bf16.mxu0 0
  %461 = vmatpush1.bf16.msra.mxu0 0
  %462 = vmatprep.subr.bf16.mxu0 0
  %463 = vmatpush1.bf16.msra.mxu0 0
  %464 = vmatprep.mubr.bf16.mxu0 0
  %465 = vmatmul.mubr.bf16.gmra.mrb[0].mxu0 %v312
  %v466 = vpop.f32.mrb[0].mxu0
  %v467 = vadd.f32 %v370, %v466
  %v468 = vpop.f32.mrb[0].mxu0
  %v469 = vpop.f32.mrb[0].mxu0
  %v470 = vadd.f32 %v373, %v469
  %v471 = vpop.f32.mrb[0].mxu0
  %472 = vmatprep.mubr.bf16.mxu0 0
  %473 = vmatmul.mubr.bf16.gmra.mrb[0].mxu0 %v315
  %v474 = vpop.f32.mrb[0].mxu0
  %v475 = vadd.f32 %v378, %v474
  %v476 = vpop.f32.mrb[0].mxu0
  %v477 = vpop.f32.mrb[0].mxu0
  %v478 = vadd.f32 %v381, %v477
  %v479 = vpop.f32.mrb[0].mxu0
  %480 = vmatprep.mubr.bf16.mxu0 0
  %481 = vmatmul.mubr.bf16.gmra.mrb[0].mxu0 %v318
  %v482 = vpop.f32.mrb[0].mxu0
  %v483 = vadd.f32 %v386, %v482
  %v484 = vpop.f32.mrb[0].mxu0
  %v485 = vpop.f32.mrb[0].mxu0
  %v486 = vadd.f32 %v389, %v485
  %v487 = vpop.f32.mrb[0].mxu0
  %488 = vmatprep.mubr.bf16.mxu0 0
  %489 = vmatmul.mubr.bf16.gmra.mrb[0].mxu0 %v321
  %v490 = vpop.f32.mrb[0].mxu0
  %v491 = vadd.f32 %v394, %v490
  %v492 = vpop.f32.mrb[0].mxu0
  %v493 = vpop.f32.mrb[0].mxu0
  %v494 = vadd.f32 %v397, %v493
  %v495 = vpop.f32.mrb[0].mxu0
  %496 = vmatprep.mubr.bf16.mxu0 0
  %497 = vmatmul.mubr.bf16.gmra.mrb[0].mxu0 %v324
  %v498 = vpop.f32.mrb[0].mxu0
  %v499 = vadd.f32 %v402, %v498
  %v500 = vpop.f32.mrb[0].mxu0
  %v501 = vpop.f32.mrb[0].mxu0
  %v502 = vadd.f32 %v405, %v501
  %v503 = vpop.f32.mrb[0].mxu0
  %504 = vmatprep.mubr.bf16.mxu0 0
  %505 = vmatmul.mubr.bf16.gmra.mrb[0].mxu0 %v327
  %v506 = vpop.f32.mrb[0].mxu0
  %v507 = vadd.f32 %v410, %v506
  %v508 = vpop.f32.mrb[0].mxu0
  %v509 = vpop.f32.mrb[0].mxu0
  %v510 = vadd.f32 %v413, %v509
  %v511 = vpop.f32.mrb[0].mxu0
  %512 = vmatprep.mubr.bf16.mxu0 0
  %513 = vmatmul.mubr.bf16.gmra.mrb[0].mxu0 %v330
  %v514 = vpop.f32.mrb[0].mxu0
  %v515 = vadd.f32 %v418, %v514
  %v516 = vpop.f32.mrb[0].mxu0
  %v517 = vpop.f32.mrb[0].mxu0
  %v518 = vadd.f32 %v421, %v517
  %v519 = vpop.f32.mrb[0].mxu0
  %520 = vmatprep.mubr.bf16.mxu0 0
  %521 = vmatmul.mubr.bf16.gmra.mrb[0].mxu0 %v333
  %v522 = vpop.f32.mrb[0].mxu0
  %v523 = vadd.f32 %v426, %v522
  %v524 = vpop.f32.mrb[0].mxu0
  %v525 = vpop.f32.mrb[0].mxu0
  %v526 = vadd.f32 %v429, %v525
  %v527 = vpop.f32.mrb[0].mxu0
  %528 = vdwg.mxu0
  %vm529 = vcmask 523264
  %530 = vst.msk [vmem:[%s2] sm:$0xff] %vm529, %v467
  %531 = vst.msk [vmem:[%s2 + $0x8] sm:$0xff] %vm529, %v470
  %532 = vst.msk [vmem:[%s2 + $0x10] sm:$0xff] %vm529, %v475
  %533 = vst.msk [vmem:[%s2 + $0x18] sm:$0xff] %vm529, %v478
  %534 = vst.msk [vmem:[%s2 + $0x20] sm:$0xff] %vm529, %v483
  %535 = vst.msk [vmem:[%s2 + $0x28] sm:$0xff] %vm529, %v486
  %536 = vst.msk [vmem:[%s2 + $0x30] sm:$0xff] %vm529, %v491
  %537 = vst.msk [vmem:[%s2 + $0x38] sm:$0xff] %vm529, %v494
  %538 = vst.msk [vmem:[%s2 + $0x40] sm:$0xff] %vm529, %v499
  %539 = vst.msk [vmem:[%s2 + $0x48] sm:$0xff] %vm529, %v502
  %540 = vst.msk [vmem:[%s2 + $0x50] sm:$0xff] %vm529, %v507
  %541 = vst.msk [vmem:[%s2 + $0x58] sm:$0xff] %vm529, %v510
  %542 = vst.msk [vmem:[%s2 + $0x60] sm:$0xff] %vm529, %v515
  %543 = vst.msk [vmem:[%s2 + $0x68] sm:$0xff] %vm529, %v518
  %544 = vst.msk [vmem:[%s2 + $0x70] sm:$0xff] %vm529, %v523
  %545 = vst.msk [vmem:[%s2 + $0x78] sm:$0xff] %vm529, %v526
  %v546 = vsel %vm529, %v467, 0.0
  %v547 = vsel %vm529, %v470, 0.0
  %v548 = vadd.f32 %v546, %v547
  %v549 = vsel %vm529, %v475, 0.0
  %v550 = vadd.f32 %v548, %v549
  %v551 = vsel %vm529, %v478, 0.0
  %v552 = vadd.f32 %v550, %v551
  %v553 = vsel %vm529, %v483, 0.0
  %v554 = vadd.f32 %v552, %v553
  %v555 = vsel %vm529, %v486, 0.0
  %v556 = vadd.f32 %v554, %v555
  %v557 = vsel %vm529, %v491, 0.0
  %v558 = vadd.f32 %v556, %v557
  %v559 = vsel %vm529, %v494, 0.0
  %v560 = vadd.f32 %v558, %v559
  %v561 = vsel %vm529, %v499, 0.0
  %v562 = vadd.f32 %v560, %v561
  %v563 = vsel %vm529, %v502, 0.0
  %v564 = vadd.f32 %v562, %v563
  %v565 = vsel %vm529, %v507, 0.0
  %v566 = vadd.f32 %v564, %v565
  %v567 = vsel %vm529, %v510, 0.0
  %v568 = vadd.f32 %v566, %v567
  %v569 = vsel %vm529, %v515, 0.0
  %v570 = vadd.f32 %v568, %v569
  %v571 = vsel %vm529, %v518, 0.0
  %v572 = vadd.f32 %v570, %v571
  %v573 = vsel %vm529, %v523, 0.0
  %v574 = vadd.f32 %v572, %v573
  %v575 = vsel %vm529, %v526, 0.0
  %v576 = vadd.f32 %v574, %v575
  %v577 = vrot.slane %v576, 4
  %v578 = vadd.f32 %v576, %v577
  %v579 = vrot.slane %v578, 2
  %v580 = vadd.f32 %v578, %v579
  %v581 = vrot.slane %v580, 1
  %v582 = vadd.f32 %v580, %v581
  %v583 = vmul.f32 %v467, %v467
  %v584 = vmul.f32 %v470, %v470
  %v585 = vmul.f32 %v475, %v475
  %v586 = vmul.f32 %v478, %v478
  %v587 = vmul.f32 %v483, %v483
  %v588 = vmul.f32 %v486, %v486
  %v589 = vmul.f32 %v491, %v491
  %v590 = vmul.f32 %v494, %v494
  %v591 = vmul.f32 %v499, %v499
  %v592 = vmul.f32 %v502, %v502
  %v593 = vmul.f32 %v507, %v507
  %v594 = vmul.f32 %v510, %v510
  %v595 = vmul.f32 %v515, %v515
  %v596 = vmul.f32 %v518, %v518
  %v597 = vmul.f32 %v523, %v523
  %v598 = vmul.f32 %v526, %v526
  %v599 = vsel %vm529, %v583, 0.0
  %v600 = vsel %vm529, %v584, 0.0
  %v601 = vadd.f32 %v599, %v600
  %v602 = vsel %vm529, %v585, 0.0
  %v603 = vadd.f32 %v601, %v602
  %v604 = vsel %vm529, %v586, 0.0
  %v605 = vadd.f32 %v603, %v604
  %v606 = vsel %vm529, %v587, 0.0
  %v607 = vadd.f32 %v605, %v606
  %v608 = vsel %vm529, %v588, 0.0
  %v609 = vadd.f32 %v607, %v608
  %v610 = vsel %vm529, %v589, 0.0
  %v611 = vadd.f32 %v609, %v610
  %v612 = vsel %vm529, %v590, 0.0
  %v613 = vadd.f32 %v611, %v612
  %v614 = vsel %vm529, %v591, 0.0
  %v615 = vadd.f32 %v613, %v614
  %v616 = vsel %vm529, %v592, 0.0
  %v617 = vadd.f32 %v615, %v616
  %v618 = vsel %vm529, %v593, 0.0
  %v619 = vadd.f32 %v617, %v618
  %v620 = vsel %vm529, %v594, 0.0
  %v621 = vadd.f32 %v619, %v620
  %v622 = vsel %vm529, %v595, 0.0
  %v623 = vadd.f32 %v621, %v622
  %v624 = vsel %vm529, %v596, 0.0
  %v625 = vadd.f32 %v623, %v624
  %v626 = vsel %vm529, %v597, 0.0
  %v627 = vadd.f32 %v625, %v626
  %v628 = vsel %vm529, %v598, 0.0
  %v629 = vadd.f32 %v627, %v628
  %v630 = vrot.slane %v629, 4
  %v631 = vadd.f32 %v629, %v630
  %v632 = vrot.slane %v631, 2
  %v633 = vadd.f32 %v631, %v632
  %v634 = vrot.slane %v633, 1
  %v635 = vadd.f32 %v633, %v634
  %vm636 = vcmask 1040384
  %v637 = vsel %vm636, %v582, %v635
  %vm638 = vcmask 517120
  %639 = vst.msk [vmem:[%s3] sm:$0x3] %vm638, %v637
  // Predicated region
  $region10: #{_lambda_.30} parent=0 // pred_check
    _
  $region11: #{_lambda_.30} parent=0 // pred_check_branch
    %641 = sbr.rel (0) target = $region13
  $region12: #{_lambda_.30} parent=0 // pred_region
    _
  $region13: #{_lambda_.30} parent=0 // pred_fallthru
    _
  // Predicated region
  $region14: #{_lambda_.30} parent=0 // pred_check
    _
  $region15: #{_lambda_.30} parent=0 // pred_check_branch
    %643 = sbr.rel (0) target = $region17
  $region16: #{_lambda_.30} parent=0 // pred_region
    _
  $region17: #{_lambda_.30} parent=0 // pred_fallthru
    _
  // Predicated region
  $region18: #{_lambda_.30} parent=0 // pred_check
    _
  $region19: #{_lambda_.30} parent=0 // pred_check_branch
    %645 = sbr.rel (0) target = $region21
  $region20: #{_lambda_.30} parent=0 // pred_region
    _
  $region21: #{_lambda_.30} parent=0 // pred_fallthru
    _
  // Predicated region
  $region22: #{_lambda_.30} parent=0 // pred_check
    _
  $region23: #{_lambda_.30} parent=0 // pred_check_branch
    %647 = sbr.rel (0) target = $region25
  $region24: #{_lambda_.30} parent=0 // pred_region
    _
  $region25: #{_lambda_.30} parent=0 // pred_fallthru
    _

// kernel: _lambda_.32
$region0: #{_lambda_.32}
  #allocation0 [shape = 'u32[]', space=smem, size = 0x4, offset = 0x4, fixed_abs, tag = 'smem constant byte address 0x4 - core index']
  #allocation1 [shape = 'u32[144,128]{1,0:T(1,128)}', space=vmem, size = 0x12000, scoped, tag = 'internal scratch']
  %s0 = inlined_call_operand.vmem [shape: bf16[128,576], index: 0, kind: input, shape index: {}]
  %s1 = inlined_call_operand.vmem [shape: bf16[576,64], index: 1, kind: input, shape index: {}]
  %s2 = inlined_call_operand.vmem [shape: f32[128,64], index: 2, kind: output, shape index: {0}]
  %s3 = inlined_call_operand.vmem [shape: f32[1,2,64], index: 3, kind: output, shape index: {1}]
  %4 = xla_tuple %s2, %s3
  %s5 = sld [smem:[#allocation0]]
  $region26: #{_lambda_.32} parent=0
    _
  %s7 = ssub.s32 1, %s5
  %s8 = scalar_select 0, %s7, %s5
  // Predicated region
  $region2: #{_lambda_.32} parent=0 // pred_check
    _
  $region3: #{_lambda_.32} parent=0 // pred_check_branch
    %10 = sbr.rel (0) target = $region5
  $region4: #{_lambda_.32} parent=0 // pred_region
    _
  $region5: #{_lambda_.32} parent=0 // pred_fallthru
    _
  // Predicated region
  $region6: #{_lambda_.32} parent=0 // pred_check
    _
  $region7: #{_lambda_.32} parent=0 // pred_check_branch
    %12 = sbr.rel (0) target = $region9
  $region8: #{_lambda_.32} parent=0 // pred_region
    _
  $region9: #{_lambda_.32} parent=0 // pred_fallthru
    _
  %v14 = vld [vmem:[%s0] sm:$0xff]
  %v15 = vld [vmem:[%s0 + $0x8] sm:$0xff]
  %v16 = vld [vmem:[%s0 + $0x10] sm:$0xf]
  %v17 = vld [vmem:[%s0 + $0x14] sm:$0xff]
  %v18 = vld [vmem:[%s0 + $0x1c] sm:$0xff]
  %v19 = vld [vmem:[%s0 + $0x24] sm:$0xf]
  %v20 = vld [vmem:[%s0 + $0x28] sm:$0xff]
  %v21 = vld [vmem:[%s0 + $0x30] sm:$0xff]
  %v22 = vld [vmem:[%s0 + $0x38] sm:$0xf]
  %v23 = vld [vmem:[%s0 + $0x3c] sm:$0xff]
  %v24 = vld [vmem:[%s0 + $0x44] sm:$0xff]
  %v25 = vld [vmem:[%s0 + $0x4c] sm:$0xf]
  %v26 = vld [vmem:[%s0 + $0x50] sm:$0xff]
  %v27 = vld [vmem:[%s0 + $0x58] sm:$0xff]
  %v28 = vld [vmem:[%s0 + $0x60] sm:$0xf]
  %v29 = vld [vmem:[%s0 + $0x64] sm:$0xff]
  %v30 = vld [vmem:[%s0 + $0x6c] sm:$0xff]
  %v31 = vld [vmem:[%s0 + $0x74] sm:$0xf]
  %v32 = vld [vmem:[%s0 + $0x78] sm:$0xff]
  %v33 = vld [vmem:[%s0 + $0x80] sm:$0xff]
  %v34 = vld [vmem:[%s0 + $0x88] sm:$0xf]
  %v35 = vld [vmem:[%s0 + $0x8c] sm:$0xff]
  %v36 = vld [vmem:[%s0 + $0x94] sm:$0xff]
  %v37 = vld [vmem:[%s0 + $0x9c] sm:$0xf]
  %v38 = vld [vmem:[%s0 + $0xa0] sm:$0xff]
  %v39 = vld [vmem:[%s0 + $0xa8] sm:$0xff]
  %v40 = vld [vmem:[%s0 + $0xb0] sm:$0xf]
  %v41 = vld [vmem:[%s0 + $0xb4] sm:$0xff]
  %v42 = vld [vmem:[%s0 + $0xbc] sm:$0xff]
  %v43 = vld [vmem:[%s0 + $0xc4] sm:$0xf]
  %v44 = vld [vmem:[%s0 + $0xc8] sm:$0xff]
  %v45 = vld [vmem:[%s0 + $0xd0] sm:$0xff]
  %v46 = vld [vmem:[%s0 + $0xd8] sm:$0xf]
  %v47 = vld [vmem:[%s0 + $0xdc] sm:$0xff]
  %v48 = vld [vmem:[%s0 + $0xe4] sm:$0xff]
  %v49 = vld [vmem:[%s0 + $0xec] sm:$0xf]
  %v50 = vld [vmem:[%s0 + $0xf0] sm:$0xff]
  %v51 = vld [vmem:[%s0 + $0xf8] sm:$0xff]
  %v52 = vld [vmem:[%s0 + $0x100] sm:$0xf]
  %v53 = vld [vmem:[%s0 + $0x104] sm:$0xff]
  %v54 = vld [vmem:[%s0 + $0x10c] sm:$0xff]
  %v55 = vld [vmem:[%s0 + $0x114] sm:$0xf]
  %v56 = vld [vmem:[%s0 + $0x118] sm:$0xff]
  %v57 = vld [vmem:[%s0 + $0x120] sm:$0xff]
  %v58 = vld [vmem:[%s0 + $0x128] sm:$0xf]
  %v59 = vld [vmem:[%s0 + $0x12c] sm:$0xff]
  %v60 = vld [vmem:[%s0 + $0x134] sm:$0xff]
  %v61 = vld [vmem:[%s0 + $0x13c] sm:$0xf]
  %v62 = vld [vmem:[%s1] sm:$0xf]
  %v63 = vld [vmem:[%s1 + $0x4] sm:$0xf]
  %v64 = vld [vmem:[%s1 + $0x8] sm:$0xf]
  %v65 = vld [vmem:[%s1 + $0xc] sm:$0xf]
  %v66 = vld [vmem:[%s1 + $0x10] sm:$0xf]
  %v67 = vld [vmem:[%s1 + $0x14] sm:$0xf]
  %v68 = vld [vmem:[%s1 + $0x18] sm:$0xf]
  %v69 = vld [vmem:[%s1 + $0x1c] sm:$0xf]
  %v70 = vld [vmem:[%s1 + $0x20] sm:$0xf]
  %v71 = vld [vmem:[%s1 + $0x24] sm:$0xf]
  %v72 = vld [vmem:[%s1 + $0x28] sm:$0xf]
  %v73 = vld [vmem:[%s1 + $0x2c] sm:$0xf]
  %v74 = vld [vmem:[%s1 + $0x30] sm:$0xf]
  %v75 = vld [vmem:[%s1 + $0x34] sm:$0xf]
  %v76 = vld [vmem:[%s1 + $0x38] sm:$0xf]
  %v77 = vld [vmem:[%s1 + $0x3c] sm:$0xf]
  %v78 = vld [vmem:[%s1 + $0x40] sm:$0xf]
  %v79 = vld [vmem:[%s1 + $0x44] sm:$0xf]
  %v80 = vld [vmem:[%s1 + $0x48] sm:$0xf]
  %v81 = vld [vmem:[%s1 + $0x4c] sm:$0xf]
  %v82 = vld [vmem:[%s1 + $0x50] sm:$0xf]
  %v83 = vld [vmem:[%s1 + $0x54] sm:$0xf]
  %v84 = vld [vmem:[%s1 + $0x58] sm:$0xf]
  %v85 = vld [vmem:[%s1 + $0x5c] sm:$0xf]
  %v86 = vld [vmem:[%s1 + $0x60] sm:$0xf]
  %v87 = vld [vmem:[%s1 + $0x64] sm:$0xf]
  %v88 = vld [vmem:[%s1 + $0x68] sm:$0xf]
  %v89 = vld [vmem:[%s1 + $0x6c] sm:$0xf]
  %v90 = vld [vmem:[%s1 + $0x70] sm:$0xf]
  %v91 = vld [vmem:[%s1 + $0x74] sm:$0xf]
  %v92 = vld [vmem:[%s1 + $0x78] sm:$0xf]
  %v93 = vld [vmem:[%s1 + $0x7c] sm:$0xf]
  %v94 = vld [vmem:[%s1 + $0x80] sm:$0xf]
  %v95 = vld [vmem:[%s1 + $0x84] sm:$0xf]
  %v96 = vld [vmem:[%s1 + $0x88] sm:$0xf]
  %v97 = vld [vmem:[%s1 + $0x8c] sm:$0xf]
  %v98 = vld [vmem:[%s1 + $0x90] sm:$0xf]
  %v99 = vld [vmem:[%s1 + $0x94] sm:$0xf]
  %v100 = vld [vmem:[%s1 + $0x98] sm:$0xf]
  %v101 = vld [vmem:[%s1 + $0x9c] sm:$0xf]
  %v102 = vld [vmem:[%s1 + $0xa0] sm:$0xf]
  %v103 = vld [vmem:[%s1 + $0xa4] sm:$0xf]
  %v104 = vld [vmem:[%s1 + $0xa8] sm:$0xf]
  %v105 = vld [vmem:[%s1 + $0xac] sm:$0xf]
  %v106 = vld [vmem:[%s1 + $0xb0] sm:$0xf]
  %v107 = vld [vmem:[%s1 + $0xb4] sm:$0xf]
  %v108 = vld [vmem:[%s1 + $0xb8] sm:$0xf]
  %v109 = vld [vmem:[%s1 + $0xbc] sm:$0xf]
  %v110 = vld [vmem:[%s1 + $0xc0] sm:$0xf]
  %v111 = vld [vmem:[%s1 + $0xc4] sm:$0xf]
  %v112 = vld [vmem:[%s1 + $0xc8] sm:$0xf]
  %v113 = vld [vmem:[%s1 + $0xcc] sm:$0xf]
  %v114 = vld [vmem:[%s1 + $0xd0] sm:$0xf]
  %v115 = vld [vmem:[%s1 + $0xd4] sm:$0xf]
  %v116 = vld [vmem:[%s1 + $0xd8] sm:$0xf]
  %v117 = vld [vmem:[%s1 + $0xdc] sm:$0xf]
  %v118 = vld [vmem:[%s1 + $0xe0] sm:$0xf]
  %v119 = vld [vmem:[%s1 + $0xe4] sm:$0xf]
  %v120 = vld [vmem:[%s1 + $0xe8] sm:$0xf]
  %v121 = vld [vmem:[%s1 + $0xec] sm:$0xf]
  %v122 = vld [vmem:[%s1 + $0xf0] sm:$0xf]
  %v123 = vld [vmem:[%s1 + $0xf4] sm:$0xf]
  %v124 = vld [vmem:[%s1 + $0xf8] sm:$0xf]
  %v125 = vld [vmem:[%s1 + $0xfc] sm:$0xf]
  %v126 = vld [vmem:[%s1 + $0x100] sm:$0xf]
  %v127 = vld [vmem:[%s1 + $0x104] sm:$0xf]
  %v128 = vld [vmem:[%s1 + $0x108] sm:$0xf]
  %v129 = vld [vmem:[%s1 + $0x10c] sm:$0xf]
  %v130 = vld [vmem:[%s1 + $0x110] sm:$0xf]
  %v131 = vld [vmem:[%s1 + $0x114] sm:$0xf]
  %v132 = vld [vmem:[%s1 + $0x118] sm:$0xf]
  %v133 = vld [vmem:[%s1 + $0x11c] sm:$0xf]
  %v182 = vunpack.c.l.b16 %v14
  %v183 = vunpack.c.h.b16 %v14
  %v184 = vunpack.c.l.b16 %v15
  %v185 = vunpack.c.h.b16 %v15
  %v186 = vunpack.c.l.b16 %v16
  %v187 = vunpack.c.l.b16 %v17
  %v188 = vunpack.c.h.b16 %v17
  %v189 = vunpack.c.l.b16 %v18
  %v190 = vunpack.c.h.b16 %v18
  %v191 = vunpack.c.l.b16 %v19
  %v192 = vunpack.c.l.b16 %v20
  %v193 = vunpack.c.h.b16 %v20
  %v194 = vunpack.c.l.b16 %v21
  %v195 = vunpack.c.h.b16 %v21
  %v196 = vunpack.c.l.b16 %v22
  %v197 = vunpack.c.l.b16 %v23
  %v198 = vunpack.c.h.b16 %v23
  %v199 = vunpack.c.l.b16 %v24
  %v200 = vunpack.c.h.b16 %v24
  %v201 = vunpack.c.l.b16 %v25
  %v202 = vunpack.c.l.b16 %v26
  %v203 = vunpack.c.h.b16 %v26
  %v204 = vunpack.c.l.b16 %v27
  %v205 = vunpack.c.h.b16 %v27
  %v206 = vunpack.c.l.b16 %v28
  %v207 = vunpack.c.l.b16 %v29
  %v208 = vunpack.c.h.b16 %v29
  %v209 = vunpack.c.l.b16 %v30
  %v210 = vunpack.c.h.b16 %v30
  %v211 = vunpack.c.l.b16 %v31
  %v212 = vunpack.c.l.b16 %v32
  %v213 = vunpack.c.h.b16 %v32
  %v214 = vunpack.c.l.b16 %v33
  %v215 = vunpack.c.h.b16 %v33
  %v216 = vunpack.c.l.b16 %v34
  %v217 = vunpack.c.l.b16 %v35
  %v218 = vunpack.c.h.b16 %v35
  %v219 = vunpack.c.l.b16 %v36
  %v220 = vunpack.c.h.b16 %v36
  %v221 = vunpack.c.l.b16 %v37
  %v222 = vunpack.c.l.b16 %v38
  %v223 = vunpack.c.h.b16 %v38
  %v224 = vunpack.c.l.b16 %v39
  %v225 = vunpack.c.h.b16 %v39
  %v226 = vunpack.c.l.b16 %v40
  %v227 = vunpack.c.l.b16 %v41
  %v228 = vunpack.c.h.b16 %v41
  %v229 = vunpack.c.l.b16 %v42
  %v230 = vunpack.c.h.b16 %v42
  %v231 = vunpack.c.l.b16 %v43
  %v232 = vunpack.c.l.b16 %v44
  %v233 = vunpack.c.h.b16 %v44
  %v234 = vunpack.c.l.b16 %v45
  %v235 = vunpack.c.h.b16 %v45
  %v236 = vunpack.c.l.b16 %v46
  %v237 = vunpack.c.l.b16 %v47
  %v238 = vunpack.c.h.b16 %v47
  %v239 = vunpack.c.l.b16 %v48
  %v240 = vunpack.c.h.b16 %v48
  %v241 = vunpack.c.l.b16 %v49
  %v242 = vunpack.c.l.b16 %v50
  %v243 = vunpack.c.h.b16 %v50
  %v244 = vunpack.c.l.b16 %v51
  %v245 = vunpack.c.h.b16 %v51
  %v246 = vunpack.c.l.b16 %v52
  %v247 = vunpack.c.l.b16 %v53
  %v248 = vunpack.c.h.b16 %v53
  %v249 = vunpack.c.l.b16 %v54
  %v250 = vunpack.c.h.b16 %v54
  %v251 = vunpack.c.l.b16 %v55
  %v252 = vunpack.c.l.b16 %v56
  %v253 = vunpack.c.h.b16 %v56
  %v254 = vunpack.c.l.b16 %v57
  %v255 = vunpack.c.h.b16 %v57
  %v256 = vunpack.c.l.b16 %v58
  %v257 = vunpack.c.l.b16 %v59
  %v258 = vunpack.c.h.b16 %v59
  %v259 = vunpack.c.l.b16 %v60
  %v260 = vunpack.c.h.b16 %v60
  %v261 = vunpack.c.l.b16 %v61
  %v262 = vpack.c.b16 %v187, %v182
  %v263 = vpack.c.b16 %v188, %v183
  %v264 = vpack.c.b16 %v189, %v184
  %v265 = vpack.c.b16 %v190, %v185
  %v266 = vpack.c.b16 %v191, %v186
  %v267 = vpack.c.b16 %v197, %v192
  %v268 = vpack.c.b16 %v198, %v193
  %v269 = vpack.c.b16 %v199, %v194
  %v270 = vpack.c.b16 %v200, %v195
  %v271 = vpack.c.b16 %v201, %v196
  %v272 = vpack.c.b16 %v207, %v202
  %v273 = vpack.c.b16 %v208, %v203
  %v274 = vpack.c.b16 %v209, %v204
  %v275 = vpack.c.b16 %v210, %v205
  %v276 = vpack.c.b16 %v211, %v206
  %v277 = vpack.c.b16 %v217, %v212
  %v278 = vpack.c.b16 %v218, %v213
  %v279 = vpack.c.b16 %v219, %v214
  %v280 = vpack.c.b16 %v220, %v215
  %v281 = vpack.c.b16 %v221, %v216
  %v282 = vpack.c.b16 %v227, %v222
  %v283 = vpack.c.b16 %v228, %v223
  %v284 = vpack.c.b16 %v229, %v224
  %v285 = vpack.c.b16 %v230, %v225
  %v286 = vpack.c.b16 %v231, %v226
  %v287 = vpack.c.b16 %v237, %v232
  %v288 = vpack.c.b16 %v238, %v233
  %v289 = vpack.c.b16 %v239, %v234
  %v290 = vpack.c.b16 %v240, %v235
  %v291 = vpack.c.b16 %v241, %v236
  %v292 = vpack.c.b16 %v247, %v242
  %v293 = vpack.c.b16 %v248, %v243
  %v294 = vpack.c.b16 %v249, %v244
  %v295 = vpack.c.b16 %v250, %v245
  %v296 = vpack.c.b16 %v251, %v246
  %v297 = vpack.c.b16 %v257, %v252
  %v298 = vpack.c.b16 %v258, %v253
  %v299 = vpack.c.b16 %v259, %v254
  %v300 = vpack.c.b16 %v260, %v255
  %v301 = vpack.c.b16 %v261, %v256
  %v406 = vunpack.c.l.b16 %v62
  %v407 = vunpack.c.l.b16 %v63
  %v408 = vunpack.c.l.b16 %v64
  %v409 = vunpack.c.l.b16 %v65
  %v410 = vunpack.c.l.b16 %v66
  %v411 = vunpack.c.l.b16 %v67
  %v412 = vunpack.c.l.b16 %v68
  %v413 = vunpack.c.l.b16 %v69
  %v414 = vunpack.c.l.b16 %v70
  %v415 = vunpack.c.l.b16 %v71
  %v416 = vunpack.c.l.b16 %v72
  %v417 = vunpack.c.l.b16 %v73
  %v418 = vunpack.c.l.b16 %v74
  %v419 = vunpack.c.l.b16 %v75
  %v420 = vunpack.c.l.b16 %v76
  %v421 = vunpack.c.l.b16 %v77
  %v422 = vunpack.c.l.b16 %v78
  %v423 = vunpack.c.l.b16 %v79
  %v424 = vunpack.c.l.b16 %v80
  %v425 = vunpack.c.l.b16 %v81
  %v426 = vunpack.c.l.b16 %v82
  %v427 = vunpack.c.l.b16 %v83
  %v428 = vunpack.c.l.b16 %v84
  %v429 = vunpack.c.l.b16 %v85
  %v430 = vunpack.c.l.b16 %v86
  %v431 = vunpack.c.l.b16 %v87
  %v432 = vunpack.c.l.b16 %v88
  %v433 = vunpack.c.l.b16 %v89
  %v434 = vunpack.c.l.b16 %v90
  %v435 = vunpack.c.l.b16 %v91
  %v436 = vunpack.c.l.b16 %v92
  %v437 = vunpack.c.l.b16 %v93
  %v438 = vunpack.c.l.b16 %v94
  %v439 = vunpack.c.l.b16 %v95
  %v440 = vunpack.c.l.b16 %v96
  %v441 = vunpack.c.l.b16 %v97
  %v442 = vunpack.c.l.b16 %v98
  %v443 = vunpack.c.l.b16 %v99
  %v444 = vunpack.c.l.b16 %v100
  %v445 = vunpack.c.l.b16 %v101
  %v446 = vunpack.c.l.b16 %v102
  %v447 = vunpack.c.l.b16 %v103
  %v448 = vunpack.c.l.b16 %v104
  %v449 = vunpack.c.l.b16 %v105
  %v450 = vunpack.c.l.b16 %v106
  %v451 = vunpack.c.l.b16 %v107
  %v452 = vunpack.c.l.b16 %v108
  %v453 = vunpack.c.l.b16 %v109
  %v454 = vunpack.c.l.b16 %v110
  %v455 = vunpack.c.l.b16 %v111
  %v456 = vunpack.c.l.b16 %v112
  %v457 = vunpack.c.l.b16 %v113
  %v458 = vunpack.c.l.b16 %v114
  %v459 = vunpack.c.l.b16 %v115
  %v460 = vunpack.c.l.b16 %v116
  %v461 = vunpack.c.l.b16 %v117
  %v462 = vunpack.c.l.b16 %v118
  %v463 = vunpack.c.l.b16 %v119
  %v464 = vunpack.c.l.b16 %v120
  %v465 = vunpack.c.l.b16 %v121
  %v466 = vunpack.c.l.b16 %v122
  %v467 = vunpack.c.l.b16 %v123
  %v468 = vunpack.c.l.b16 %v124
  %v469 = vunpack.c.l.b16 %v125
  %v470 = vunpack.c.l.b16 %v126
  %v471 = vunpack.c.l.b16 %v127
  %v472 = vunpack.c.l.b16 %v128
  %v473 = vunpack.c.l.b16 %v129
  %v474 = vunpack.c.l.b16 %v130
  %v475 = vunpack.c.l.b16 %v131
  %v476 = vunpack.c.l.b16 %v132
  %v477 = vunpack.c.l.b16 %v133
  %v478 = vpack.c.b16 %v407, %v406
  %v479 = vpack.c.b16 %v409, %v408
  %v480 = vpack.c.b16 %v411, %v410
  %v481 = vpack.c.b16 %v413, %v412
  %v482 = vpack.c.b16 %v415, %v414
  %v483 = vpack.c.b16 %v417, %v416
  %v484 = vpack.c.b16 %v419, %v418
  %v485 = vpack.c.b16 %v421, %v420
  %v486 = vpack.c.b16 %v423, %v422
  %v487 = vpack.c.b16 %v425, %v424
  %v488 = vpack.c.b16 %v427, %v426
  %v489 = vpack.c.b16 %v429, %v428
  %v490 = vpack.c.b16 %v431, %v430
  %v491 = vpack.c.b16 %v433, %v432
  %v492 = vpack.c.b16 %v435, %v434
  %v493 = vpack.c.b16 %v437, %v436
  %v494 = vpack.c.b16 %v439, %v438
  %v495 = vpack.c.b16 %v441, %v440
  %v496 = vpack.c.b16 %v443, %v442
  %v497 = vpack.c.b16 %v445, %v444
  %v498 = vpack.c.b16 %v447, %v446
  %v499 = vpack.c.b16 %v449, %v448
  %v500 = vpack.c.b16 %v451, %v450
  %v501 = vpack.c.b16 %v453, %v452
  %v502 = vpack.c.b16 %v455, %v454
  %v503 = vpack.c.b16 %v457, %v456
  %v504 = vpack.c.b16 %v459, %v458
  %v505 = vpack.c.b16 %v461, %v460
  %v506 = vpack.c.b16 %v463, %v462
  %v507 = vpack.c.b16 %v465, %v464
  %v508 = vpack.c.b16 %v467, %v466
  %v509 = vpack.c.b16 %v469, %v468
  %v510 = vpack.c.b16 %v471, %v470
  %v511 = vpack.c.b16 %v473, %v472
  %v512 = vpack.c.b16 %v475, %v474
  %v513 = vpack.c.b16 %v477, %v476
  %vm550 = vcmask 523264
  %v552 = vsel %vm550, %v266, 0
  %v555 = vsel %vm550, %v271, 0
  %v558 = vsel %vm550, %v276, 0
  %v561 = vsel %vm550, %v281, 0
  %v564 = vsel %vm550, %v286, 0
  %v567 = vsel %vm550, %v291, 0
  %v570 = vsel %vm550, %v296, 0
  %v573 = vsel %vm550, %v301, 0
  %575 = vmatprep.subr.bf16.mxu0 0
  %576 = vmatpush1.bf16.msra.mxu0 %v478
  %577 = vmatprep.subr.bf16.mxu0 0
  %578 = vmatpush1.bf16.msra.mxu0 %v479
  %579 = vmatprep.subr.bf16.mxu0 0
  %580 = vmatpush1.bf16.msra.mxu0 %v480
  %581 = vmatprep.subr.bf16.mxu0 0
  %582 = vmatpush1.bf16.msra.mxu0 %v481
  %583 = vmatprep.subr.bf16.mxu0 0
  %584 = vmatpush1.bf16.msra.mxu0 %v482
  %585 = vmatprep.subr.bf16.mxu0 0
  %586 = vmatpush1.bf16.msra.mxu0 %v483
  %587 = vmatprep.subr.bf16.mxu0 0
  %588 = vmatpush1.bf16.msra.mxu0 %v484
  %589 = vmatprep.subr.bf16.mxu0 0
  %590 = vmatpush1.bf16.msra.mxu0 %v485
  %591 = vmatprep.subr.bf16.mxu0 0
  %592 = vmatpush1.bf16.msra.mxu0 %v486
  %593 = vmatprep.subr.bf16.mxu0 0
  %594 = vmatpush1.bf16.msra.mxu0 %v487
  %595 = vmatprep.subr.bf16.mxu0 0
  %596 = vmatpush1.bf16.msra.mxu0 %v488
  %597 = vmatprep.subr.bf16.mxu0 0
  %598 = vmatpush1.bf16.msra.mxu0 %v489
  %599 = vmatprep.subr.bf16.mxu0 0
  %600 = vmatpush1.bf16.msra.mxu0 %v490
  %601 = vmatprep.subr.bf16.mxu0 0
  %602 = vmatpush1.bf16.msra.mxu0 %v491
  %603 = vmatprep.subr.bf16.mxu0 0
  %604 = vmatpush1.bf16.msra.mxu0 %v492
  %605 = vmatprep.subr.bf16.mxu0 0
  %606 = vmatpush1.bf16.msra.mxu0 %v493
  %607 = vmatprep.mubr.bf16.mxu0 %v263
  %608 = vmatmul.mubr.bf16.gmra.mrb[0].mxu0 %v262
  %v609 = vpop.f32.mrb[0].mxu0
  %v610 = vadd.f32 0.0, %v609
  %v611 = vpop.f32.mrb[0].mxu0
  %v612 = vpop.f32.mrb[0].mxu0
  %v613 = vadd.f32 0.0, %v612
  %v614 = vpop.f32.mrb[0].mxu0
  %615 = vmatprep.mubr.bf16.mxu0 %v268
  %616 = vmatmul.mubr.bf16.gmra.mrb[0].mxu0 %v267
  %v617 = vpop.f32.mrb[0].mxu0
  %v618 = vadd.f32 0.0, %v617
  %v619 = vpop.f32.mrb[0].mxu0
  %v620 = vpop.f32.mrb[0].mxu0
  %v621 = vadd.f32 0.0, %v620
  %v622 = vpop.f32.mrb[0].mxu0
  %623 = vmatprep.mubr.bf16.mxu0 %v273
  %624 = vmatmul.mubr.bf16.gmra.mrb[0].mxu0 %v272
  %v625 = vpop.f32.mrb[0].mxu0
  %v626 = vadd.f32 0.0, %v625
  %v627 = vpop.f32.mrb[0].mxu0
  %v628 = vpop.f32.mrb[0].mxu0
  %v629 = vadd.f32 0.0, %v628
  %v630 = vpop.f32.mrb[0].mxu0
  %631 = vmatprep.mubr.bf16.mxu0 %v278
  %632 = vmatmul.mubr.bf16.gmra.mrb[0].mxu0 %v277
  %v633 = vpop.f32.mrb[0].mxu0
  %v634 = vadd.f32 0.0, %v633
  %v635 = vpop.f32.mrb[0].mxu0
  %v636 = vpop.f32.mrb[0].mxu0
  %v637 = vadd.f32 0.0, %v636
  %v638 = vpop.f32.mrb[0].mxu0
  %639 = vmatprep.mubr.bf16.mxu0 %v283
  %640 = vmatmul.mubr.bf16.gmra.mrb[0].mxu0 %v282
  %v641 = vpop.f32.mrb[0].mxu0
  %v642 = vadd.f32 0.0, %v641
  %v643 = vpop.f32.mrb[0].mxu0
  %v644 = vpop.f32.mrb[0].mxu0
  %v645 = vadd.f32 0.0, %v644
  %v646 = vpop.f32.mrb[0].mxu0
  %647 = vmatprep.mubr.bf16.mxu0 %v288
  %648 = vmatmul.mubr.bf16.gmra.mrb[0].mxu0 %v287
  %v649 = vpop.f32.mrb[0].mxu0
  %v650 = vadd.f32 0.0, %v649
  %v651 = vpop.f32.mrb[0].mxu0
  %v652 = vpop.f32.mrb[0].mxu0
  %v653 = vadd.f32 0.0, %v652
  %v654 = vpop.f32.mrb[0].mxu0
  %655 = vmatprep.mubr.bf16.mxu0 %v293
  %656 = vmatmul.mubr.bf16.gmra.mrb[0].mxu0 %v292
  %v657 = vpop.f32.mrb[0].mxu0
  %v658 = vadd.f32 0.0, %v657
  %v659 = vpop.f32.mrb[0].mxu0
  %v660 = vpop.f32.mrb[0].mxu0
  %v661 = vadd.f32 0.0, %v660
  %v662 = vpop.f32.mrb[0].mxu0
  %663 = vmatprep.mubr.bf16.mxu0 %v298
  %664 = vmatmul.mubr.bf16.gmra.mrb[0].mxu0 %v297
  %v665 = vpop.f32.mrb[0].mxu0
  %v666 = vadd.f32 0.0, %v665
  %v667 = vpop.f32.mrb[0].mxu0
  %v668 = vpop.f32.mrb[0].mxu0
  %v669 = vadd.f32 0.0, %v668
  %v670 = vpop.f32.mrb[0].mxu0
  %671 = vdwg.mxu0
  %672 = vmatprep.subr.bf16.mxu0 0
  %673 = vmatpush1.bf16.msra.mxu0 %v494
  %674 = vmatprep.subr.bf16.mxu0 0
  %675 = vmatpush1.bf16.msra.mxu0 %v495
  %676 = vmatprep.subr.bf16.mxu0 0
  %677 = vmatpush1.bf16.msra.mxu0 %v496
  %678 = vmatprep.subr.bf16.mxu0 0
  %679 = vmatpush1.bf16.msra.mxu0 %v497
  %680 = vmatprep.subr.bf16.mxu0 0
  %681 = vmatpush1.bf16.msra.mxu0 %v498
  %682 = vmatprep.subr.bf16.mxu0 0
  %683 = vmatpush1.bf16.msra.mxu0 %v499
  %684 = vmatprep.subr.bf16.mxu0 0
  %685 = vmatpush1.bf16.msra.mxu0 %v500
  %686 = vmatprep.subr.bf16.mxu0 0
  %687 = vmatpush1.bf16.msra.mxu0 %v501
  %688 = vmatprep.subr.bf16.mxu0 0
  %689 = vmatpush1.bf16.msra.mxu0 %v502
  %690 = vmatprep.subr.bf16.mxu0 0
  %691 = vmatpush1.bf16.msra.mxu0 %v503
  %692 = vmatprep.subr.bf16.mxu0 0
  %693 = vmatpush1.bf16.msra.mxu0 %v504
  %694 = vmatprep.subr.bf16.mxu0 0
  %695 = vmatpush1.bf16.msra.mxu0 %v505
  %696 = vmatprep.subr.bf16.mxu0 0
  %697 = vmatpush1.bf16.msra.mxu0 %v506
  %698 = vmatprep.subr.bf16.mxu0 0
  %699 = vmatpush1.bf16.msra.mxu0 %v507
  %700 = vmatprep.subr.bf16.mxu0 0
  %701 = vmatpush1.bf16.msra.mxu0 %v508
  %702 = vmatprep.subr.bf16.mxu0 0
  %703 = vmatpush1.bf16.msra.mxu0 %v509
  %704 = vmatprep.mubr.bf16.mxu0 %v265
  %705 = vmatmul.mubr.bf16.gmra.mrb[0].mxu0 %v264
  %v706 = vpop.f32.mrb[0].mxu0
  %v707 = vadd.f32 %v610, %v706
  %v708 = vpop.f32.mrb[0].mxu0
  %v709 = vpop.f32.mrb[0].mxu0
  %v710 = vadd.f32 %v613, %v709
  %v711 = vpop.f32.mrb[0].mxu0
  %712 = vmatprep.mubr.bf16.mxu0 %v270
  %713 = vmatmul.mubr.bf16.gmra.mrb[0].mxu0 %v269
  %v714 = vpop.f32.mrb[0].mxu0
  %v715 = vadd.f32 %v618, %v714
  %v716 = vpop.f32.mrb[0].mxu0
  %v717 = vpop.f32.mrb[0].mxu0
  %v718 = vadd.f32 %v621, %v717
  %v719 = vpop.f32.mrb[0].mxu0
  %720 = vmatprep.mubr.bf16.mxu0 %v275
  %721 = vmatmul.mubr.bf16.gmra.mrb[0].mxu0 %v274
  %v722 = vpop.f32.mrb[0].mxu0
  %v723 = vadd.f32 %v626, %v722
  %v724 = vpop.f32.mrb[0].mxu0
  %v725 = vpop.f32.mrb[0].mxu0
  %v726 = vadd.f32 %v629, %v725
  %v727 = vpop.f32.mrb[0].mxu0
  %728 = vmatprep.mubr.bf16.mxu0 %v280
  %729 = vmatmul.mubr.bf16.gmra.mrb[0].mxu0 %v279
  %v730 = vpop.f32.mrb[0].mxu0
  %v731 = vadd.f32 %v634, %v730
  %v732 = vpop.f32.mrb[0].mxu0
  %v733 = vpop.f32.mrb[0].mxu0
  %v734 = vadd.f32 %v637, %v733
  %v735 = vpop.f32.mrb[0].mxu0
  %736 = vmatprep.mubr.bf16.mxu0 %v285
  %737 = vmatmul.mubr.bf16.gmra.mrb[0].mxu0 %v284
  %v738 = vpop.f32.mrb[0].mxu0
  %v739 = vadd.f32 %v642, %v738
  %v740 = vpop.f32.mrb[0].mxu0
  %v741 = vpop.f32.mrb[0].mxu0
  %v742 = vadd.f32 %v645, %v741
  %v743 = vpop.f32.mrb[0].mxu0
  %744 = vmatprep.mubr.bf16.mxu0 %v290
  %745 = vmatmul.mubr.bf16.gmra.mrb[0].mxu0 %v289
  %v746 = vpop.f32.mrb[0].mxu0
  %v747 = vadd.f32 %v650, %v746
  %v748 = vpop.f32.mrb[0].mxu0
  %v749 = vpop.f32.mrb[0].mxu0
  %v750 = vadd.f32 %v653, %v749
  %v751 = vpop.f32.mrb[0].mxu0
  %752 = vmatprep.mubr.bf16.mxu0 %v295
  %753 = vmatmul.mubr.bf16.gmra.mrb[0].mxu0 %v294
  %v754 = vpop.f32.mrb[0].mxu0
  %v755 = vadd.f32 %v658, %v754
  %v756 = vpop.f32.mrb[0].mxu0
  %v757 = vpop.f32.mrb[0].mxu0
  %v758 = vadd.f32 %v661, %v757
  %v759 = vpop.f32.mrb[0].mxu0
  %760 = vmatprep.mubr.bf16.mxu0 %v300
  %761 = vmatmul.mubr.bf16.gmra.mrb[0].mxu0 %v299
  %v762 = vpop.f32.mrb[0].mxu0
  %v763 = vadd.f32 %v666, %v762
  %v764 = vpop.f32.mrb[0].mxu0
  %v765 = vpop.f32.mrb[0].mxu0
  %v766 = vadd.f32 %v669, %v765
  %v767 = vpop.f32.mrb[0].mxu0
  %768 = vdwg.mxu0
  %769 = vmatprep.subr.bf16.mxu0 0
  %770 = vmatpush1.bf16.msra.mxu0 %v510
  %771 = vmatprep.subr.bf16.mxu0 0
  %772 = vmatpush1.bf16.msra.mxu0 %v511
  %773 = vmatprep.subr.bf16.mxu0 0
  %774 = vmatpush1.bf16.msra.mxu0 %v512
  %775 = vmatprep.subr.bf16.mxu0 0
  %776 = vmatpush1.bf16.msra.mxu0 %v513
  %777 = vmatprep.subr.bf16.mxu0 0
  %778 = vmatpush1.bf16.msra.mxu0 0
  %779 = vmatprep.subr.bf16.mxu0 0
  %780 = vmatpush1.bf16.msra.mxu0 0
  %781 = vmatprep.subr.bf16.mxu0 0
  %782 = vmatpush1.bf16.msra.mxu0 0
  %783 = vmatprep.subr.bf16.mxu0 0
  %784 = vmatpush1.bf16.msra.mxu0 0
  %785 = vmatprep.subr.bf16.mxu0 0
  %786 = vmatpush1.bf16.msra.mxu0 0
  %787 = vmatprep.subr.bf16.mxu0 0
  %788 = vmatpush1.bf16.msra.mxu0 0
  %789 = vmatprep.subr.bf16.mxu0 0
  %790 = vmatpush1.bf16.msra.mxu0 0
  %791 = vmatprep.subr.bf16.mxu0 0
  %792 = vmatpush1.bf16.msra.mxu0 0
  %793 = vmatprep.subr.bf16.mxu0 0
  %794 = vmatpush1.bf16.msra.mxu0 0
  %795 = vmatprep.subr.bf16.mxu0 0
  %796 = vmatpush1.bf16.msra.mxu0 0
  %797 = vmatprep.subr.bf16.mxu0 0
  %798 = vmatpush1.bf16.msra.mxu0 0
  %799 = vmatprep.subr.bf16.mxu0 0
  %800 = vmatpush1.bf16.msra.mxu0 0
  %801 = vmatprep.mubr.bf16.mxu0 0
  %802 = vmatmul.mubr.bf16.gmra.mrb[0].mxu0 %v552
  %v803 = vpop.f32.mrb[0].mxu0
  %v804 = vadd.f32 %v707, %v803
  %v805 = vpop.f32.mrb[0].mxu0
  %v806 = vpop.f32.mrb[0].mxu0
  %v807 = vadd.f32 %v710, %v806
  %v808 = vpop.f32.mrb[0].mxu0
  %809 = vmatprep.mubr.bf16.mxu0 0
  %810 = vmatmul.mubr.bf16.gmra.mrb[0].mxu0 %v555
  %v811 = vpop.f32.mrb[0].mxu0
  %v812 = vadd.f32 %v715, %v811
  %v813 = vpop.f32.mrb[0].mxu0
  %v814 = vpop.f32.mrb[0].mxu0
  %v815 = vadd.f32 %v718, %v814
  %v816 = vpop.f32.mrb[0].mxu0
  %817 = vmatprep.mubr.bf16.mxu0 0
  %818 = vmatmul.mubr.bf16.gmra.mrb[0].mxu0 %v558
  %v819 = vpop.f32.mrb[0].mxu0
  %v820 = vadd.f32 %v723, %v819
  %v821 = vpop.f32.mrb[0].mxu0
  %v822 = vpop.f32.mrb[0].mxu0
  %v823 = vadd.f32 %v726, %v822
  %v824 = vpop.f32.mrb[0].mxu0
  %825 = vmatprep.mubr.bf16.mxu0 0
  %826 = vmatmul.mubr.bf16.gmra.mrb[0].mxu0 %v561
  %v827 = vpop.f32.mrb[0].mxu0
  %v828 = vadd.f32 %v731, %v827
  %v829 = vpop.f32.mrb[0].mxu0
  %v830 = vpop.f32.mrb[0].mxu0
  %v831 = vadd.f32 %v734, %v830
  %v832 = vpop.f32.mrb[0].mxu0
  %833 = vmatprep.mubr.bf16.mxu0 0
  %834 = vmatmul.mubr.bf16.gmra.mrb[0].mxu0 %v564
  %v835 = vpop.f32.mrb[0].mxu0
  %v836 = vadd.f32 %v739, %v835
  %v837 = vpop.f32.mrb[0].mxu0
  %v838 = vpop.f32.mrb[0].mxu0
  %v839 = vadd.f32 %v742, %v838
  %v840 = vpop.f32.mrb[0].mxu0
  %841 = vmatprep.mubr.bf16.mxu0 0
  %842 = vmatmul.mubr.bf16.gmra.mrb[0].mxu0 %v567
  %v843 = vpop.f32.mrb[0].mxu0
  %v844 = vadd.f32 %v747, %v843
  %v845 = vpop.f32.mrb[0].mxu0
  %v846 = vpop.f32.mrb[0].mxu0
  %v847 = vadd.f32 %v750, %v846
  %v848 = vpop.f32.mrb[0].mxu0
  %849 = vmatprep.mubr.bf16.mxu0 0
  %850 = vmatmul.mubr.bf16.gmra.mrb[0].mxu0 %v570
  %v851 = vpop.f32.mrb[0].mxu0
  %v852 = vadd.f32 %v755, %v851
  %v853 = vpop.f32.mrb[0].mxu0
  %v854 = vpop.f32.mrb[0].mxu0
  %v855 = vadd.f32 %v758, %v854
  %v856 = vpop.f32.mrb[0].mxu0
  %857 = vmatprep.mubr.bf16.mxu0 0
  %858 = vmatmul.mubr.bf16.gmra.mrb[0].mxu0 %v573
  %v859 = vpop.f32.mrb[0].mxu0
  %v860 = vadd.f32 %v763, %v859
  %v861 = vpop.f32.mrb[0].mxu0
  %v862 = vpop.f32.mrb[0].mxu0
  %v863 = vadd.f32 %v766, %v862
  %v864 = vpop.f32.mrb[0].mxu0
  %865 = vdwg.mxu0
  %866 = vst.msk [vmem:[%s2] sm:$0xff] %vm550, %v804
  %867 = vst.msk [vmem:[%s2 + $0x8] sm:$0xff] %vm550, %v807
  %868 = vst.msk [vmem:[%s2 + $0x10] sm:$0xff] %vm550, %v812
  %869 = vst.msk [vmem:[%s2 + $0x18] sm:$0xff] %vm550, %v815
  %870 = vst.msk [vmem:[%s2 + $0x20] sm:$0xff] %vm550, %v820
  %871 = vst.msk [vmem:[%s2 + $0x28] sm:$0xff] %vm550, %v823
  %872 = vst.msk [vmem:[%s2 + $0x30] sm:$0xff] %vm550, %v828
  %873 = vst.msk [vmem:[%s2 + $0x38] sm:$0xff] %vm550, %v831
  %874 = vst.msk [vmem:[%s2 + $0x40] sm:$0xff] %vm550, %v836
  %875 = vst.msk [vmem:[%s2 + $0x48] sm:$0xff] %vm550, %v839
  %876 = vst.msk [vmem:[%s2 + $0x50] sm:$0xff] %vm550, %v844
  %877 = vst.msk [vmem:[%s2 + $0x58] sm:$0xff] %vm550, %v847
  %878 = vst.msk [vmem:[%s2 + $0x60] sm:$0xff] %vm550, %v852
  %879 = vst.msk [vmem:[%s2 + $0x68] sm:$0xff] %vm550, %v855
  %880 = vst.msk [vmem:[%s2 + $0x70] sm:$0xff] %vm550, %v860
  %881 = vst.msk [vmem:[%s2 + $0x78] sm:$0xff] %vm550, %v863
  %v882 = vsel %vm550, %v804, 0.0
  %v883 = vsel %vm550, %v807, 0.0
  %v884 = vadd.f32 %v882, %v883
  %v885 = vsel %vm550, %v812, 0.0
  %v886 = vadd.f32 %v884, %v885
  %v887 = vsel %vm550, %v815, 0.0
  %v888 = vadd.f32 %v886, %v887
  %v889 = vsel %vm550, %v820, 0.0
  %v890 = vadd.f32 %v888, %v889
  %v891 = vsel %vm550, %v823, 0.0
  %v892 = vadd.f32 %v890, %v891
  %v893 = vsel %vm550, %v828, 0.0
  %v894 = vadd.f32 %v892, %v893
  %v895 = vsel %vm550, %v831, 0.0
  %v896 = vadd.f32 %v894, %v895
  %v897 = vsel %vm550, %v836, 0.0
  %v898 = vadd.f32 %v896, %v897
  %v899 = vsel %vm550, %v839, 0.0
  %v900 = vadd.f32 %v898, %v899
  %v901 = vsel %vm550, %v844, 0.0
  %v902 = vadd.f32 %v900, %v901
  %v903 = vsel %vm550, %v847, 0.0
  %v904 = vadd.f32 %v902, %v903
  %v905 = vsel %vm550, %v852, 0.0
  %v906 = vadd.f32 %v904, %v905
  %v907 = vsel %vm550, %v855, 0.0
  %v908 = vadd.f32 %v906, %v907
  %v909 = vsel %vm550, %v860, 0.0
  %v910 = vadd.f32 %v908, %v909
  %v911 = vsel %vm550, %v863, 0.0
  %v912 = vadd.f32 %v910, %v911
  %v913 = vrot.slane %v912, 4
  %v914 = vadd.f32 %v912, %v913
  %v915 = vrot.slane %v914, 2
  %v916 = vadd.f32 %v914, %v915
  %v917 = vrot.slane %v916, 1
  %v918 = vadd.f32 %v916, %v917
  %v919 = vmul.f32 %v804, %v804
  %v920 = vmul.f32 %v807, %v807
  %v921 = vmul.f32 %v812, %v812
  %v922 = vmul.f32 %v815, %v815
  %v923 = vmul.f32 %v820, %v820
  %v924 = vmul.f32 %v823, %v823
  %v925 = vmul.f32 %v828, %v828
  %v926 = vmul.f32 %v831, %v831
  %v927 = vmul.f32 %v836, %v836
  %v928 = vmul.f32 %v839, %v839
  %v929 = vmul.f32 %v844, %v844
  %v930 = vmul.f32 %v847, %v847
  %v931 = vmul.f32 %v852, %v852
  %v932 = vmul.f32 %v855, %v855
  %v933 = vmul.f32 %v860, %v860
  %v934 = vmul.f32 %v863, %v863
  %v935 = vsel %vm550, %v919, 0.0
  %v936 = vsel %vm550, %v920, 0.0
  %v937 = vadd.f32 %v935, %v936
  %v938 = vsel %vm550, %v921, 0.0
  %v939 = vadd.f32 %v937, %v938
  %v940 = vsel %vm550, %v922, 0.0
  %v941 = vadd.f32 %v939, %v940
  %v942 = vsel %vm550, %v923, 0.0
  %v943 = vadd.f32 %v941, %v942
  %v944 = vsel %vm550, %v924, 0.0
  %v945 = vadd.f32 %v943, %v944
  %v946 = vsel %vm550, %v925, 0.0
  %v947 = vadd.f32 %v945, %v946
  %v948 = vsel %vm550, %v926, 0.0
  %v949 = vadd.f32 %v947, %v948
  %v950 = vsel %vm550, %v927, 0.0
  %v951 = vadd.f32 %v949, %v950
  %v952 = vsel %vm550, %v928, 0.0
  %v953 = vadd.f32 %v951, %v952
  %v954 = vsel %vm550, %v929, 0.0
  %v955 = vadd.f32 %v953, %v954
  %v956 = vsel %vm550, %v930, 0.0
  %v957 = vadd.f32 %v955, %v956
  %v958 = vsel %vm550, %v931, 0.0
  %v959 = vadd.f32 %v957, %v958
  %v960 = vsel %vm550, %v932, 0.0
  %v961 = vadd.f32 %v959, %v960
  %v962 = vsel %vm550, %v933, 0.0
  %v963 = vadd.f32 %v961, %v962
  %v964 = vsel %vm550, %v934, 0.0
  %v965 = vadd.f32 %v963, %v964
  %v966 = vrot.slane %v965, 4
  %v967 = vadd.f32 %v965, %v966
  %v968 = vrot.slane %v967, 2
  %v969 = vadd.f32 %v967, %v968
  %v970 = vrot.slane %v969, 1
  %v971 = vadd.f32 %v969, %v970
  %vm972 = vcmask 1040384
  %v973 = vsel %vm972, %v918, %v971
  %vm974 = vcmask 517120
  %975 = vst.msk [vmem:[%s3] sm:$0x3] %vm974, %v973
  // Predicated region
  $region10: #{_lambda_.32} parent=0 // pred_check
    _
  $region11: #{_lambda_.32} parent=0 // pred_check_branch
    %977 = sbr.rel (0) target = $region13
  $region12: #{_lambda_.32} parent=0 // pred_region
    _
  $region13: #{_lambda_.32} parent=0 // pred_fallthru
    _
  // Predicated region
  $region14: #{_lambda_.32} parent=0 // pred_check
    _
  $region15: #{_lambda_.32} parent=0 // pred_check_branch
    %979 = sbr.rel (0) target = $region17
  $region16: #{_lambda_.32} parent=0 // pred_region
    _
  $region17: #{_lambda_.32} parent=0 // pred_fallthru
    _
  // Predicated region
  $region18: #{_lambda_.32} parent=0 // pred_check
    _
  $region19: #{_lambda_.32} parent=0 // pred_check_branch
    %981 = sbr.rel (0) target = $region21
  $region20: #{_lambda_.32} parent=0 // pred_region
    _
  $region21: #{_lambda_.32} parent=0 // pred_fallthru
    _
  // Predicated region
  $region22: #{_lambda_.32} parent=0 // pred_check
    _
  $region23: #{_lambda_.32} parent=0 // pred_check_branch
    %983 = sbr.rel (0) target = $region25
  $region24: #{_lambda_.32} parent=0 // pred_region
    _
  $region25: #{_lambda_.32} parent=0 // pred_fallthru
    _

// kernel: _lambda_.35
$region0: #{_lambda_.35}
  #allocation0 [shape = 'u32[]', space=smem, size = 0x4, offset = 0x4, fixed_abs, tag = 'smem constant byte address 0x4 - core index']
  #allocation1 [shape = 'u32[144,128]{1,0:T(1,128)}', space=vmem, size = 0x12000, scoped, tag = 'internal scratch']
  %s0 = inlined_call_operand.vmem [shape: f32[32,128], index: 0, kind: input, shape index: {}]
  %s1 = inlined_call_operand.vmem [shape: f32[1,128], index: 1, kind: input, shape index: {}]
  %s2 = inlined_call_operand.vmem [shape: f32[1,128], index: 2, kind: input, shape index: {}]
  %s3 = inlined_call_operand.vmem [shape: f32[32,128], index: 3, kind: output, shape index: {}]
  %s4 = sld [smem:[#allocation0]]
  $region22: #{_lambda_.35} parent=0
    _
  %s6 = ssub.s32 1, %s4
  %s7 = scalar_select 0, %s6, %s4
  // Predicated region
  $region2: #{_lambda_.35} parent=0 // pred_check
    _
  $region3: #{_lambda_.35} parent=0 // pred_check_branch
    %9 = sbr.rel (0) target = $region5
  $region4: #{_lambda_.35} parent=0 // pred_region
    _
  $region5: #{_lambda_.35} parent=0 // pred_fallthru
    _
  // Predicated region
  $region6: #{_lambda_.35} parent=0 // pred_check
    _
  $region7: #{_lambda_.35} parent=0 // pred_check_branch
    %11 = sbr.rel (0) target = $region9
  $region8: #{_lambda_.35} parent=0 // pred_region
    _
  $region9: #{_lambda_.35} parent=0 // pred_fallthru
    _
  // Predicated region
  $region10: #{_lambda_.35} parent=0 // pred_check
    _
  $region11: #{_lambda_.35} parent=0 // pred_check_branch
    %13 = sbr.rel (0) target = $region13
  $region12: #{_lambda_.35} parent=0 // pred_region
    _
  $region13: #{_lambda_.35} parent=0 // pred_fallthru
    _
  %v14 = vld [vmem:[%s0] sm:$0xff]
  %v15 = vld [vmem:[%s0 + $0x8] sm:$0xff]
  %v16 = vld [vmem:[%s0 + $0x10] sm:$0xff]
  %v17 = vld [vmem:[%s0 + $0x18] sm:$0xff]
  %v18 = vld [vmem:[%s1] sm:$0x1]
  %v20 = vlaneseq
  %v21 = vshrl.u32 %v20, 7
  %v22 = vsub.s32 0, %v21
  %v23 = vrot.slane %v18, %v22
  %v25 = vmul.f32 %v14, %v23
  %v26 = vmul.f32 %v15, %v23
  %v27 = vmul.f32 %v16, %v23
  %v28 = vmul.f32 %v17, %v23
  %v29 = vld [vmem:[%s2] sm:$0x1]
  %v31 = vlaneseq
  %v32 = vshrl.u32 %v31, 7
  %v33 = vsub.s32 0, %v32
  %v34 = vrot.slane %v29, %v33
  %v36 = vadd.f32 %v25, %v34
  %v37 = vadd.f32 %v26, %v34
  %v38 = vadd.f32 %v27, %v34
  %v39 = vadd.f32 %v28, %v34
  %v40 = vmax.f32 %v36, 0.0
  %v41 = vmax.f32 %v37, 0.0
  %v42 = vmax.f32 %v38, 0.0
  %v43 = vmax.f32 %v39, 0.0
  %44 = vst [vmem:[%s3] sm:$0xff] %v40
  %45 = vst [vmem:[%s3 + $0x8] sm:$0xff] %v41
  %46 = vst [vmem:[%s3 + $0x10] sm:$0xff] %v42
  %47 = vst [vmem:[%s3 + $0x18] sm:$0xff] %v43
  // Predicated region
  $region14: #{_lambda_.35} parent=0 // pred_check
    _
  $region15: #{_lambda_.35} parent=0 // pred_check_branch
    %49 = sbr.rel (0) target = $region17
  $region16: #{_lambda_.35} parent=0 // pred_region
    _
  $region17: #{_lambda_.35} parent=0 // pred_fallthru
    _
  // Predicated region
  $region18: #{_lambda_.35} parent=0 // pred_check
    _
  $region19: #{_lambda_.35} parent=0 // pred_check_branch
    %51 = sbr.rel (0) target = $region21
  $region20: #{_lambda_.35} parent=0 // pred_region
    _
  $region21: #{_lambda_.35} parent=0 // pred_fallthru
    _

// kernel: _lambda_.34
$region0: #{_lambda_.34}
  #allocation0 [shape = 'u32[]', space=smem, size = 0x4, offset = 0x4, fixed_abs, tag = 'smem constant byte address 0x4 - core index']
  #allocation1 [shape = 'u32[144,128]{1,0:T(1,128)}', space=vmem, size = 0x12000, scoped, tag = 'internal scratch']
  %s0 = inlined_call_operand.vmem [shape: bf16[32,576], index: 0, kind: input, shape index: {}]
  %s1 = inlined_call_operand.vmem [shape: bf16[576,128], index: 1, kind: input, shape index: {}]
  %s2 = inlined_call_operand.vmem [shape: f32[32,128], index: 2, kind: output, shape index: {0}]
  %s3 = inlined_call_operand.vmem [shape: f32[1,2,128], index: 3, kind: output, shape index: {1}]
  %4 = xla_tuple %s2, %s3
  %s5 = sld [smem:[#allocation0]]
  $region26: #{_lambda_.34} parent=0
    _
  %s7 = ssub.s32 1, %s5
  %s8 = scalar_select 0, %s7, %s5
  // Predicated region
  $region2: #{_lambda_.34} parent=0 // pred_check
    _
  $region3: #{_lambda_.34} parent=0 // pred_check_branch
    %10 = sbr.rel (0) target = $region5
  $region4: #{_lambda_.34} parent=0 // pred_region
    _
  $region5: #{_lambda_.34} parent=0 // pred_fallthru
    _
  // Predicated region
  $region6: #{_lambda_.34} parent=0 // pred_check
    _
  $region7: #{_lambda_.34} parent=0 // pred_check_branch
    %12 = sbr.rel (0) target = $region9
  $region8: #{_lambda_.34} parent=0 // pred_region
    _
  $region9: #{_lambda_.34} parent=0 // pred_fallthru
    _
  %v14 = vld [vmem:[%s0] sm:$0xff]
  %v15 = vld [vmem:[%s0 + $0x8] sm:$0xff]
  %v16 = vld [vmem:[%s0 + $0x10] sm:$0xf]
  %v17 = vld [vmem:[%s0 + $0x14] sm:$0xff]
  %v18 = vld [vmem:[%s0 + $0x1c] sm:$0xff]
  %v19 = vld [vmem:[%s0 + $0x24] sm:$0xf]
  %v20 = vld [vmem:[%s0 + $0x28] sm:$0xff]
  %v21 = vld [vmem:[%s0 + $0x30] sm:$0xff]
  %v22 = vld [vmem:[%s0 + $0x38] sm:$0xf]
  %v23 = vld [vmem:[%s0 + $0x3c] sm:$0xff]
  %v24 = vld [vmem:[%s0 + $0x44] sm:$0xff]
  %v25 = vld [vmem:[%s0 + $0x4c] sm:$0xf]
  %v26 = vld [vmem:[%s1] sm:$0xf]
  %v27 = vld [vmem:[%s1 + $0x4] sm:$0xf]
  %v28 = vld [vmem:[%s1 + $0x8] sm:$0xf]
  %v29 = vld [vmem:[%s1 + $0xc] sm:$0xf]
  %v30 = vld [vmem:[%s1 + $0x10] sm:$0xf]
  %v31 = vld [vmem:[%s1 + $0x14] sm:$0xf]
  %v32 = vld [vmem:[%s1 + $0x18] sm:$0xf]
  %v33 = vld [vmem:[%s1 + $0x1c] sm:$0xf]
  %v34 = vld [vmem:[%s1 + $0x20] sm:$0xf]
  %v35 = vld [vmem:[%s1 + $0x24] sm:$0xf]
  %v36 = vld [vmem:[%s1 + $0x28] sm:$0xf]
  %v37 = vld [vmem:[%s1 + $0x2c] sm:$0xf]
  %v38 = vld [vmem:[%s1 + $0x30] sm:$0xf]
  %v39 = vld [vmem:[%s1 + $0x34] sm:$0xf]
  %v40 = vld [vmem:[%s1 + $0x38] sm:$0xf]
  %v41 = vld [vmem:[%s1 + $0x3c] sm:$0xf]
  %v42 = vld [vmem:[%s1 + $0x40] sm:$0xf]
  %v43 = vld [vmem:[%s1 + $0x44] sm:$0xf]
  %v44 = vld [vmem:[%s1 + $0x48] sm:$0xf]
  %v45 = vld [vmem:[%s1 + $0x4c] sm:$0xf]
  %v46 = vld [vmem:[%s1 + $0x50] sm:$0xf]
  %v47 = vld [vmem:[%s1 + $0x54] sm:$0xf]
  %v48 = vld [vmem:[%s1 + $0x58] sm:$0xf]
  %v49 = vld [vmem:[%s1 + $0x5c] sm:$0xf]
  %v50 = vld [vmem:[%s1 + $0x60] sm:$0xf]
  %v51 = vld [vmem:[%s1 + $0x64] sm:$0xf]
  %v52 = vld [vmem:[%s1 + $0x68] sm:$0xf]
  %v53 = vld [vmem:[%s1 + $0x6c] sm:$0xf]
  %v54 = vld [vmem:[%s1 + $0x70] sm:$0xf]
  %v55 = vld [vmem:[%s1 + $0x74] sm:$0xf]
  %v56 = vld [vmem:[%s1 + $0x78] sm:$0xf]
  %v57 = vld [vmem:[%s1 + $0x7c] sm:$0xf]
  %v58 = vld [vmem:[%s1 + $0x80] sm:$0xf]
  %v59 = vld [vmem:[%s1 + $0x84] sm:$0xf]
  %v60 = vld [vmem:[%s1 + $0x88] sm:$0xf]
  %v61 = vld [vmem:[%s1 + $0x8c] sm:$0xf]
  %v62 = vld [vmem:[%s1 + $0x90] sm:$0xf]
  %v63 = vld [vmem:[%s1 + $0x94] sm:$0xf]
  %v64 = vld [vmem:[%s1 + $0x98] sm:$0xf]
  %v65 = vld [vmem:[%s1 + $0x9c] sm:$0xf]
  %v66 = vld [vmem:[%s1 + $0xa0] sm:$0xf]
  %v67 = vld [vmem:[%s1 + $0xa4] sm:$0xf]
  %v68 = vld [vmem:[%s1 + $0xa8] sm:$0xf]
  %v69 = vld [vmem:[%s1 + $0xac] sm:$0xf]
  %v70 = vld [vmem:[%s1 + $0xb0] sm:$0xf]
  %v71 = vld [vmem:[%s1 + $0xb4] sm:$0xf]
  %v72 = vld [vmem:[%s1 + $0xb8] sm:$0xf]
  %v73 = vld [vmem:[%s1 + $0xbc] sm:$0xf]
  %v74 = vld [vmem:[%s1 + $0xc0] sm:$0xf]
  %v75 = vld [vmem:[%s1 + $0xc4] sm:$0xf]
  %v76 = vld [vmem:[%s1 + $0xc8] sm:$0xf]
  %v77 = vld [vmem:[%s1 + $0xcc] sm:$0xf]
  %v78 = vld [vmem:[%s1 + $0xd0] sm:$0xf]
  %v79 = vld [vmem:[%s1 + $0xd4] sm:$0xf]
  %v80 = vld [vmem:[%s1 + $0xd8] sm:$0xf]
  %v81 = vld [vmem:[%s1 + $0xdc] sm:$0xf]
  %v82 = vld [vmem:[%s1 + $0xe0] sm:$0xf]
  %v83 = vld [vmem:[%s1 + $0xe4] sm:$0xf]
  %v84 = vld [vmem:[%s1 + $0xe8] sm:$0xf]
  %v85 = vld [vmem:[%s1 + $0xec] sm:$0xf]
  %v86 = vld [vmem:[%s1 + $0xf0] sm:$0xf]
  %v87 = vld [vmem:[%s1 + $0xf4] sm:$0xf]
  %v88 = vld [vmem:[%s1 + $0xf8] sm:$0xf]
  %v89 = vld [vmem:[%s1 + $0xfc] sm:$0xf]
  %v90 = vld [vmem:[%s1 + $0x100] sm:$0xf]
  %v91 = vld [vmem:[%s1 + $0x104] sm:$0xf]
  %v92 = vld [vmem:[%s1 + $0x108] sm:$0xf]
  %v93 = vld [vmem:[%s1 + $0x10c] sm:$0xf]
  %v94 = vld [vmem:[%s1 + $0x110] sm:$0xf]
  %v95 = vld [vmem:[%s1 + $0x114] sm:$0xf]
  %v96 = vld [vmem:[%s1 + $0x118] sm:$0xf]
  %v97 = vld [vmem:[%s1 + $0x11c] sm:$0xf]
  %v110 = vunpack.c.l.b16 %v14
  %v111 = vunpack.c.h.b16 %v14
  %v112 = vunpack.c.l.b16 %v15
  %v113 = vunpack.c.h.b16 %v15
  %v114 = vunpack.c.l.b16 %v16
  %v115 = vunpack.c.l.b16 %v17
  %v116 = vunpack.c.h.b16 %v17
  %v117 = vunpack.c.l.b16 %v18
  %v118 = vunpack.c.h.b16 %v18
  %v119 = vunpack.c.l.b16 %v19
  %v120 = vunpack.c.l.b16 %v20
  %v121 = vunpack.c.h.b16 %v20
  %v122 = vunpack.c.l.b16 %v21
  %v123 = vunpack.c.h.b16 %v21
  %v124 = vunpack.c.l.b16 %v22
  %v125 = vunpack.c.l.b16 %v23
  %v126 = vunpack.c.h.b16 %v23
  %v127 = vunpack.c.l.b16 %v24
  %v128 = vunpack.c.h.b16 %v24
  %v129 = vunpack.c.l.b16 %v25
  %v130 = vpack.c.b16 %v115, %v110
  %v131 = vpack.c.b16 %v116, %v111
  %v132 = vpack.c.b16 %v117, %v112
  %v133 = vpack.c.b16 %v118, %v113
  %v134 = vpack.c.b16 %v119, %v114
  %v135 = vpack.c.b16 %v125, %v120
  %v136 = vpack.c.b16 %v126, %v121
  %v137 = vpack.c.b16 %v127, %v122
  %v138 = vpack.c.b16 %v128, %v123
  %v139 = vpack.c.b16 %v129, %v124
  %v220 = vunpack.c.l.b16 %v26
  %v221 = vunpack.c.l.b16 %v27
  %v222 = vunpack.c.l.b16 %v28
  %v223 = vunpack.c.l.b16 %v29
  %v224 = vunpack.c.l.b16 %v30
  %v225 = vunpack.c.l.b16 %v31
  %v226 = vunpack.c.l.b16 %v32
  %v227 = vunpack.c.l.b16 %v33
  %v228 = vunpack.c.l.b16 %v34
  %v229 = vunpack.c.l.b16 %v35
  %v230 = vunpack.c.l.b16 %v36
  %v231 = vunpack.c.l.b16 %v37
  %v232 = vunpack.c.l.b16 %v38
  %v233 = vunpack.c.l.b16 %v39
  %v234 = vunpack.c.l.b16 %v40
  %v235 = vunpack.c.l.b16 %v41
  %v236 = vunpack.c.l.b16 %v42
  %v237 = vunpack.c.l.b16 %v43
  %v238 = vunpack.c.l.b16 %v44
  %v239 = vunpack.c.l.b16 %v45
  %v240 = vunpack.c.l.b16 %v46
  %v241 = vunpack.c.l.b16 %v47
  %v242 = vunpack.c.l.b16 %v48
  %v243 = vunpack.c.l.b16 %v49
  %v244 = vunpack.c.l.b16 %v50
  %v245 = vunpack.c.l.b16 %v51
  %v246 = vunpack.c.l.b16 %v52
  %v247 = vunpack.c.l.b16 %v53
  %v248 = vunpack.c.l.b16 %v54
  %v249 = vunpack.c.l.b16 %v55
  %v250 = vunpack.c.l.b16 %v56
  %v251 = vunpack.c.l.b16 %v57
  %v252 = vunpack.c.l.b16 %v58
  %v253 = vunpack.c.l.b16 %v59
  %v254 = vunpack.c.l.b16 %v60
  %v255 = vunpack.c.l.b16 %v61
  %v256 = vunpack.c.l.b16 %v62
  %v257 = vunpack.c.l.b16 %v63
  %v258 = vunpack.c.l.b16 %v64
  %v259 = vunpack.c.l.b16 %v65
  %v260 = vunpack.c.l.b16 %v66
  %v261 = vunpack.c.l.b16 %v67
  %v262 = vunpack.c.l.b16 %v68
  %v263 = vunpack.c.l.b16 %v69
  %v264 = vunpack.c.l.b16 %v70
  %v265 = vunpack.c.l.b16 %v71
  %v266 = vunpack.c.l.b16 %v72
  %v267 = vunpack.c.l.b16 %v73
  %v268 = vunpack.c.l.b16 %v74
  %v269 = vunpack.c.l.b16 %v75
  %v270 = vunpack.c.l.b16 %v76
  %v271 = vunpack.c.l.b16 %v77
  %v272 = vunpack.c.l.b16 %v78
  %v273 = vunpack.c.l.b16 %v79
  %v274 = vunpack.c.l.b16 %v80
  %v275 = vunpack.c.l.b16 %v81
  %v276 = vunpack.c.l.b16 %v82
  %v277 = vunpack.c.l.b16 %v83
  %v278 = vunpack.c.l.b16 %v84
  %v279 = vunpack.c.l.b16 %v85
  %v280 = vunpack.c.l.b16 %v86
  %v281 = vunpack.c.l.b16 %v87
  %v282 = vunpack.c.l.b16 %v88
  %v283 = vunpack.c.l.b16 %v89
  %v284 = vunpack.c.l.b16 %v90
  %v285 = vunpack.c.l.b16 %v91
  %v286 = vunpack.c.l.b16 %v92
  %v287 = vunpack.c.l.b16 %v93
  %v288 = vunpack.c.l.b16 %v94
  %v289 = vunpack.c.l.b16 %v95
  %v290 = vunpack.c.l.b16 %v96
  %v291 = vunpack.c.l.b16 %v97
  %v292 = vpack.c.b16 %v221, %v220
  %v293 = vpack.c.b16 %v223, %v222
  %v294 = vpack.c.b16 %v225, %v224
  %v295 = vpack.c.b16 %v227, %v226
  %v296 = vpack.c.b16 %v229, %v228
  %v297 = vpack.c.b16 %v231, %v230
  %v298 = vpack.c.b16 %v233, %v232
  %v299 = vpack.c.b16 %v235, %v234
  %v300 = vpack.c.b16 %v237, %v236
  %v301 = vpack.c.b16 %v239, %v238
  %v302 = vpack.c.b16 %v241, %v240
  %v303 = vpack.c.b16 %v243, %v242
  %v304 = vpack.c.b16 %v245, %v244
  %v305 = vpack.c.b16 %v247, %v246
  %v306 = vpack.c.b16 %v249, %v248
  %v307 = vpack.c.b16 %v251, %v250
  %v308 = vpack.c.b16 %v253, %v252
  %v309 = vpack.c.b16 %v255, %v254
  %v310 = vpack.c.b16 %v257, %v256
  %v311 = vpack.c.b16 %v259, %v258
  %v312 = vpack.c.b16 %v261, %v260
  %v313 = vpack.c.b16 %v263, %v262
  %v314 = vpack.c.b16 %v265, %v264
  %v315 = vpack.c.b16 %v267, %v266
  %v316 = vpack.c.b16 %v269, %v268
  %v317 = vpack.c.b16 %v271, %v270
  %v318 = vpack.c.b16 %v273, %v272
  %v319 = vpack.c.b16 %v275, %v274
  %v320 = vpack.c.b16 %v277, %v276
  %v321 = vpack.c.b16 %v279, %v278
  %v322 = vpack.c.b16 %v281, %v280
  %v323 = vpack.c.b16 %v283, %v282
  %v324 = vpack.c.b16 %v285, %v284
  %v325 = vpack.c.b16 %v287, %v286
  %v326 = vpack.c.b16 %v289, %v288
  %v327 = vpack.c.b16 %v291, %v290
  %vm364 = vcmask 523264
  %v366 = vsel %vm364, %v134, 0
  %v369 = vsel %vm364, %v139, 0
  %371 = vmatprep.subr.bf16.mxu0 0
  %372 = vmatpush1.bf16.msra.mxu0 %v292
  %373 = vmatprep.subr.bf16.mxu0 0
  %374 = vmatpush1.bf16.msra.mxu0 %v293
  %375 = vmatprep.subr.bf16.mxu0 0
  %376 = vmatpush1.bf16.msra.mxu0 %v294
  %377 = vmatprep.subr.bf16.mxu0 0
  %378 = vmatpush1.bf16.msra.mxu0 %v295
  %379 = vmatprep.subr.bf16.mxu0 0
  %380 = vmatpush1.bf16.msra.mxu0 %v296
  %381 = vmatprep.subr.bf16.mxu0 0
  %382 = vmatpush1.bf16.msra.mxu0 %v297
  %383 = vmatprep.subr.bf16.mxu0 0
  %384 = vmatpush1.bf16.msra.mxu0 %v298
  %385 = vmatprep.subr.bf16.mxu0 0
  %386 = vmatpush1.bf16.msra.mxu0 %v299
  %387 = vmatprep.subr.bf16.mxu0 0
  %388 = vmatpush1.bf16.msra.mxu0 %v300
  %389 = vmatprep.subr.bf16.mxu0 0
  %390 = vmatpush1.bf16.msra.mxu0 %v301
  %391 = vmatprep.subr.bf16.mxu0 0
  %392 = vmatpush1.bf16.msra.mxu0 %v302
  %393 = vmatprep.subr.bf16.mxu0 0
  %394 = vmatpush1.bf16.msra.mxu0 %v303
  %395 = vmatprep.subr.bf16.mxu0 0
  %396 = vmatpush1.bf16.msra.mxu0 %v304
  %397 = vmatprep.subr.bf16.mxu0 0
  %398 = vmatpush1.bf16.msra.mxu0 %v305
  %399 = vmatprep.subr.bf16.mxu0 0
  %400 = vmatpush1.bf16.msra.mxu0 %v306
  %401 = vmatprep.subr.bf16.mxu0 0
  %402 = vmatpush1.bf16.msra.mxu0 %v307
  %403 = vmatprep.mubr.bf16.mxu0 %v131
  %404 = vmatmul.mubr.bf16.gmra.mrb[0].mxu0 %v130
  %v405 = vpop.f32.mrb[0].mxu0
  %v406 = vadd.f32 0.0, %v405
  %v407 = vpop.f32.mrb[0].mxu0
  %v408 = vpop.f32.mrb[0].mxu0
  %v409 = vadd.f32 0.0, %v408
  %v410 = vpop.f32.mrb[0].mxu0
  %411 = vmatprep.mubr.bf16.mxu0 %v136
  %412 = vmatmul.mubr.bf16.gmra.mrb[0].mxu0 %v135
  %v413 = vpop.f32.mrb[0].mxu0
  %v414 = vadd.f32 0.0, %v413
  %v415 = vpop.f32.mrb[0].mxu0
  %v416 = vpop.f32.mrb[0].mxu0
  %v417 = vadd.f32 0.0, %v416
  %v418 = vpop.f32.mrb[0].mxu0
  %419 = vdwg.mxu0
  %420 = vmatprep.subr.bf16.mxu0 0
  %421 = vmatpush1.bf16.msra.mxu0 %v308
  %422 = vmatprep.subr.bf16.mxu0 0
  %423 = vmatpush1.bf16.msra.mxu0 %v309
  %424 = vmatprep.subr.bf16.mxu0 0
  %425 = vmatpush1.bf16.msra.mxu0 %v310
  %426 = vmatprep.subr.bf16.mxu0 0
  %427 = vmatpush1.bf16.msra.mxu0 %v311
  %428 = vmatprep.subr.bf16.mxu0 0
  %429 = vmatpush1.bf16.msra.mxu0 %v312
  %430 = vmatprep.subr.bf16.mxu0 0
  %431 = vmatpush1.bf16.msra.mxu0 %v313
  %432 = vmatprep.subr.bf16.mxu0 0
  %433 = vmatpush1.bf16.msra.mxu0 %v314
  %434 = vmatprep.subr.bf16.mxu0 0
  %435 = vmatpush1.bf16.msra.mxu0 %v315
  %436 = vmatprep.subr.bf16.mxu0 0
  %437 = vmatpush1.bf16.msra.mxu0 %v316
  %438 = vmatprep.subr.bf16.mxu0 0
  %439 = vmatpush1.bf16.msra.mxu0 %v317
  %440 = vmatprep.subr.bf16.mxu0 0
  %441 = vmatpush1.bf16.msra.mxu0 %v318
  %442 = vmatprep.subr.bf16.mxu0 0
  %443 = vmatpush1.bf16.msra.mxu0 %v319
  %444 = vmatprep.subr.bf16.mxu0 0
  %445 = vmatpush1.bf16.msra.mxu0 %v320
  %446 = vmatprep.subr.bf16.mxu0 0
  %447 = vmatpush1.bf16.msra.mxu0 %v321
  %448 = vmatprep.subr.bf16.mxu0 0
  %449 = vmatpush1.bf16.msra.mxu0 %v322
  %450 = vmatprep.subr.bf16.mxu0 0
  %451 = vmatpush1.bf16.msra.mxu0 %v323
  %452 = vmatprep.mubr.bf16.mxu0 %v133
  %453 = vmatmul.mubr.bf16.gmra.mrb[0].mxu0 %v132
  %v454 = vpop.f32.mrb[0].mxu0
  %v455 = vadd.f32 %v406, %v454
  %v456 = vpop.f32.mrb[0].mxu0
  %v457 = vpop.f32.mrb[0].mxu0
  %v458 = vadd.f32 %v409, %v457
  %v459 = vpop.f32.mrb[0].mxu0
  %460 = vmatprep.mubr.bf16.mxu0 %v138
  %461 = vmatmul.mubr.bf16.gmra.mrb[0].mxu0 %v137
  %v462 = vpop.f32.mrb[0].mxu0
  %v463 = vadd.f32 %v414, %v462
  %v464 = vpop.f32.mrb[0].mxu0
  %v465 = vpop.f32.mrb[0].mxu0
  %v466 = vadd.f32 %v417, %v465
  %v467 = vpop.f32.mrb[0].mxu0
  %468 = vdwg.mxu0
  %469 = vmatprep.subr.bf16.mxu0 0
  %470 = vmatpush1.bf16.msra.mxu0 %v324
  %471 = vmatprep.subr.bf16.mxu0 0
  %472 = vmatpush1.bf16.msra.mxu0 %v325
  %473 = vmatprep.subr.bf16.mxu0 0
  %474 = vmatpush1.bf16.msra.mxu0 %v326
  %475 = vmatprep.subr.bf16.mxu0 0
  %476 = vmatpush1.bf16.msra.mxu0 %v327
  %477 = vmatprep.subr.bf16.mxu0 0
  %478 = vmatpush1.bf16.msra.mxu0 0
  %479 = vmatprep.subr.bf16.mxu0 0
  %480 = vmatpush1.bf16.msra.mxu0 0
  %481 = vmatprep.subr.bf16.mxu0 0
  %482 = vmatpush1.bf16.msra.mxu0 0
  %483 = vmatprep.subr.bf16.mxu0 0
  %484 = vmatpush1.bf16.msra.mxu0 0
  %485 = vmatprep.subr.bf16.mxu0 0
  %486 = vmatpush1.bf16.msra.mxu0 0
  %487 = vmatprep.subr.bf16.mxu0 0
  %488 = vmatpush1.bf16.msra.mxu0 0
  %489 = vmatprep.subr.bf16.mxu0 0
  %490 = vmatpush1.bf16.msra.mxu0 0
  %491 = vmatprep.subr.bf16.mxu0 0
  %492 = vmatpush1.bf16.msra.mxu0 0
  %493 = vmatprep.subr.bf16.mxu0 0
  %494 = vmatpush1.bf16.msra.mxu0 0
  %495 = vmatprep.subr.bf16.mxu0 0
  %496 = vmatpush1.bf16.msra.mxu0 0
  %497 = vmatprep.subr.bf16.mxu0 0
  %498 = vmatpush1.bf16.msra.mxu0 0
  %499 = vmatprep.subr.bf16.mxu0 0
  %500 = vmatpush1.bf16.msra.mxu0 0
  %501 = vmatprep.mubr.bf16.mxu0 0
  %502 = vmatmul.mubr.bf16.gmra.mrb[0].mxu0 %v366
  %v503 = vpop.f32.mrb[0].mxu0
  %v504 = vadd.f32 %v455, %v503
  %v505 = vpop.f32.mrb[0].mxu0
  %v506 = vpop.f32.mrb[0].mxu0
  %v507 = vadd.f32 %v458, %v506
  %v508 = vpop.f32.mrb[0].mxu0
  %509 = vmatprep.mubr.bf16.mxu0 0
  %510 = vmatmul.mubr.bf16.gmra.mrb[0].mxu0 %v369
  %v511 = vpop.f32.mrb[0].mxu0
  %v512 = vadd.f32 %v463, %v511
  %v513 = vpop.f32.mrb[0].mxu0
  %v514 = vpop.f32.mrb[0].mxu0
  %v515 = vadd.f32 %v466, %v514
  %v516 = vpop.f32.mrb[0].mxu0
  %517 = vdwg.mxu0
  %518 = vst [vmem:[%s2] sm:$0xff] %v504
  %519 = vst [vmem:[%s2 + $0x8] sm:$0xff] %v507
  %520 = vst [vmem:[%s2 + $0x10] sm:$0xff] %v512
  %521 = vst [vmem:[%s2 + $0x18] sm:$0xff] %v515
  %v522 = vadd.f32 %v504, %v507
  %v523 = vadd.f32 %v522, %v512
  %v524 = vadd.f32 %v523, %v515
  %v525 = vrot.slane %v524, 4
  %v526 = vadd.f32 %v524, %v525
  %v527 = vrot.slane %v526, 2
  %v528 = vadd.f32 %v526, %v527
  %v529 = vrot.slane %v528, 1
  %v530 = vadd.f32 %v528, %v529
  %v531 = vmul.f32 %v504, %v504
  %v532 = vmul.f32 %v507, %v507
  %v533 = vmul.f32 %v512, %v512
  %v534 = vmul.f32 %v515, %v515
  %v535 = vadd.f32 %v531, %v532
  %v536 = vadd.f32 %v535, %v533
  %v537 = vadd.f32 %v536, %v534
  %v538 = vrot.slane %v537, 4
  %v539 = vadd.f32 %v537, %v538
  %v540 = vrot.slane %v539, 2
  %v541 = vadd.f32 %v539, %v540
  %v542 = vrot.slane %v541, 1
  %v543 = vadd.f32 %v541, %v542
  %vm544 = vcmask 1040384
  %v545 = vsel %vm544, %v530, %v543
  %546 = vst [vmem:[%s3] sm:$0x3] %v545
  // Predicated region
  $region10: #{_lambda_.34} parent=0 // pred_check
    _
  $region11: #{_lambda_.34} parent=0 // pred_check_branch
    %548 = sbr.rel (0) target = $region13
  $region12: #{_lambda_.34} parent=0 // pred_region
    _
  $region13: #{_lambda_.34} parent=0 // pred_fallthru
    _
  // Predicated region
  $region14: #{_lambda_.34} parent=0 // pred_check
    _
  $region15: #{_lambda_.34} parent=0 // pred_check_branch
    %550 = sbr.rel (0) target = $region17
  $region16: #{_lambda_.34} parent=0 // pred_region
    _
  $region17: #{_lambda_.34} parent=0 // pred_fallthru
    _
  // Predicated region
  $region18: #{_lambda_.34} parent=0 // pred_check
    _
  $region19: #{_lambda_.34} parent=0 // pred_check_branch
    %552 = sbr.rel (0) target = $region21
  $region20: #{_lambda_.34} parent=0 // pred_region
    _
  $region21: #{_lambda_.34} parent=0 // pred_fallthru
    _
  // Predicated region
  $region22: #{_lambda_.34} parent=0 // pred_check
    _
  $region23: #{_lambda_.34} parent=0 // pred_check_branch
    %554 = sbr.rel (0) target = $region25
  $region24: #{_lambda_.34} parent=0 // pred_region
    _
  $region25: #{_lambda_.34} parent=0 // pred_fallthru
    _

// kernel: _lambda_.39
$region0: #{_lambda_.39}
  #allocation0 [shape = 'u32[]', space=smem, size = 0x4, offset = 0x4, fixed_abs, tag = 'smem constant byte address 0x4 - core index']
  #allocation1 [shape = 'u32[144,128]{1,0:T(1,128)}', space=vmem, size = 0x12000, scoped, tag = 'internal scratch']
  %s0 = inlined_call_operand.vmem [shape: f32[8,128], index: 0, kind: input, shape index: {}]
  %s1 = inlined_call_operand.vmem [shape: f32[1,128], index: 1, kind: input, shape index: {}]
  %s2 = inlined_call_operand.vmem [shape: f32[1,128], index: 2, kind: input, shape index: {}]
  %s3 = inlined_call_operand.vmem [shape: f32[8,128], index: 3, kind: output, shape index: {}]
  %s4 = sld [smem:[#allocation0]]
  $region22: #{_lambda_.39} parent=0
    _
  %s6 = ssub.s32 1, %s4
  %s7 = scalar_select 0, %s6, %s4
  // Predicated region
  $region2: #{_lambda_.39} parent=0 // pred_check
    _
  $region3: #{_lambda_.39} parent=0 // pred_check_branch
    %9 = sbr.rel (0) target = $region5
  $region4: #{_lambda_.39} parent=0 // pred_region
    _
  $region5: #{_lambda_.39} parent=0 // pred_fallthru
    _
  // Predicated region
  $region6: #{_lambda_.39} parent=0 // pred_check
    _
  $region7: #{_lambda_.39} parent=0 // pred_check_branch
    %11 = sbr.rel (0) target = $region9
  $region8: #{_lambda_.39} parent=0 // pred_region
    _
  $region9: #{_lambda_.39} parent=0 // pred_fallthru
    _
  // Predicated region
  $region10: #{_lambda_.39} parent=0 // pred_check
    _
  $region11: #{_lambda_.39} parent=0 // pred_check_branch
    %13 = sbr.rel (0) target = $region13
  $region12: #{_lambda_.39} parent=0 // pred_region
    _
  $region13: #{_lambda_.39} parent=0 // pred_fallthru
    _
  %v14 = vld [vmem:[%s0] sm:$0xff]
  %v15 = vld [vmem:[%s1] sm:$0x1]
  %v17 = vlaneseq
  %v18 = vshrl.u32 %v17, 7
  %v19 = vsub.s32 0, %v18
  %v20 = vrot.slane %v15, %v19
  %v22 = vmul.f32 %v14, %v20
  %v23 = vld [vmem:[%s2] sm:$0x1]
  %v25 = vlaneseq
  %v26 = vshrl.u32 %v25, 7
  %v27 = vsub.s32 0, %v26
  %v28 = vrot.slane %v23, %v27
  %v30 = vadd.f32 %v22, %v28
  %v31 = vmax.f32 %v30, 0.0
  %32 = vst [vmem:[%s3] sm:$0xff] %v31
  // Predicated region
  $region14: #{_lambda_.39} parent=0 // pred_check
    _
  $region15: #{_lambda_.39} parent=0 // pred_check_branch
    %34 = sbr.rel (0) target = $region17
  $region16: #{_lambda_.39} parent=0 // pred_region
    _
  $region17: #{_lambda_.39} parent=0 // pred_fallthru
    _
  // Predicated region
  $region18: #{_lambda_.39} parent=0 // pred_check
    _
  $region19: #{_lambda_.39} parent=0 // pred_check_branch
    %36 = sbr.rel (0) target = $region21
  $region20: #{_lambda_.39} parent=0 // pred_region
    _
  $region21: #{_lambda_.39} parent=0 // pred_fallthru
    _

// kernel: tile.10
$region0: #{tile.10}
  #allocation0 [shape = 's32[1]{0}', space=sflag, size = 0x4, scoped, tag = 'scoped memory for tile.10']
  %s0 = inlined_call_operand.vmem [shape: f32[64], index: 0, kind: input, shape index: {}]
  %s1 = inlined_call_operand.vmem [shape: f32[4,64], index: 1, kind: output, shape index: {}]
  // Predicated region
  $region2: #{tile.10} parent=0 // pred_check
    _
  $region3: #{tile.10} parent=0 // pred_check_branch
    %3 = sbr.rel (0) target = $region5
  $region4: #{tile.10} parent=0 // pred_region
    _
  $region5: #{tile.10} parent=0 // pred_fallthru
    _
  %v4 = vld [vmem:[%s0] ss:$0 sm:$0xff]
  %5 = vst [vmem:[%s1] sm:$0xf] %v4

// kernel: tile.11
$region0: #{tile.11}
  %s0 = inlined_call_operand.vmem [shape: f32[4,64], index: 0, kind: input, shape index: {}]
  %s1 = inlined_call_operand.vmem [shape: f32[1,256], index: 1, kind: output, shape index: {}]
  $region1: #{tile.11} parent=0
    #allocation0 [shape = 'u8[8192]{0}', space=vmem, size = 0x2000, scoped, tag = 'scoped mem for output reshape']
    #allocation1 [shape = 'u8[4096]{0}', space=vmem, size = 0x1000, scoped, tag = 'scoped mem for input reshape']
    %s3 = sshllo.u32 0, 4
    %v4 = vld [vmem:[%s0] sm:%s3]
    %5 = vst [vmem:[#allocation1] sm:%s3] %v4
    %s6 = smov 3
    %v7 = vld [vmem:[#allocation1] ss:$2 sm:%s6]
    %vm8 = vcmask 523264
    %9 = vst.msk [vmem:[#allocation0] ss:$8 sm:$0x3] %vm8, %v7
    %s10 = scalar_lea.vmem [#allocation1], 1
    %s11 = smov 3
    %v12 = vld [vmem:[%s10] ss:$2 sm:%s11]
    %13 = vrot.lane.b32.xlu0 %v12, 64
    %v14 = vpop.permute.xlu0 %13
    %vm15 = vcmask 1048064
    %16 = vst.msk [vmem:[#allocation0] ss:$8 sm:$0x3] %vm15, %v14
    %s18 = sshllo.u32 0, 1
    %v20 = vld [vmem:[#allocation0] sm:%s18]
    %s21 = sshllo.u32 0, 1
    %22 = vst [vmem:[%s1] sm:%s21] %v20
    %s23 = scalar_lea.vmem [#allocation0], 8
    %v24 = vld [vmem:[%s23] sm:%s18]
    %s25 = sshllo.u32 0, 1
    %s26 = scalar_lea.vmem %s1, 1
    %27 = vst [vmem:[%s26] sm:%s25] %v24

// kernel: _lambda_.36
$region0: #{_lambda_.36}
  #allocation0 [shape = 'u32[]', space=smem, size = 0x4, offset = 0x4, fixed_abs, tag = 'smem constant byte address 0x4 - core index']
  #allocation1 [shape = 'u32[144,128]{1,0:T(1,128)}', space=vmem, size = 0x12000, scoped, tag = 'internal scratch']
  %s0 = inlined_call_operand.vmem [shape: bf16[32,1152], index: 0, kind: input, shape index: {}]
  %s1 = inlined_call_operand.vmem [shape: bf16[1152,128], index: 1, kind: input, shape index: {}]
  %s2 = inlined_call_operand.vmem [shape: f32[32,128], index: 2, kind: output, shape index: {0}]
  %s3 = inlined_call_operand.vmem [shape: f32[1,2,128], index: 3, kind: output, shape index: {1}]
  %4 = xla_tuple %s2, %s3
  %s5 = sld [smem:[#allocation0]]
  $region26: #{_lambda_.36} parent=0
    _
  %s7 = ssub.s32 1, %s5
  %s8 = scalar_select 0, %s7, %s5
  // Predicated region
  $region2: #{_lambda_.36} parent=0 // pred_check
    _
  $region3: #{_lambda_.36} parent=0 // pred_check_branch
    %10 = sbr.rel (0) target = $region5
  $region4: #{_lambda_.36} parent=0 // pred_region
    _
  $region5: #{_lambda_.36} parent=0 // pred_fallthru
    _
  // Predicated region
  $region6: #{_lambda_.36} parent=0 // pred_check
    _
  $region7: #{_lambda_.36} parent=0 // pred_check_branch
    %12 = sbr.rel (0) target = $region9
  $region8: #{_lambda_.36} parent=0 // pred_region
    _
  $region9: #{_lambda_.36} parent=0 // pred_fallthru
    _
  %v14 = vld [vmem:[%s0] sm:$0xff]
  %v15 = vld [vmem:[%s0 + $0x8] sm:$0xff]
  %v16 = vld [vmem:[%s0 + $0x10] sm:$0xff]
  %v17 = vld [vmem:[%s0 + $0x18] sm:$0xff]
  %v18 = vld [vmem:[%s0 + $0x20] sm:$0xf]
  %v19 = vld [vmem:[%s0 + $0x24] sm:$0xff]
  %v20 = vld [vmem:[%s0 + $0x2c] sm:$0xff]
  %v21 = vld [vmem:[%s0 + $0x34] sm:$0xff]
  %v22 = vld [vmem:[%s0 + $0x3c] sm:$0xff]
  %v23 = vld [vmem:[%s0 + $0x44] sm:$0xf]
  %v24 = vld [vmem:[%s0 + $0x48] sm:$0xff]
  %v25 = vld [vmem:[%s0 + $0x50] sm:$0xff]
  %v26 = vld [vmem:[%s0 + $0x58] sm:$0xff]
  %v27 = vld [vmem:[%s0 + $0x60] sm:$0xff]
  %v28 = vld [vmem:[%s0 + $0x68] sm:$0xf]
  %v29 = vld [vmem:[%s0 + $0x6c] sm:$0xff]
  %v30 = vld [vmem:[%s0 + $0x74] sm:$0xff]
  %v31 = vld [vmem:[%s0 + $0x7c] sm:$0xff]
  %v32 = vld [vmem:[%s0 + $0x84] sm:$0xff]
  %v33 = vld [vmem:[%s0 + $0x8c] sm:$0xf]
  %v34 = vld [vmem:[%s1] sm:$0xf]
  %v35 = vld [vmem:[%s1 + $0x4] sm:$0xf]
  %v36 = vld [vmem:[%s1 + $0x8] sm:$0xf]
  %v37 = vld [vmem:[%s1 + $0xc] sm:$0xf]
  %v38 = vld [vmem:[%s1 + $0x10] sm:$0xf]
  %v39 = vld [vmem:[%s1 + $0x14] sm:$0xf]
  %v40 = vld [vmem:[%s1 + $0x18] sm:$0xf]
  %v41 = vld [vmem:[%s1 + $0x1c] sm:$0xf]
  %v42 = vld [vmem:[%s1 + $0x20] sm:$0xf]
  %v43 = vld [vmem:[%s1 + $0x24] sm:$0xf]
  %v44 = vld [vmem:[%s1 + $0x28] sm:$0xf]
  %v45 = vld [vmem:[%s1 + $0x2c] sm:$0xf]
  %v46 = vld [vmem:[%s1 + $0x30] sm:$0xf]
  %v47 = vld [vmem:[%s1 + $0x34] sm:$0xf]
  %v48 = vld [vmem:[%s1 + $0x38] sm:$0xf]
  %v49 = vld [vmem:[%s1 + $0x3c] sm:$0xf]
  %v50 = vld [vmem:[%s1 + $0x40] sm:$0xf]
  %v51 = vld [vmem:[%s1 + $0x44] sm:$0xf]
  %v52 = vld [vmem:[%s1 + $0x48] sm:$0xf]
  %v53 = vld [vmem:[%s1 + $0x4c] sm:$0xf]
  %v54 = vld [vmem:[%s1 + $0x50] sm:$0xf]
  %v55 = vld [vmem:[%s1 + $0x54] sm:$0xf]
  %v56 = vld [vmem:[%s1 + $0x58] sm:$0xf]
  %v57 = vld [vmem:[%s1 + $0x5c] sm:$0xf]
  %v58 = vld [vmem:[%s1 + $0x60] sm:$0xf]
  %v59 = vld [vmem:[%s1 + $0x64] sm:$0xf]
  %v60 = vld [vmem:[%s1 + $0x68] sm:$0xf]
  %v61 = vld [vmem:[%s1 + $0x6c] sm:$0xf]
  %v62 = vld [vmem:[%s1 + $0x70] sm:$0xf]
  %v63 = vld [vmem:[%s1 + $0x74] sm:$0xf]
  %v64 = vld [vmem:[%s1 + $0x78] sm:$0xf]
  %v65 = vld [vmem:[%s1 + $0x7c] sm:$0xf]
  %v66 = vld [vmem:[%s1 + $0x80] sm:$0xf]
  %v67 = vld [vmem:[%s1 + $0x84] sm:$0xf]
  %v68 = vld [vmem:[%s1 + $0x88] sm:$0xf]
  %v69 = vld [vmem:[%s1 + $0x8c] sm:$0xf]
  %v70 = vld [vmem:[%s1 + $0x90] sm:$0xf]
  %v71 = vld [vmem:[%s1 + $0x94] sm:$0xf]
  %v72 = vld [vmem:[%s1 + $0x98] sm:$0xf]
  %v73 = vld [vmem:[%s1 + $0x9c] sm:$0xf]
  %v74 = vld [vmem:[%s1 + $0xa0] sm:$0xf]
  %v75 = vld [vmem:[%s1 + $0xa4] sm:$0xf]
  %v76 = vld [vmem:[%s1 + $0xa8] sm:$0xf]
  %v77 = vld [vmem:[%s1 + $0xac] sm:$0xf]
  %v78 = vld [vmem:[%s1 + $0xb0] sm:$0xf]
  %v79 = vld [vmem:[%s1 + $0xb4] sm:$0xf]
  %v80 = vld [vmem:[%s1 + $0xb8] sm:$0xf]
  %v81 = vld [vmem:[%s1 + $0xbc] sm:$0xf]
  %v82 = vld [vmem:[%s1 + $0xc0] sm:$0xf]
  %v83 = vld [vmem:[%s1 + $0xc4] sm:$0xf]
  %v84 = vld [vmem:[%s1 + $0xc8] sm:$0xf]
  %v85 = vld [vmem:[%s1 + $0xcc] sm:$0xf]
  %v86 = vld [vmem:[%s1 + $0xd0] sm:$0xf]
  %v87 = vld [vmem:[%s1 + $0xd4] sm:$0xf]
  %v88 = vld [vmem:[%s1 + $0xd8] sm:$0xf]
  %v89 = vld [vmem:[%s1 + $0xdc] sm:$0xf]
  %v90 = vld [vmem:[%s1 + $0xe0] sm:$0xf]
  %v91 = vld [vmem:[%s1 + $0xe4] sm:$0xf]
  %v92 = vld [vmem:[%s1 + $0xe8] sm:$0xf]
  %v93 = vld [vmem:[%s1 + $0xec] sm:$0xf]
  %v94 = vld [vmem:[%s1 + $0xf0] sm:$0xf]
  %v95 = vld [vmem:[%s1 + $0xf4] sm:$0xf]
  %v96 = vld [vmem:[%s1 + $0xf8] sm:$0xf]
  %v97 = vld [vmem:[%s1 + $0xfc] sm:$0xf]
  %v98 = vld [vmem:[%s1 + $0x100] sm:$0xf]
  %v99 = vld [vmem:[%s1 + $0x104] sm:$0xf]
  %v100 = vld [vmem:[%s1 + $0x108] sm:$0xf]
  %v101 = vld [vmem:[%s1 + $0x10c] sm:$0xf]
  %v102 = vld [vmem:[%s1 + $0x110] sm:$0xf]
  %v103 = vld [vmem:[%s1 + $0x114] sm:$0xf]
  %v104 = vld [vmem:[%s1 + $0x118] sm:$0xf]
  %v105 = vld [vmem:[%s1 + $0x11c] sm:$0xf]
  %v106 = vld [vmem:[%s1 + $0x120] sm:$0xf]
  %v107 = vld [vmem:[%s1 + $0x124] sm:$0xf]
  %v108 = vld [vmem:[%s1 + $0x128] sm:$0xf]
  %v109 = vld [vmem:[%s1 + $0x12c] sm:$0xf]
  %v110 = vld [vmem:[%s1 + $0x130] sm:$0xf]
  %v111 = vld [vmem:[%s1 + $0x134] sm:$0xf]
  %v112 = vld [vmem:[%s1 + $0x138] sm:$0xf]
  %v113 = vld [vmem:[%s1 + $0x13c] sm:$0xf]
  %v114 = vld [vmem:[%s1 + $0x140] sm:$0xf]
  %v115 = vld [vmem:[%s1 + $0x144] sm:$0xf]
  %v116 = vld [vmem:[%s1 + $0x148] sm:$0xf]
  %v117 = vld [vmem:[%s1 + $0x14c] sm:$0xf]
  %v118 = vld [vmem:[%s1 + $0x150] sm:$0xf]
  %v119 = vld [vmem:[%s1 + $0x154] sm:$0xf]
  %v120 = vld [vmem:[%s1 + $0x158] sm:$0xf]
  %v121 = vld [vmem:[%s1 + $0x15c] sm:$0xf]
  %v122 = vld [vmem:[%s1 + $0x160] sm:$0xf]
  %v123 = vld [vmem:[%s1 + $0x164] sm:$0xf]
  %v124 = vld [vmem:[%s1 + $0x168] sm:$0xf]
  %v125 = vld [vmem:[%s1 + $0x16c] sm:$0xf]
  %v126 = vld [vmem:[%s1 + $0x170] sm:$0xf]
  %v127 = vld [vmem:[%s1 + $0x174] sm:$0xf]
  %v128 = vld [vmem:[%s1 + $0x178] sm:$0xf]
  %v129 = vld [vmem:[%s1 + $0x17c] sm:$0xf]
  %v130 = vld [vmem:[%s1 + $0x180] sm:$0xf]
  %v131 = vld [vmem:[%s1 + $0x184] sm:$0xf]
  %v132 = vld [vmem:[%s1 + $0x188] sm:$0xf]
  %v133 = vld [vmem:[%s1 + $0x18c] sm:$0xf]
  %v134 = vld [vmem:[%s1 + $0x190] sm:$0xf]
  %v135 = vld [vmem:[%s1 + $0x194] sm:$0xf]
  %v136 = vld [vmem:[%s1 + $0x198] sm:$0xf]
  %v137 = vld [vmem:[%s1 + $0x19c] sm:$0xf]
  %v138 = vld [vmem:[%s1 + $0x1a0] sm:$0xf]
  %v139 = vld [vmem:[%s1 + $0x1a4] sm:$0xf]
  %v140 = vld [vmem:[%s1 + $0x1a8] sm:$0xf]
  %v141 = vld [vmem:[%s1 + $0x1ac] sm:$0xf]
  %v142 = vld [vmem:[%s1 + $0x1b0] sm:$0xf]
  %v143 = vld [vmem:[%s1 + $0x1b4] sm:$0xf]
  %v144 = vld [vmem:[%s1 + $0x1b8] sm:$0xf]
  %v145 = vld [vmem:[%s1 + $0x1bc] sm:$0xf]
  %v146 = vld [vmem:[%s1 + $0x1c0] sm:$0xf]
  %v147 = vld [vmem:[%s1 + $0x1c4] sm:$0xf]
  %v148 = vld [vmem:[%s1 + $0x1c8] sm:$0xf]
  %v149 = vld [vmem:[%s1 + $0x1cc] sm:$0xf]
  %v150 = vld [vmem:[%s1 + $0x1d0] sm:$0xf]
  %v151 = vld [vmem:[%s1 + $0x1d4] sm:$0xf]
  %v152 = vld [vmem:[%s1 + $0x1d8] sm:$0xf]
  %v153 = vld [vmem:[%s1 + $0x1dc] sm:$0xf]
  %v154 = vld [vmem:[%s1 + $0x1e0] sm:$0xf]
  %v155 = vld [vmem:[%s1 + $0x1e4] sm:$0xf]
  %v156 = vld [vmem:[%s1 + $0x1e8] sm:$0xf]
  %v157 = vld [vmem:[%s1 + $0x1ec] sm:$0xf]
  %v158 = vld [vmem:[%s1 + $0x1f0] sm:$0xf]
  %v159 = vld [vmem:[%s1 + $0x1f4] sm:$0xf]
  %v160 = vld [vmem:[%s1 + $0x1f8] sm:$0xf]
  %v161 = vld [vmem:[%s1 + $0x1fc] sm:$0xf]
  %v162 = vld [vmem:[%s1 + $0x200] sm:$0xf]
  %v163 = vld [vmem:[%s1 + $0x204] sm:$0xf]
  %v164 = vld [vmem:[%s1 + $0x208] sm:$0xf]
  %v165 = vld [vmem:[%s1 + $0x20c] sm:$0xf]
  %v166 = vld [vmem:[%s1 + $0x210] sm:$0xf]
  %v167 = vld [vmem:[%s1 + $0x214] sm:$0xf]
  %v168 = vld [vmem:[%s1 + $0x218] sm:$0xf]
  %v169 = vld [vmem:[%s1 + $0x21c] sm:$0xf]
  %v170 = vld [vmem:[%s1 + $0x220] sm:$0xf]
  %v171 = vld [vmem:[%s1 + $0x224] sm:$0xf]
  %v172 = vld [vmem:[%s1 + $0x228] sm:$0xf]
  %v173 = vld [vmem:[%s1 + $0x22c] sm:$0xf]
  %v174 = vld [vmem:[%s1 + $0x230] sm:$0xf]
  %v175 = vld [vmem:[%s1 + $0x234] sm:$0xf]
  %v176 = vld [vmem:[%s1 + $0x238] sm:$0xf]
  %v177 = vld [vmem:[%s1 + $0x23c] sm:$0xf]
  %v198 = vunpack.c.l.b16 %v14
  %v199 = vunpack.c.h.b16 %v14
  %v200 = vunpack.c.l.b16 %v15
  %v201 = vunpack.c.h.b16 %v15
  %v202 = vunpack.c.l.b16 %v16
  %v203 = vunpack.c.h.b16 %v16
  %v204 = vunpack.c.l.b16 %v17
  %v205 = vunpack.c.h.b16 %v17
  %v206 = vunpack.c.l.b16 %v18
  %v207 = vunpack.c.l.b16 %v19
  %v208 = vunpack.c.h.b16 %v19
  %v209 = vunpack.c.l.b16 %v20
  %v210 = vunpack.c.h.b16 %v20
  %v211 = vunpack.c.l.b16 %v21
  %v212 = vunpack.c.h.b16 %v21
  %v213 = vunpack.c.l.b16 %v22
  %v214 = vunpack.c.h.b16 %v22
  %v215 = vunpack.c.l.b16 %v23
  %v216 = vunpack.c.l.b16 %v24
  %v217 = vunpack.c.h.b16 %v24
  %v218 = vunpack.c.l.b16 %v25
  %v219 = vunpack.c.h.b16 %v25
  %v220 = vunpack.c.l.b16 %v26
  %v221 = vunpack.c.h.b16 %v26
  %v222 = vunpack.c.l.b16 %v27
  %v223 = vunpack.c.h.b16 %v27
  %v224 = vunpack.c.l.b16 %v28
  %v225 = vunpack.c.l.b16 %v29
  %v226 = vunpack.c.h.b16 %v29
  %v227 = vunpack.c.l.b16 %v30
  %v228 = vunpack.c.h.b16 %v30
  %v229 = vunpack.c.l.b16 %v31
  %v230 = vunpack.c.h.b16 %v31
  %v231 = vunpack.c.l.b16 %v32
  %v232 = vunpack.c.h.b16 %v32
  %v233 = vunpack.c.l.b16 %v33
  %v234 = vpack.c.b16 %v207, %v198
  %v235 = vpack.c.b16 %v208, %v199
  %v236 = vpack.c.b16 %v209, %v200
  %v237 = vpack.c.b16 %v210, %v201
  %v238 = vpack.c.b16 %v211, %v202
  %v239 = vpack.c.b16 %v212, %v203
  %v240 = vpack.c.b16 %v213, %v204
  %v241 = vpack.c.b16 %v214, %v205
  %v242 = vpack.c.b16 %v215, %v206
  %v243 = vpack.c.b16 %v225, %v216
  %v244 = vpack.c.b16 %v226, %v217
  %v245 = vpack.c.b16 %v227, %v218
  %v246 = vpack.c.b16 %v228, %v219
  %v247 = vpack.c.b16 %v229, %v220
  %v248 = vpack.c.b16 %v230, %v221
  %v249 = vpack.c.b16 %v231, %v222
  %v250 = vpack.c.b16 %v232, %v223
  %v251 = vpack.c.b16 %v233, %v224
  %v414 = vunpack.c.l.b16 %v34
  %v415 = vunpack.c.l.b16 %v35
  %v416 = vunpack.c.l.b16 %v36
  %v417 = vunpack.c.l.b16 %v37
  %v418 = vunpack.c.l.b16 %v38
  %v419 = vunpack.c.l.b16 %v39
  %v420 = vunpack.c.l.b16 %v40
  %v421 = vunpack.c.l.b16 %v41
  %v422 = vunpack.c.l.b16 %v42
  %v423 = vunpack.c.l.b16 %v43
  %v424 = vunpack.c.l.b16 %v44
  %v425 = vunpack.c.l.b16 %v45
  %v426 = vunpack.c.l.b16 %v46
  %v427 = vunpack.c.l.b16 %v47
  %v428 = vunpack.c.l.b16 %v48
  %v429 = vunpack.c.l.b16 %v49
  %v430 = vunpack.c.l.b16 %v50
  %v431 = vunpack.c.l.b16 %v51
  %v432 = vunpack.c.l.b16 %v52
  %v433 = vunpack.c.l.b16 %v53
  %v434 = vunpack.c.l.b16 %v54
  %v435 = vunpack.c.l.b16 %v55
  %v436 = vunpack.c.l.b16 %v56
  %v437 = vunpack.c.l.b16 %v57
  %v438 = vunpack.c.l.b16 %v58
  %v439 = vunpack.c.l.b16 %v59
  %v440 = vunpack.c.l.b16 %v60
  %v441 = vunpack.c.l.b16 %v61
  %v442 = vunpack.c.l.b16 %v62
  %v443 = vunpack.c.l.b16 %v63
  %v444 = vunpack.c.l.b16 %v64
  %v445 = vunpack.c.l.b16 %v65
  %v446 = vunpack.c.l.b16 %v66
  %v447 = vunpack.c.l.b16 %v67
  %v448 = vunpack.c.l.b16 %v68
  %v449 = vunpack.c.l.b16 %v69
  %v450 = vunpack.c.l.b16 %v70
  %v451 = vunpack.c.l.b16 %v71
  %v452 = vunpack.c.l.b16 %v72
  %v453 = vunpack.c.l.b16 %v73
  %v454 = vunpack.c.l.b16 %v74
  %v455 = vunpack.c.l.b16 %v75
  %v456 = vunpack.c.l.b16 %v76
  %v457 = vunpack.c.l.b16 %v77
  %v458 = vunpack.c.l.b16 %v78
  %v459 = vunpack.c.l.b16 %v79
  %v460 = vunpack.c.l.b16 %v80
  %v461 = vunpack.c.l.b16 %v81
  %v462 = vunpack.c.l.b16 %v82
  %v463 = vunpack.c.l.b16 %v83
  %v464 = vunpack.c.l.b16 %v84
  %v465 = vunpack.c.l.b16 %v85
  %v466 = vunpack.c.l.b16 %v86
  %v467 = vunpack.c.l.b16 %v87
  %v468 = vunpack.c.l.b16 %v88
  %v469 = vunpack.c.l.b16 %v89
  %v470 = vunpack.c.l.b16 %v90
  %v471 = vunpack.c.l.b16 %v91
  %v472 = vunpack.c.l.b16 %v92
  %v473 = vunpack.c.l.b16 %v93
  %v474 = vunpack.c.l.b16 %v94
  %v475 = vunpack.c.l.b16 %v95
  %v476 = vunpack.c.l.b16 %v96
  %v477 = vunpack.c.l.b16 %v97
  %v478 = vunpack.c.l.b16 %v98
  %v479 = vunpack.c.l.b16 %v99
  %v480 = vunpack.c.l.b16 %v100
  %v481 = vunpack.c.l.b16 %v101
  %v482 = vunpack.c.l.b16 %v102
  %v483 = vunpack.c.l.b16 %v103
  %v484 = vunpack.c.l.b16 %v104
  %v485 = vunpack.c.l.b16 %v105
  %v486 = vunpack.c.l.b16 %v106
  %v487 = vunpack.c.l.b16 %v107
  %v488 = vunpack.c.l.b16 %v108
  %v489 = vunpack.c.l.b16 %v109
  %v490 = vunpack.c.l.b16 %v110
  %v491 = vunpack.c.l.b16 %v111
  %v492 = vunpack.c.l.b16 %v112
  %v493 = vunpack.c.l.b16 %v113
  %v494 = vunpack.c.l.b16 %v114
  %v495 = vunpack.c.l.b16 %v115
  %v496 = vunpack.c.l.b16 %v116
  %v497 = vunpack.c.l.b16 %v117
  %v498 = vunpack.c.l.b16 %v118
  %v499 = vunpack.c.l.b16 %v119
  %v500 = vunpack.c.l.b16 %v120
  %v501 = vunpack.c.l.b16 %v121
  %v502 = vunpack.c.l.b16 %v122
  %v503 = vunpack.c.l.b16 %v123
  %v504 = vunpack.c.l.b16 %v124
  %v505 = vunpack.c.l.b16 %v125
  %v506 = vunpack.c.l.b16 %v126
  %v507 = vunpack.c.l.b16 %v127
  %v508 = vunpack.c.l.b16 %v128
  %v509 = vunpack.c.l.b16 %v129
  %v510 = vunpack.c.l.b16 %v130
  %v511 = vunpack.c.l.b16 %v131
  %v512 = vunpack.c.l.b16 %v132
  %v513 = vunpack.c.l.b16 %v133
  %v514 = vunpack.c.l.b16 %v134
  %v515 = vunpack.c.l.b16 %v135
  %v516 = vunpack.c.l.b16 %v136
  %v517 = vunpack.c.l.b16 %v137
  %v518 = vunpack.c.l.b16 %v138
  %v519 = vunpack.c.l.b16 %v139
  %v520 = vunpack.c.l.b16 %v140
  %v521 = vunpack.c.l.b16 %v141
  %v522 = vunpack.c.l.b16 %v142
  %v523 = vunpack.c.l.b16 %v143
  %v524 = vunpack.c.l.b16 %v144
  %v525 = vunpack.c.l.b16 %v145
  %v526 = vunpack.c.l.b16 %v146
  %v527 = vunpack.c.l.b16 %v147
  %v528 = vunpack.c.l.b16 %v148
  %v529 = vunpack.c.l.b16 %v149
  %v530 = vunpack.c.l.b16 %v150
  %v531 = vunpack.c.l.b16 %v151
  %v532 = vunpack.c.l.b16 %v152
  %v533 = vunpack.c.l.b16 %v153
  %v534 = vunpack.c.l.b16 %v154
  %v535 = vunpack.c.l.b16 %v155
  %v536 = vunpack.c.l.b16 %v156
  %v537 = vunpack.c.l.b16 %v157
  %v538 = vunpack.c.l.b16 %v158
  %v539 = vunpack.c.l.b16 %v159
  %v540 = vunpack.c.l.b16 %v160
  %v541 = vunpack.c.l.b16 %v161
  %v542 = vunpack.c.l.b16 %v162
  %v543 = vunpack.c.l.b16 %v163
  %v544 = vunpack.c.l.b16 %v164
  %v545 = vunpack.c.l.b16 %v165
  %v546 = vunpack.c.l.b16 %v166
  %v547 = vunpack.c.l.b16 %v167
  %v548 = vunpack.c.l.b16 %v168
  %v549 = vunpack.c.l.b16 %v169
  %v550 = vunpack.c.l.b16 %v170
  %v551 = vunpack.c.l.b16 %v171
  %v552 = vunpack.c.l.b16 %v172
  %v553 = vunpack.c.l.b16 %v173
  %v554 = vunpack.c.l.b16 %v174
  %v555 = vunpack.c.l.b16 %v175
  %v556 = vunpack.c.l.b16 %v176
  %v557 = vunpack.c.l.b16 %v177
  %v558 = vpack.c.b16 %v415, %v414
  %v559 = vpack.c.b16 %v417, %v416
  %v560 = vpack.c.b16 %v419, %v418
  %v561 = vpack.c.b16 %v421, %v420
  %v562 = vpack.c.b16 %v423, %v422
  %v563 = vpack.c.b16 %v425, %v424
  %v564 = vpack.c.b16 %v427, %v426
  %v565 = vpack.c.b16 %v429, %v428
  %v566 = vpack.c.b16 %v431, %v430
  %v567 = vpack.c.b16 %v433, %v432
  %v568 = vpack.c.b16 %v435, %v434
  %v569 = vpack.c.b16 %v437, %v436
  %v570 = vpack.c.b16 %v439, %v438
  %v571 = vpack.c.b16 %v441, %v440
  %v572 = vpack.c.b16 %v443, %v442
  %v573 = vpack.c.b16 %v445, %v444
  %v574 = vpack.c.b16 %v447, %v446
  %v575 = vpack.c.b16 %v449, %v448
  %v576 = vpack.c.b16 %v451, %v450
  %v577 = vpack.c.b16 %v453, %v452
  %v578 = vpack.c.b16 %v455, %v454
  %v579 = vpack.c.b16 %v457, %v456
  %v580 = vpack.c.b16 %v459, %v458
  %v581 = vpack.c.b16 %v461, %v460
  %v582 = vpack.c.b16 %v463, %v462
  %v583 = vpack.c.b16 %v465, %v464
  %v584 = vpack.c.b16 %v467, %v466
  %v585 = vpack.c.b16 %v469, %v468
  %v586 = vpack.c.b16 %v471, %v470
  %v587 = vpack.c.b16 %v473, %v472
  %v588 = vpack.c.b16 %v475, %v474
  %v589 = vpack.c.b16 %v477, %v476
  %v590 = vpack.c.b16 %v479, %v478
  %v591 = vpack.c.b16 %v481, %v480
  %v592 = vpack.c.b16 %v483, %v482
  %v593 = vpack.c.b16 %v485, %v484
  %v594 = vpack.c.b16 %v487, %v486
  %v595 = vpack.c.b16 %v489, %v488
  %v596 = vpack.c.b16 %v491, %v490
  %v597 = vpack.c.b16 %v493, %v492
  %v598 = vpack.c.b16 %v495, %v494
  %v599 = vpack.c.b16 %v497, %v496
  %v600 = vpack.c.b16 %v499, %v498
  %v601 = vpack.c.b16 %v501, %v500
  %v602 = vpack.c.b16 %v503, %v502
  %v603 = vpack.c.b16 %v505, %v504
  %v604 = vpack.c.b16 %v507, %v506
  %v605 = vpack.c.b16 %v509, %v508
  %v606 = vpack.c.b16 %v511, %v510
  %v607 = vpack.c.b16 %v513, %v512
  %v608 = vpack.c.b16 %v515, %v514
  %v609 = vpack.c.b16 %v517, %v516
  %v610 = vpack.c.b16 %v519, %v518
  %v611 = vpack.c.b16 %v521, %v520
  %v612 = vpack.c.b16 %v523, %v522
  %v613 = vpack.c.b16 %v525, %v524
  %v614 = vpack.c.b16 %v527, %v526
  %v615 = vpack.c.b16 %v529, %v528
  %v616 = vpack.c.b16 %v531, %v530
  %v617 = vpack.c.b16 %v533, %v532
  %v618 = vpack.c.b16 %v535, %v534
  %v619 = vpack.c.b16 %v537, %v536
  %v620 = vpack.c.b16 %v539, %v538
  %v621 = vpack.c.b16 %v541, %v540
  %v622 = vpack.c.b16 %v543, %v542
  %v623 = vpack.c.b16 %v545, %v544
  %v624 = vpack.c.b16 %v547, %v546
  %v625 = vpack.c.b16 %v549, %v548
  %v626 = vpack.c.b16 %v551, %v550
  %v627 = vpack.c.b16 %v553, %v552
  %v628 = vpack.c.b16 %v555, %v554
  %v629 = vpack.c.b16 %v557, %v556
  %702 = vmatprep.subr.bf16.mxu0 0
  %703 = vmatpush1.bf16.msra.mxu0 %v558
  %704 = vmatprep.subr.bf16.mxu0 0
  %705 = vmatpush1.bf16.msra.mxu0 %v559
  %706 = vmatprep.subr.bf16.mxu0 0
  %707 = vmatpush1.bf16.msra.mxu0 %v560
  %708 = vmatprep.subr.bf16.mxu0 0
  %709 = vmatpush1.bf16.msra.mxu0 %v561
  %710 = vmatprep.subr.bf16.mxu0 0
  %711 = vmatpush1.bf16.msra.mxu0 %v562
  %712 = vmatprep.subr.bf16.mxu0 0
  %713 = vmatpush1.bf16.msra.mxu0 %v563
  %714 = vmatprep.subr.bf16.mxu0 0
  %715 = vmatpush1.bf16.msra.mxu0 %v564
  %716 = vmatprep.subr.bf16.mxu0 0
  %717 = vmatpush1.bf16.msra.mxu0 %v565
  %718 = vmatprep.subr.bf16.mxu0 0
  %719 = vmatpush1.bf16.msra.mxu0 %v566
  %720 = vmatprep.subr.bf16.mxu0 0
  %721 = vmatpush1.bf16.msra.mxu0 %v567
  %722 = vmatprep.subr.bf16.mxu0 0
  %723 = vmatpush1.bf16.msra.mxu0 %v568
  %724 = vmatprep.subr.bf16.mxu0 0
  %725 = vmatpush1.bf16.msra.mxu0 %v569
  %726 = vmatprep.subr.bf16.mxu0 0
  %727 = vmatpush1.bf16.msra.mxu0 %v570
  %728 = vmatprep.subr.bf16.mxu0 0
  %729 = vmatpush1.bf16.msra.mxu0 %v571
  %730 = vmatprep.subr.bf16.mxu0 0
  %731 = vmatpush1.bf16.msra.mxu0 %v572
  %732 = vmatprep.subr.bf16.mxu0 0
  %733 = vmatpush1.bf16.msra.mxu0 %v573
  %734 = vmatprep.mubr.bf16.mxu0 %v235
  %735 = vmatmul.mubr.bf16.gmra.mrb[0].mxu0 %v234
  %v736 = vpop.f32.mrb[0].mxu0
  %v737 = vadd.f32 0.0, %v736
  %v738 = vpop.f32.mrb[0].mxu0
  %v739 = vpop.f32.mrb[0].mxu0
  %v740 = vadd.f32 0.0, %v739
  %v741 = vpop.f32.mrb[0].mxu0
  %742 = vmatprep.mubr.bf16.mxu0 %v244
  %743 = vmatmul.mubr.bf16.gmra.mrb[0].mxu0 %v243
  %v744 = vpop.f32.mrb[0].mxu0
  %v745 = vadd.f32 0.0, %v744
  %v746 = vpop.f32.mrb[0].mxu0
  %v747 = vpop.f32.mrb[0].mxu0
  %v748 = vadd.f32 0.0, %v747
  %v749 = vpop.f32.mrb[0].mxu0
  %750 = vdwg.mxu0
  %751 = vmatprep.subr.bf16.mxu0 0
  %752 = vmatpush1.bf16.msra.mxu0 %v574
  %753 = vmatprep.subr.bf16.mxu0 0
  %754 = vmatpush1.bf16.msra.mxu0 %v575
  %755 = vmatprep.subr.bf16.mxu0 0
  %756 = vmatpush1.bf16.msra.mxu0 %v576
  %757 = vmatprep.subr.bf16.mxu0 0
  %758 = vmatpush1.bf16.msra.mxu0 %v577
  %759 = vmatprep.subr.bf16.mxu0 0
  %760 = vmatpush1.bf16.msra.mxu0 %v578
  %761 = vmatprep.subr.bf16.mxu0 0
  %762 = vmatpush1.bf16.msra.mxu0 %v579
  %763 = vmatprep.subr.bf16.mxu0 0
  %764 = vmatpush1.bf16.msra.mxu0 %v580
  %765 = vmatprep.subr.bf16.mxu0 0
  %766 = vmatpush1.bf16.msra.mxu0 %v581
  %767 = vmatprep.subr.bf16.mxu0 0
  %768 = vmatpush1.bf16.msra.mxu0 %v582
  %769 = vmatprep.subr.bf16.mxu0 0
  %770 = vmatpush1.bf16.msra.mxu0 %v583
  %771 = vmatprep.subr.bf16.mxu0 0
  %772 = vmatpush1.bf16.msra.mxu0 %v584
  %773 = vmatprep.subr.bf16.mxu0 0
  %774 = vmatpush1.bf16.msra.mxu0 %v585
  %775 = vmatprep.subr.bf16.mxu0 0
  %776 = vmatpush1.bf16.msra.mxu0 %v586
  %777 = vmatprep.subr.bf16.mxu0 0
  %778 = vmatpush1.bf16.msra.mxu0 %v587
  %779 = vmatprep.subr.bf16.mxu0 0
  %780 = vmatpush1.bf16.msra.mxu0 %v588
  %781 = vmatprep.subr.bf16.mxu0 0
  %782 = vmatpush1.bf16.msra.mxu0 %v589
  %783 = vmatprep.mubr.bf16.mxu0 %v237
  %784 = vmatmul.mubr.bf16.gmra.mrb[0].mxu0 %v236
  %v785 = vpop.f32.mrb[0].mxu0
  %v786 = vadd.f32 %v737, %v785
  %v787 = vpop.f32.mrb[0].mxu0
  %v788 = vpop.f32.mrb[0].mxu0
  %v789 = vadd.f32 %v740, %v788
  %v790 = vpop.f32.mrb[0].mxu0
  %791 = vmatprep.mubr.bf16.mxu0 %v246
  %792 = vmatmul.mubr.bf16.gmra.mrb[0].mxu0 %v245
  %v793 = vpop.f32.mrb[0].mxu0
  %v794 = vadd.f32 %v745, %v793
  %v795 = vpop.f32.mrb[0].mxu0
  %v796 = vpop.f32.mrb[0].mxu0
  %v797 = vadd.f32 %v748, %v796
  %v798 = vpop.f32.mrb[0].mxu0
  %799 = vdwg.mxu0
  %800 = vmatprep.subr.bf16.mxu0 0
  %801 = vmatpush1.bf16.msra.mxu0 %v590
  %802 = vmatprep.subr.bf16.mxu0 0
  %803 = vmatpush1.bf16.msra.mxu0 %v591
  %804 = vmatprep.subr.bf16.mxu0 0
  %805 = vmatpush1.bf16.msra.mxu0 %v592
  %806 = vmatprep.subr.bf16.mxu0 0
  %807 = vmatpush1.bf16.msra.mxu0 %v593
  %808 = vmatprep.subr.bf16.mxu0 0
  %809 = vmatpush1.bf16.msra.mxu0 %v594
  %810 = vmatprep.subr.bf16.mxu0 0
  %811 = vmatpush1.bf16.msra.mxu0 %v595
  %812 = vmatprep.subr.bf16.mxu0 0
  %813 = vmatpush1.bf16.msra.mxu0 %v596
  %814 = vmatprep.subr.bf16.mxu0 0
  %815 = vmatpush1.bf16.msra.mxu0 %v597
  %816 = vmatprep.subr.bf16.mxu0 0
  %817 = vmatpush1.bf16.msra.mxu0 %v598
  %818 = vmatprep.subr.bf16.mxu0 0
  %819 = vmatpush1.bf16.msra.mxu0 %v599
  %820 = vmatprep.subr.bf16.mxu0 0
  %821 = vmatpush1.bf16.msra.mxu0 %v600
  %822 = vmatprep.subr.bf16.mxu0 0
  %823 = vmatpush1.bf16.msra.mxu0 %v601
  %824 = vmatprep.subr.bf16.mxu0 0
  %825 = vmatpush1.bf16.msra.mxu0 %v602
  %826 = vmatprep.subr.bf16.mxu0 0
  %827 = vmatpush1.bf16.msra.mxu0 %v603
  %828 = vmatprep.subr.bf16.mxu0 0
  %829 = vmatpush1.bf16.msra.mxu0 %v604
  %830 = vmatprep.subr.bf16.mxu0 0
  %831 = vmatpush1.bf16.msra.mxu0 %v605
  %832 = vmatprep.mubr.bf16.mxu0 %v239
  %833 = vmatmul.mubr.bf16.gmra.mrb[0].mxu0 %v238
  %v834 = vpop.f32.mrb[0].mxu0
  %v835 = vadd.f32 %v786, %v834
  %v836 = vpop.f32.mrb[0].mxu0
  %v837 = vpop.f32.mrb[0].mxu0
  %v838 = vadd.f32 %v789, %v837
  %v839 = vpop.f32.mrb[0].mxu0
  %840 = vmatprep.mubr.bf16.mxu0 %v248
  %841 = vmatmul.mubr.bf16.gmra.mrb[0].mxu0 %v247
  %v842 = vpop.f32.mrb[0].mxu0
  %v843 = vadd.f32 %v794, %v842
  %v844 = vpop.f32.mrb[0].mxu0
  %v845 = vpop.f32.mrb[0].mxu0
  %v846 = vadd.f32 %v797, %v845
  %v847 = vpop.f32.mrb[0].mxu0
  %848 = vdwg.mxu0
  %849 = vmatprep.subr.bf16.mxu0 0
  %850 = vmatpush1.bf16.msra.mxu0 %v606
  %851 = vmatprep.subr.bf16.mxu0 0
  %852 = vmatpush1.bf16.msra.mxu0 %v607
  %853 = vmatprep.subr.bf16.mxu0 0
  %854 = vmatpush1.bf16.msra.mxu0 %v608
  %855 = vmatprep.subr.bf16.mxu0 0
  %856 = vmatpush1.bf16.msra.mxu0 %v609
  %857 = vmatprep.subr.bf16.mxu0 0
  %858 = vmatpush1.bf16.msra.mxu0 %v610
  %859 = vmatprep.subr.bf16.mxu0 0
  %860 = vmatpush1.bf16.msra.mxu0 %v611
  %861 = vmatprep.subr.bf16.mxu0 0
  %862 = vmatpush1.bf16.msra.mxu0 %v612
  %863 = vmatprep.subr.bf16.mxu0 0
  %864 = vmatpush1.bf16.msra.mxu0 %v613
  %865 = vmatprep.subr.bf16.mxu0 0
  %866 = vmatpush1.bf16.msra.mxu0 %v614
  %867 = vmatprep.subr.bf16.mxu0 0
  %868 = vmatpush1.bf16.msra.mxu0 %v615
  %869 = vmatprep.subr.bf16.mxu0 0
  %870 = vmatpush1.bf16.msra.mxu0 %v616
  %871 = vmatprep.subr.bf16.mxu0 0
  %872 = vmatpush1.bf16.msra.mxu0 %v617
  %873 = vmatprep.subr.bf16.mxu0 0
  %874 = vmatpush1.bf16.msra.mxu0 %v618
  %875 = vmatprep.subr.bf16.mxu0 0
  %876 = vmatpush1.bf16.msra.mxu0 %v619
  %877 = vmatprep.subr.bf16.mxu0 0
  %878 = vmatpush1.bf16.msra.mxu0 %v620
  %879 = vmatprep.subr.bf16.mxu0 0
  %880 = vmatpush1.bf16.msra.mxu0 %v621
  %881 = vmatprep.mubr.bf16.mxu0 %v241
  %882 = vmatmul.mubr.bf16.gmra.mrb[0].mxu0 %v240
  %v883 = vpop.f32.mrb[0].mxu0
  %v884 = vadd.f32 %v835, %v883
  %v885 = vpop.f32.mrb[0].mxu0
  %v886 = vpop.f32.mrb[0].mxu0
  %v887 = vadd.f32 %v838, %v886
  %v888 = vpop.f32.mrb[0].mxu0
  %889 = vmatprep.mubr.bf16.mxu0 %v250
  %890 = vmatmul.mubr.bf16.gmra.mrb[0].mxu0 %v249
  %v891 = vpop.f32.mrb[0].mxu0
  %v892 = vadd.f32 %v843, %v891
  %v893 = vpop.f32.mrb[0].mxu0
  %v894 = vpop.f32.mrb[0].mxu0
  %v895 = vadd.f32 %v846, %v894
  %v896 = vpop.f32.mrb[0].mxu0
  %897 = vdwg.mxu0
  %898 = vmatprep.subr.bf16.mxu0 0
  %899 = vmatpush1.bf16.msra.mxu0 %v622
  %900 = vmatprep.subr.bf16.mxu0 0
  %901 = vmatpush1.bf16.msra.mxu0 %v623
  %902 = vmatprep.subr.bf16.mxu0 0
  %903 = vmatpush1.bf16.msra.mxu0 %v624
  %904 = vmatprep.subr.bf16.mxu0 0
  %905 = vmatpush1.bf16.msra.mxu0 %v625
  %906 = vmatprep.subr.bf16.mxu0 0
  %907 = vmatpush1.bf16.msra.mxu0 %v626
  %908 = vmatprep.subr.bf16.mxu0 0
  %909 = vmatpush1.bf16.msra.mxu0 %v627
  %910 = vmatprep.subr.bf16.mxu0 0
  %911 = vmatpush1.bf16.msra.mxu0 %v628
  %912 = vmatprep.subr.bf16.mxu0 0
  %913 = vmatpush1.bf16.msra.mxu0 %v629
  %914 = vmatprep.subr.bf16.mxu0 0
  %915 = vmatpush1.bf16.msra.mxu0 0
  %916 = vmatprep.subr.bf16.mxu0 0
  %917 = vmatpush1.bf16.msra.mxu0 0
  %918 = vmatprep.subr.bf16.mxu0 0
  %919 = vmatpush1.bf16.msra.mxu0 0
  %920 = vmatprep.subr.bf16.mxu0 0
  %921 = vmatpush1.bf16.msra.mxu0 0
  %922 = vmatprep.subr.bf16.mxu0 0
  %923 = vmatpush1.bf16.msra.mxu0 0
  %924 = vmatprep.subr.bf16.mxu0 0
  %925 = vmatpush1.bf16.msra.mxu0 0
  %926 = vmatprep.subr.bf16.mxu0 0
  %927 = vmatpush1.bf16.msra.mxu0 0
  %928 = vmatprep.subr.bf16.mxu0 0
  %929 = vmatpush1.bf16.msra.mxu0 0
  %930 = vmatprep.mubr.bf16.mxu0 0
  %931 = vmatmul.mubr.bf16.gmra.mrb[0].mxu0 %v242
  %v932 = vpop.f32.mrb[0].mxu0
  %v933 = vadd.f32 %v884, %v932
  %v934 = vpop.f32.mrb[0].mxu0
  %v935 = vpop.f32.mrb[0].mxu0
  %v936 = vadd.f32 %v887, %v935
  %v937 = vpop.f32.mrb[0].mxu0
  %938 = vmatprep.mubr.bf16.mxu0 0
  %939 = vmatmul.mubr.bf16.gmra.mrb[0].mxu0 %v251
  %v940 = vpop.f32.mrb[0].mxu0
  %v941 = vadd.f32 %v892, %v940
  %v942 = vpop.f32.mrb[0].mxu0
  %v943 = vpop.f32.mrb[0].mxu0
  %v944 = vadd.f32 %v895, %v943
  %v945 = vpop.f32.mrb[0].mxu0
  %946 = vdwg.mxu0
  %947 = vst [vmem:[%s2] sm:$0xff] %v933
  %948 = vst [vmem:[%s2 + $0x8] sm:$0xff] %v936
  %949 = vst [vmem:[%s2 + $0x10] sm:$0xff] %v941
  %950 = vst [vmem:[%s2 + $0x18] sm:$0xff] %v944
  %v951 = vadd.f32 %v933, %v936
  %v952 = vadd.f32 %v951, %v941
  %v953 = vadd.f32 %v952, %v944
  %v954 = vrot.slane %v953, 4
  %v955 = vadd.f32 %v953, %v954
  %v956 = vrot.slane %v955, 2
  %v957 = vadd.f32 %v955, %v956
  %v958 = vrot.slane %v957, 1
  %v959 = vadd.f32 %v957, %v958
  %v960 = vmul.f32 %v933, %v933
  %v961 = vmul.f32 %v936, %v936
  %v962 = vmul.f32 %v941, %v941
  %v963 = vmul.f32 %v944, %v944
  %v964 = vadd.f32 %v960, %v961
  %v965 = vadd.f32 %v964, %v962
  %v966 = vadd.f32 %v965, %v963
  %v967 = vrot.slane %v966, 4
  %v968 = vadd.f32 %v966, %v967
  %v969 = vrot.slane %v968, 2
  %v970 = vadd.f32 %v968, %v969
  %v971 = vrot.slane %v970, 1
  %v972 = vadd.f32 %v970, %v971
  %vm973 = vcmask 1040384
  %v974 = vsel %vm973, %v959, %v972
  %975 = vst [vmem:[%s3] sm:$0x3] %v974
  // Predicated region
  $region10: #{_lambda_.36} parent=0 // pred_check
    _
  $region11: #{_lambda_.36} parent=0 // pred_check_branch
    %977 = sbr.rel (0) target = $region13
  $region12: #{_lambda_.36} parent=0 // pred_region
    _
  $region13: #{_lambda_.36} parent=0 // pred_fallthru
    _
  // Predicated region
  $region14: #{_lambda_.36} parent=0 // pred_check
    _
  $region15: #{_lambda_.36} parent=0 // pred_check_branch
    %979 = sbr.rel (0) target = $region17
  $region16: #{_lambda_.36} parent=0 // pred_region
    _
  $region17: #{_lambda_.36} parent=0 // pred_fallthru
    _
  // Predicated region
  $region18: #{_lambda_.36} parent=0 // pred_check
    _
  $region19: #{_lambda_.36} parent=0 // pred_check_branch
    %981 = sbr.rel (0) target = $region21
  $region20: #{_lambda_.36} parent=0 // pred_region
    _
  $region21: #{_lambda_.36} parent=0 // pred_fallthru
    _
  // Predicated region
  $region22: #{_lambda_.36} parent=0 // pred_check
    _
  $region23: #{_lambda_.36} parent=0 // pred_check_branch
    %983 = sbr.rel (0) target = $region25
  $region24: #{_lambda_.36} parent=0 // pred_region
    _
  $region25: #{_lambda_.36} parent=0 // pred_fallthru
    _

// kernel: _lambda_.42
$region0: #{_lambda_.42}
  #allocation0 [shape = 'u32[]', space=smem, size = 0x4, offset = 0x4, fixed_abs, tag = 'smem constant byte address 0x4 - core index']
  #allocation1 [shape = 'u32[144,128]{1,0:T(1,128)}', space=vmem, size = 0x12000, scoped, tag = 'internal scratch']
  %s0 = inlined_call_operand.vmem [shape: bf16[8,128], index: 0, kind: input, shape index: {}]
  %s1 = inlined_call_operand.vmem [shape: bf16[128,256], index: 1, kind: input, shape index: {}]
  %s2 = inlined_call_operand.vmem [shape: f32[1,256], index: 2, kind: input, shape index: {}]
  %s3 = inlined_call_operand.vmem [shape: f32[8,256], index: 3, kind: output, shape index: {}]
  %s4 = sld [smem:[#allocation0]]
  $region22: #{_lambda_.42} parent=0
    _
  %s6 = ssub.s32 1, %s4
  %s7 = scalar_select 0, %s6, %s4
  // Predicated region
  $region2: #{_lambda_.42} parent=0 // pred_check
    _
  $region3: #{_lambda_.42} parent=0 // pred_check_branch
    %9 = sbr.rel (0) target = $region5
  $region4: #{_lambda_.42} parent=0 // pred_region
    _
  $region5: #{_lambda_.42} parent=0 // pred_fallthru
    _
  // Predicated region
  $region6: #{_lambda_.42} parent=0 // pred_check
    _
  $region7: #{_lambda_.42} parent=0 // pred_check_branch
    %11 = sbr.rel (0) target = $region9
  $region8: #{_lambda_.42} parent=0 // pred_region
    _
  $region9: #{_lambda_.42} parent=0 // pred_fallthru
    _
  // Predicated region
  $region10: #{_lambda_.42} parent=0 // pred_check
    _
  $region11: #{_lambda_.42} parent=0 // pred_check_branch
    %13 = sbr.rel (0) target = $region13
  $region12: #{_lambda_.42} parent=0 // pred_region
    _
  $region13: #{_lambda_.42} parent=0 // pred_fallthru
    _
  %v15 = vld [vmem:[%s0] sm:$0xf]
  %v16 = vld [vmem:[%s1] sm:$0xff]
  %v17 = vld [vmem:[%s1 + $0x8] sm:$0xff]
  %v18 = vld [vmem:[%s1 + $0x10] sm:$0xff]
  %v19 = vld [vmem:[%s1 + $0x18] sm:$0xff]
  %v20 = vld [vmem:[%s1 + $0x20] sm:$0xff]
  %v21 = vld [vmem:[%s1 + $0x28] sm:$0xff]
  %v22 = vld [vmem:[%s1 + $0x30] sm:$0xff]
  %v23 = vld [vmem:[%s1 + $0x38] sm:$0xff]
  %v24 = vld [vmem:[%s1 + $0x40] sm:$0xff]
  %v25 = vld [vmem:[%s1 + $0x48] sm:$0xff]
  %v26 = vld [vmem:[%s1 + $0x50] sm:$0xff]
  %v27 = vld [vmem:[%s1 + $0x58] sm:$0xff]
  %v28 = vld [vmem:[%s1 + $0x60] sm:$0xff]
  %v29 = vld [vmem:[%s1 + $0x68] sm:$0xff]
  %v30 = vld [vmem:[%s1 + $0x70] sm:$0xff]
  %v31 = vld [vmem:[%s1 + $0x78] sm:$0xff]
  %v32 = vld [vmem:[%s2] sm:$0x3]
  %v34 = vlaneseq
  %v35 = vshrl.u32 %v34, 7
  %v36 = vsub.s32 0, %v35
  %v37 = vrot.slane %v32, %v36
  %v38 = vlaneseq
  %v39 = vshrl.u32 %v38, 7
  %v40 = vsub.s32 1, %v39
  %v41 = vrot.slane %v32, %v40
  %v60 = vunpack.c.l.b16 %v16
  %v61 = vunpack.c.h.b16 %v16
  %v62 = vunpack.c.l.b16 %v17
  %v63 = vunpack.c.h.b16 %v17
  %v64 = vunpack.c.l.b16 %v18
  %v65 = vunpack.c.h.b16 %v18
  %v66 = vunpack.c.l.b16 %v19
  %v67 = vunpack.c.h.b16 %v19
  %v68 = vunpack.c.l.b16 %v20
  %v69 = vunpack.c.h.b16 %v20
  %v70 = vunpack.c.l.b16 %v21
  %v71 = vunpack.c.h.b16 %v21
  %v72 = vunpack.c.l.b16 %v22
  %v73 = vunpack.c.h.b16 %v22
  %v74 = vunpack.c.l.b16 %v23
  %v75 = vunpack.c.h.b16 %v23
  %v76 = vunpack.c.l.b16 %v24
  %v77 = vunpack.c.h.b16 %v24
  %v78 = vunpack.c.l.b16 %v25
  %v79 = vunpack.c.h.b16 %v25
  %v80 = vunpack.c.l.b16 %v26
  %v81 = vunpack.c.h.b16 %v26
  %v82 = vunpack.c.l.b16 %v27
  %v83 = vunpack.c.h.b16 %v27
  %v84 = vunpack.c.l.b16 %v28
  %v85 = vunpack.c.h.b16 %v28
  %v86 = vunpack.c.l.b16 %v29
  %v87 = vunpack.c.h.b16 %v29
  %v88 = vunpack.c.l.b16 %v30
  %v89 = vunpack.c.h.b16 %v30
  %v90 = vunpack.c.l.b16 %v31
  %v91 = vunpack.c.h.b16 %v31
  %v92 = vpack.c.b16 %v62, %v60
  %v93 = vpack.c.b16 %v63, %v61
  %v94 = vpack.c.b16 %v66, %v64
  %v95 = vpack.c.b16 %v67, %v65
  %v96 = vpack.c.b16 %v70, %v68
  %v97 = vpack.c.b16 %v71, %v69
  %v98 = vpack.c.b16 %v74, %v72
  %v99 = vpack.c.b16 %v75, %v73
  %v100 = vpack.c.b16 %v78, %v76
  %v101 = vpack.c.b16 %v79, %v77
  %v102 = vpack.c.b16 %v82, %v80
  %v103 = vpack.c.b16 %v83, %v81
  %v104 = vpack.c.b16 %v86, %v84
  %v105 = vpack.c.b16 %v87, %v85
  %v106 = vpack.c.b16 %v90, %v88
  %v107 = vpack.c.b16 %v91, %v89
  %124 = vmatprep.subr.bf16.mxu0 %v93
  %125 = vmatpush1.bf16.msra.mxu0 %v92
  %126 = vmatprep.subr.bf16.mxu0 %v95
  %127 = vmatpush1.bf16.msra.mxu0 %v94
  %128 = vmatprep.subr.bf16.mxu0 %v97
  %129 = vmatpush1.bf16.msra.mxu0 %v96
  %130 = vmatprep.subr.bf16.mxu0 %v99
  %131 = vmatpush1.bf16.msra.mxu0 %v98
  %132 = vmatprep.subr.bf16.mxu0 %v101
  %133 = vmatpush1.bf16.msra.mxu0 %v100
  %134 = vmatprep.subr.bf16.mxu0 %v103
  %135 = vmatpush1.bf16.msra.mxu0 %v102
  %136 = vmatprep.subr.bf16.mxu0 %v105
  %137 = vmatpush1.bf16.msra.mxu0 %v104
  %138 = vmatprep.subr.bf16.mxu0 %v107
  %139 = vmatpush1.bf16.msra.mxu0 %v106
  %140 = vmatprep.subr.bf16.mxu0 0
  %141 = vmatpush1.bf16.msra.mxu0 0
  %142 = vmatprep.subr.bf16.mxu0 0
  %143 = vmatpush1.bf16.msra.mxu0 0
  %144 = vmatprep.subr.bf16.mxu0 0
  %145 = vmatpush1.bf16.msra.mxu0 0
  %146 = vmatprep.subr.bf16.mxu0 0
  %147 = vmatpush1.bf16.msra.mxu0 0
  %148 = vmatprep.subr.bf16.mxu0 0
  %149 = vmatpush1.bf16.msra.mxu0 0
  %150 = vmatprep.subr.bf16.mxu0 0
  %151 = vmatpush1.bf16.msra.mxu0 0
  %152 = vmatprep.subr.bf16.mxu0 0
  %153 = vmatpush1.bf16.msra.mxu0 0
  %154 = vmatprep.subr.bf16.mxu0 0
  %155 = vmatpush1.bf16.msra.mxu0 0
  %156 = vmatprep.mubr.bf16.mxu0 0
  %157 = vmatmul.mubr.bf16.gmra.mrb[0].mxu0 %v15
  %v158 = vpop.f32.mrb[0].mxu0
  %v159 = vadd.f32 %v37, %v158
  %v160 = vpop.f32.mrb[0].mxu0
  %v161 = vadd.f32 %v41, %v160
  %v162 = vpop.f32.mrb[0].mxu0
  %v163 = vpop.f32.mrb[0].mxu0
  %164 = vdwg.mxu0
  %165 = vst [vmem:[%s3] sm:$0xff] %v159
  %166 = vst [vmem:[%s3 + $0x8] sm:$0xff] %v161
  // Predicated region
  $region14: #{_lambda_.42} parent=0 // pred_check
    _
  $region15: #{_lambda_.42} parent=0 // pred_check_branch
    %168 = sbr.rel (0) target = $region17
  $region16: #{_lambda_.42} parent=0 // pred_region
    _
  $region17: #{_lambda_.42} parent=0 // pred_fallthru
    _
  // Predicated region
  $region18: #{_lambda_.42} parent=0 // pred_check
    _
  $region19: #{_lambda_.42} parent=0 // pred_check_branch
    %170 = sbr.rel (0) target = $region21
  $region20: #{_lambda_.42} parent=0 // pred_region
    _
  $region21: #{_lambda_.42} parent=0 // pred_fallthru
    _

// kernel: _lambda_.38
$region0: #{_lambda_.38}
  #allocation0 [shape = 'u32[]', space=smem, size = 0x4, offset = 0x4, fixed_abs, tag = 'smem constant byte address 0x4 - core index']
  #allocation1 [shape = 'u32[144,128]{1,0:T(1,128)}', space=vmem, size = 0x12000, scoped, tag = 'internal scratch']
  %s0 = inlined_call_operand.vmem [shape: bf16[8,1152], index: 0, kind: input, shape index: {}]
  %s1 = inlined_call_operand.vmem [shape: bf16[1152,128], index: 1, kind: input, shape index: {}]
  %s2 = inlined_call_operand.vmem [shape: f32[8,128], index: 2, kind: output, shape index: {0}]
  %s3 = inlined_call_operand.vmem [shape: f32[1,2,128], index: 3, kind: output, shape index: {1}]
  %4 = xla_tuple %s2, %s3
  %s5 = sld [smem:[#allocation0]]
  $region26: #{_lambda_.38} parent=0
    _
  %s7 = ssub.s32 1, %s5
  %s8 = scalar_select 0, %s7, %s5
  // Predicated region
  $region2: #{_lambda_.38} parent=0 // pred_check
    _
  $region3: #{_lambda_.38} parent=0 // pred_check_branch
    %10 = sbr.rel (0) target = $region5
  $region4: #{_lambda_.38} parent=0 // pred_region
    _
  $region5: #{_lambda_.38} parent=0 // pred_fallthru
    _
  // Predicated region
  $region6: #{_lambda_.38} parent=0 // pred_check
    _
  $region7: #{_lambda_.38} parent=0 // pred_check_branch
    %12 = sbr.rel (0) target = $region9
  $region8: #{_lambda_.38} parent=0 // pred_region
    _
  $region9: #{_lambda_.38} parent=0 // pred_fallthru
    _
  %v14 = vld [vmem:[%s0] sm:$0xff]
  %v15 = vld [vmem:[%s0 + $0x8] sm:$0xff]
  %v16 = vld [vmem:[%s0 + $0x10] sm:$0xff]
  %v17 = vld [vmem:[%s0 + $0x18] sm:$0xff]
  %v18 = vld [vmem:[%s0 + $0x20] sm:$0xf]
  %v19 = vld [vmem:[%s1] sm:$0xf]
  %v20 = vld [vmem:[%s1 + $0x4] sm:$0xf]
  %v21 = vld [vmem:[%s1 + $0x8] sm:$0xf]
  %v22 = vld [vmem:[%s1 + $0xc] sm:$0xf]
  %v23 = vld [vmem:[%s1 + $0x10] sm:$0xf]
  %v24 = vld [vmem:[%s1 + $0x14] sm:$0xf]
  %v25 = vld [vmem:[%s1 + $0x18] sm:$0xf]
  %v26 = vld [vmem:[%s1 + $0x1c] sm:$0xf]
  %v27 = vld [vmem:[%s1 + $0x20] sm:$0xf]
  %v28 = vld [vmem:[%s1 + $0x24] sm:$0xf]
  %v29 = vld [vmem:[%s1 + $0x28] sm:$0xf]
  %v30 = vld [vmem:[%s1 + $0x2c] sm:$0xf]
  %v31 = vld [vmem:[%s1 + $0x30] sm:$0xf]
  %v32 = vld [vmem:[%s1 + $0x34] sm:$0xf]
  %v33 = vld [vmem:[%s1 + $0x38] sm:$0xf]
  %v34 = vld [vmem:[%s1 + $0x3c] sm:$0xf]
  %v35 = vld [vmem:[%s1 + $0x40] sm:$0xf]
  %v36 = vld [vmem:[%s1 + $0x44] sm:$0xf]
  %v37 = vld [vmem:[%s1 + $0x48] sm:$0xf]
  %v38 = vld [vmem:[%s1 + $0x4c] sm:$0xf]
  %v39 = vld [vmem:[%s1 + $0x50] sm:$0xf]
  %v40 = vld [vmem:[%s1 + $0x54] sm:$0xf]
  %v41 = vld [vmem:[%s1 + $0x58] sm:$0xf]
  %v42 = vld [vmem:[%s1 + $0x5c] sm:$0xf]
  %v43 = vld [vmem:[%s1 + $0x60] sm:$0xf]
  %v44 = vld [vmem:[%s1 + $0x64] sm:$0xf]
  %v45 = vld [vmem:[%s1 + $0x68] sm:$0xf]
  %v46 = vld [vmem:[%s1 + $0x6c] sm:$0xf]
  %v47 = vld [vmem:[%s1 + $0x70] sm:$0xf]
  %v48 = vld [vmem:[%s1 + $0x74] sm:$0xf]
  %v49 = vld [vmem:[%s1 + $0x78] sm:$0xf]
  %v50 = vld [vmem:[%s1 + $0x7c] sm:$0xf]
  %v51 = vld [vmem:[%s1 + $0x80] sm:$0xf]
  %v52 = vld [vmem:[%s1 + $0x84] sm:$0xf]
  %v53 = vld [vmem:[%s1 + $0x88] sm:$0xf]
  %v54 = vld [vmem:[%s1 + $0x8c] sm:$0xf]
  %v55 = vld [vmem:[%s1 + $0x90] sm:$0xf]
  %v56 = vld [vmem:[%s1 + $0x94] sm:$0xf]
  %v57 = vld [vmem:[%s1 + $0x98] sm:$0xf]
  %v58 = vld [vmem:[%s1 + $0x9c] sm:$0xf]
  %v59 = vld [vmem:[%s1 + $0xa0] sm:$0xf]
  %v60 = vld [vmem:[%s1 + $0xa4] sm:$0xf]
  %v61 = vld [vmem:[%s1 + $0xa8] sm:$0xf]
  %v62 = vld [vmem:[%s1 + $0xac] sm:$0xf]
  %v63 = vld [vmem:[%s1 + $0xb0] sm:$0xf]
  %v64 = vld [vmem:[%s1 + $0xb4] sm:$0xf]
  %v65 = vld [vmem:[%s1 + $0xb8] sm:$0xf]
  %v66 = vld [vmem:[%s1 + $0xbc] sm:$0xf]
  %v67 = vld [vmem:[%s1 + $0xc0] sm:$0xf]
  %v68 = vld [vmem:[%s1 + $0xc4] sm:$0xf]
  %v69 = vld [vmem:[%s1 + $0xc8] sm:$0xf]
  %v70 = vld [vmem:[%s1 + $0xcc] sm:$0xf]
  %v71 = vld [vmem:[%s1 + $0xd0] sm:$0xf]
  %v72 = vld [vmem:[%s1 + $0xd4] sm:$0xf]
  %v73 = vld [vmem:[%s1 + $0xd8] sm:$0xf]
  %v74 = vld [vmem:[%s1 + $0xdc] sm:$0xf]
  %v75 = vld [vmem:[%s1 + $0xe0] sm:$0xf]
  %v76 = vld [vmem:[%s1 + $0xe4] sm:$0xf]
  %v77 = vld [vmem:[%s1 + $0xe8] sm:$0xf]
  %v78 = vld [vmem:[%s1 + $0xec] sm:$0xf]
  %v79 = vld [vmem:[%s1 + $0xf0] sm:$0xf]
  %v80 = vld [vmem:[%s1 + $0xf4] sm:$0xf]
  %v81 = vld [vmem:[%s1 + $0xf8] sm:$0xf]
  %v82 = vld [vmem:[%s1 + $0xfc] sm:$0xf]
  %v83 = vld [vmem:[%s1 + $0x100] sm:$0xf]
  %v84 = vld [vmem:[%s1 + $0x104] sm:$0xf]
  %v85 = vld [vmem:[%s1 + $0x108] sm:$0xf]
  %v86 = vld [vmem:[%s1 + $0x10c] sm:$0xf]
  %v87 = vld [vmem:[%s1 + $0x110] sm:$0xf]
  %v88 = vld [vmem:[%s1 + $0x114] sm:$0xf]
  %v89 = vld [vmem:[%s1 + $0x118] sm:$0xf]
  %v90 = vld [vmem:[%s1 + $0x11c] sm:$0xf]
  %v91 = vld [vmem:[%s1 + $0x120] sm:$0xf]
  %v92 = vld [vmem:[%s1 + $0x124] sm:$0xf]
  %v93 = vld [vmem:[%s1 + $0x128] sm:$0xf]
  %v94 = vld [vmem:[%s1 + $0x12c] sm:$0xf]
  %v95 = vld [vmem:[%s1 + $0x130] sm:$0xf]
  %v96 = vld [vmem:[%s1 + $0x134] sm:$0xf]
  %v97 = vld [vmem:[%s1 + $0x138] sm:$0xf]
  %v98 = vld [vmem:[%s1 + $0x13c] sm:$0xf]
  %v99 = vld [vmem:[%s1 + $0x140] sm:$0xf]
  %v100 = vld [vmem:[%s1 + $0x144] sm:$0xf]
  %v101 = vld [vmem:[%s1 + $0x148] sm:$0xf]
  %v102 = vld [vmem:[%s1 + $0x14c] sm:$0xf]
  %v103 = vld [vmem:[%s1 + $0x150] sm:$0xf]
  %v104 = vld [vmem:[%s1 + $0x154] sm:$0xf]
  %v105 = vld [vmem:[%s1 + $0x158] sm:$0xf]
  %v106 = vld [vmem:[%s1 + $0x15c] sm:$0xf]
  %v107 = vld [vmem:[%s1 + $0x160] sm:$0xf]
  %v108 = vld [vmem:[%s1 + $0x164] sm:$0xf]
  %v109 = vld [vmem:[%s1 + $0x168] sm:$0xf]
  %v110 = vld [vmem:[%s1 + $0x16c] sm:$0xf]
  %v111 = vld [vmem:[%s1 + $0x170] sm:$0xf]
  %v112 = vld [vmem:[%s1 + $0x174] sm:$0xf]
  %v113 = vld [vmem:[%s1 + $0x178] sm:$0xf]
  %v114 = vld [vmem:[%s1 + $0x17c] sm:$0xf]
  %v115 = vld [vmem:[%s1 + $0x180] sm:$0xf]
  %v116 = vld [vmem:[%s1 + $0x184] sm:$0xf]
  %v117 = vld [vmem:[%s1 + $0x188] sm:$0xf]
  %v118 = vld [vmem:[%s1 + $0x18c] sm:$0xf]
  %v119 = vld [vmem:[%s1 + $0x190] sm:$0xf]
  %v120 = vld [vmem:[%s1 + $0x194] sm:$0xf]
  %v121 = vld [vmem:[%s1 + $0x198] sm:$0xf]
  %v122 = vld [vmem:[%s1 + $0x19c] sm:$0xf]
  %v123 = vld [vmem:[%s1 + $0x1a0] sm:$0xf]
  %v124 = vld [vmem:[%s1 + $0x1a4] sm:$0xf]
  %v125 = vld [vmem:[%s1 + $0x1a8] sm:$0xf]
  %v126 = vld [vmem:[%s1 + $0x1ac] sm:$0xf]
  %v127 = vld [vmem:[%s1 + $0x1b0] sm:$0xf]
  %v128 = vld [vmem:[%s1 + $0x1b4] sm:$0xf]
  %v129 = vld [vmem:[%s1 + $0x1b8] sm:$0xf]
  %v130 = vld [vmem:[%s1 + $0x1bc] sm:$0xf]
  %v131 = vld [vmem:[%s1 + $0x1c0] sm:$0xf]
  %v132 = vld [vmem:[%s1 + $0x1c4] sm:$0xf]
  %v133 = vld [vmem:[%s1 + $0x1c8] sm:$0xf]
  %v134 = vld [vmem:[%s1 + $0x1cc] sm:$0xf]
  %v135 = vld [vmem:[%s1 + $0x1d0] sm:$0xf]
  %v136 = vld [vmem:[%s1 + $0x1d4] sm:$0xf]
  %v137 = vld [vmem:[%s1 + $0x1d8] sm:$0xf]
  %v138 = vld [vmem:[%s1 + $0x1dc] sm:$0xf]
  %v139 = vld [vmem:[%s1 + $0x1e0] sm:$0xf]
  %v140 = vld [vmem:[%s1 + $0x1e4] sm:$0xf]
  %v141 = vld [vmem:[%s1 + $0x1e8] sm:$0xf]
  %v142 = vld [vmem:[%s1 + $0x1ec] sm:$0xf]
  %v143 = vld [vmem:[%s1 + $0x1f0] sm:$0xf]
  %v144 = vld [vmem:[%s1 + $0x1f4] sm:$0xf]
  %v145 = vld [vmem:[%s1 + $0x1f8] sm:$0xf]
  %v146 = vld [vmem:[%s1 + $0x1fc] sm:$0xf]
  %v147 = vld [vmem:[%s1 + $0x200] sm:$0xf]
  %v148 = vld [vmem:[%s1 + $0x204] sm:$0xf]
  %v149 = vld [vmem:[%s1 + $0x208] sm:$0xf]
  %v150 = vld [vmem:[%s1 + $0x20c] sm:$0xf]
  %v151 = vld [vmem:[%s1 + $0x210] sm:$0xf]
  %v152 = vld [vmem:[%s1 + $0x214] sm:$0xf]
  %v153 = vld [vmem:[%s1 + $0x218] sm:$0xf]
  %v154 = vld [vmem:[%s1 + $0x21c] sm:$0xf]
  %v155 = vld [vmem:[%s1 + $0x220] sm:$0xf]
  %v156 = vld [vmem:[%s1 + $0x224] sm:$0xf]
  %v157 = vld [vmem:[%s1 + $0x228] sm:$0xf]
  %v158 = vld [vmem:[%s1 + $0x22c] sm:$0xf]
  %v159 = vld [vmem:[%s1 + $0x230] sm:$0xf]
  %v160 = vld [vmem:[%s1 + $0x234] sm:$0xf]
  %v161 = vld [vmem:[%s1 + $0x238] sm:$0xf]
  %v162 = vld [vmem:[%s1 + $0x23c] sm:$0xf]
  %v168 = vunpack.c.l.b16 %v14
  %v169 = vunpack.c.h.b16 %v14
  %v170 = vunpack.c.l.b16 %v15
  %v171 = vunpack.c.h.b16 %v15
  %v172 = vunpack.c.l.b16 %v16
  %v173 = vunpack.c.h.b16 %v16
  %v174 = vunpack.c.l.b16 %v17
  %v175 = vunpack.c.h.b16 %v17
  %v176 = vunpack.c.l.b16 %v18
  %v177 = vpack.c.b16 %v168, %v168
  %v178 = vpack.c.b16 %v169, %v169
  %v179 = vpack.c.b16 %v170, %v170
  %v180 = vpack.c.b16 %v171, %v171
  %v181 = vpack.c.b16 %v172, %v172
  %v182 = vpack.c.b16 %v173, %v173
  %v183 = vpack.c.b16 %v174, %v174
  %v184 = vpack.c.b16 %v175, %v175
  %v185 = vpack.c.b16 %v176, %v176
  %v339 = vunpack.c.l.b16 %v19
  %v340 = vunpack.c.l.b16 %v20
  %v341 = vunpack.c.l.b16 %v21
  %v342 = vunpack.c.l.b16 %v22
  %v343 = vunpack.c.l.b16 %v23
  %v344 = vunpack.c.l.b16 %v24
  %v345 = vunpack.c.l.b16 %v25
  %v346 = vunpack.c.l.b16 %v26
  %v347 = vunpack.c.l.b16 %v27
  %v348 = vunpack.c.l.b16 %v28
  %v349 = vunpack.c.l.b16 %v29
  %v350 = vunpack.c.l.b16 %v30
  %v351 = vunpack.c.l.b16 %v31
  %v352 = vunpack.c.l.b16 %v32
  %v353 = vunpack.c.l.b16 %v33
  %v354 = vunpack.c.l.b16 %v34
  %v355 = vunpack.c.l.b16 %v35
  %v356 = vunpack.c.l.b16 %v36
  %v357 = vunpack.c.l.b16 %v37
  %v358 = vunpack.c.l.b16 %v38
  %v359 = vunpack.c.l.b16 %v39
  %v360 = vunpack.c.l.b16 %v40
  %v361 = vunpack.c.l.b16 %v41
  %v362 = vunpack.c.l.b16 %v42
  %v363 = vunpack.c.l.b16 %v43
  %v364 = vunpack.c.l.b16 %v44
  %v365 = vunpack.c.l.b16 %v45
  %v366 = vunpack.c.l.b16 %v46
  %v367 = vunpack.c.l.b16 %v47
  %v368 = vunpack.c.l.b16 %v48
  %v369 = vunpack.c.l.b16 %v49
  %v370 = vunpack.c.l.b16 %v50
  %v371 = vunpack.c.l.b16 %v51
  %v372 = vunpack.c.l.b16 %v52
  %v373 = vunpack.c.l.b16 %v53
  %v374 = vunpack.c.l.b16 %v54
  %v375 = vunpack.c.l.b16 %v55
  %v376 = vunpack.c.l.b16 %v56
  %v377 = vunpack.c.l.b16 %v57
  %v378 = vunpack.c.l.b16 %v58
  %v379 = vunpack.c.l.b16 %v59
  %v380 = vunpack.c.l.b16 %v60
  %v381 = vunpack.c.l.b16 %v61
  %v382 = vunpack.c.l.b16 %v62
  %v383 = vunpack.c.l.b16 %v63
  %v384 = vunpack.c.l.b16 %v64
  %v385 = vunpack.c.l.b16 %v65
  %v386 = vunpack.c.l.b16 %v66
  %v387 = vunpack.c.l.b16 %v67
  %v388 = vunpack.c.l.b16 %v68
  %v389 = vunpack.c.l.b16 %v69
  %v390 = vunpack.c.l.b16 %v70
  %v391 = vunpack.c.l.b16 %v71
  %v392 = vunpack.c.l.b16 %v72
  %v393 = vunpack.c.l.b16 %v73
  %v394 = vunpack.c.l.b16 %v74
  %v395 = vunpack.c.l.b16 %v75
  %v396 = vunpack.c.l.b16 %v76
  %v397 = vunpack.c.l.b16 %v77
  %v398 = vunpack.c.l.b16 %v78
  %v399 = vunpack.c.l.b16 %v79
  %v400 = vunpack.c.l.b16 %v80
  %v401 = vunpack.c.l.b16 %v81
  %v402 = vunpack.c.l.b16 %v82
  %v403 = vunpack.c.l.b16 %v83
  %v404 = vunpack.c.l.b16 %v84
  %v405 = vunpack.c.l.b16 %v85
  %v406 = vunpack.c.l.b16 %v86
  %v407 = vunpack.c.l.b16 %v87
  %v408 = vunpack.c.l.b16 %v88
  %v409 = vunpack.c.l.b16 %v89
  %v410 = vunpack.c.l.b16 %v90
  %v411 = vunpack.c.l.b16 %v91
  %v412 = vunpack.c.l.b16 %v92
  %v413 = vunpack.c.l.b16 %v93
  %v414 = vunpack.c.l.b16 %v94
  %v415 = vunpack.c.l.b16 %v95
  %v416 = vunpack.c.l.b16 %v96
  %v417 = vunpack.c.l.b16 %v97
  %v418 = vunpack.c.l.b16 %v98
  %v419 = vunpack.c.l.b16 %v99
  %v420 = vunpack.c.l.b16 %v100
  %v421 = vunpack.c.l.b16 %v101
  %v422 = vunpack.c.l.b16 %v102
  %v423 = vunpack.c.l.b16 %v103
  %v424 = vunpack.c.l.b16 %v104
  %v425 = vunpack.c.l.b16 %v105
  %v426 = vunpack.c.l.b16 %v106
  %v427 = vunpack.c.l.b16 %v107
  %v428 = vunpack.c.l.b16 %v108
  %v429 = vunpack.c.l.b16 %v109
  %v430 = vunpack.c.l.b16 %v110
  %v431 = vunpack.c.l.b16 %v111
  %v432 = vunpack.c.l.b16 %v112
  %v433 = vunpack.c.l.b16 %v113
  %v434 = vunpack.c.l.b16 %v114
  %v435 = vunpack.c.l.b16 %v115
  %v436 = vunpack.c.l.b16 %v116
  %v437 = vunpack.c.l.b16 %v117
  %v438 = vunpack.c.l.b16 %v118
  %v439 = vunpack.c.l.b16 %v119
  %v440 = vunpack.c.l.b16 %v120
  %v441 = vunpack.c.l.b16 %v121
  %v442 = vunpack.c.l.b16 %v122
  %v443 = vunpack.c.l.b16 %v123
  %v444 = vunpack.c.l.b16 %v124
  %v445 = vunpack.c.l.b16 %v125
  %v446 = vunpack.c.l.b16 %v126
  %v447 = vunpack.c.l.b16 %v127
  %v448 = vunpack.c.l.b16 %v128
  %v449 = vunpack.c.l.b16 %v129
  %v450 = vunpack.c.l.b16 %v130
  %v451 = vunpack.c.l.b16 %v131
  %v452 = vunpack.c.l.b16 %v132
  %v453 = vunpack.c.l.b16 %v133
  %v454 = vunpack.c.l.b16 %v134
  %v455 = vunpack.c.l.b16 %v135
  %v456 = vunpack.c.l.b16 %v136
  %v457 = vunpack.c.l.b16 %v137
  %v458 = vunpack.c.l.b16 %v138
  %v459 = vunpack.c.l.b16 %v139
  %v460 = vunpack.c.l.b16 %v140
  %v461 = vunpack.c.l.b16 %v141
  %v462 = vunpack.c.l.b16 %v142
  %v463 = vunpack.c.l.b16 %v143
  %v464 = vunpack.c.l.b16 %v144
  %v465 = vunpack.c.l.b16 %v145
  %v466 = vunpack.c.l.b16 %v146
  %v467 = vunpack.c.l.b16 %v147
  %v468 = vunpack.c.l.b16 %v148
  %v469 = vunpack.c.l.b16 %v149
  %v470 = vunpack.c.l.b16 %v150
  %v471 = vunpack.c.l.b16 %v151
  %v472 = vunpack.c.l.b16 %v152
  %v473 = vunpack.c.l.b16 %v153
  %v474 = vunpack.c.l.b16 %v154
  %v475 = vunpack.c.l.b16 %v155
  %v476 = vunpack.c.l.b16 %v156
  %v477 = vunpack.c.l.b16 %v157
  %v478 = vunpack.c.l.b16 %v158
  %v479 = vunpack.c.l.b16 %v159
  %v480 = vunpack.c.l.b16 %v160
  %v481 = vunpack.c.l.b16 %v161
  %v482 = vunpack.c.l.b16 %v162
  %v483 = vpack.c.b16 %v340, %v339
  %v484 = vpack.c.b16 %v342, %v341
  %v485 = vpack.c.b16 %v344, %v343
  %v486 = vpack.c.b16 %v346, %v345
  %v487 = vpack.c.b16 %v348, %v347
  %v488 = vpack.c.b16 %v350, %v349
  %v489 = vpack.c.b16 %v352, %v351
  %v490 = vpack.c.b16 %v354, %v353
  %v491 = vpack.c.b16 %v356, %v355
  %v492 = vpack.c.b16 %v358, %v357
  %v493 = vpack.c.b16 %v360, %v359
  %v494 = vpack.c.b16 %v362, %v361
  %v495 = vpack.c.b16 %v364, %v363
  %v496 = vpack.c.b16 %v366, %v365
  %v497 = vpack.c.b16 %v368, %v367
  %v498 = vpack.c.b16 %v370, %v369
  %v499 = vpack.c.b16 %v372, %v371
  %v500 = vpack.c.b16 %v374, %v373
  %v501 = vpack.c.b16 %v376, %v375
  %v502 = vpack.c.b16 %v378, %v377
  %v503 = vpack.c.b16 %v380, %v379
  %v504 = vpack.c.b16 %v382, %v381
  %v505 = vpack.c.b16 %v384, %v383
  %v506 = vpack.c.b16 %v386, %v385
  %v507 = vpack.c.b16 %v388, %v387
  %v508 = vpack.c.b16 %v390, %v389
  %v509 = vpack.c.b16 %v392, %v391
  %v510 = vpack.c.b16 %v394, %v393
  %v511 = vpack.c.b16 %v396, %v395
  %v512 = vpack.c.b16 %v398, %v397
  %v513 = vpack.c.b16 %v400, %v399
  %v514 = vpack.c.b16 %v402, %v401
  %v515 = vpack.c.b16 %v404, %v403
  %v516 = vpack.c.b16 %v406, %v405
  %v517 = vpack.c.b16 %v408, %v407
  %v518 = vpack.c.b16 %v410, %v409
  %v519 = vpack.c.b16 %v412, %v411
  %v520 = vpack.c.b16 %v414, %v413
  %v521 = vpack.c.b16 %v416, %v415
  %v522 = vpack.c.b16 %v418, %v417
  %v523 = vpack.c.b16 %v420, %v419
  %v524 = vpack.c.b16 %v422, %v421
  %v525 = vpack.c.b16 %v424, %v423
  %v526 = vpack.c.b16 %v426, %v425
  %v527 = vpack.c.b16 %v428, %v427
  %v528 = vpack.c.b16 %v430, %v429
  %v529 = vpack.c.b16 %v432, %v431
  %v530 = vpack.c.b16 %v434, %v433
  %v531 = vpack.c.b16 %v436, %v435
  %v532 = vpack.c.b16 %v438, %v437
  %v533 = vpack.c.b16 %v440, %v439
  %v534 = vpack.c.b16 %v442, %v441
  %v535 = vpack.c.b16 %v444, %v443
  %v536 = vpack.c.b16 %v446, %v445
  %v537 = vpack.c.b16 %v448, %v447
  %v538 = vpack.c.b16 %v450, %v449
  %v539 = vpack.c.b16 %v452, %v451
  %v540 = vpack.c.b16 %v454, %v453
  %v541 = vpack.c.b16 %v456, %v455
  %v542 = vpack.c.b16 %v458, %v457
  %v543 = vpack.c.b16 %v460, %v459
  %v544 = vpack.c.b16 %v462, %v461
  %v545 = vpack.c.b16 %v464, %v463
  %v546 = vpack.c.b16 %v466, %v465
  %v547 = vpack.c.b16 %v468, %v467
  %v548 = vpack.c.b16 %v470, %v469
  %v549 = vpack.c.b16 %v472, %v471
  %v550 = vpack.c.b16 %v474, %v473
  %v551 = vpack.c.b16 %v476, %v475
  %v552 = vpack.c.b16 %v478, %v477
  %v553 = vpack.c.b16 %v480, %v479
  %v554 = vpack.c.b16 %v482, %v481
  %627 = vmatprep.subr.bf16.mxu0 0
  %628 = vmatpush1.bf16.msra.mxu0 %v483
  %629 = vmatprep.subr.bf16.mxu0 0
  %630 = vmatpush1.bf16.msra.mxu0 %v484
  %631 = vmatprep.subr.bf16.mxu0 0
  %632 = vmatpush1.bf16.msra.mxu0 %v485
  %633 = vmatprep.subr.bf16.mxu0 0
  %634 = vmatpush1.bf16.msra.mxu0 %v486
  %635 = vmatprep.subr.bf16.mxu0 0
  %636 = vmatpush1.bf16.msra.mxu0 %v487
  %637 = vmatprep.subr.bf16.mxu0 0
  %638 = vmatpush1.bf16.msra.mxu0 %v488
  %639 = vmatprep.subr.bf16.mxu0 0
  %640 = vmatpush1.bf16.msra.mxu0 %v489
  %641 = vmatprep.subr.bf16.mxu0 0
  %642 = vmatpush1.bf16.msra.mxu0 %v490
  %643 = vmatprep.subr.bf16.mxu0 0
  %644 = vmatpush1.bf16.msra.mxu0 %v491
  %645 = vmatprep.subr.bf16.mxu0 0
  %646 = vmatpush1.bf16.msra.mxu0 %v492
  %647 = vmatprep.subr.bf16.mxu0 0
  %648 = vmatpush1.bf16.msra.mxu0 %v493
  %649 = vmatprep.subr.bf16.mxu0 0
  %650 = vmatpush1.bf16.msra.mxu0 %v494
  %651 = vmatprep.subr.bf16.mxu0 0
  %652 = vmatpush1.bf16.msra.mxu0 %v495
  %653 = vmatprep.subr.bf16.mxu0 0
  %654 = vmatpush1.bf16.msra.mxu0 %v496
  %655 = vmatprep.subr.bf16.mxu0 0
  %656 = vmatpush1.bf16.msra.mxu0 %v497
  %657 = vmatprep.subr.bf16.mxu0 0
  %658 = vmatpush1.bf16.msra.mxu0 %v498
  %659 = vmatprep.mubr.bf16.mxu0 %v178
  %660 = vmatmul.mubr.bf16.gmra.mrb[0].mxu0 %v177
  %v661 = vpop.f32.mrb[0].mxu0
  %v662 = vadd.f32 0.0, %v661
  %v663 = vpop.f32.mrb[0].mxu0
  %v664 = vpop.f32.mrb[0].mxu0
  %v665 = vpop.f32.mrb[0].mxu0
  %666 = vdwg.mxu0
  %667 = vmatprep.subr.bf16.mxu0 0
  %668 = vmatpush1.bf16.msra.mxu0 %v499
  %669 = vmatprep.subr.bf16.mxu0 0
  %670 = vmatpush1.bf16.msra.mxu0 %v500
  %671 = vmatprep.subr.bf16.mxu0 0
  %672 = vmatpush1.bf16.msra.mxu0 %v501
  %673 = vmatprep.subr.bf16.mxu0 0
  %674 = vmatpush1.bf16.msra.mxu0 %v502
  %675 = vmatprep.subr.bf16.mxu0 0
  %676 = vmatpush1.bf16.msra.mxu0 %v503
  %677 = vmatprep.subr.bf16.mxu0 0
  %678 = vmatpush1.bf16.msra.mxu0 %v504
  %679 = vmatprep.subr.bf16.mxu0 0
  %680 = vmatpush1.bf16.msra.mxu0 %v505
  %681 = vmatprep.subr.bf16.mxu0 0
  %682 = vmatpush1.bf16.msra.mxu0 %v506
  %683 = vmatprep.subr.bf16.mxu0 0
  %684 = vmatpush1.bf16.msra.mxu0 %v507
  %685 = vmatprep.subr.bf16.mxu0 0
  %686 = vmatpush1.bf16.msra.mxu0 %v508
  %687 = vmatprep.subr.bf16.mxu0 0
  %688 = vmatpush1.bf16.msra.mxu0 %v509
  %689 = vmatprep.subr.bf16.mxu0 0
  %690 = vmatpush1.bf16.msra.mxu0 %v510
  %691 = vmatprep.subr.bf16.mxu0 0
  %692 = vmatpush1.bf16.msra.mxu0 %v511
  %693 = vmatprep.subr.bf16.mxu0 0
  %694 = vmatpush1.bf16.msra.mxu0 %v512
  %695 = vmatprep.subr.bf16.mxu0 0
  %696 = vmatpush1.bf16.msra.mxu0 %v513
  %697 = vmatprep.subr.bf16.mxu0 0
  %698 = vmatpush1.bf16.msra.mxu0 %v514
  %699 = vmatprep.mubr.bf16.mxu0 %v180
  %700 = vmatmul.mubr.bf16.gmra.mrb[0].mxu0 %v179
  %v701 = vpop.f32.mrb[0].mxu0
  %v702 = vadd.f32 %v662, %v701
  %v703 = vpop.f32.mrb[0].mxu0
  %v704 = vpop.f32.mrb[0].mxu0
  %v705 = vpop.f32.mrb[0].mxu0
  %706 = vdwg.mxu0
  %707 = vmatprep.subr.bf16.mxu0 0
  %708 = vmatpush1.bf16.msra.mxu0 %v515
  %709 = vmatprep.subr.bf16.mxu0 0
  %710 = vmatpush1.bf16.msra.mxu0 %v516
  %711 = vmatprep.subr.bf16.mxu0 0
  %712 = vmatpush1.bf16.msra.mxu0 %v517
  %713 = vmatprep.subr.bf16.mxu0 0
  %714 = vmatpush1.bf16.msra.mxu0 %v518
  %715 = vmatprep.subr.bf16.mxu0 0
  %716 = vmatpush1.bf16.msra.mxu0 %v519
  %717 = vmatprep.subr.bf16.mxu0 0
  %718 = vmatpush1.bf16.msra.mxu0 %v520
  %719 = vmatprep.subr.bf16.mxu0 0
  %720 = vmatpush1.bf16.msra.mxu0 %v521
  %721 = vmatprep.subr.bf16.mxu0 0
  %722 = vmatpush1.bf16.msra.mxu0 %v522
  %723 = vmatprep.subr.bf16.mxu0 0
  %724 = vmatpush1.bf16.msra.mxu0 %v523
  %725 = vmatprep.subr.bf16.mxu0 0
  %726 = vmatpush1.bf16.msra.mxu0 %v524
  %727 = vmatprep.subr.bf16.mxu0 0
  %728 = vmatpush1.bf16.msra.mxu0 %v525
  %729 = vmatprep.subr.bf16.mxu0 0
  %730 = vmatpush1.bf16.msra.mxu0 %v526
  %731 = vmatprep.subr.bf16.mxu0 0
  %732 = vmatpush1.bf16.msra.mxu0 %v527
  %733 = vmatprep.subr.bf16.mxu0 0
  %734 = vmatpush1.bf16.msra.mxu0 %v528
  %735 = vmatprep.subr.bf16.mxu0 0
  %736 = vmatpush1.bf16.msra.mxu0 %v529
  %737 = vmatprep.subr.bf16.mxu0 0
  %738 = vmatpush1.bf16.msra.mxu0 %v530
  %739 = vmatprep.mubr.bf16.mxu0 %v182
  %740 = vmatmul.mubr.bf16.gmra.mrb[0].mxu0 %v181
  %v741 = vpop.f32.mrb[0].mxu0
  %v742 = vadd.f32 %v702, %v741
  %v743 = vpop.f32.mrb[0].mxu0
  %v744 = vpop.f32.mrb[0].mxu0
  %v745 = vpop.f32.mrb[0].mxu0
  %746 = vdwg.mxu0
  %747 = vmatprep.subr.bf16.mxu0 0
  %748 = vmatpush1.bf16.msra.mxu0 %v531
  %749 = vmatprep.subr.bf16.mxu0 0
  %750 = vmatpush1.bf16.msra.mxu0 %v532
  %751 = vmatprep.subr.bf16.mxu0 0
  %752 = vmatpush1.bf16.msra.mxu0 %v533
  %753 = vmatprep.subr.bf16.mxu0 0
  %754 = vmatpush1.bf16.msra.mxu0 %v534
  %755 = vmatprep.subr.bf16.mxu0 0
  %756 = vmatpush1.bf16.msra.mxu0 %v535
  %757 = vmatprep.subr.bf16.mxu0 0
  %758 = vmatpush1.bf16.msra.mxu0 %v536
  %759 = vmatprep.subr.bf16.mxu0 0
  %760 = vmatpush1.bf16.msra.mxu0 %v537
  %761 = vmatprep.subr.bf16.mxu0 0
  %762 = vmatpush1.bf16.msra.mxu0 %v538
  %763 = vmatprep.subr.bf16.mxu0 0
  %764 = vmatpush1.bf16.msra.mxu0 %v539
  %765 = vmatprep.subr.bf16.mxu0 0
  %766 = vmatpush1.bf16.msra.mxu0 %v540
  %767 = vmatprep.subr.bf16.mxu0 0
  %768 = vmatpush1.bf16.msra.mxu0 %v541
  %769 = vmatprep.subr.bf16.mxu0 0
  %770 = vmatpush1.bf16.msra.mxu0 %v542
  %771 = vmatprep.subr.bf16.mxu0 0
  %772 = vmatpush1.bf16.msra.mxu0 %v543
  %773 = vmatprep.subr.bf16.mxu0 0
  %774 = vmatpush1.bf16.msra.mxu0 %v544
  %775 = vmatprep.subr.bf16.mxu0 0
  %776 = vmatpush1.bf16.msra.mxu0 %v545
  %777 = vmatprep.subr.bf16.mxu0 0
  %778 = vmatpush1.bf16.msra.mxu0 %v546
  %779 = vmatprep.mubr.bf16.mxu0 %v184
  %780 = vmatmul.mubr.bf16.gmra.mrb[0].mxu0 %v183
  %v781 = vpop.f32.mrb[0].mxu0
  %v782 = vadd.f32 %v742, %v781
  %v783 = vpop.f32.mrb[0].mxu0
  %v784 = vpop.f32.mrb[0].mxu0
  %v785 = vpop.f32.mrb[0].mxu0
  %786 = vdwg.mxu0
  %787 = vmatprep.subr.bf16.mxu0 0
  %788 = vmatpush1.bf16.msra.mxu0 %v547
  %789 = vmatprep.subr.bf16.mxu0 0
  %790 = vmatpush1.bf16.msra.mxu0 %v548
  %791 = vmatprep.subr.bf16.mxu0 0
  %792 = vmatpush1.bf16.msra.mxu0 %v549
  %793 = vmatprep.subr.bf16.mxu0 0
  %794 = vmatpush1.bf16.msra.mxu0 %v550
  %795 = vmatprep.subr.bf16.mxu0 0
  %796 = vmatpush1.bf16.msra.mxu0 %v551
  %797 = vmatprep.subr.bf16.mxu0 0
  %798 = vmatpush1.bf16.msra.mxu0 %v552
  %799 = vmatprep.subr.bf16.mxu0 0
  %800 = vmatpush1.bf16.msra.mxu0 %v553
  %801 = vmatprep.subr.bf16.mxu0 0
  %802 = vmatpush1.bf16.msra.mxu0 %v554
  %803 = vmatprep.subr.bf16.mxu0 0
  %804 = vmatpush1.bf16.msra.mxu0 0
  %805 = vmatprep.subr.bf16.mxu0 0
  %806 = vmatpush1.bf16.msra.mxu0 0
  %807 = vmatprep.subr.bf16.mxu0 0
  %808 = vmatpush1.bf16.msra.mxu0 0
  %809 = vmatprep.subr.bf16.mxu0 0
  %810 = vmatpush1.bf16.msra.mxu0 0
  %811 = vmatprep.subr.bf16.mxu0 0
  %812 = vmatpush1.bf16.msra.mxu0 0
  %813 = vmatprep.subr.bf16.mxu0 0
  %814 = vmatpush1.bf16.msra.mxu0 0
  %815 = vmatprep.subr.bf16.mxu0 0
  %816 = vmatpush1.bf16.msra.mxu0 0
  %817 = vmatprep.subr.bf16.mxu0 0
  %818 = vmatpush1.bf16.msra.mxu0 0
  %819 = vmatprep.mubr.bf16.mxu0 0
  %820 = vmatmul.mubr.bf16.gmra.mrb[0].mxu0 %v185
  %v821 = vpop.f32.mrb[0].mxu0
  %v822 = vadd.f32 %v782, %v821
  %v823 = vpop.f32.mrb[0].mxu0
  %v824 = vpop.f32.mrb[0].mxu0
  %v825 = vpop.f32.mrb[0].mxu0
  %826 = vdwg.mxu0
  %827 = vst [vmem:[%s2] sm:$0xff] %v822
  %v828 = vrot.slane %v822, 4
  %v829 = vadd.f32 %v822, %v828
  %v830 = vrot.slane %v829, 2
  %v831 = vadd.f32 %v829, %v830
  %v832 = vrot.slane %v831, 1
  %v833 = vadd.f32 %v831, %v832
  %v834 = vmul.f32 %v822, %v822
  %v835 = vrot.slane %v834, 4
  %v836 = vadd.f32 %v834, %v835
  %v837 = vrot.slane %v836, 2
  %v838 = vadd.f32 %v836, %v837
  %v839 = vrot.slane %v838, 1
  %v840 = vadd.f32 %v838, %v839
  %vm841 = vcmask 1040384
  %v842 = vsel %vm841, %v833, %v840
  %843 = vst [vmem:[%s3] sm:$0x3] %v842
  // Predicated region
  $region10: #{_lambda_.38} parent=0 // pred_check
    _
  $region11: #{_lambda_.38} parent=0 // pred_check_branch
    %845 = sbr.rel (0) target = $region13
  $region12: #{_lambda_.38} parent=0 // pred_region
    _
  $region13: #{_lambda_.38} parent=0 // pred_fallthru
    _
  // Predicated region
  $region14: #{_lambda_.38} parent=0 // pred_check
    _
  $region15: #{_lambda_.38} parent=0 // pred_check_branch
    %847 = sbr.rel (0) target = $region17
  $region16: #{_lambda_.38} parent=0 // pred_region
    _
  $region17: #{_lambda_.38} parent=0 // pred_fallthru
    _
  // Predicated region
  $region18: #{_lambda_.38} parent=0 // pred_check
    _
  $region19: #{_lambda_.38} parent=0 // pred_check_branch
    %849 = sbr.rel (0) target = $region21
  $region20: #{_lambda_.38} parent=0 // pred_region
    _
  $region21: #{_lambda_.38} parent=0 // pred_fallthru
    _
  // Predicated region
  $region22: #{_lambda_.38} parent=0 // pred_check
    _
  $region23: #{_lambda_.38} parent=0 // pred_check_branch
    %851 = sbr.rel (0) target = $region25
  $region24: #{_lambda_.38} parent=0 // pred_region
    _
  $region25: #{_lambda_.38} parent=0 // pred_fallthru
    _

// kernel: _lambda_.44
$region0: #{_lambda_.44}
  #allocation0 [shape = 'u32[]', space=smem, size = 0x4, offset = 0x4, fixed_abs, tag = 'smem constant byte address 0x4 - core index']
  #allocation1 [shape = 'u32[144,128]{1,0:T(1,128)}', space=vmem, size = 0x12000, scoped, tag = 'internal scratch']
  %s0 = inlined_call_operand.vmem [shape: f32[32,64], index: 0, kind: input, shape index: {}]
  %s1 = inlined_call_operand.vmem [shape: f32[1,64], index: 1, kind: input, shape index: {}]
  %s2 = inlined_call_operand.vmem [shape: f32[1,64], index: 2, kind: input, shape index: {}]
  %s3 = inlined_call_operand.vmem [shape: f32[32,64], index: 3, kind: output, shape index: {}]
  %s4 = sld [smem:[#allocation0]]
  $region22: #{_lambda_.44} parent=0
    _
  %s6 = ssub.s32 1, %s4
  %s7 = scalar_select 0, %s6, %s4
  // Predicated region
  $region2: #{_lambda_.44} parent=0 // pred_check
    _
  $region3: #{_lambda_.44} parent=0 // pred_check_branch
    %9 = sbr.rel (0) target = $region5
  $region4: #{_lambda_.44} parent=0 // pred_region
    _
  $region5: #{_lambda_.44} parent=0 // pred_fallthru
    _
  // Predicated region
  $region6: #{_lambda_.44} parent=0 // pred_check
    _
  $region7: #{_lambda_.44} parent=0 // pred_check_branch
    %11 = sbr.rel (0) target = $region9
  $region8: #{_lambda_.44} parent=0 // pred_region
    _
  $region9: #{_lambda_.44} parent=0 // pred_fallthru
    _
  // Predicated region
  $region10: #{_lambda_.44} parent=0 // pred_check
    _
  $region11: #{_lambda_.44} parent=0 // pred_check_branch
    %13 = sbr.rel (0) target = $region13
  $region12: #{_lambda_.44} parent=0 // pred_region
    _
  $region13: #{_lambda_.44} parent=0 // pred_fallthru
    _
  %v14 = vld [vmem:[%s0] sm:$0xff]
  %v15 = vld [vmem:[%s0 + $0x8] sm:$0xff]
  %v16 = vld [vmem:[%s0 + $0x10] sm:$0xff]
  %v17 = vld [vmem:[%s0 + $0x18] sm:$0xff]
  %v18 = vld [vmem:[%s1] sm:$0x1]
  %v20 = vlaneseq
  %v21 = vshrl.u32 %v20, 7
  %v22 = vsub.s32 0, %v21
  %v23 = vrot.slane %v18, %v22
  %v25 = vmul.f32 %v14, %v23
  %v26 = vmul.f32 %v15, %v23
  %v27 = vmul.f32 %v16, %v23
  %v28 = vmul.f32 %v17, %v23
  %v29 = vld [vmem:[%s2] sm:$0x1]
  %v31 = vlaneseq
  %v32 = vshrl.u32 %v31, 7
  %v33 = vsub.s32 0, %v32
  %v34 = vrot.slane %v29, %v33
  %v36 = vadd.f32 %v25, %v34
  %v37 = vadd.f32 %v26, %v34
  %v38 = vadd.f32 %v27, %v34
  %v39 = vadd.f32 %v28, %v34
  %v40 = vmax.f32 %v36, 0.0
  %v41 = vmax.f32 %v37, 0.0
  %v42 = vmax.f32 %v38, 0.0
  %v43 = vmax.f32 %v39, 0.0
  %vm44 = vcmask 523264
  %45 = vst.msk [vmem:[%s3] sm:$0xff] %vm44, %v40
  %46 = vst.msk [vmem:[%s3 + $0x8] sm:$0xff] %vm44, %v41
  %47 = vst.msk [vmem:[%s3 + $0x10] sm:$0xff] %vm44, %v42
  %48 = vst.msk [vmem:[%s3 + $0x18] sm:$0xff] %vm44, %v43
  // Predicated region
  $region14: #{_lambda_.44} parent=0 // pred_check
    _
  $region15: #{_lambda_.44} parent=0 // pred_check_branch
    %50 = sbr.rel (0) target = $region17
  $region16: #{_lambda_.44} parent=0 // pred_region
    _
  $region17: #{_lambda_.44} parent=0 // pred_fallthru
    _
  // Predicated region
  $region18: #{_lambda_.44} parent=0 // pred_check
    _
  $region19: #{_lambda_.44} parent=0 // pred_check_branch
    %52 = sbr.rel (0) target = $region21
  $region20: #{_lambda_.44} parent=0 // pred_region
    _
  $region21: #{_lambda_.44} parent=0 // pred_fallthru
    _

// kernel: tile.14
$region0: #{tile.14}
  #allocation0 [shape = 's32[1]{0}', space=sflag, size = 0x4, scoped, tag = 'scoped memory for tile.14']
  %s0 = inlined_call_operand.vmem [shape: f32[32], index: 0, kind: input, shape index: {}]
  %s1 = inlined_call_operand.vmem [shape: f32[4,32], index: 1, kind: output, shape index: {}]
  // Predicated region
  $region2: #{tile.14} parent=0 // pred_check
    _
  $region3: #{tile.14} parent=0 // pred_check_branch
    %3 = sbr.rel (0) target = $region5
  $region4: #{tile.14} parent=0 // pred_region
    _
  $region5: #{tile.14} parent=0 // pred_fallthru
    _
  %v4 = vld [vmem:[%s0] ss:$0 sm:$0xff]
  %5 = vst [vmem:[%s1] sm:$0xf] %v4

// kernel: tile.15
$region0: #{tile.15}
  %s0 = inlined_call_operand.vmem [shape: f32[4,32], index: 0, kind: input, shape index: {}]
  %s1 = inlined_call_operand.vmem [shape: f32[1,128], index: 1, kind: output, shape index: {}]
  $region1: #{tile.15} parent=0
    #allocation0 [shape = 'u8[4096]{0}', space=vmem, size = 0x1000, scoped, tag = 'scoped mem for output reshape']
    #allocation1 [shape = 'u8[4096]{0}', space=vmem, size = 0x1000, scoped, tag = 'scoped mem for input reshape']
    %s3 = sshllo.u32 0, 4
    %v4 = vld [vmem:[%s0] sm:%s3]
    %5 = vst [vmem:[#allocation1] sm:%s3] %v4
    %v6 = vld [vmem:[#allocation1] sm:$0x1]
    %vm7 = vcmask 261120
    %8 = vst.msk [vmem:[#allocation0] sm:$0x1] %vm7, %v6
    %s9 = scalar_lea.vmem [#allocation1], 3
    %v10 = vld [vmem:[%s9] sm:$0x1]
    %11 = vrot.lane.b32.xlu0 %v10, 96
    %v12 = vpop.permute.xlu0 %11
    %vm13 = vcmask 1048320
    %14 = vst.msk [vmem:[#allocation0] sm:$0x1] %vm13, %v12
    %s15 = scalar_lea.vmem [#allocation1], 2
    %v16 = vld [vmem:[%s15] sm:$0x1]
    %17 = vrot.lane.b32.xlu0 %v16, 64
    %v18 = vpop.permute.xlu0 %17
    %vm19 = vcmask 785920
    %20 = vst.msk [vmem:[#allocation0] sm:$0x1] %vm19, %v18
    %s21 = scalar_lea.vmem [#allocation1], 1
    %v22 = vld [vmem:[%s21] sm:$0x1]
    %23 = vrot.lane.b32.xlu0 %v22, 32
    %v24 = vpop.permute.xlu0 %23
    %vm25 = vcmask 523520
    %26 = vst.msk [vmem:[#allocation0] sm:$0x1] %vm25, %v24
    %s28 = sshllo.u32 0, 1
    %v30 = vld [vmem:[#allocation0] sm:%s28]
    %s31 = sshllo.u32 0, 1
    %32 = vst [vmem:[%s1] sm:%s31] %v30

// kernel: _lambda_.47
$region0: #{_lambda_.47}
  #allocation0 [shape = 'u32[]', space=smem, size = 0x4, offset = 0x4, fixed_abs, tag = 'smem constant byte address 0x4 - core index']
  #allocation1 [shape = 'u32[144,128]{1,0:T(1,128)}', space=vmem, size = 0x12000, scoped, tag = 'internal scratch']
  %s0 = inlined_call_operand.vmem [shape: bf16[32,64], index: 0, kind: input, shape index: {}]
  %s1 = inlined_call_operand.vmem [shape: bf16[64,128], index: 1, kind: input, shape index: {}]
  %s2 = inlined_call_operand.vmem [shape: f32[1,128], index: 2, kind: input, shape index: {}]
  %s3 = inlined_call_operand.vmem [shape: f32[32,128], index: 3, kind: output, shape index: {}]
  %s4 = sld [smem:[#allocation0]]
  $region22: #{_lambda_.47} parent=0
    _
  %s6 = ssub.s32 1, %s4
  %s7 = scalar_select 0, %s6, %s4
  // Predicated region
  $region2: #{_lambda_.47} parent=0 // pred_check
    _
  $region3: #{_lambda_.47} parent=0 // pred_check_branch
    %9 = sbr.rel (0) target = $region5
  $region4: #{_lambda_.47} parent=0 // pred_region
    _
  $region5: #{_lambda_.47} parent=0 // pred_fallthru
    _
  // Predicated region
  $region6: #{_lambda_.47} parent=0 // pred_check
    _
  $region7: #{_lambda_.47} parent=0 // pred_check_branch
    %11 = sbr.rel (0) target = $region9
  $region8: #{_lambda_.47} parent=0 // pred_region
    _
  $region9: #{_lambda_.47} parent=0 // pred_fallthru
    _
  // Predicated region
  $region10: #{_lambda_.47} parent=0 // pred_check
    _
  $region11: #{_lambda_.47} parent=0 // pred_check_branch
    %13 = sbr.rel (0) target = $region13
  $region12: #{_lambda_.47} parent=0 // pred_region
    _
  $region13: #{_lambda_.47} parent=0 // pred_fallthru
    _
  %v15 = vld [vmem:[%s0] sm:$0xf]
  %v16 = vld [vmem:[%s0 + $0x4] sm:$0xf]
  %v17 = vld [vmem:[%s0 + $0x8] sm:$0xf]
  %v18 = vld [vmem:[%s0 + $0xc] sm:$0xf]
  %v19 = vld [vmem:[%s1] sm:$0xf]
  %v20 = vld [vmem:[%s1 + $0x4] sm:$0xf]
  %v21 = vld [vmem:[%s1 + $0x8] sm:$0xf]
  %v22 = vld [vmem:[%s1 + $0xc] sm:$0xf]
  %v23 = vld [vmem:[%s1 + $0x10] sm:$0xf]
  %v24 = vld [vmem:[%s1 + $0x14] sm:$0xf]
  %v25 = vld [vmem:[%s1 + $0x18] sm:$0xf]
  %v26 = vld [vmem:[%s1 + $0x1c] sm:$0xf]
  %v27 = vld [vmem:[%s2] sm:$0x1]
  %v29 = vlaneseq
  %v30 = vshrl.u32 %v29, 7
  %v31 = vsub.s32 0, %v30
  %v32 = vrot.slane %v27, %v31
  %v38 = vunpack.c.l.b16 %v15
  %v39 = vunpack.c.l.b16 %v16
  %v40 = vunpack.c.l.b16 %v17
  %v41 = vunpack.c.l.b16 %v18
  %v42 = vpack.c.b16 %v39, %v38
  %v43 = vpack.c.b16 %v41, %v40
  %v52 = vunpack.c.l.b16 %v19
  %v53 = vunpack.c.l.b16 %v20
  %v54 = vunpack.c.l.b16 %v21
  %v55 = vunpack.c.l.b16 %v22
  %v56 = vunpack.c.l.b16 %v23
  %v57 = vunpack.c.l.b16 %v24
  %v58 = vunpack.c.l.b16 %v25
  %v59 = vunpack.c.l.b16 %v26
  %v60 = vpack.c.b16 %v53, %v52
  %v61 = vpack.c.b16 %v55, %v54
  %v62 = vpack.c.b16 %v57, %v56
  %v63 = vpack.c.b16 %v59, %v58
  %vm68 = vcmask 523264
  %v70 = vsel %vm68, %v42, 0
  %v73 = vsel %vm68, %v43, 0
  %75 = vmatprep.subr.bf16.mxu0 0
  %76 = vmatpush1.bf16.msra.mxu0 %v60
  %77 = vmatprep.subr.bf16.mxu0 0
  %78 = vmatpush1.bf16.msra.mxu0 %v61
  %79 = vmatprep.subr.bf16.mxu0 0
  %80 = vmatpush1.bf16.msra.mxu0 %v62
  %81 = vmatprep.subr.bf16.mxu0 0
  %82 = vmatpush1.bf16.msra.mxu0 %v63
  %83 = vmatprep.subr.bf16.mxu0 0
  %84 = vmatpush1.bf16.msra.mxu0 0
  %85 = vmatprep.subr.bf16.mxu0 0
  %86 = vmatpush1.bf16.msra.mxu0 0
  %87 = vmatprep.subr.bf16.mxu0 0
  %88 = vmatpush1.bf16.msra.mxu0 0
  %89 = vmatprep.subr.bf16.mxu0 0
  %90 = vmatpush1.bf16.msra.mxu0 0
  %91 = vmatprep.subr.bf16.mxu0 0
  %92 = vmatpush1.bf16.msra.mxu0 0
  %93 = vmatprep.subr.bf16.mxu0 0
  %94 = vmatpush1.bf16.msra.mxu0 0
  %95 = vmatprep.subr.bf16.mxu0 0
  %96 = vmatpush1.bf16.msra.mxu0 0
  %97 = vmatprep.subr.bf16.mxu0 0
  %98 = vmatpush1.bf16.msra.mxu0 0
  %99 = vmatprep.subr.bf16.mxu0 0
  %100 = vmatpush1.bf16.msra.mxu0 0
  %101 = vmatprep.subr.bf16.mxu0 0
  %102 = vmatpush1.bf16.msra.mxu0 0
  %103 = vmatprep.subr.bf16.mxu0 0
  %104 = vmatpush1.bf16.msra.mxu0 0
  %105 = vmatprep.subr.bf16.mxu0 0
  %106 = vmatpush1.bf16.msra.mxu0 0
  %107 = vmatprep.mubr.bf16.mxu0 0
  %108 = vmatmul.mubr.bf16.gmra.mrb[0].mxu0 %v70
  %v109 = vpop.f32.mrb[0].mxu0
  %v110 = vadd.f32 %v32, %v109
  %v111 = vpop.f32.mrb[0].mxu0
  %v112 = vpop.f32.mrb[0].mxu0
  %v113 = vadd.f32 %v32, %v112
  %v114 = vpop.f32.mrb[0].mxu0
  %115 = vmatprep.mubr.bf16.mxu0 0
  %116 = vmatmul.mubr.bf16.gmra.mrb[0].mxu0 %v73
  %v117 = vpop.f32.mrb[0].mxu0
  %v118 = vadd.f32 %v32, %v117
  %v119 = vpop.f32.mrb[0].mxu0
  %v120 = vpop.f32.mrb[0].mxu0
  %v121 = vadd.f32 %v32, %v120
  %v122 = vpop.f32.mrb[0].mxu0
  %123 = vdwg.mxu0
  %124 = vst [vmem:[%s3] sm:$0xff] %v110
  %125 = vst [vmem:[%s3 + $0x8] sm:$0xff] %v113
  %126 = vst [vmem:[%s3 + $0x10] sm:$0xff] %v118
  %127 = vst [vmem:[%s3 + $0x18] sm:$0xff] %v121
  // Predicated region
  $region14: #{_lambda_.47} parent=0 // pred_check
    _
  $region15: #{_lambda_.47} parent=0 // pred_check_branch
    %129 = sbr.rel (0) target = $region17
  $region16: #{_lambda_.47} parent=0 // pred_region
    _
  $region17: #{_lambda_.47} parent=0 // pred_fallthru
    _
  // Predicated region
  $region18: #{_lambda_.47} parent=0 // pred_check
    _
  $region19: #{_lambda_.47} parent=0 // pred_check_branch
    %131 = sbr.rel (0) target = $region21
  $region20: #{_lambda_.47} parent=0 // pred_region
    _
  $region21: #{_lambda_.47} parent=0 // pred_fallthru
    _

// kernel: _lambda_.45
$region0: #{_lambda_.45}
  #allocation0 [shape = 'u32[]', space=smem, size = 0x4, offset = 0x4, fixed_abs, tag = 'smem constant byte address 0x4 - core index']
  #allocation1 [shape = 'u32[144,128]{1,0:T(1,128)}', space=vmem, size = 0x12000, scoped, tag = 'internal scratch']
  %s0 = inlined_call_operand.vmem [shape: bf16[32,576], index: 0, kind: input, shape index: {}]
  %s1 = inlined_call_operand.vmem [shape: bf16[576,64], index: 1, kind: input, shape index: {}]
  %s2 = inlined_call_operand.vmem [shape: f32[32,64], index: 2, kind: output, shape index: {0}]
  %s3 = inlined_call_operand.vmem [shape: f32[1,2,64], index: 3, kind: output, shape index: {1}]
  %4 = xla_tuple %s2, %s3
  %s5 = sld [smem:[#allocation0]]
  $region26: #{_lambda_.45} parent=0
    _
  %s7 = ssub.s32 1, %s5
  %s8 = scalar_select 0, %s7, %s5
  // Predicated region
  $region2: #{_lambda_.45} parent=0 // pred_check
    _
  $region3: #{_lambda_.45} parent=0 // pred_check_branch
    %10 = sbr.rel (0) target = $region5
  $region4: #{_lambda_.45} parent=0 // pred_region
    _
  $region5: #{_lambda_.45} parent=0 // pred_fallthru
    _
  // Predicated region
  $region6: #{_lambda_.45} parent=0 // pred_check
    _
  $region7: #{_lambda_.45} parent=0 // pred_check_branch
    %12 = sbr.rel (0) target = $region9
  $region8: #{_lambda_.45} parent=0 // pred_region
    _
  $region9: #{_lambda_.45} parent=0 // pred_fallthru
    _
  %v14 = vld [vmem:[%s0] sm:$0xff]
  %v15 = vld [vmem:[%s0 + $0x8] sm:$0xff]
  %v16 = vld [vmem:[%s0 + $0x10] sm:$0xf]
  %v17 = vld [vmem:[%s0 + $0x14] sm:$0xff]
  %v18 = vld [vmem:[%s0 + $0x1c] sm:$0xff]
  %v19 = vld [vmem:[%s0 + $0x24] sm:$0xf]
  %v20 = vld [vmem:[%s0 + $0x28] sm:$0xff]
  %v21 = vld [vmem:[%s0 + $0x30] sm:$0xff]
  %v22 = vld [vmem:[%s0 + $0x38] sm:$0xf]
  %v23 = vld [vmem:[%s0 + $0x3c] sm:$0xff]
  %v24 = vld [vmem:[%s0 + $0x44] sm:$0xff]
  %v25 = vld [vmem:[%s0 + $0x4c] sm:$0xf]
  %v26 = vld [vmem:[%s1] sm:$0xf]
  %v27 = vld [vmem:[%s1 + $0x4] sm:$0xf]
  %v28 = vld [vmem:[%s1 + $0x8] sm:$0xf]
  %v29 = vld [vmem:[%s1 + $0xc] sm:$0xf]
  %v30 = vld [vmem:[%s1 + $0x10] sm:$0xf]
  %v31 = vld [vmem:[%s1 + $0x14] sm:$0xf]
  %v32 = vld [vmem:[%s1 + $0x18] sm:$0xf]
  %v33 = vld [vmem:[%s1 + $0x1c] sm:$0xf]
  %v34 = vld [vmem:[%s1 + $0x20] sm:$0xf]
  %v35 = vld [vmem:[%s1 + $0x24] sm:$0xf]
  %v36 = vld [vmem:[%s1 + $0x28] sm:$0xf]
  %v37 = vld [vmem:[%s1 + $0x2c] sm:$0xf]
  %v38 = vld [vmem:[%s1 + $0x30] sm:$0xf]
  %v39 = vld [vmem:[%s1 + $0x34] sm:$0xf]
  %v40 = vld [vmem:[%s1 + $0x38] sm:$0xf]
  %v41 = vld [vmem:[%s1 + $0x3c] sm:$0xf]
  %v42 = vld [vmem:[%s1 + $0x40] sm:$0xf]
  %v43 = vld [vmem:[%s1 + $0x44] sm:$0xf]
  %v44 = vld [vmem:[%s1 + $0x48] sm:$0xf]
  %v45 = vld [vmem:[%s1 + $0x4c] sm:$0xf]
  %v46 = vld [vmem:[%s1 + $0x50] sm:$0xf]
  %v47 = vld [vmem:[%s1 + $0x54] sm:$0xf]
  %v48 = vld [vmem:[%s1 + $0x58] sm:$0xf]
  %v49 = vld [vmem:[%s1 + $0x5c] sm:$0xf]
  %v50 = vld [vmem:[%s1 + $0x60] sm:$0xf]
  %v51 = vld [vmem:[%s1 + $0x64] sm:$0xf]
  %v52 = vld [vmem:[%s1 + $0x68] sm:$0xf]
  %v53 = vld [vmem:[%s1 + $0x6c] sm:$0xf]
  %v54 = vld [vmem:[%s1 + $0x70] sm:$0xf]
  %v55 = vld [vmem:[%s1 + $0x74] sm:$0xf]
  %v56 = vld [vmem:[%s1 + $0x78] sm:$0xf]
  %v57 = vld [vmem:[%s1 + $0x7c] sm:$0xf]
  %v58 = vld [vmem:[%s1 + $0x80] sm:$0xf]
  %v59 = vld [vmem:[%s1 + $0x84] sm:$0xf]
  %v60 = vld [vmem:[%s1 + $0x88] sm:$0xf]
  %v61 = vld [vmem:[%s1 + $0x8c] sm:$0xf]
  %v62 = vld [vmem:[%s1 + $0x90] sm:$0xf]
  %v63 = vld [vmem:[%s1 + $0x94] sm:$0xf]
  %v64 = vld [vmem:[%s1 + $0x98] sm:$0xf]
  %v65 = vld [vmem:[%s1 + $0x9c] sm:$0xf]
  %v66 = vld [vmem:[%s1 + $0xa0] sm:$0xf]
  %v67 = vld [vmem:[%s1 + $0xa4] sm:$0xf]
  %v68 = vld [vmem:[%s1 + $0xa8] sm:$0xf]
  %v69 = vld [vmem:[%s1 + $0xac] sm:$0xf]
  %v70 = vld [vmem:[%s1 + $0xb0] sm:$0xf]
  %v71 = vld [vmem:[%s1 + $0xb4] sm:$0xf]
  %v72 = vld [vmem:[%s1 + $0xb8] sm:$0xf]
  %v73 = vld [vmem:[%s1 + $0xbc] sm:$0xf]
  %v74 = vld [vmem:[%s1 + $0xc0] sm:$0xf]
  %v75 = vld [vmem:[%s1 + $0xc4] sm:$0xf]
  %v76 = vld [vmem:[%s1 + $0xc8] sm:$0xf]
  %v77 = vld [vmem:[%s1 + $0xcc] sm:$0xf]
  %v78 = vld [vmem:[%s1 + $0xd0] sm:$0xf]
  %v79 = vld [vmem:[%s1 + $0xd4] sm:$0xf]
  %v80 = vld [vmem:[%s1 + $0xd8] sm:$0xf]
  %v81 = vld [vmem:[%s1 + $0xdc] sm:$0xf]
  %v82 = vld [vmem:[%s1 + $0xe0] sm:$0xf]
  %v83 = vld [vmem:[%s1 + $0xe4] sm:$0xf]
  %v84 = vld [vmem:[%s1 + $0xe8] sm:$0xf]
  %v85 = vld [vmem:[%s1 + $0xec] sm:$0xf]
  %v86 = vld [vmem:[%s1 + $0xf0] sm:$0xf]
  %v87 = vld [vmem:[%s1 + $0xf4] sm:$0xf]
  %v88 = vld [vmem:[%s1 + $0xf8] sm:$0xf]
  %v89 = vld [vmem:[%s1 + $0xfc] sm:$0xf]
  %v90 = vld [vmem:[%s1 + $0x100] sm:$0xf]
  %v91 = vld [vmem:[%s1 + $0x104] sm:$0xf]
  %v92 = vld [vmem:[%s1 + $0x108] sm:$0xf]
  %v93 = vld [vmem:[%s1 + $0x10c] sm:$0xf]
  %v94 = vld [vmem:[%s1 + $0x110] sm:$0xf]
  %v95 = vld [vmem:[%s1 + $0x114] sm:$0xf]
  %v96 = vld [vmem:[%s1 + $0x118] sm:$0xf]
  %v97 = vld [vmem:[%s1 + $0x11c] sm:$0xf]
  %v110 = vunpack.c.l.b16 %v14
  %v111 = vunpack.c.h.b16 %v14
  %v112 = vunpack.c.l.b16 %v15
  %v113 = vunpack.c.h.b16 %v15
  %v114 = vunpack.c.l.b16 %v16
  %v115 = vunpack.c.l.b16 %v17
  %v116 = vunpack.c.h.b16 %v17
  %v117 = vunpack.c.l.b16 %v18
  %v118 = vunpack.c.h.b16 %v18
  %v119 = vunpack.c.l.b16 %v19
  %v120 = vunpack.c.l.b16 %v20
  %v121 = vunpack.c.h.b16 %v20
  %v122 = vunpack.c.l.b16 %v21
  %v123 = vunpack.c.h.b16 %v21
  %v124 = vunpack.c.l.b16 %v22
  %v125 = vunpack.c.l.b16 %v23
  %v126 = vunpack.c.h.b16 %v23
  %v127 = vunpack.c.l.b16 %v24
  %v128 = vunpack.c.h.b16 %v24
  %v129 = vunpack.c.l.b16 %v25
  %v130 = vpack.c.b16 %v115, %v110
  %v131 = vpack.c.b16 %v116, %v111
  %v132 = vpack.c.b16 %v117, %v112
  %v133 = vpack.c.b16 %v118, %v113
  %v134 = vpack.c.b16 %v119, %v114
  %v135 = vpack.c.b16 %v125, %v120
  %v136 = vpack.c.b16 %v126, %v121
  %v137 = vpack.c.b16 %v127, %v122
  %v138 = vpack.c.b16 %v128, %v123
  %v139 = vpack.c.b16 %v129, %v124
  %v220 = vunpack.c.l.b16 %v26
  %v221 = vunpack.c.l.b16 %v27
  %v222 = vunpack.c.l.b16 %v28
  %v223 = vunpack.c.l.b16 %v29
  %v224 = vunpack.c.l.b16 %v30
  %v225 = vunpack.c.l.b16 %v31
  %v226 = vunpack.c.l.b16 %v32
  %v227 = vunpack.c.l.b16 %v33
  %v228 = vunpack.c.l.b16 %v34
  %v229 = vunpack.c.l.b16 %v35
  %v230 = vunpack.c.l.b16 %v36
  %v231 = vunpack.c.l.b16 %v37
  %v232 = vunpack.c.l.b16 %v38
  %v233 = vunpack.c.l.b16 %v39
  %v234 = vunpack.c.l.b16 %v40
  %v235 = vunpack.c.l.b16 %v41
  %v236 = vunpack.c.l.b16 %v42
  %v237 = vunpack.c.l.b16 %v43
  %v238 = vunpack.c.l.b16 %v44
  %v239 = vunpack.c.l.b16 %v45
  %v240 = vunpack.c.l.b16 %v46
  %v241 = vunpack.c.l.b16 %v47
  %v242 = vunpack.c.l.b16 %v48
  %v243 = vunpack.c.l.b16 %v49
  %v244 = vunpack.c.l.b16 %v50
  %v245 = vunpack.c.l.b16 %v51
  %v246 = vunpack.c.l.b16 %v52
  %v247 = vunpack.c.l.b16 %v53
  %v248 = vunpack.c.l.b16 %v54
  %v249 = vunpack.c.l.b16 %v55
  %v250 = vunpack.c.l.b16 %v56
  %v251 = vunpack.c.l.b16 %v57
  %v252 = vunpack.c.l.b16 %v58
  %v253 = vunpack.c.l.b16 %v59
  %v254 = vunpack.c.l.b16 %v60
  %v255 = vunpack.c.l.b16 %v61
  %v256 = vunpack.c.l.b16 %v62
  %v257 = vunpack.c.l.b16 %v63
  %v258 = vunpack.c.l.b16 %v64
  %v259 = vunpack.c.l.b16 %v65
  %v260 = vunpack.c.l.b16 %v66
  %v261 = vunpack.c.l.b16 %v67
  %v262 = vunpack.c.l.b16 %v68
  %v263 = vunpack.c.l.b16 %v69
  %v264 = vunpack.c.l.b16 %v70
  %v265 = vunpack.c.l.b16 %v71
  %v266 = vunpack.c.l.b16 %v72
  %v267 = vunpack.c.l.b16 %v73
  %v268 = vunpack.c.l.b16 %v74
  %v269 = vunpack.c.l.b16 %v75
  %v270 = vunpack.c.l.b16 %v76
  %v271 = vunpack.c.l.b16 %v77
  %v272 = vunpack.c.l.b16 %v78
  %v273 = vunpack.c.l.b16 %v79
  %v274 = vunpack.c.l.b16 %v80
  %v275 = vunpack.c.l.b16 %v81
  %v276 = vunpack.c.l.b16 %v82
  %v277 = vunpack.c.l.b16 %v83
  %v278 = vunpack.c.l.b16 %v84
  %v279 = vunpack.c.l.b16 %v85
  %v280 = vunpack.c.l.b16 %v86
  %v281 = vunpack.c.l.b16 %v87
  %v282 = vunpack.c.l.b16 %v88
  %v283 = vunpack.c.l.b16 %v89
  %v284 = vunpack.c.l.b16 %v90
  %v285 = vunpack.c.l.b16 %v91
  %v286 = vunpack.c.l.b16 %v92
  %v287 = vunpack.c.l.b16 %v93
  %v288 = vunpack.c.l.b16 %v94
  %v289 = vunpack.c.l.b16 %v95
  %v290 = vunpack.c.l.b16 %v96
  %v291 = vunpack.c.l.b16 %v97
  %v292 = vpack.c.b16 %v221, %v220
  %v293 = vpack.c.b16 %v223, %v222
  %v294 = vpack.c.b16 %v225, %v224
  %v295 = vpack.c.b16 %v227, %v226
  %v296 = vpack.c.b16 %v229, %v228
  %v297 = vpack.c.b16 %v231, %v230
  %v298 = vpack.c.b16 %v233, %v232
  %v299 = vpack.c.b16 %v235, %v234
  %v300 = vpack.c.b16 %v237, %v236
  %v301 = vpack.c.b16 %v239, %v238
  %v302 = vpack.c.b16 %v241, %v240
  %v303 = vpack.c.b16 %v243, %v242
  %v304 = vpack.c.b16 %v245, %v244
  %v305 = vpack.c.b16 %v247, %v246
  %v306 = vpack.c.b16 %v249, %v248
  %v307 = vpack.c.b16 %v251, %v250
  %v308 = vpack.c.b16 %v253, %v252
  %v309 = vpack.c.b16 %v255, %v254
  %v310 = vpack.c.b16 %v257, %v256
  %v311 = vpack.c.b16 %v259, %v258
  %v312 = vpack.c.b16 %v261, %v260
  %v313 = vpack.c.b16 %v263, %v262
  %v314 = vpack.c.b16 %v265, %v264
  %v315 = vpack.c.b16 %v267, %v266
  %v316 = vpack.c.b16 %v269, %v268
  %v317 = vpack.c.b16 %v271, %v270
  %v318 = vpack.c.b16 %v273, %v272
  %v319 = vpack.c.b16 %v275, %v274
  %v320 = vpack.c.b16 %v277, %v276
  %v321 = vpack.c.b16 %v279, %v278
  %v322 = vpack.c.b16 %v281, %v280
  %v323 = vpack.c.b16 %v283, %v282
  %v324 = vpack.c.b16 %v285, %v284
  %v325 = vpack.c.b16 %v287, %v286
  %v326 = vpack.c.b16 %v289, %v288
  %v327 = vpack.c.b16 %v291, %v290
  %vm364 = vcmask 523264
  %v366 = vsel %vm364, %v134, 0
  %v369 = vsel %vm364, %v139, 0
  %371 = vmatprep.subr.bf16.mxu0 0
  %372 = vmatpush1.bf16.msra.mxu0 %v292
  %373 = vmatprep.subr.bf16.mxu0 0
  %374 = vmatpush1.bf16.msra.mxu0 %v293
  %375 = vmatprep.subr.bf16.mxu0 0
  %376 = vmatpush1.bf16.msra.mxu0 %v294
  %377 = vmatprep.subr.bf16.mxu0 0
  %378 = vmatpush1.bf16.msra.mxu0 %v295
  %379 = vmatprep.subr.bf16.mxu0 0
  %380 = vmatpush1.bf16.msra.mxu0 %v296
  %381 = vmatprep.subr.bf16.mxu0 0
  %382 = vmatpush1.bf16.msra.mxu0 %v297
  %383 = vmatprep.subr.bf16.mxu0 0
  %384 = vmatpush1.bf16.msra.mxu0 %v298
  %385 = vmatprep.subr.bf16.mxu0 0
  %386 = vmatpush1.bf16.msra.mxu0 %v299
  %387 = vmatprep.subr.bf16.mxu0 0
  %388 = vmatpush1.bf16.msra.mxu0 %v300
  %389 = vmatprep.subr.bf16.mxu0 0
  %390 = vmatpush1.bf16.msra.mxu0 %v301
  %391 = vmatprep.subr.bf16.mxu0 0
  %392 = vmatpush1.bf16.msra.mxu0 %v302
  %393 = vmatprep.subr.bf16.mxu0 0
  %394 = vmatpush1.bf16.msra.mxu0 %v303
  %395 = vmatprep.subr.bf16.mxu0 0
  %396 = vmatpush1.bf16.msra.mxu0 %v304
  %397 = vmatprep.subr.bf16.mxu0 0
  %398 = vmatpush1.bf16.msra.mxu0 %v305
  %399 = vmatprep.subr.bf16.mxu0 0
  %400 = vmatpush1.bf16.msra.mxu0 %v306
  %401 = vmatprep.subr.bf16.mxu0 0
  %402 = vmatpush1.bf16.msra.mxu0 %v307
  %403 = vmatprep.mubr.bf16.mxu0 %v131
  %404 = vmatmul.mubr.bf16.gmra.mrb[0].mxu0 %v130
  %v405 = vpop.f32.mrb[0].mxu0
  %v406 = vadd.f32 0.0, %v405
  %v407 = vpop.f32.mrb[0].mxu0
  %v408 = vpop.f32.mrb[0].mxu0
  %v409 = vadd.f32 0.0, %v408
  %v410 = vpop.f32.mrb[0].mxu0
  %411 = vmatprep.mubr.bf16.mxu0 %v136
  %412 = vmatmul.mubr.bf16.gmra.mrb[0].mxu0 %v135
  %v413 = vpop.f32.mrb[0].mxu0
  %v414 = vadd.f32 0.0, %v413
  %v415 = vpop.f32.mrb[0].mxu0
  %v416 = vpop.f32.mrb[0].mxu0
  %v417 = vadd.f32 0.0, %v416
  %v418 = vpop.f32.mrb[0].mxu0
  %419 = vdwg.mxu0
  %420 = vmatprep.subr.bf16.mxu0 0
  %421 = vmatpush1.bf16.msra.mxu0 %v308
  %422 = vmatprep.subr.bf16.mxu0 0
  %423 = vmatpush1.bf16.msra.mxu0 %v309
  %424 = vmatprep.subr.bf16.mxu0 0
  %425 = vmatpush1.bf16.msra.mxu0 %v310
  %426 = vmatprep.subr.bf16.mxu0 0
  %427 = vmatpush1.bf16.msra.mxu0 %v311
  %428 = vmatprep.subr.bf16.mxu0 0
  %429 = vmatpush1.bf16.msra.mxu0 %v312
  %430 = vmatprep.subr.bf16.mxu0 0
  %431 = vmatpush1.bf16.msra.mxu0 %v313
  %432 = vmatprep.subr.bf16.mxu0 0
  %433 = vmatpush1.bf16.msra.mxu0 %v314
  %434 = vmatprep.subr.bf16.mxu0 0
  %435 = vmatpush1.bf16.msra.mxu0 %v315
  %436 = vmatprep.subr.bf16.mxu0 0
  %437 = vmatpush1.bf16.msra.mxu0 %v316
  %438 = vmatprep.subr.bf16.mxu0 0
  %439 = vmatpush1.bf16.msra.mxu0 %v317
  %440 = vmatprep.subr.bf16.mxu0 0
  %441 = vmatpush1.bf16.msra.mxu0 %v318
  %442 = vmatprep.subr.bf16.mxu0 0
  %443 = vmatpush1.bf16.msra.mxu0 %v319
  %444 = vmatprep.subr.bf16.mxu0 0
  %445 = vmatpush1.bf16.msra.mxu0 %v320
  %446 = vmatprep.subr.bf16.mxu0 0
  %447 = vmatpush1.bf16.msra.mxu0 %v321
  %448 = vmatprep.subr.bf16.mxu0 0
  %449 = vmatpush1.bf16.msra.mxu0 %v322
  %450 = vmatprep.subr.bf16.mxu0 0
  %451 = vmatpush1.bf16.msra.mxu0 %v323
  %452 = vmatprep.mubr.bf16.mxu0 %v133
  %453 = vmatmul.mubr.bf16.gmra.mrb[0].mxu0 %v132
  %v454 = vpop.f32.mrb[0].mxu0
  %v455 = vadd.f32 %v406, %v454
  %v456 = vpop.f32.mrb[0].mxu0
  %v457 = vpop.f32.mrb[0].mxu0
  %v458 = vadd.f32 %v409, %v457
  %v459 = vpop.f32.mrb[0].mxu0
  %460 = vmatprep.mubr.bf16.mxu0 %v138
  %461 = vmatmul.mubr.bf16.gmra.mrb[0].mxu0 %v137
  %v462 = vpop.f32.mrb[0].mxu0
  %v463 = vadd.f32 %v414, %v462
  %v464 = vpop.f32.mrb[0].mxu0
  %v465 = vpop.f32.mrb[0].mxu0
  %v466 = vadd.f32 %v417, %v465
  %v467 = vpop.f32.mrb[0].mxu0
  %468 = vdwg.mxu0
  %469 = vmatprep.subr.bf16.mxu0 0
  %470 = vmatpush1.bf16.msra.mxu0 %v324
  %471 = vmatprep.subr.bf16.mxu0 0
  %472 = vmatpush1.bf16.msra.mxu0 %v325
  %473 = vmatprep.subr.bf16.mxu0 0
  %474 = vmatpush1.bf16.msra.mxu0 %v326
  %475 = vmatprep.subr.bf16.mxu0 0
  %476 = vmatpush1.bf16.msra.mxu0 %v327
  %477 = vmatprep.subr.bf16.mxu0 0
  %478 = vmatpush1.bf16.msra.mxu0 0
  %479 = vmatprep.subr.bf16.mxu0 0
  %480 = vmatpush1.bf16.msra.mxu0 0
  %481 = vmatprep.subr.bf16.mxu0 0
  %482 = vmatpush1.bf16.msra.mxu0 0
  %483 = vmatprep.subr.bf16.mxu0 0
  %484 = vmatpush1.bf16.msra.mxu0 0
  %485 = vmatprep.subr.bf16.mxu0 0
  %486 = vmatpush1.bf16.msra.mxu0 0
  %487 = vmatprep.subr.bf16.mxu0 0
  %488 = vmatpush1.bf16.msra.mxu0 0
  %489 = vmatprep.subr.bf16.mxu0 0
  %490 = vmatpush1.bf16.msra.mxu0 0
  %491 = vmatprep.subr.bf16.mxu0 0
  %492 = vmatpush1.bf16.msra.mxu0 0
  %493 = vmatprep.subr.bf16.mxu0 0
  %494 = vmatpush1.bf16.msra.mxu0 0
  %495 = vmatprep.subr.bf16.mxu0 0
  %496 = vmatpush1.bf16.msra.mxu0 0
  %497 = vmatprep.subr.bf16.mxu0 0
  %498 = vmatpush1.bf16.msra.mxu0 0
  %499 = vmatprep.subr.bf16.mxu0 0
  %500 = vmatpush1.bf16.msra.mxu0 0
  %501 = vmatprep.mubr.bf16.mxu0 0
  %502 = vmatmul.mubr.bf16.gmra.mrb[0].mxu0 %v366
  %v503 = vpop.f32.mrb[0].mxu0
  %v504 = vadd.f32 %v455, %v503
  %v505 = vpop.f32.mrb[0].mxu0
  %v506 = vpop.f32.mrb[0].mxu0
  %v507 = vadd.f32 %v458, %v506
  %v508 = vpop.f32.mrb[0].mxu0
  %509 = vmatprep.mubr.bf16.mxu0 0
  %510 = vmatmul.mubr.bf16.gmra.mrb[0].mxu0 %v369
  %v511 = vpop.f32.mrb[0].mxu0
  %v512 = vadd.f32 %v463, %v511
  %v513 = vpop.f32.mrb[0].mxu0
  %v514 = vpop.f32.mrb[0].mxu0
  %v515 = vadd.f32 %v466, %v514
  %v516 = vpop.f32.mrb[0].mxu0
  %517 = vdwg.mxu0
  %518 = vst.msk [vmem:[%s2] sm:$0xff] %vm364, %v504
  %519 = vst.msk [vmem:[%s2 + $0x8] sm:$0xff] %vm364, %v507
  %520 = vst.msk [vmem:[%s2 + $0x10] sm:$0xff] %vm364, %v512
  %521 = vst.msk [vmem:[%s2 + $0x18] sm:$0xff] %vm364, %v515
  %v522 = vsel %vm364, %v504, 0.0
  %v523 = vsel %vm364, %v507, 0.0
  %v524 = vadd.f32 %v522, %v523
  %v525 = vsel %vm364, %v512, 0.0
  %v526 = vadd.f32 %v524, %v525
  %v527 = vsel %vm364, %v515, 0.0
  %v528 = vadd.f32 %v526, %v527
  %v529 = vrot.slane %v528, 4
  %v530 = vadd.f32 %v528, %v529
  %v531 = vrot.slane %v530, 2
  %v532 = vadd.f32 %v530, %v531
  %v533 = vrot.slane %v532, 1
  %v534 = vadd.f32 %v532, %v533
  %v535 = vmul.f32 %v504, %v504
  %v536 = vmul.f32 %v507, %v507
  %v537 = vmul.f32 %v512, %v512
  %v538 = vmul.f32 %v515, %v515
  %v539 = vsel %vm364, %v535, 0.0
  %v540 = vsel %vm364, %v536, 0.0
  %v541 = vadd.f32 %v539, %v540
  %v542 = vsel %vm364, %v537, 0.0
  %v543 = vadd.f32 %v541, %v542
  %v544 = vsel %vm364, %v538, 0.0
  %v545 = vadd.f32 %v543, %v544
  %v546 = vrot.slane %v545, 4
  %v547 = vadd.f32 %v545, %v546
  %v548 = vrot.slane %v547, 2
  %v549 = vadd.f32 %v547, %v548
  %v550 = vrot.slane %v549, 1
  %v551 = vadd.f32 %v549, %v550
  %vm552 = vcmask 1040384
  %v553 = vsel %vm552, %v534, %v551
  %vm554 = vcmask 517120
  %555 = vst.msk [vmem:[%s3] sm:$0x3] %vm554, %v553
  // Predicated region
  $region10: #{_lambda_.45} parent=0 // pred_check
    _
  $region11: #{_lambda_.45} parent=0 // pred_check_branch
    %557 = sbr.rel (0) target = $region13
  $region12: #{_lambda_.45} parent=0 // pred_region
    _
  $region13: #{_lambda_.45} parent=0 // pred_fallthru
    _
  // Predicated region
  $region14: #{_lambda_.45} parent=0 // pred_check
    _
  $region15: #{_lambda_.45} parent=0 // pred_check_branch
    %559 = sbr.rel (0) target = $region17
  $region16: #{_lambda_.45} parent=0 // pred_region
    _
  $region17: #{_lambda_.45} parent=0 // pred_fallthru
    _
  // Predicated region
  $region18: #{_lambda_.45} parent=0 // pred_check
    _
  $region19: #{_lambda_.45} parent=0 // pred_check_branch
    %561 = sbr.rel (0) target = $region21
  $region20: #{_lambda_.45} parent=0 // pred_region
    _
  $region21: #{_lambda_.45} parent=0 // pred_fallthru
    _
  // Predicated region
  $region22: #{_lambda_.45} parent=0 // pred_check
    _
  $region23: #{_lambda_.45} parent=0 // pred_check_branch
    %563 = sbr.rel (0) target = $region25
  $region24: #{_lambda_.45} parent=0 // pred_region
    _
  $region25: #{_lambda_.45} parent=0 // pred_fallthru
    _

// kernel: _lambda_.43
$region0: #{_lambda_.43}
  #allocation0 [shape = 'u32[]', space=smem, size = 0x4, offset = 0x4, fixed_abs, tag = 'smem constant byte address 0x4 - core index']
  #allocation1 [shape = 'u32[144,128]{1,0:T(1,128)}', space=vmem, size = 0x12000, scoped, tag = 'internal scratch']
  %s0 = inlined_call_operand.vmem [shape: bf16[32,1728], index: 0, kind: input, shape index: {}]
  %s1 = inlined_call_operand.vmem [shape: bf16[1728,64], index: 1, kind: input, shape index: {}]
  %s2 = inlined_call_operand.vmem [shape: f32[32,64], index: 2, kind: output, shape index: {0}]
  %s3 = inlined_call_operand.vmem [shape: f32[1,2,64], index: 3, kind: output, shape index: {1}]
  %4 = xla_tuple %s2, %s3
  %s5 = sld [smem:[#allocation0]]
  $region26: #{_lambda_.43} parent=0
    _
  %s7 = ssub.s32 1, %s5
  %s8 = scalar_select 0, %s7, %s5
  // Predicated region
  $region2: #{_lambda_.43} parent=0 // pred_check
    _
  $region3: #{_lambda_.43} parent=0 // pred_check_branch
    %10 = sbr.rel (0) target = $region5
  $region4: #{_lambda_.43} parent=0 // pred_region
    _
  $region5: #{_lambda_.43} parent=0 // pred_fallthru
    _
  // Predicated region
  $region6: #{_lambda_.43} parent=0 // pred_check
    _
  $region7: #{_lambda_.43} parent=0 // pred_check_branch
    %12 = sbr.rel (0) target = $region9
  $region8: #{_lambda_.43} parent=0 // pred_region
    _
  $region9: #{_lambda_.43} parent=0 // pred_fallthru
    _
  %v14 = vld [vmem:[%s0] sm:$0xff]
  %v15 = vld [vmem:[%s0 + $0x8] sm:$0xff]
  %v16 = vld [vmem:[%s0 + $0x10] sm:$0xff]
  %v17 = vld [vmem:[%s0 + $0x18] sm:$0xff]
  %v18 = vld [vmem:[%s0 + $0x20] sm:$0xff]
  %v19 = vld [vmem:[%s0 + $0x28] sm:$0xff]
  %v20 = vld [vmem:[%s0 + $0x30] sm:$0xff]
  %v21 = vld [vmem:[%s0 + $0x38] sm:$0xff]
  %v22 = vld [vmem:[%s0 + $0x40] sm:$0xff]
  %v23 = vld [vmem:[%s0 + $0x48] sm:$0xff]
  %v24 = vld [vmem:[%s0 + $0x50] sm:$0xff]
  %v25 = vld [vmem:[%s0 + $0x58] sm:$0xff]
  %v26 = vld [vmem:[%s0 + $0x60] sm:$0xff]
  %v27 = vld [vmem:[%s0 + $0x68] sm:$0xff]
  %v28 = vld [vmem:[%s0 + $0x70] sm:$0xff]
  %v29 = vld [vmem:[%s0 + $0x78] sm:$0xff]
  %v30 = vld [vmem:[%s0 + $0x80] sm:$0xff]
  %v31 = vld [vmem:[%s0 + $0x88] sm:$0xff]
  %v32 = vld [vmem:[%s0 + $0x90] sm:$0xff]
  %v33 = vld [vmem:[%s0 + $0x98] sm:$0xff]
  %v34 = vld [vmem:[%s0 + $0xa0] sm:$0xff]
  %v35 = vld [vmem:[%s0 + $0xa8] sm:$0xff]
  %v36 = vld [vmem:[%s0 + $0xb0] sm:$0xff]
  %v37 = vld [vmem:[%s0 + $0xb8] sm:$0xff]
  %v38 = vld [vmem:[%s0 + $0xc0] sm:$0xff]
  %v39 = vld [vmem:[%s0 + $0xc8] sm:$0xff]
  %v40 = vld [vmem:[%s0 + $0xd0] sm:$0xff]
  %v41 = vld [vmem:[%s0 + $0xd8] sm:$0xff]
  %v42 = vld [vmem:[%s1] sm:$0xf]
  %v43 = vld [vmem:[%s1 + $0x4] sm:$0xf]
  %v44 = vld [vmem:[%s1 + $0x8] sm:$0xf]
  %v45 = vld [vmem:[%s1 + $0xc] sm:$0xf]
  %v46 = vld [vmem:[%s1 + $0x10] sm:$0xf]
  %v47 = vld [vmem:[%s1 + $0x14] sm:$0xf]
  %v48 = vld [vmem:[%s1 + $0x18] sm:$0xf]
  %v49 = vld [vmem:[%s1 + $0x1c] sm:$0xf]
  %v50 = vld [vmem:[%s1 + $0x20] sm:$0xf]
  %v51 = vld [vmem:[%s1 + $0x24] sm:$0xf]
  %v52 = vld [vmem:[%s1 + $0x28] sm:$0xf]
  %v53 = vld [vmem:[%s1 + $0x2c] sm:$0xf]
  %v54 = vld [vmem:[%s1 + $0x30] sm:$0xf]
  %v55 = vld [vmem:[%s1 + $0x34] sm:$0xf]
  %v56 = vld [vmem:[%s1 + $0x38] sm:$0xf]
  %v57 = vld [vmem:[%s1 + $0x3c] sm:$0xf]
  %v58 = vld [vmem:[%s1 + $0x40] sm:$0xf]
  %v59 = vld [vmem:[%s1 + $0x44] sm:$0xf]
  %v60 = vld [vmem:[%s1 + $0x48] sm:$0xf]
  %v61 = vld [vmem:[%s1 + $0x4c] sm:$0xf]
  %v62 = vld [vmem:[%s1 + $0x50] sm:$0xf]
  %v63 = vld [vmem:[%s1 + $0x54] sm:$0xf]
  %v64 = vld [vmem:[%s1 + $0x58] sm:$0xf]
  %v65 = vld [vmem:[%s1 + $0x5c] sm:$0xf]
  %v66 = vld [vmem:[%s1 + $0x60] sm:$0xf]
  %v67 = vld [vmem:[%s1 + $0x64] sm:$0xf]
  %v68 = vld [vmem:[%s1 + $0x68] sm:$0xf]
  %v69 = vld [vmem:[%s1 + $0x6c] sm:$0xf]
  %v70 = vld [vmem:[%s1 + $0x70] sm:$0xf]
  %v71 = vld [vmem:[%s1 + $0x74] sm:$0xf]
  %v72 = vld [vmem:[%s1 + $0x78] sm:$0xf]
  %v73 = vld [vmem:[%s1 + $0x7c] sm:$0xf]
  %v74 = vld [vmem:[%s1 + $0x80] sm:$0xf]
  %v75 = vld [vmem:[%s1 + $0x84] sm:$0xf]
  %v76 = vld [vmem:[%s1 + $0x88] sm:$0xf]
  %v77 = vld [vmem:[%s1 + $0x8c] sm:$0xf]
  %v78 = vld [vmem:[%s1 + $0x90] sm:$0xf]
  %v79 = vld [vmem:[%s1 + $0x94] sm:$0xf]
  %v80 = vld [vmem:[%s1 + $0x98] sm:$0xf]
  %v81 = vld [vmem:[%s1 + $0x9c] sm:$0xf]
  %v82 = vld [vmem:[%s1 + $0xa0] sm:$0xf]
  %v83 = vld [vmem:[%s1 + $0xa4] sm:$0xf]
  %v84 = vld [vmem:[%s1 + $0xa8] sm:$0xf]
  %v85 = vld [vmem:[%s1 + $0xac] sm:$0xf]
  %v86 = vld [vmem:[%s1 + $0xb0] sm:$0xf]
  %v87 = vld [vmem:[%s1 + $0xb4] sm:$0xf]
  %v88 = vld [vmem:[%s1 + $0xb8] sm:$0xf]
  %v89 = vld [vmem:[%s1 + $0xbc] sm:$0xf]
  %v90 = vld [vmem:[%s1 + $0xc0] sm:$0xf]
  %v91 = vld [vmem:[%s1 + $0xc4] sm:$0xf]
  %v92 = vld [vmem:[%s1 + $0xc8] sm:$0xf]
  %v93 = vld [vmem:[%s1 + $0xcc] sm:$0xf]
  %v94 = vld [vmem:[%s1 + $0xd0] sm:$0xf]
  %v95 = vld [vmem:[%s1 + $0xd4] sm:$0xf]
  %v96 = vld [vmem:[%s1 + $0xd8] sm:$0xf]
  %v97 = vld [vmem:[%s1 + $0xdc] sm:$0xf]
  %v98 = vld [vmem:[%s1 + $0xe0] sm:$0xf]
  %v99 = vld [vmem:[%s1 + $0xe4] sm:$0xf]
  %v100 = vld [vmem:[%s1 + $0xe8] sm:$0xf]
  %v101 = vld [vmem:[%s1 + $0xec] sm:$0xf]
  %v102 = vld [vmem:[%s1 + $0xf0] sm:$0xf]
  %v103 = vld [vmem:[%s1 + $0xf4] sm:$0xf]
  %v104 = vld [vmem:[%s1 + $0xf8] sm:$0xf]
  %v105 = vld [vmem:[%s1 + $0xfc] sm:$0xf]
  %v106 = vld [vmem:[%s1 + $0x100] sm:$0xf]
  %v107 = vld [vmem:[%s1 + $0x104] sm:$0xf]
  %v108 = vld [vmem:[%s1 + $0x108] sm:$0xf]
  %v109 = vld [vmem:[%s1 + $0x10c] sm:$0xf]
  %v110 = vld [vmem:[%s1 + $0x110] sm:$0xf]
  %v111 = vld [vmem:[%s1 + $0x114] sm:$0xf]
  %v112 = vld [vmem:[%s1 + $0x118] sm:$0xf]
  %v113 = vld [vmem:[%s1 + $0x11c] sm:$0xf]
  %v114 = vld [vmem:[%s1 + $0x120] sm:$0xf]
  %v115 = vld [vmem:[%s1 + $0x124] sm:$0xf]
  %v116 = vld [vmem:[%s1 + $0x128] sm:$0xf]
  %v117 = vld [vmem:[%s1 + $0x12c] sm:$0xf]
  %v118 = vld [vmem:[%s1 + $0x130] sm:$0xf]
  %v119 = vld [vmem:[%s1 + $0x134] sm:$0xf]
  %v120 = vld [vmem:[%s1 + $0x138] sm:$0xf]
  %v121 = vld [vmem:[%s1 + $0x13c] sm:$0xf]
  %v122 = vld [vmem:[%s1 + $0x140] sm:$0xf]
  %v123 = vld [vmem:[%s1 + $0x144] sm:$0xf]
  %v124 = vld [vmem:[%s1 + $0x148] sm:$0xf]
  %v125 = vld [vmem:[%s1 + $0x14c] sm:$0xf]
  %v126 = vld [vmem:[%s1 + $0x150] sm:$0xf]
  %v127 = vld [vmem:[%s1 + $0x154] sm:$0xf]
  %v128 = vld [vmem:[%s1 + $0x158] sm:$0xf]
  %v129 = vld [vmem:[%s1 + $0x15c] sm:$0xf]
  %v130 = vld [vmem:[%s1 + $0x160] sm:$0xf]
  %v131 = vld [vmem:[%s1 + $0x164] sm:$0xf]
  %v132 = vld [vmem:[%s1 + $0x168] sm:$0xf]
  %v133 = vld [vmem:[%s1 + $0x16c] sm:$0xf]
  %v134 = vld [vmem:[%s1 + $0x170] sm:$0xf]
  %v135 = vld [vmem:[%s1 + $0x174] sm:$0xf]
  %v136 = vld [vmem:[%s1 + $0x178] sm:$0xf]
  %v137 = vld [vmem:[%s1 + $0x17c] sm:$0xf]
  %v138 = vld [vmem:[%s1 + $0x180] sm:$0xf]
  %v139 = vld [vmem:[%s1 + $0x184] sm:$0xf]
  %v140 = vld [vmem:[%s1 + $0x188] sm:$0xf]
  %v141 = vld [vmem:[%s1 + $0x18c] sm:$0xf]
  %v142 = vld [vmem:[%s1 + $0x190] sm:$0xf]
  %v143 = vld [vmem:[%s1 + $0x194] sm:$0xf]
  %v144 = vld [vmem:[%s1 + $0x198] sm:$0xf]
  %v145 = vld [vmem:[%s1 + $0x19c] sm:$0xf]
  %v146 = vld [vmem:[%s1 + $0x1a0] sm:$0xf]
  %v147 = vld [vmem:[%s1 + $0x1a4] sm:$0xf]
  %v148 = vld [vmem:[%s1 + $0x1a8] sm:$0xf]
  %v149 = vld [vmem:[%s1 + $0x1ac] sm:$0xf]
  %v150 = vld [vmem:[%s1 + $0x1b0] sm:$0xf]
  %v151 = vld [vmem:[%s1 + $0x1b4] sm:$0xf]
  %v152 = vld [vmem:[%s1 + $0x1b8] sm:$0xf]
  %v153 = vld [vmem:[%s1 + $0x1bc] sm:$0xf]
  %v154 = vld [vmem:[%s1 + $0x1c0] sm:$0xf]
  %v155 = vld [vmem:[%s1 + $0x1c4] sm:$0xf]
  %v156 = vld [vmem:[%s1 + $0x1c8] sm:$0xf]
  %v157 = vld [vmem:[%s1 + $0x1cc] sm:$0xf]
  %v158 = vld [vmem:[%s1 + $0x1d0] sm:$0xf]
  %v159 = vld [vmem:[%s1 + $0x1d4] sm:$0xf]
  %v160 = vld [vmem:[%s1 + $0x1d8] sm:$0xf]
  %v161 = vld [vmem:[%s1 + $0x1dc] sm:$0xf]
  %v162 = vld [vmem:[%s1 + $0x1e0] sm:$0xf]
  %v163 = vld [vmem:[%s1 + $0x1e4] sm:$0xf]
  %v164 = vld [vmem:[%s1 + $0x1e8] sm:$0xf]
  %v165 = vld [vmem:[%s1 + $0x1ec] sm:$0xf]
  %v166 = vld [vmem:[%s1 + $0x1f0] sm:$0xf]
  %v167 = vld [vmem:[%s1 + $0x1f4] sm:$0xf]
  %v168 = vld [vmem:[%s1 + $0x1f8] sm:$0xf]
  %v169 = vld [vmem:[%s1 + $0x1fc] sm:$0xf]
  %v170 = vld [vmem:[%s1 + $0x200] sm:$0xf]
  %v171 = vld [vmem:[%s1 + $0x204] sm:$0xf]
  %v172 = vld [vmem:[%s1 + $0x208] sm:$0xf]
  %v173 = vld [vmem:[%s1 + $0x20c] sm:$0xf]
  %v174 = vld [vmem:[%s1 + $0x210] sm:$0xf]
  %v175 = vld [vmem:[%s1 + $0x214] sm:$0xf]
  %v176 = vld [vmem:[%s1 + $0x218] sm:$0xf]
  %v177 = vld [vmem:[%s1 + $0x21c] sm:$0xf]
  %v178 = vld [vmem:[%s1 + $0x220] sm:$0xf]
  %v179 = vld [vmem:[%s1 + $0x224] sm:$0xf]
  %v180 = vld [vmem:[%s1 + $0x228] sm:$0xf]
  %v181 = vld [vmem:[%s1 + $0x22c] sm:$0xf]
  %v182 = vld [vmem:[%s1 + $0x230] sm:$0xf]
  %v183 = vld [vmem:[%s1 + $0x234] sm:$0xf]
  %v184 = vld [vmem:[%s1 + $0x238] sm:$0xf]
  %v185 = vld [vmem:[%s1 + $0x23c] sm:$0xf]
  %v186 = vld [vmem:[%s1 + $0x240] sm:$0xf]
  %v187 = vld [vmem:[%s1 + $0x244] sm:$0xf]
  %v188 = vld [vmem:[%s1 + $0x248] sm:$0xf]
  %v189 = vld [vmem:[%s1 + $0x24c] sm:$0xf]
  %v190 = vld [vmem:[%s1 + $0x250] sm:$0xf]
  %v191 = vld [vmem:[%s1 + $0x254] sm:$0xf]
  %v192 = vld [vmem:[%s1 + $0x258] sm:$0xf]
  %v193 = vld [vmem:[%s1 + $0x25c] sm:$0xf]
  %v194 = vld [vmem:[%s1 + $0x260] sm:$0xf]
  %v195 = vld [vmem:[%s1 + $0x264] sm:$0xf]
  %v196 = vld [vmem:[%s1 + $0x268] sm:$0xf]
  %v197 = vld [vmem:[%s1 + $0x26c] sm:$0xf]
  %v198 = vld [vmem:[%s1 + $0x270] sm:$0xf]
  %v199 = vld [vmem:[%s1 + $0x274] sm:$0xf]
  %v200 = vld [vmem:[%s1 + $0x278] sm:$0xf]
  %v201 = vld [vmem:[%s1 + $0x27c] sm:$0xf]
  %v202 = vld [vmem:[%s1 + $0x280] sm:$0xf]
  %v203 = vld [vmem:[%s1 + $0x284] sm:$0xf]
  %v204 = vld [vmem:[%s1 + $0x288] sm:$0xf]
  %v205 = vld [vmem:[%s1 + $0x28c] sm:$0xf]
  %v206 = vld [vmem:[%s1 + $0x290] sm:$0xf]
  %v207 = vld [vmem:[%s1 + $0x294] sm:$0xf]
  %v208 = vld [vmem:[%s1 + $0x298] sm:$0xf]
  %v209 = vld [vmem:[%s1 + $0x29c] sm:$0xf]
  %v210 = vld [vmem:[%s1 + $0x2a0] sm:$0xf]
  %v211 = vld [vmem:[%s1 + $0x2a4] sm:$0xf]
  %v212 = vld [vmem:[%s1 + $0x2a8] sm:$0xf]
  %v213 = vld [vmem:[%s1 + $0x2ac] sm:$0xf]
  %v214 = vld [vmem:[%s1 + $0x2b0] sm:$0xf]
  %v215 = vld [vmem:[%s1 + $0x2b4] sm:$0xf]
  %v216 = vld [vmem:[%s1 + $0x2b8] sm:$0xf]
  %v217 = vld [vmem:[%s1 + $0x2bc] sm:$0xf]
  %v218 = vld [vmem:[%s1 + $0x2c0] sm:$0xf]
  %v219 = vld [vmem:[%s1 + $0x2c4] sm:$0xf]
  %v220 = vld [vmem:[%s1 + $0x2c8] sm:$0xf]
  %v221 = vld [vmem:[%s1 + $0x2cc] sm:$0xf]
  %v222 = vld [vmem:[%s1 + $0x2d0] sm:$0xf]
  %v223 = vld [vmem:[%s1 + $0x2d4] sm:$0xf]
  %v224 = vld [vmem:[%s1 + $0x2d8] sm:$0xf]
  %v225 = vld [vmem:[%s1 + $0x2dc] sm:$0xf]
  %v226 = vld [vmem:[%s1 + $0x2e0] sm:$0xf]
  %v227 = vld [vmem:[%s1 + $0x2e4] sm:$0xf]
  %v228 = vld [vmem:[%s1 + $0x2e8] sm:$0xf]
  %v229 = vld [vmem:[%s1 + $0x2ec] sm:$0xf]
  %v230 = vld [vmem:[%s1 + $0x2f0] sm:$0xf]
  %v231 = vld [vmem:[%s1 + $0x2f4] sm:$0xf]
  %v232 = vld [vmem:[%s1 + $0x2f8] sm:$0xf]
  %v233 = vld [vmem:[%s1 + $0x2fc] sm:$0xf]
  %v234 = vld [vmem:[%s1 + $0x300] sm:$0xf]
  %v235 = vld [vmem:[%s1 + $0x304] sm:$0xf]
  %v236 = vld [vmem:[%s1 + $0x308] sm:$0xf]
  %v237 = vld [vmem:[%s1 + $0x30c] sm:$0xf]
  %v238 = vld [vmem:[%s1 + $0x310] sm:$0xf]
  %v239 = vld [vmem:[%s1 + $0x314] sm:$0xf]
  %v240 = vld [vmem:[%s1 + $0x318] sm:$0xf]
  %v241 = vld [vmem:[%s1 + $0x31c] sm:$0xf]
  %v242 = vld [vmem:[%s1 + $0x320] sm:$0xf]
  %v243 = vld [vmem:[%s1 + $0x324] sm:$0xf]
  %v244 = vld [vmem:[%s1 + $0x328] sm:$0xf]
  %v245 = vld [vmem:[%s1 + $0x32c] sm:$0xf]
  %v246 = vld [vmem:[%s1 + $0x330] sm:$0xf]
  %v247 = vld [vmem:[%s1 + $0x334] sm:$0xf]
  %v248 = vld [vmem:[%s1 + $0x338] sm:$0xf]
  %v249 = vld [vmem:[%s1 + $0x33c] sm:$0xf]
  %v250 = vld [vmem:[%s1 + $0x340] sm:$0xf]
  %v251 = vld [vmem:[%s1 + $0x344] sm:$0xf]
  %v252 = vld [vmem:[%s1 + $0x348] sm:$0xf]
  %v253 = vld [vmem:[%s1 + $0x34c] sm:$0xf]
  %v254 = vld [vmem:[%s1 + $0x350] sm:$0xf]
  %v255 = vld [vmem:[%s1 + $0x354] sm:$0xf]
  %v256 = vld [vmem:[%s1 + $0x358] sm:$0xf]
  %v257 = vld [vmem:[%s1 + $0x35c] sm:$0xf]
  %v286 = vunpack.c.l.b16 %v14
  %v287 = vunpack.c.h.b16 %v14
  %v288 = vunpack.c.l.b16 %v15
  %v289 = vunpack.c.h.b16 %v15
  %v290 = vunpack.c.l.b16 %v16
  %v291 = vunpack.c.h.b16 %v16
  %v292 = vunpack.c.l.b16 %v17
  %v293 = vunpack.c.h.b16 %v17
  %v294 = vunpack.c.l.b16 %v18
  %v295 = vunpack.c.h.b16 %v18
  %v296 = vunpack.c.l.b16 %v19
  %v297 = vunpack.c.h.b16 %v19
  %v298 = vunpack.c.l.b16 %v20
  %v299 = vunpack.c.h.b16 %v20
  %v300 = vunpack.c.l.b16 %v21
  %v301 = vunpack.c.h.b16 %v21
  %v302 = vunpack.c.l.b16 %v22
  %v303 = vunpack.c.h.b16 %v22
  %v304 = vunpack.c.l.b16 %v23
  %v305 = vunpack.c.h.b16 %v23
  %v306 = vunpack.c.l.b16 %v24
  %v307 = vunpack.c.h.b16 %v24
  %v308 = vunpack.c.l.b16 %v25
  %v309 = vunpack.c.h.b16 %v25
  %v310 = vunpack.c.l.b16 %v26
  %v311 = vunpack.c.h.b16 %v26
  %v312 = vunpack.c.l.b16 %v27
  %v313 = vunpack.c.h.b16 %v27
  %v314 = vunpack.c.l.b16 %v28
  %v315 = vunpack.c.h.b16 %v28
  %v316 = vunpack.c.l.b16 %v29
  %v317 = vunpack.c.h.b16 %v29
  %v318 = vunpack.c.l.b16 %v30
  %v319 = vunpack.c.h.b16 %v30
  %v320 = vunpack.c.l.b16 %v31
  %v321 = vunpack.c.h.b16 %v31
  %v322 = vunpack.c.l.b16 %v32
  %v323 = vunpack.c.h.b16 %v32
  %v324 = vunpack.c.l.b16 %v33
  %v325 = vunpack.c.h.b16 %v33
  %v326 = vunpack.c.l.b16 %v34
  %v327 = vunpack.c.h.b16 %v34
  %v328 = vunpack.c.l.b16 %v35
  %v329 = vunpack.c.h.b16 %v35
  %v330 = vunpack.c.l.b16 %v36
  %v331 = vunpack.c.h.b16 %v36
  %v332 = vunpack.c.l.b16 %v37
  %v333 = vunpack.c.h.b16 %v37
  %v334 = vunpack.c.l.b16 %v38
  %v335 = vunpack.c.h.b16 %v38
  %v336 = vunpack.c.l.b16 %v39
  %v337 = vunpack.c.h.b16 %v39
  %v338 = vunpack.c.l.b16 %v40
  %v339 = vunpack.c.h.b16 %v40
  %v340 = vunpack.c.l.b16 %v41
  %v341 = vunpack.c.h.b16 %v41
  %v342 = vpack.c.b16 %v300, %v286
  %v343 = vpack.c.b16 %v301, %v287
  %v344 = vpack.c.b16 %v302, %v288
  %v345 = vpack.c.b16 %v303, %v289
  %v346 = vpack.c.b16 %v304, %v290
  %v347 = vpack.c.b16 %v305, %v291
  %v348 = vpack.c.b16 %v306, %v292
  %v349 = vpack.c.b16 %v307, %v293
  %v350 = vpack.c.b16 %v308, %v294
  %v351 = vpack.c.b16 %v309, %v295
  %v352 = vpack.c.b16 %v310, %v296
  %v353 = vpack.c.b16 %v311, %v297
  %v354 = vpack.c.b16 %v312, %v298
  %v355 = vpack.c.b16 %v313, %v299
  %v356 = vpack.c.b16 %v328, %v314
  %v357 = vpack.c.b16 %v329, %v315
  %v358 = vpack.c.b16 %v330, %v316
  %v359 = vpack.c.b16 %v331, %v317
  %v360 = vpack.c.b16 %v332, %v318
  %v361 = vpack.c.b16 %v333, %v319
  %v362 = vpack.c.b16 %v334, %v320
  %v363 = vpack.c.b16 %v335, %v321
  %v364 = vpack.c.b16 %v336, %v322
  %v365 = vpack.c.b16 %v337, %v323
  %v366 = vpack.c.b16 %v338, %v324
  %v367 = vpack.c.b16 %v339, %v325
  %v368 = vpack.c.b16 %v340, %v326
  %v369 = vpack.c.b16 %v341, %v327
  %v612 = vunpack.c.l.b16 %v42
  %v613 = vunpack.c.l.b16 %v43
  %v614 = vunpack.c.l.b16 %v44
  %v615 = vunpack.c.l.b16 %v45
  %v616 = vunpack.c.l.b16 %v46
  %v617 = vunpack.c.l.b16 %v47
  %v618 = vunpack.c.l.b16 %v48
  %v619 = vunpack.c.l.b16 %v49
  %v620 = vunpack.c.l.b16 %v50
  %v621 = vunpack.c.l.b16 %v51
  %v622 = vunpack.c.l.b16 %v52
  %v623 = vunpack.c.l.b16 %v53
  %v624 = vunpack.c.l.b16 %v54
  %v625 = vunpack.c.l.b16 %v55
  %v626 = vunpack.c.l.b16 %v56
  %v627 = vunpack.c.l.b16 %v57
  %v628 = vunpack.c.l.b16 %v58
  %v629 = vunpack.c.l.b16 %v59
  %v630 = vunpack.c.l.b16 %v60
  %v631 = vunpack.c.l.b16 %v61
  %v632 = vunpack.c.l.b16 %v62
  %v633 = vunpack.c.l.b16 %v63
  %v634 = vunpack.c.l.b16 %v64
  %v635 = vunpack.c.l.b16 %v65
  %v636 = vunpack.c.l.b16 %v66
  %v637 = vunpack.c.l.b16 %v67
  %v638 = vunpack.c.l.b16 %v68
  %v639 = vunpack.c.l.b16 %v69
  %v640 = vunpack.c.l.b16 %v70
  %v641 = vunpack.c.l.b16 %v71
  %v642 = vunpack.c.l.b16 %v72
  %v643 = vunpack.c.l.b16 %v73
  %v644 = vunpack.c.l.b16 %v74
  %v645 = vunpack.c.l.b16 %v75
  %v646 = vunpack.c.l.b16 %v76
  %v647 = vunpack.c.l.b16 %v77
  %v648 = vunpack.c.l.b16 %v78
  %v649 = vunpack.c.l.b16 %v79
  %v650 = vunpack.c.l.b16 %v80
  %v651 = vunpack.c.l.b16 %v81
  %v652 = vunpack.c.l.b16 %v82
  %v653 = vunpack.c.l.b16 %v83
  %v654 = vunpack.c.l.b16 %v84
  %v655 = vunpack.c.l.b16 %v85
  %v656 = vunpack.c.l.b16 %v86
  %v657 = vunpack.c.l.b16 %v87
  %v658 = vunpack.c.l.b16 %v88
  %v659 = vunpack.c.l.b16 %v89
  %v660 = vunpack.c.l.b16 %v90
  %v661 = vunpack.c.l.b16 %v91
  %v662 = vunpack.c.l.b16 %v92
  %v663 = vunpack.c.l.b16 %v93
  %v664 = vunpack.c.l.b16 %v94
  %v665 = vunpack.c.l.b16 %v95
  %v666 = vunpack.c.l.b16 %v96
  %v667 = vunpack.c.l.b16 %v97
  %v668 = vunpack.c.l.b16 %v98
  %v669 = vunpack.c.l.b16 %v99
  %v670 = vunpack.c.l.b16 %v100
  %v671 = vunpack.c.l.b16 %v101
  %v672 = vunpack.c.l.b16 %v102
  %v673 = vunpack.c.l.b16 %v103
  %v674 = vunpack.c.l.b16 %v104
  %v675 = vunpack.c.l.b16 %v105
  %v676 = vunpack.c.l.b16 %v106
  %v677 = vunpack.c.l.b16 %v107
  %v678 = vunpack.c.l.b16 %v108
  %v679 = vunpack.c.l.b16 %v109
  %v680 = vunpack.c.l.b16 %v110
  %v681 = vunpack.c.l.b16 %v111
  %v682 = vunpack.c.l.b16 %v112
  %v683 = vunpack.c.l.b16 %v113
  %v684 = vunpack.c.l.b16 %v114
  %v685 = vunpack.c.l.b16 %v115
  %v686 = vunpack.c.l.b16 %v116
  %v687 = vunpack.c.l.b16 %v117
  %v688 = vunpack.c.l.b16 %v118
  %v689 = vunpack.c.l.b16 %v119
  %v690 = vunpack.c.l.b16 %v120
  %v691 = vunpack.c.l.b16 %v121
  %v692 = vunpack.c.l.b16 %v122
  %v693 = vunpack.c.l.b16 %v123
  %v694 = vunpack.c.l.b16 %v124
  %v695 = vunpack.c.l.b16 %v125
  %v696 = vunpack.c.l.b16 %v126
  %v697 = vunpack.c.l.b16 %v127
  %v698 = vunpack.c.l.b16 %v128
  %v699 = vunpack.c.l.b16 %v129
  %v700 = vunpack.c.l.b16 %v130
  %v701 = vunpack.c.l.b16 %v131
  %v702 = vunpack.c.l.b16 %v132
  %v703 = vunpack.c.l.b16 %v133
  %v704 = vunpack.c.l.b16 %v134
  %v705 = vunpack.c.l.b16 %v135
  %v706 = vunpack.c.l.b16 %v136
  %v707 = vunpack.c.l.b16 %v137
  %v708 = vunpack.c.l.b16 %v138
  %v709 = vunpack.c.l.b16 %v139
  %v710 = vunpack.c.l.b16 %v140
  %v711 = vunpack.c.l.b16 %v141
  %v712 = vunpack.c.l.b16 %v142
  %v713 = vunpack.c.l.b16 %v143
  %v714 = vunpack.c.l.b16 %v144
  %v715 = vunpack.c.l.b16 %v145
  %v716 = vunpack.c.l.b16 %v146
  %v717 = vunpack.c.l.b16 %v147
  %v718 = vunpack.c.l.b16 %v148
  %v719 = vunpack.c.l.b16 %v149
  %v720 = vunpack.c.l.b16 %v150
  %v721 = vunpack.c.l.b16 %v151
  %v722 = vunpack.c.l.b16 %v152
  %v723 = vunpack.c.l.b16 %v153
  %v724 = vunpack.c.l.b16 %v154
  %v725 = vunpack.c.l.b16 %v155
  %v726 = vunpack.c.l.b16 %v156
  %v727 = vunpack.c.l.b16 %v157
  %v728 = vunpack.c.l.b16 %v158
  %v729 = vunpack.c.l.b16 %v159
  %v730 = vunpack.c.l.b16 %v160
  %v731 = vunpack.c.l.b16 %v161
  %v732 = vunpack.c.l.b16 %v162
  %v733 = vunpack.c.l.b16 %v163
  %v734 = vunpack.c.l.b16 %v164
  %v735 = vunpack.c.l.b16 %v165
  %v736 = vunpack.c.l.b16 %v166
  %v737 = vunpack.c.l.b16 %v167
  %v738 = vunpack.c.l.b16 %v168
  %v739 = vunpack.c.l.b16 %v169
  %v740 = vunpack.c.l.b16 %v170
  %v741 = vunpack.c.l.b16 %v171
  %v742 = vunpack.c.l.b16 %v172
  %v743 = vunpack.c.l.b16 %v173
  %v744 = vunpack.c.l.b16 %v174
  %v745 = vunpack.c.l.b16 %v175
  %v746 = vunpack.c.l.b16 %v176
  %v747 = vunpack.c.l.b16 %v177
  %v748 = vunpack.c.l.b16 %v178
  %v749 = vunpack.c.l.b16 %v179
  %v750 = vunpack.c.l.b16 %v180
  %v751 = vunpack.c.l.b16 %v181
  %v752 = vunpack.c.l.b16 %v182
  %v753 = vunpack.c.l.b16 %v183
  %v754 = vunpack.c.l.b16 %v184
  %v755 = vunpack.c.l.b16 %v185
  %v756 = vunpack.c.l.b16 %v186
  %v757 = vunpack.c.l.b16 %v187
  %v758 = vunpack.c.l.b16 %v188
  %v759 = vunpack.c.l.b16 %v189
  %v760 = vunpack.c.l.b16 %v190
  %v761 = vunpack.c.l.b16 %v191
  %v762 = vunpack.c.l.b16 %v192
  %v763 = vunpack.c.l.b16 %v193
  %v764 = vunpack.c.l.b16 %v194
  %v765 = vunpack.c.l.b16 %v195
  %v766 = vunpack.c.l.b16 %v196
  %v767 = vunpack.c.l.b16 %v197
  %v768 = vunpack.c.l.b16 %v198
  %v769 = vunpack.c.l.b16 %v199
  %v770 = vunpack.c.l.b16 %v200
  %v771 = vunpack.c.l.b16 %v201
  %v772 = vunpack.c.l.b16 %v202
  %v773 = vunpack.c.l.b16 %v203
  %v774 = vunpack.c.l.b16 %v204
  %v775 = vunpack.c.l.b16 %v205
  %v776 = vunpack.c.l.b16 %v206
  %v777 = vunpack.c.l.b16 %v207
  %v778 = vunpack.c.l.b16 %v208
  %v779 = vunpack.c.l.b16 %v209
  %v780 = vunpack.c.l.b16 %v210
  %v781 = vunpack.c.l.b16 %v211
  %v782 = vunpack.c.l.b16 %v212
  %v783 = vunpack.c.l.b16 %v213
  %v784 = vunpack.c.l.b16 %v214
  %v785 = vunpack.c.l.b16 %v215
  %v786 = vunpack.c.l.b16 %v216
  %v787 = vunpack.c.l.b16 %v217
  %v788 = vunpack.c.l.b16 %v218
  %v789 = vunpack.c.l.b16 %v219
  %v790 = vunpack.c.l.b16 %v220
  %v791 = vunpack.c.l.b16 %v221
  %v792 = vunpack.c.l.b16 %v222
  %v793 = vunpack.c.l.b16 %v223
  %v794 = vunpack.c.l.b16 %v224
  %v795 = vunpack.c.l.b16 %v225
  %v796 = vunpack.c.l.b16 %v226
  %v797 = vunpack.c.l.b16 %v227
  %v798 = vunpack.c.l.b16 %v228
  %v799 = vunpack.c.l.b16 %v229
  %v800 = vunpack.c.l.b16 %v230
  %v801 = vunpack.c.l.b16 %v231
  %v802 = vunpack.c.l.b16 %v232
  %v803 = vunpack.c.l.b16 %v233
  %v804 = vunpack.c.l.b16 %v234
  %v805 = vunpack.c.l.b16 %v235
  %v806 = vunpack.c.l.b16 %v236
  %v807 = vunpack.c.l.b16 %v237
  %v808 = vunpack.c.l.b16 %v238
  %v809 = vunpack.c.l.b16 %v239
  %v810 = vunpack.c.l.b16 %v240
  %v811 = vunpack.c.l.b16 %v241
  %v812 = vunpack.c.l.b16 %v242
  %v813 = vunpack.c.l.b16 %v243
  %v814 = vunpack.c.l.b16 %v244
  %v815 = vunpack.c.l.b16 %v245
  %v816 = vunpack.c.l.b16 %v246
  %v817 = vunpack.c.l.b16 %v247
  %v818 = vunpack.c.l.b16 %v248
  %v819 = vunpack.c.l.b16 %v249
  %v820 = vunpack.c.l.b16 %v250
  %v821 = vunpack.c.l.b16 %v251
  %v822 = vunpack.c.l.b16 %v252
  %v823 = vunpack.c.l.b16 %v253
  %v824 = vunpack.c.l.b16 %v254
  %v825 = vunpack.c.l.b16 %v255
  %v826 = vunpack.c.l.b16 %v256
  %v827 = vunpack.c.l.b16 %v257
  %v828 = vpack.c.b16 %v613, %v612
  %v829 = vpack.c.b16 %v615, %v614
  %v830 = vpack.c.b16 %v617, %v616
  %v831 = vpack.c.b16 %v619, %v618
  %v832 = vpack.c.b16 %v621, %v620
  %v833 = vpack.c.b16 %v623, %v622
  %v834 = vpack.c.b16 %v625, %v624
  %v835 = vpack.c.b16 %v627, %v626
  %v836 = vpack.c.b16 %v629, %v628
  %v837 = vpack.c.b16 %v631, %v630
  %v838 = vpack.c.b16 %v633, %v632
  %v839 = vpack.c.b16 %v635, %v634
  %v840 = vpack.c.b16 %v637, %v636
  %v841 = vpack.c.b16 %v639, %v638
  %v842 = vpack.c.b16 %v641, %v640
  %v843 = vpack.c.b16 %v643, %v642
  %v844 = vpack.c.b16 %v645, %v644
  %v845 = vpack.c.b16 %v647, %v646
  %v846 = vpack.c.b16 %v649, %v648
  %v847 = vpack.c.b16 %v651, %v650
  %v848 = vpack.c.b16 %v653, %v652
  %v849 = vpack.c.b16 %v655, %v654
  %v850 = vpack.c.b16 %v657, %v656
  %v851 = vpack.c.b16 %v659, %v658
  %v852 = vpack.c.b16 %v661, %v660
  %v853 = vpack.c.b16 %v663, %v662
  %v854 = vpack.c.b16 %v665, %v664
  %v855 = vpack.c.b16 %v667, %v666
  %v856 = vpack.c.b16 %v669, %v668
  %v857 = vpack.c.b16 %v671, %v670
  %v858 = vpack.c.b16 %v673, %v672
  %v859 = vpack.c.b16 %v675, %v674
  %v860 = vpack.c.b16 %v677, %v676
  %v861 = vpack.c.b16 %v679, %v678
  %v862 = vpack.c.b16 %v681, %v680
  %v863 = vpack.c.b16 %v683, %v682
  %v864 = vpack.c.b16 %v685, %v684
  %v865 = vpack.c.b16 %v687, %v686
  %v866 = vpack.c.b16 %v689, %v688
  %v867 = vpack.c.b16 %v691, %v690
  %v868 = vpack.c.b16 %v693, %v692
  %v869 = vpack.c.b16 %v695, %v694
  %v870 = vpack.c.b16 %v697, %v696
  %v871 = vpack.c.b16 %v699, %v698
  %v872 = vpack.c.b16 %v701, %v700
  %v873 = vpack.c.b16 %v703, %v702
  %v874 = vpack.c.b16 %v705, %v704
  %v875 = vpack.c.b16 %v707, %v706
  %v876 = vpack.c.b16 %v709, %v708
  %v877 = vpack.c.b16 %v711, %v710
  %v878 = vpack.c.b16 %v713, %v712
  %v879 = vpack.c.b16 %v715, %v714
  %v880 = vpack.c.b16 %v717, %v716
  %v881 = vpack.c.b16 %v719, %v718
  %v882 = vpack.c.b16 %v721, %v720
  %v883 = vpack.c.b16 %v723, %v722
  %v884 = vpack.c.b16 %v725, %v724
  %v885 = vpack.c.b16 %v727, %v726
  %v886 = vpack.c.b16 %v729, %v728
  %v887 = vpack.c.b16 %v731, %v730
  %v888 = vpack.c.b16 %v733, %v732
  %v889 = vpack.c.b16 %v735, %v734
  %v890 = vpack.c.b16 %v737, %v736
  %v891 = vpack.c.b16 %v739, %v738
  %v892 = vpack.c.b16 %v741, %v740
  %v893 = vpack.c.b16 %v743, %v742
  %v894 = vpack.c.b16 %v745, %v744
  %v895 = vpack.c.b16 %v747, %v746
  %v896 = vpack.c.b16 %v749, %v748
  %v897 = vpack.c.b16 %v751, %v750
  %v898 = vpack.c.b16 %v753, %v752
  %v899 = vpack.c.b16 %v755, %v754
  %v900 = vpack.c.b16 %v757, %v756
  %v901 = vpack.c.b16 %v759, %v758
  %v902 = vpack.c.b16 %v761, %v760
  %v903 = vpack.c.b16 %v763, %v762
  %v904 = vpack.c.b16 %v765, %v764
  %v905 = vpack.c.b16 %v767, %v766
  %v906 = vpack.c.b16 %v769, %v768
  %v907 = vpack.c.b16 %v771, %v770
  %v908 = vpack.c.b16 %v773, %v772
  %v909 = vpack.c.b16 %v775, %v774
  %v910 = vpack.c.b16 %v777, %v776
  %v911 = vpack.c.b16 %v779, %v778
  %v912 = vpack.c.b16 %v781, %v780
  %v913 = vpack.c.b16 %v783, %v782
  %v914 = vpack.c.b16 %v785, %v784
  %v915 = vpack.c.b16 %v787, %v786
  %v916 = vpack.c.b16 %v789, %v788
  %v917 = vpack.c.b16 %v791, %v790
  %v918 = vpack.c.b16 %v793, %v792
  %v919 = vpack.c.b16 %v795, %v794
  %v920 = vpack.c.b16 %v797, %v796
  %v921 = vpack.c.b16 %v799, %v798
  %v922 = vpack.c.b16 %v801, %v800
  %v923 = vpack.c.b16 %v803, %v802
  %v924 = vpack.c.b16 %v805, %v804
  %v925 = vpack.c.b16 %v807, %v806
  %v926 = vpack.c.b16 %v809, %v808
  %v927 = vpack.c.b16 %v811, %v810
  %v928 = vpack.c.b16 %v813, %v812
  %v929 = vpack.c.b16 %v815, %v814
  %v930 = vpack.c.b16 %v817, %v816
  %v931 = vpack.c.b16 %v819, %v818
  %v932 = vpack.c.b16 %v821, %v820
  %v933 = vpack.c.b16 %v823, %v822
  %v934 = vpack.c.b16 %v825, %v824
  %v935 = vpack.c.b16 %v827, %v826
  %vm1044 = vcmask 523264
  %v1046 = vsel %vm1044, %v355, 0
  %v1049 = vsel %vm1044, %v369, 0
  %1051 = vmatprep.subr.bf16.mxu0 0
  %1052 = vmatpush1.bf16.msra.mxu0 %v828
  %1053 = vmatprep.subr.bf16.mxu0 0
  %1054 = vmatpush1.bf16.msra.mxu0 %v829
  %1055 = vmatprep.subr.bf16.mxu0 0
  %1056 = vmatpush1.bf16.msra.mxu0 %v830
  %1057 = vmatprep.subr.bf16.mxu0 0
  %1058 = vmatpush1.bf16.msra.mxu0 %v831
  %1059 = vmatprep.subr.bf16.mxu0 0
  %1060 = vmatpush1.bf16.msra.mxu0 %v832
  %1061 = vmatprep.subr.bf16.mxu0 0
  %1062 = vmatpush1.bf16.msra.mxu0 %v833
  %1063 = vmatprep.subr.bf16.mxu0 0
  %1064 = vmatpush1.bf16.msra.mxu0 %v834
  %1065 = vmatprep.subr.bf16.mxu0 0
  %1066 = vmatpush1.bf16.msra.mxu0 %v835
  %1067 = vmatprep.subr.bf16.mxu0 0
  %1068 = vmatpush1.bf16.msra.mxu0 %v836
  %1069 = vmatprep.subr.bf16.mxu0 0
  %1070 = vmatpush1.bf16.msra.mxu0 %v837
  %1071 = vmatprep.subr.bf16.mxu0 0
  %1072 = vmatpush1.bf16.msra.mxu0 %v838
  %1073 = vmatprep.subr.bf16.mxu0 0
  %1074 = vmatpush1.bf16.msra.mxu0 %v839
  %1075 = vmatprep.subr.bf16.mxu0 0
  %1076 = vmatpush1.bf16.msra.mxu0 %v840
  %1077 = vmatprep.subr.bf16.mxu0 0
  %1078 = vmatpush1.bf16.msra.mxu0 %v841
  %1079 = vmatprep.subr.bf16.mxu0 0
  %1080 = vmatpush1.bf16.msra.mxu0 %v842
  %1081 = vmatprep.subr.bf16.mxu0 0
  %1082 = vmatpush1.bf16.msra.mxu0 %v843
  %1083 = vmatprep.mubr.bf16.mxu0 %v343
  %1084 = vmatmul.mubr.bf16.gmra.mrb[0].mxu0 %v342
  %v1085 = vpop.f32.mrb[0].mxu0
  %v1086 = vadd.f32 0.0, %v1085
  %v1087 = vpop.f32.mrb[0].mxu0
  %v1088 = vpop.f32.mrb[0].mxu0
  %v1089 = vadd.f32 0.0, %v1088
  %v1090 = vpop.f32.mrb[0].mxu0
  %1091 = vmatprep.mubr.bf16.mxu0 %v357
  %1092 = vmatmul.mubr.bf16.gmra.mrb[0].mxu0 %v356
  %v1093 = vpop.f32.mrb[0].mxu0
  %v1094 = vadd.f32 0.0, %v1093
  %v1095 = vpop.f32.mrb[0].mxu0
  %v1096 = vpop.f32.mrb[0].mxu0
  %v1097 = vadd.f32 0.0, %v1096
  %v1098 = vpop.f32.mrb[0].mxu0
  %1099 = vdwg.mxu0
  %1100 = vmatprep.subr.bf16.mxu0 0
  %1101 = vmatpush1.bf16.msra.mxu0 %v844
  %1102 = vmatprep.subr.bf16.mxu0 0
  %1103 = vmatpush1.bf16.msra.mxu0 %v845
  %1104 = vmatprep.subr.bf16.mxu0 0
  %1105 = vmatpush1.bf16.msra.mxu0 %v846
  %1106 = vmatprep.subr.bf16.mxu0 0
  %1107 = vmatpush1.bf16.msra.mxu0 %v847
  %1108 = vmatprep.subr.bf16.mxu0 0
  %1109 = vmatpush1.bf16.msra.mxu0 %v848
  %1110 = vmatprep.subr.bf16.mxu0 0
  %1111 = vmatpush1.bf16.msra.mxu0 %v849
  %1112 = vmatprep.subr.bf16.mxu0 0
  %1113 = vmatpush1.bf16.msra.mxu0 %v850
  %1114 = vmatprep.subr.bf16.mxu0 0
  %1115 = vmatpush1.bf16.msra.mxu0 %v851
  %1116 = vmatprep.subr.bf16.mxu0 0
  %1117 = vmatpush1.bf16.msra.mxu0 %v852
  %1118 = vmatprep.subr.bf16.mxu0 0
  %1119 = vmatpush1.bf16.msra.mxu0 %v853
  %1120 = vmatprep.subr.bf16.mxu0 0
  %1121 = vmatpush1.bf16.msra.mxu0 %v854
  %1122 = vmatprep.subr.bf16.mxu0 0
  %1123 = vmatpush1.bf16.msra.mxu0 %v855
  %1124 = vmatprep.subr.bf16.mxu0 0
  %1125 = vmatpush1.bf16.msra.mxu0 %v856
  %1126 = vmatprep.subr.bf16.mxu0 0
  %1127 = vmatpush1.bf16.msra.mxu0 %v857
  %1128 = vmatprep.subr.bf16.mxu0 0
  %1129 = vmatpush1.bf16.msra.mxu0 %v858
  %1130 = vmatprep.subr.bf16.mxu0 0
  %1131 = vmatpush1.bf16.msra.mxu0 %v859
  %1132 = vmatprep.mubr.bf16.mxu0 %v345
  %1133 = vmatmul.mubr.bf16.gmra.mrb[0].mxu0 %v344
  %v1134 = vpop.f32.mrb[0].mxu0
  %v1135 = vadd.f32 %v1086, %v1134
  %v1136 = vpop.f32.mrb[0].mxu0
  %v1137 = vpop.f32.mrb[0].mxu0
  %v1138 = vadd.f32 %v1089, %v1137
  %v1139 = vpop.f32.mrb[0].mxu0
  %1140 = vmatprep.mubr.bf16.mxu0 %v359
  %1141 = vmatmul.mubr.bf16.gmra.mrb[0].mxu0 %v358
  %v1142 = vpop.f32.mrb[0].mxu0
  %v1143 = vadd.f32 %v1094, %v1142
  %v1144 = vpop.f32.mrb[0].mxu0
  %v1145 = vpop.f32.mrb[0].mxu0
  %v1146 = vadd.f32 %v1097, %v1145
  %v1147 = vpop.f32.mrb[0].mxu0
  %1148 = vdwg.mxu0
  %1149 = vmatprep.subr.bf16.mxu0 0
  %1150 = vmatpush1.bf16.msra.mxu0 %v860
  %1151 = vmatprep.subr.bf16.mxu0 0
  %1152 = vmatpush1.bf16.msra.mxu0 %v861
  %1153 = vmatprep.subr.bf16.mxu0 0
  %1154 = vmatpush1.bf16.msra.mxu0 %v862
  %1155 = vmatprep.subr.bf16.mxu0 0
  %1156 = vmatpush1.bf16.msra.mxu0 %v863
  %1157 = vmatprep.subr.bf16.mxu0 0
  %1158 = vmatpush1.bf16.msra.mxu0 %v864
  %1159 = vmatprep.subr.bf16.mxu0 0
  %1160 = vmatpush1.bf16.msra.mxu0 %v865
  %1161 = vmatprep.subr.bf16.mxu0 0
  %1162 = vmatpush1.bf16.msra.mxu0 %v866
  %1163 = vmatprep.subr.bf16.mxu0 0
  %1164 = vmatpush1.bf16.msra.mxu0 %v867
  %1165 = vmatprep.subr.bf16.mxu0 0
  %1166 = vmatpush1.bf16.msra.mxu0 %v868
  %1167 = vmatprep.subr.bf16.mxu0 0
  %1168 = vmatpush1.bf16.msra.mxu0 %v869
  %1169 = vmatprep.subr.bf16.mxu0 0
  %1170 = vmatpush1.bf16.msra.mxu0 %v870
  %1171 = vmatprep.subr.bf16.mxu0 0
  %1172 = vmatpush1.bf16.msra.mxu0 %v871
  %1173 = vmatprep.subr.bf16.mxu0 0
  %1174 = vmatpush1.bf16.msra.mxu0 %v872
  %1175 = vmatprep.subr.bf16.mxu0 0
  %1176 = vmatpush1.bf16.msra.mxu0 %v873
  %1177 = vmatprep.subr.bf16.mxu0 0
  %1178 = vmatpush1.bf16.msra.mxu0 %v874
  %1179 = vmatprep.subr.bf16.mxu0 0
  %1180 = vmatpush1.bf16.msra.mxu0 %v875
  %1181 = vmatprep.mubr.bf16.mxu0 %v347
  %1182 = vmatmul.mubr.bf16.gmra.mrb[0].mxu0 %v346
  %v1183 = vpop.f32.mrb[0].mxu0
  %v1184 = vadd.f32 %v1135, %v1183
  %v1185 = vpop.f32.mrb[0].mxu0
  %v1186 = vpop.f32.mrb[0].mxu0
  %v1187 = vadd.f32 %v1138, %v1186
  %v1188 = vpop.f32.mrb[0].mxu0
  %1189 = vmatprep.mubr.bf16.mxu0 %v361
  %1190 = vmatmul.mubr.bf16.gmra.mrb[0].mxu0 %v360
  %v1191 = vpop.f32.mrb[0].mxu0
  %v1192 = vadd.f32 %v1143, %v1191
  %v1193 = vpop.f32.mrb[0].mxu0
  %v1194 = vpop.f32.mrb[0].mxu0
  %v1195 = vadd.f32 %v1146, %v1194
  %v1196 = vpop.f32.mrb[0].mxu0
  %1197 = vdwg.mxu0
  %1198 = vmatprep.subr.bf16.mxu0 0
  %1199 = vmatpush1.bf16.msra.mxu0 %v876
  %1200 = vmatprep.subr.bf16.mxu0 0
  %1201 = vmatpush1.bf16.msra.mxu0 %v877
  %1202 = vmatprep.subr.bf16.mxu0 0
  %1203 = vmatpush1.bf16.msra.mxu0 %v878
  %1204 = vmatprep.subr.bf16.mxu0 0
  %1205 = vmatpush1.bf16.msra.mxu0 %v879
  %1206 = vmatprep.subr.bf16.mxu0 0
  %1207 = vmatpush1.bf16.msra.mxu0 %v880
  %1208 = vmatprep.subr.bf16.mxu0 0
  %1209 = vmatpush1.bf16.msra.mxu0 %v881
  %1210 = vmatprep.subr.bf16.mxu0 0
  %1211 = vmatpush1.bf16.msra.mxu0 %v882
  %1212 = vmatprep.subr.bf16.mxu0 0
  %1213 = vmatpush1.bf16.msra.mxu0 %v883
  %1214 = vmatprep.subr.bf16.mxu0 0
  %1215 = vmatpush1.bf16.msra.mxu0 %v884
  %1216 = vmatprep.subr.bf16.mxu0 0
  %1217 = vmatpush1.bf16.msra.mxu0 %v885
  %1218 = vmatprep.subr.bf16.mxu0 0
  %1219 = vmatpush1.bf16.msra.mxu0 %v886
  %1220 = vmatprep.subr.bf16.mxu0 0
  %1221 = vmatpush1.bf16.msra.mxu0 %v887
  %1222 = vmatprep.subr.bf16.mxu0 0
  %1223 = vmatpush1.bf16.msra.mxu0 %v888
  %1224 = vmatprep.subr.bf16.mxu0 0
  %1225 = vmatpush1.bf16.msra.mxu0 %v889
  %1226 = vmatprep.subr.bf16.mxu0 0
  %1227 = vmatpush1.bf16.msra.mxu0 %v890
  %1228 = vmatprep.subr.bf16.mxu0 0
  %1229 = vmatpush1.bf16.msra.mxu0 %v891
  %1230 = vmatprep.mubr.bf16.mxu0 %v349
  %1231 = vmatmul.mubr.bf16.gmra.mrb[0].mxu0 %v348
  %v1232 = vpop.f32.mrb[0].mxu0
  %v1233 = vadd.f32 %v1184, %v1232
  %v1234 = vpop.f32.mrb[0].mxu0
  %v1235 = vpop.f32.mrb[0].mxu0
  %v1236 = vadd.f32 %v1187, %v1235
  %v1237 = vpop.f32.mrb[0].mxu0
  %1238 = vmatprep.mubr.bf16.mxu0 %v363
  %1239 = vmatmul.mubr.bf16.gmra.mrb[0].mxu0 %v362
  %v1240 = vpop.f32.mrb[0].mxu0
  %v1241 = vadd.f32 %v1192, %v1240
  %v1242 = vpop.f32.mrb[0].mxu0
  %v1243 = vpop.f32.mrb[0].mxu0
  %v1244 = vadd.f32 %v1195, %v1243
  %v1245 = vpop.f32.mrb[0].mxu0
  %1246 = vdwg.mxu0
  %1247 = vmatprep.subr.bf16.mxu0 0
  %1248 = vmatpush1.bf16.msra.mxu0 %v892
  %1249 = vmatprep.subr.bf16.mxu0 0
  %1250 = vmatpush1.bf16.msra.mxu0 %v893
  %1251 = vmatprep.subr.bf16.mxu0 0
  %1252 = vmatpush1.bf16.msra.mxu0 %v894
  %1253 = vmatprep.subr.bf16.mxu0 0
  %1254 = vmatpush1.bf16.msra.mxu0 %v895
  %1255 = vmatprep.subr.bf16.mxu0 0
  %1256 = vmatpush1.bf16.msra.mxu0 %v896
  %1257 = vmatprep.subr.bf16.mxu0 0
  %1258 = vmatpush1.bf16.msra.mxu0 %v897
  %1259 = vmatprep.subr.bf16.mxu0 0
  %1260 = vmatpush1.bf16.msra.mxu0 %v898
  %1261 = vmatprep.subr.bf16.mxu0 0
  %1262 = vmatpush1.bf16.msra.mxu0 %v899
  %1263 = vmatprep.subr.bf16.mxu0 0
  %1264 = vmatpush1.bf16.msra.mxu0 %v900
  %1265 = vmatprep.subr.bf16.mxu0 0
  %1266 = vmatpush1.bf16.msra.mxu0 %v901
  %1267 = vmatprep.subr.bf16.mxu0 0
  %1268 = vmatpush1.bf16.msra.mxu0 %v902
  %1269 = vmatprep.subr.bf16.mxu0 0
  %1270 = vmatpush1.bf16.msra.mxu0 %v903
  %1271 = vmatprep.subr.bf16.mxu0 0
  %1272 = vmatpush1.bf16.msra.mxu0 %v904
  %1273 = vmatprep.subr.bf16.mxu0 0
  %1274 = vmatpush1.bf16.msra.mxu0 %v905
  %1275 = vmatprep.subr.bf16.mxu0 0
  %1276 = vmatpush1.bf16.msra.mxu0 %v906
  %1277 = vmatprep.subr.bf16.mxu0 0
  %1278 = vmatpush1.bf16.msra.mxu0 %v907
  %1279 = vmatprep.mubr.bf16.mxu0 %v351
  %1280 = vmatmul.mubr.bf16.gmra.mrb[0].mxu0 %v350
  %v1281 = vpop.f32.mrb[0].mxu0
  %v1282 = vadd.f32 %v1233, %v1281
  %v1283 = vpop.f32.mrb[0].mxu0
  %v1284 = vpop.f32.mrb[0].mxu0
  %v1285 = vadd.f32 %v1236, %v1284
  %v1286 = vpop.f32.mrb[0].mxu0
  %1287 = vmatprep.mubr.bf16.mxu0 %v365
  %1288 = vmatmul.mubr.bf16.gmra.mrb[0].mxu0 %v364
  %v1289 = vpop.f32.mrb[0].mxu0
  %v1290 = vadd.f32 %v1241, %v1289
  %v1291 = vpop.f32.mrb[0].mxu0
  %v1292 = vpop.f32.mrb[0].mxu0
  %v1293 = vadd.f32 %v1244, %v1292
  %v1294 = vpop.f32.mrb[0].mxu0
  %1295 = vdwg.mxu0
  %1296 = vmatprep.subr.bf16.mxu0 0
  %1297 = vmatpush1.bf16.msra.mxu0 %v908
  %1298 = vmatprep.subr.bf16.mxu0 0
  %1299 = vmatpush1.bf16.msra.mxu0 %v909
  %1300 = vmatprep.subr.bf16.mxu0 0
  %1301 = vmatpush1.bf16.msra.mxu0 %v910
  %1302 = vmatprep.subr.bf16.mxu0 0
  %1303 = vmatpush1.bf16.msra.mxu0 %v911
  %1304 = vmatprep.subr.bf16.mxu0 0
  %1305 = vmatpush1.bf16.msra.mxu0 %v912
  %1306 = vmatprep.subr.bf16.mxu0 0
  %1307 = vmatpush1.bf16.msra.mxu0 %v913
  %1308 = vmatprep.subr.bf16.mxu0 0
  %1309 = vmatpush1.bf16.msra.mxu0 %v914
  %1310 = vmatprep.subr.bf16.mxu0 0
  %1311 = vmatpush1.bf16.msra.mxu0 %v915
  %1312 = vmatprep.subr.bf16.mxu0 0
  %1313 = vmatpush1.bf16.msra.mxu0 %v916
  %1314 = vmatprep.subr.bf16.mxu0 0
  %1315 = vmatpush1.bf16.msra.mxu0 %v917
  %1316 = vmatprep.subr.bf16.mxu0 0
  %1317 = vmatpush1.bf16.msra.mxu0 %v918
  %1318 = vmatprep.subr.bf16.mxu0 0
  %1319 = vmatpush1.bf16.msra.mxu0 %v919
  %1320 = vmatprep.subr.bf16.mxu0 0
  %1321 = vmatpush1.bf16.msra.mxu0 %v920
  %1322 = vmatprep.subr.bf16.mxu0 0
  %1323 = vmatpush1.bf16.msra.mxu0 %v921
  %1324 = vmatprep.subr.bf16.mxu0 0
  %1325 = vmatpush1.bf16.msra.mxu0 %v922
  %1326 = vmatprep.subr.bf16.mxu0 0
  %1327 = vmatpush1.bf16.msra.mxu0 %v923
  %1328 = vmatprep.mubr.bf16.mxu0 %v353
  %1329 = vmatmul.mubr.bf16.gmra.mrb[0].mxu0 %v352
  %v1330 = vpop.f32.mrb[0].mxu0
  %v1331 = vadd.f32 %v1282, %v1330
  %v1332 = vpop.f32.mrb[0].mxu0
  %v1333 = vpop.f32.mrb[0].mxu0
  %v1334 = vadd.f32 %v1285, %v1333
  %v1335 = vpop.f32.mrb[0].mxu0
  %1336 = vmatprep.mubr.bf16.mxu0 %v367
  %1337 = vmatmul.mubr.bf16.gmra.mrb[0].mxu0 %v366
  %v1338 = vpop.f32.mrb[0].mxu0
  %v1339 = vadd.f32 %v1290, %v1338
  %v1340 = vpop.f32.mrb[0].mxu0
  %v1341 = vpop.f32.mrb[0].mxu0
  %v1342 = vadd.f32 %v1293, %v1341
  %v1343 = vpop.f32.mrb[0].mxu0
  %1344 = vdwg.mxu0
  %1345 = vmatprep.subr.bf16.mxu0 0
  %1346 = vmatpush1.bf16.msra.mxu0 %v924
  %1347 = vmatprep.subr.bf16.mxu0 0
  %1348 = vmatpush1.bf16.msra.mxu0 %v925
  %1349 = vmatprep.subr.bf16.mxu0 0
  %1350 = vmatpush1.bf16.msra.mxu0 %v926
  %1351 = vmatprep.subr.bf16.mxu0 0
  %1352 = vmatpush1.bf16.msra.mxu0 %v927
  %1353 = vmatprep.subr.bf16.mxu0 0
  %1354 = vmatpush1.bf16.msra.mxu0 %v928
  %1355 = vmatprep.subr.bf16.mxu0 0
  %1356 = vmatpush1.bf16.msra.mxu0 %v929
  %1357 = vmatprep.subr.bf16.mxu0 0
  %1358 = vmatpush1.bf16.msra.mxu0 %v930
  %1359 = vmatprep.subr.bf16.mxu0 0
  %1360 = vmatpush1.bf16.msra.mxu0 %v931
  %1361 = vmatprep.subr.bf16.mxu0 0
  %1362 = vmatpush1.bf16.msra.mxu0 %v932
  %1363 = vmatprep.subr.bf16.mxu0 0
  %1364 = vmatpush1.bf16.msra.mxu0 %v933
  %1365 = vmatprep.subr.bf16.mxu0 0
  %1366 = vmatpush1.bf16.msra.mxu0 %v934
  %1367 = vmatprep.subr.bf16.mxu0 0
  %1368 = vmatpush1.bf16.msra.mxu0 %v935
  %1369 = vmatprep.subr.bf16.mxu0 0
  %1370 = vmatpush1.bf16.msra.mxu0 0
  %1371 = vmatprep.subr.bf16.mxu0 0
  %1372 = vmatpush1.bf16.msra.mxu0 0
  %1373 = vmatprep.subr.bf16.mxu0 0
  %1374 = vmatpush1.bf16.msra.mxu0 0
  %1375 = vmatprep.subr.bf16.mxu0 0
  %1376 = vmatpush1.bf16.msra.mxu0 0
  %1377 = vmatprep.mubr.bf16.mxu0 %v1046
  %1378 = vmatmul.mubr.bf16.gmra.mrb[0].mxu0 %v354
  %v1379 = vpop.f32.mrb[0].mxu0
  %v1380 = vadd.f32 %v1331, %v1379
  %v1381 = vpop.f32.mrb[0].mxu0
  %v1382 = vpop.f32.mrb[0].mxu0
  %v1383 = vadd.f32 %v1334, %v1382
  %v1384 = vpop.f32.mrb[0].mxu0
  %1385 = vmatprep.mubr.bf16.mxu0 %v1049
  %1386 = vmatmul.mubr.bf16.gmra.mrb[0].mxu0 %v368
  %v1387 = vpop.f32.mrb[0].mxu0
  %v1388 = vadd.f32 %v1339, %v1387
  %v1389 = vpop.f32.mrb[0].mxu0
  %v1390 = vpop.f32.mrb[0].mxu0
  %v1391 = vadd.f32 %v1342, %v1390
  %v1392 = vpop.f32.mrb[0].mxu0
  %1393 = vdwg.mxu0
  %1394 = vst.msk [vmem:[%s2] sm:$0xff] %vm1044, %v1380
  %1395 = vst.msk [vmem:[%s2 + $0x8] sm:$0xff] %vm1044, %v1383
  %1396 = vst.msk [vmem:[%s2 + $0x10] sm:$0xff] %vm1044, %v1388
  %1397 = vst.msk [vmem:[%s2 + $0x18] sm:$0xff] %vm1044, %v1391
  %v1398 = vsel %vm1044, %v1380, 0.0
  %v1399 = vsel %vm1044, %v1383, 0.0
  %v1400 = vadd.f32 %v1398, %v1399
  %v1401 = vsel %vm1044, %v1388, 0.0
  %v1402 = vadd.f32 %v1400, %v1401
  %v1403 = vsel %vm1044, %v1391, 0.0
  %v1404 = vadd.f32 %v1402, %v1403
  %v1405 = vrot.slane %v1404, 4
  %v1406 = vadd.f32 %v1404, %v1405
  %v1407 = vrot.slane %v1406, 2
  %v1408 = vadd.f32 %v1406, %v1407
  %v1409 = vrot.slane %v1408, 1
  %v1410 = vadd.f32 %v1408, %v1409
  %v1411 = vmul.f32 %v1380, %v1380
  %v1412 = vmul.f32 %v1383, %v1383
  %v1413 = vmul.f32 %v1388, %v1388
  %v1414 = vmul.f32 %v1391, %v1391
  %v1415 = vsel %vm1044, %v1411, 0.0
  %v1416 = vsel %vm1044, %v1412, 0.0
  %v1417 = vadd.f32 %v1415, %v1416
  %v1418 = vsel %vm1044, %v1413, 0.0
  %v1419 = vadd.f32 %v1417, %v1418
  %v1420 = vsel %vm1044, %v1414, 0.0
  %v1421 = vadd.f32 %v1419, %v1420
  %v1422 = vrot.slane %v1421, 4
  %v1423 = vadd.f32 %v1421, %v1422
  %v1424 = vrot.slane %v1423, 2
  %v1425 = vadd.f32 %v1423, %v1424
  %v1426 = vrot.slane %v1425, 1
  %v1427 = vadd.f32 %v1425, %v1426
  %vm1428 = vcmask 1040384
  %v1429 = vsel %vm1428, %v1410, %v1427
  %vm1430 = vcmask 517120
  %1431 = vst.msk [vmem:[%s3] sm:$0x3] %vm1430, %v1429
  // Predicated region
  $region10: #{_lambda_.43} parent=0 // pred_check
    _
  $region11: #{_lambda_.43} parent=0 // pred_check_branch
    %1433 = sbr.rel (0) target = $region13
  $region12: #{_lambda_.43} parent=0 // pred_region
    _
  $region13: #{_lambda_.43} parent=0 // pred_fallthru
    _
  // Predicated region
  $region14: #{_lambda_.43} parent=0 // pred_check
    _
  $region15: #{_lambda_.43} parent=0 // pred_check_branch
    %1435 = sbr.rel (0) target = $region17
  $region16: #{_lambda_.43} parent=0 // pred_region
    _
  $region17: #{_lambda_.43} parent=0 // pred_fallthru
    _
  // Predicated region
  $region18: #{_lambda_.43} parent=0 // pred_check
    _
  $region19: #{_lambda_.43} parent=0 // pred_check_branch
    %1437 = sbr.rel (0) target = $region21
  $region20: #{_lambda_.43} parent=0 // pred_region
    _
  $region21: #{_lambda_.43} parent=0 // pred_fallthru
    _
  // Predicated region
  $region22: #{_lambda_.43} parent=0 // pred_check
    _
  $region23: #{_lambda_.43} parent=0 // pred_check_branch
    %1439 = sbr.rel (0) target = $region25
  $region24: #{_lambda_.43} parent=0 // pred_region
    _
  $region25: #{_lambda_.43} parent=0 // pred_fallthru
    _

// kernel: _lambda_.49
$region0: #{_lambda_.49}
  #allocation0 [shape = 'u32[]', space=smem, size = 0x4, offset = 0x4, fixed_abs, tag = 'smem constant byte address 0x4 - core index']
  #allocation1 [shape = 'u32[144,128]{1,0:T(1,128)}', space=vmem, size = 0x12000, scoped, tag = 'internal scratch']
  %s0 = inlined_call_operand.vmem [shape: f32[128,32], index: 0, kind: input, shape index: {}]
  %s1 = inlined_call_operand.vmem [shape: f32[1,32], index: 1, kind: input, shape index: {}]
  %s2 = inlined_call_operand.vmem [shape: f32[1,32], index: 2, kind: input, shape index: {}]
  %s3 = inlined_call_operand.vmem [shape: f32[128,32], index: 3, kind: output, shape index: {}]
  %s4 = sld [smem:[#allocation0]]
  $region22: #{_lambda_.49} parent=0
    _
  %s6 = ssub.s32 1, %s4
  %s7 = scalar_select 0, %s6, %s4
  // Predicated region
  $region2: #{_lambda_.49} parent=0 // pred_check
    _
  $region3: #{_lambda_.49} parent=0 // pred_check_branch
    %9 = sbr.rel (0) target = $region5
  $region4: #{_lambda_.49} parent=0 // pred_region
    _
  $region5: #{_lambda_.49} parent=0 // pred_fallthru
    _
  // Predicated region
  $region6: #{_lambda_.49} parent=0 // pred_check
    _
  $region7: #{_lambda_.49} parent=0 // pred_check_branch
    %11 = sbr.rel (0) target = $region9
  $region8: #{_lambda_.49} parent=0 // pred_region
    _
  $region9: #{_lambda_.49} parent=0 // pred_fallthru
    _
  // Predicated region
  $region10: #{_lambda_.49} parent=0 // pred_check
    _
  $region11: #{_lambda_.49} parent=0 // pred_check_branch
    %13 = sbr.rel (0) target = $region13
  $region12: #{_lambda_.49} parent=0 // pred_region
    _
  $region13: #{_lambda_.49} parent=0 // pred_fallthru
    _
  %v14 = vld [vmem:[%s0] sm:$0xff]
  %v15 = vld [vmem:[%s0 + $0x8] sm:$0xff]
  %v16 = vld [vmem:[%s0 + $0x10] sm:$0xff]
  %v17 = vld [vmem:[%s0 + $0x18] sm:$0xff]
  %v18 = vld [vmem:[%s0 + $0x20] sm:$0xff]
  %v19 = vld [vmem:[%s0 + $0x28] sm:$0xff]
  %v20 = vld [vmem:[%s0 + $0x30] sm:$0xff]
  %v21 = vld [vmem:[%s0 + $0x38] sm:$0xff]
  %v22 = vld [vmem:[%s0 + $0x40] sm:$0xff]
  %v23 = vld [vmem:[%s0 + $0x48] sm:$0xff]
  %v24 = vld [vmem:[%s0 + $0x50] sm:$0xff]
  %v25 = vld [vmem:[%s0 + $0x58] sm:$0xff]
  %v26 = vld [vmem:[%s0 + $0x60] sm:$0xff]
  %v27 = vld [vmem:[%s0 + $0x68] sm:$0xff]
  %v28 = vld [vmem:[%s0 + $0x70] sm:$0xff]
  %v29 = vld [vmem:[%s0 + $0x78] sm:$0xff]
  %v30 = vld [vmem:[%s1] sm:$0x1]
  %v32 = vlaneseq
  %v33 = vshrl.u32 %v32, 7
  %v34 = vsub.s32 0, %v33
  %v35 = vrot.slane %v30, %v34
  %v37 = vmul.f32 %v14, %v35
  %v38 = vmul.f32 %v15, %v35
  %v39 = vmul.f32 %v16, %v35
  %v40 = vmul.f32 %v17, %v35
  %v41 = vmul.f32 %v18, %v35
  %v42 = vmul.f32 %v19, %v35
  %v43 = vmul.f32 %v20, %v35
  %v44 = vmul.f32 %v21, %v35
  %v45 = vmul.f32 %v22, %v35
  %v46 = vmul.f32 %v23, %v35
  %v47 = vmul.f32 %v24, %v35
  %v48 = vmul.f32 %v25, %v35
  %v49 = vmul.f32 %v26, %v35
  %v50 = vmul.f32 %v27, %v35
  %v51 = vmul.f32 %v28, %v35
  %v52 = vmul.f32 %v29, %v35
  %v53 = vld [vmem:[%s2] sm:$0x1]
  %v55 = vlaneseq
  %v56 = vshrl.u32 %v55, 7
  %v57 = vsub.s32 0, %v56
  %v58 = vrot.slane %v53, %v57
  %v60 = vadd.f32 %v37, %v58
  %v61 = vadd.f32 %v38, %v58
  %v62 = vadd.f32 %v39, %v58
  %v63 = vadd.f32 %v40, %v58
  %v64 = vadd.f32 %v41, %v58
  %v65 = vadd.f32 %v42, %v58
  %v66 = vadd.f32 %v43, %v58
  %v67 = vadd.f32 %v44, %v58
  %v68 = vadd.f32 %v45, %v58
  %v69 = vadd.f32 %v46, %v58
  %v70 = vadd.f32 %v47, %v58
  %v71 = vadd.f32 %v48, %v58
  %v72 = vadd.f32 %v49, %v58
  %v73 = vadd.f32 %v50, %v58
  %v74 = vadd.f32 %v51, %v58
  %v75 = vadd.f32 %v52, %v58
  %v76 = vmax.f32 %v60, 0.0
  %v77 = vmax.f32 %v61, 0.0
  %v78 = vmax.f32 %v62, 0.0
  %v79 = vmax.f32 %v63, 0.0
  %v80 = vmax.f32 %v64, 0.0
  %v81 = vmax.f32 %v65, 0.0
  %v82 = vmax.f32 %v66, 0.0
  %v83 = vmax.f32 %v67, 0.0
  %v84 = vmax.f32 %v68, 0.0
  %v85 = vmax.f32 %v69, 0.0
  %v86 = vmax.f32 %v70, 0.0
  %v87 = vmax.f32 %v71, 0.0
  %v88 = vmax.f32 %v72, 0.0
  %v89 = vmax.f32 %v73, 0.0
  %v90 = vmax.f32 %v74, 0.0
  %v91 = vmax.f32 %v75, 0.0
  %vm92 = vcmask 261120
  %93 = vst.msk [vmem:[%s3] sm:$0xff] %vm92, %v76
  %94 = vst.msk [vmem:[%s3 + $0x8] sm:$0xff] %vm92, %v77
  %95 = vst.msk [vmem:[%s3 + $0x10] sm:$0xff] %vm92, %v78
  %96 = vst.msk [vmem:[%s3 + $0x18] sm:$0xff] %vm92, %v79
  %97 = vst.msk [vmem:[%s3 + $0x20] sm:$0xff] %vm92, %v80
  %98 = vst.msk [vmem:[%s3 + $0x28] sm:$0xff] %vm92, %v81
  %99 = vst.msk [vmem:[%s3 + $0x30] sm:$0xff] %vm92, %v82
  %100 = vst.msk [vmem:[%s3 + $0x38] sm:$0xff] %vm92, %v83
  %101 = vst.msk [vmem:[%s3 + $0x40] sm:$0xff] %vm92, %v84
  %102 = vst.msk [vmem:[%s3 + $0x48] sm:$0xff] %vm92, %v85
  %103 = vst.msk [vmem:[%s3 + $0x50] sm:$0xff] %vm92, %v86
  %104 = vst.msk [vmem:[%s3 + $0x58] sm:$0xff] %vm92, %v87
  %105 = vst.msk [vmem:[%s3 + $0x60] sm:$0xff] %vm92, %v88
  %106 = vst.msk [vmem:[%s3 + $0x68] sm:$0xff] %vm92, %v89
  %107 = vst.msk [vmem:[%s3 + $0x70] sm:$0xff] %vm92, %v90
  %108 = vst.msk [vmem:[%s3 + $0x78] sm:$0xff] %vm92, %v91
  // Predicated region
  $region14: #{_lambda_.49} parent=0 // pred_check
    _
  $region15: #{_lambda_.49} parent=0 // pred_check_branch
    %110 = sbr.rel (0) target = $region17
  $region16: #{_lambda_.49} parent=0 // pred_region
    _
  $region17: #{_lambda_.49} parent=0 // pred_fallthru
    _
  // Predicated region
  $region18: #{_lambda_.49} parent=0 // pred_check
    _
  $region19: #{_lambda_.49} parent=0 // pred_check_branch
    %112 = sbr.rel (0) target = $region21
  $region20: #{_lambda_.49} parent=0 // pred_region
    _
  $region21: #{_lambda_.49} parent=0 // pred_fallthru
    _

// kernel: _lambda_.48
$region0: #{_lambda_.48}
  #allocation0 [shape = 'u32[]', space=smem, size = 0x4, offset = 0x4, fixed_abs, tag = 'smem constant byte address 0x4 - core index']
  #allocation1 [shape = 'u32[144,128]{1,0:T(1,128)}', space=vmem, size = 0x12000, scoped, tag = 'internal scratch']
  %s0 = inlined_call_operand.vmem [shape: bf16[128,864], index: 0, kind: input, shape index: {}]
  %s1 = inlined_call_operand.vmem [shape: bf16[864,32], index: 1, kind: input, shape index: {}]
  %s2 = inlined_call_operand.vmem [shape: f32[128,32], index: 2, kind: output, shape index: {0}]
  %s3 = inlined_call_operand.vmem [shape: f32[1,2,32], index: 3, kind: output, shape index: {1}]
  %4 = xla_tuple %s2, %s3
  %s5 = sld [smem:[#allocation0]]
  $region26: #{_lambda_.48} parent=0
    _
  %s7 = ssub.s32 1, %s5
  %s8 = scalar_select 0, %s7, %s5
  // Predicated region
  $region2: #{_lambda_.48} parent=0 // pred_check
    _
  $region3: #{_lambda_.48} parent=0 // pred_check_branch
    %10 = sbr.rel (0) target = $region5
  $region4: #{_lambda_.48} parent=0 // pred_region
    _
  $region5: #{_lambda_.48} parent=0 // pred_fallthru
    _
  // Predicated region
  $region6: #{_lambda_.48} parent=0 // pred_check
    _
  $region7: #{_lambda_.48} parent=0 // pred_check_branch
    %12 = sbr.rel (0) target = $region9
  $region8: #{_lambda_.48} parent=0 // pred_region
    _
  $region9: #{_lambda_.48} parent=0 // pred_fallthru
    _
  %v14 = vld [vmem:[%s0] sm:$0xff]
  %v15 = vld [vmem:[%s0 + $0x8] sm:$0xff]
  %v16 = vld [vmem:[%s0 + $0x10] sm:$0xff]
  %v17 = vld [vmem:[%s0 + $0x18] sm:$0xf]
  %v18 = vld [vmem:[%s0 + $0x1c] sm:$0xff]
  %v19 = vld [vmem:[%s0 + $0x24] sm:$0xff]
  %v20 = vld [vmem:[%s0 + $0x2c] sm:$0xff]
  %v21 = vld [vmem:[%s0 + $0x34] sm:$0xf]
  %v22 = vld [vmem:[%s0 + $0x38] sm:$0xff]
  %v23 = vld [vmem:[%s0 + $0x40] sm:$0xff]
  %v24 = vld [vmem:[%s0 + $0x48] sm:$0xff]
  %v25 = vld [vmem:[%s0 + $0x50] sm:$0xf]
  %v26 = vld [vmem:[%s0 + $0x54] sm:$0xff]
  %v27 = vld [vmem:[%s0 + $0x5c] sm:$0xff]
  %v28 = vld [vmem:[%s0 + $0x64] sm:$0xff]
  %v29 = vld [vmem:[%s0 + $0x6c] sm:$0xf]
  %v30 = vld [vmem:[%s0 + $0x70] sm:$0xff]
  %v31 = vld [vmem:[%s0 + $0x78] sm:$0xff]
  %v32 = vld [vmem:[%s0 + $0x80] sm:$0xff]
  %v33 = vld [vmem:[%s0 + $0x88] sm:$0xf]
  %v34 = vld [vmem:[%s0 + $0x8c] sm:$0xff]
  %v35 = vld [vmem:[%s0 + $0x94] sm:$0xff]
  %v36 = vld [vmem:[%s0 + $0x9c] sm:$0xff]
  %v37 = vld [vmem:[%s0 + $0xa4] sm:$0xf]
  %v38 = vld [vmem:[%s0 + $0xa8] sm:$0xff]
  %v39 = vld [vmem:[%s0 + $0xb0] sm:$0xff]
  %v40 = vld [vmem:[%s0 + $0xb8] sm:$0xff]
  %v41 = vld [vmem:[%s0 + $0xc0] sm:$0xf]
  %v42 = vld [vmem:[%s0 + $0xc4] sm:$0xff]
  %v43 = vld [vmem:[%s0 + $0xcc] sm:$0xff]
  %v44 = vld [vmem:[%s0 + $0xd4] sm:$0xff]
  %v45 = vld [vmem:[%s0 + $0xdc] sm:$0xf]
  %v46 = vld [vmem:[%s0 + $0xe0] sm:$0xff]
  %v47 = vld [vmem:[%s0 + $0xe8] sm:$0xff]
  %v48 = vld [vmem:[%s0 + $0xf0] sm:$0xff]
  %v49 = vld [vmem:[%s0 + $0xf8] sm:$0xf]
  %v50 = vld [vmem:[%s0 + $0xfc] sm:$0xff]
  %v51 = vld [vmem:[%s0 + $0x104] sm:$0xff]
  %v52 = vld [vmem:[%s0 + $0x10c] sm:$0xff]
  %v53 = vld [vmem:[%s0 + $0x114] sm:$0xf]
  %v54 = vld [vmem:[%s0 + $0x118] sm:$0xff]
  %v55 = vld [vmem:[%s0 + $0x120] sm:$0xff]
  %v56 = vld [vmem:[%s0 + $0x128] sm:$0xff]
  %v57 = vld [vmem:[%s0 + $0x130] sm:$0xf]
  %v58 = vld [vmem:[%s0 + $0x134] sm:$0xff]
  %v59 = vld [vmem:[%s0 + $0x13c] sm:$0xff]
  %v60 = vld [vmem:[%s0 + $0x144] sm:$0xff]
  %v61 = vld [vmem:[%s0 + $0x14c] sm:$0xf]
  %v62 = vld [vmem:[%s0 + $0x150] sm:$0xff]
  %v63 = vld [vmem:[%s0 + $0x158] sm:$0xff]
  %v64 = vld [vmem:[%s0 + $0x160] sm:$0xff]
  %v65 = vld [vmem:[%s0 + $0x168] sm:$0xf]
  %v66 = vld [vmem:[%s0 + $0x16c] sm:$0xff]
  %v67 = vld [vmem:[%s0 + $0x174] sm:$0xff]
  %v68 = vld [vmem:[%s0 + $0x17c] sm:$0xff]
  %v69 = vld [vmem:[%s0 + $0x184] sm:$0xf]
  %v70 = vld [vmem:[%s0 + $0x188] sm:$0xff]
  %v71 = vld [vmem:[%s0 + $0x190] sm:$0xff]
  %v72 = vld [vmem:[%s0 + $0x198] sm:$0xff]
  %v73 = vld [vmem:[%s0 + $0x1a0] sm:$0xf]
  %v74 = vld [vmem:[%s0 + $0x1a4] sm:$0xff]
  %v75 = vld [vmem:[%s0 + $0x1ac] sm:$0xff]
  %v76 = vld [vmem:[%s0 + $0x1b4] sm:$0xff]
  %v77 = vld [vmem:[%s0 + $0x1bc] sm:$0xf]
  %v78 = vld [vmem:[%s1] sm:$0xf]
  %v79 = vld [vmem:[%s1 + $0x4] sm:$0xf]
  %v80 = vld [vmem:[%s1 + $0x8] sm:$0xf]
  %v81 = vld [vmem:[%s1 + $0xc] sm:$0xf]
  %v82 = vld [vmem:[%s1 + $0x10] sm:$0xf]
  %v83 = vld [vmem:[%s1 + $0x14] sm:$0xf]
  %v84 = vld [vmem:[%s1 + $0x18] sm:$0xf]
  %v85 = vld [vmem:[%s1 + $0x1c] sm:$0xf]
  %v86 = vld [vmem:[%s1 + $0x20] sm:$0xf]
  %v87 = vld [vmem:[%s1 + $0x24] sm:$0xf]
  %v88 = vld [vmem:[%s1 + $0x28] sm:$0xf]
  %v89 = vld [vmem:[%s1 + $0x2c] sm:$0xf]
  %v90 = vld [vmem:[%s1 + $0x30] sm:$0xf]
  %v91 = vld [vmem:[%s1 + $0x34] sm:$0xf]
  %v92 = vld [vmem:[%s1 + $0x38] sm:$0xf]
  %v93 = vld [vmem:[%s1 + $0x3c] sm:$0xf]
  %v94 = vld [vmem:[%s1 + $0x40] sm:$0xf]
  %v95 = vld [vmem:[%s1 + $0x44] sm:$0xf]
  %v96 = vld [vmem:[%s1 + $0x48] sm:$0xf]
  %v97 = vld [vmem:[%s1 + $0x4c] sm:$0xf]
  %v98 = vld [vmem:[%s1 + $0x50] sm:$0xf]
  %v99 = vld [vmem:[%s1 + $0x54] sm:$0xf]
  %v100 = vld [vmem:[%s1 + $0x58] sm:$0xf]
  %v101 = vld [vmem:[%s1 + $0x5c] sm:$0xf]
  %v102 = vld [vmem:[%s1 + $0x60] sm:$0xf]
  %v103 = vld [vmem:[%s1 + $0x64] sm:$0xf]
  %v104 = vld [vmem:[%s1 + $0x68] sm:$0xf]
  %v105 = vld [vmem:[%s1 + $0x6c] sm:$0xf]
  %v106 = vld [vmem:[%s1 + $0x70] sm:$0xf]
  %v107 = vld [vmem:[%s1 + $0x74] sm:$0xf]
  %v108 = vld [vmem:[%s1 + $0x78] sm:$0xf]
  %v109 = vld [vmem:[%s1 + $0x7c] sm:$0xf]
  %v110 = vld [vmem:[%s1 + $0x80] sm:$0xf]
  %v111 = vld [vmem:[%s1 + $0x84] sm:$0xf]
  %v112 = vld [vmem:[%s1 + $0x88] sm:$0xf]
  %v113 = vld [vmem:[%s1 + $0x8c] sm:$0xf]
  %v114 = vld [vmem:[%s1 + $0x90] sm:$0xf]
  %v115 = vld [vmem:[%s1 + $0x94] sm:$0xf]
  %v116 = vld [vmem:[%s1 + $0x98] sm:$0xf]
  %v117 = vld [vmem:[%s1 + $0x9c] sm:$0xf]
  %v118 = vld [vmem:[%s1 + $0xa0] sm:$0xf]
  %v119 = vld [vmem:[%s1 + $0xa4] sm:$0xf]
  %v120 = vld [vmem:[%s1 + $0xa8] sm:$0xf]
  %v121 = vld [vmem:[%s1 + $0xac] sm:$0xf]
  %v122 = vld [vmem:[%s1 + $0xb0] sm:$0xf]
  %v123 = vld [vmem:[%s1 + $0xb4] sm:$0xf]
  %v124 = vld [vmem:[%s1 + $0xb8] sm:$0xf]
  %v125 = vld [vmem:[%s1 + $0xbc] sm:$0xf]
  %v126 = vld [vmem:[%s1 + $0xc0] sm:$0xf]
  %v127 = vld [vmem:[%s1 + $0xc4] sm:$0xf]
  %v128 = vld [vmem:[%s1 + $0xc8] sm:$0xf]
  %v129 = vld [vmem:[%s1 + $0xcc] sm:$0xf]
  %v130 = vld [vmem:[%s1 + $0xd0] sm:$0xf]
  %v131 = vld [vmem:[%s1 + $0xd4] sm:$0xf]
  %v132 = vld [vmem:[%s1 + $0xd8] sm:$0xf]
  %v133 = vld [vmem:[%s1 + $0xdc] sm:$0xf]
  %v134 = vld [vmem:[%s1 + $0xe0] sm:$0xf]
  %v135 = vld [vmem:[%s1 + $0xe4] sm:$0xf]
  %v136 = vld [vmem:[%s1 + $0xe8] sm:$0xf]
  %v137 = vld [vmem:[%s1 + $0xec] sm:$0xf]
  %v138 = vld [vmem:[%s1 + $0xf0] sm:$0xf]
  %v139 = vld [vmem:[%s1 + $0xf4] sm:$0xf]
  %v140 = vld [vmem:[%s1 + $0xf8] sm:$0xf]
  %v141 = vld [vmem:[%s1 + $0xfc] sm:$0xf]
  %v142 = vld [vmem:[%s1 + $0x100] sm:$0xf]
  %v143 = vld [vmem:[%s1 + $0x104] sm:$0xf]
  %v144 = vld [vmem:[%s1 + $0x108] sm:$0xf]
  %v145 = vld [vmem:[%s1 + $0x10c] sm:$0xf]
  %v146 = vld [vmem:[%s1 + $0x110] sm:$0xf]
  %v147 = vld [vmem:[%s1 + $0x114] sm:$0xf]
  %v148 = vld [vmem:[%s1 + $0x118] sm:$0xf]
  %v149 = vld [vmem:[%s1 + $0x11c] sm:$0xf]
  %v150 = vld [vmem:[%s1 + $0x120] sm:$0xf]
  %v151 = vld [vmem:[%s1 + $0x124] sm:$0xf]
  %v152 = vld [vmem:[%s1 + $0x128] sm:$0xf]
  %v153 = vld [vmem:[%s1 + $0x12c] sm:$0xf]
  %v154 = vld [vmem:[%s1 + $0x130] sm:$0xf]
  %v155 = vld [vmem:[%s1 + $0x134] sm:$0xf]
  %v156 = vld [vmem:[%s1 + $0x138] sm:$0xf]
  %v157 = vld [vmem:[%s1 + $0x13c] sm:$0xf]
  %v158 = vld [vmem:[%s1 + $0x140] sm:$0xf]
  %v159 = vld [vmem:[%s1 + $0x144] sm:$0xf]
  %v160 = vld [vmem:[%s1 + $0x148] sm:$0xf]
  %v161 = vld [vmem:[%s1 + $0x14c] sm:$0xf]
  %v162 = vld [vmem:[%s1 + $0x150] sm:$0xf]
  %v163 = vld [vmem:[%s1 + $0x154] sm:$0xf]
  %v164 = vld [vmem:[%s1 + $0x158] sm:$0xf]
  %v165 = vld [vmem:[%s1 + $0x15c] sm:$0xf]
  %v166 = vld [vmem:[%s1 + $0x160] sm:$0xf]
  %v167 = vld [vmem:[%s1 + $0x164] sm:$0xf]
  %v168 = vld [vmem:[%s1 + $0x168] sm:$0xf]
  %v169 = vld [vmem:[%s1 + $0x16c] sm:$0xf]
  %v170 = vld [vmem:[%s1 + $0x170] sm:$0xf]
  %v171 = vld [vmem:[%s1 + $0x174] sm:$0xf]
  %v172 = vld [vmem:[%s1 + $0x178] sm:$0xf]
  %v173 = vld [vmem:[%s1 + $0x17c] sm:$0xf]
  %v174 = vld [vmem:[%s1 + $0x180] sm:$0xf]
  %v175 = vld [vmem:[%s1 + $0x184] sm:$0xf]
  %v176 = vld [vmem:[%s1 + $0x188] sm:$0xf]
  %v177 = vld [vmem:[%s1 + $0x18c] sm:$0xf]
  %v178 = vld [vmem:[%s1 + $0x190] sm:$0xf]
  %v179 = vld [vmem:[%s1 + $0x194] sm:$0xf]
  %v180 = vld [vmem:[%s1 + $0x198] sm:$0xf]
  %v181 = vld [vmem:[%s1 + $0x19c] sm:$0xf]
  %v182 = vld [vmem:[%s1 + $0x1a0] sm:$0xf]
  %v183 = vld [vmem:[%s1 + $0x1a4] sm:$0xf]
  %v184 = vld [vmem:[%s1 + $0x1a8] sm:$0xf]
  %v185 = vld [vmem:[%s1 + $0x1ac] sm:$0xf]
  %v250 = vunpack.c.l.b16 %v14
  %v251 = vunpack.c.h.b16 %v14
  %v252 = vunpack.c.l.b16 %v15
  %v253 = vunpack.c.h.b16 %v15
  %v254 = vunpack.c.l.b16 %v16
  %v255 = vunpack.c.h.b16 %v16
  %v256 = vunpack.c.l.b16 %v17
  %v257 = vunpack.c.l.b16 %v18
  %v258 = vunpack.c.h.b16 %v18
  %v259 = vunpack.c.l.b16 %v19
  %v260 = vunpack.c.h.b16 %v19
  %v261 = vunpack.c.l.b16 %v20
  %v262 = vunpack.c.h.b16 %v20
  %v263 = vunpack.c.l.b16 %v21
  %v264 = vunpack.c.l.b16 %v22
  %v265 = vunpack.c.h.b16 %v22
  %v266 = vunpack.c.l.b16 %v23
  %v267 = vunpack.c.h.b16 %v23
  %v268 = vunpack.c.l.b16 %v24
  %v269 = vunpack.c.h.b16 %v24
  %v270 = vunpack.c.l.b16 %v25
  %v271 = vunpack.c.l.b16 %v26
  %v272 = vunpack.c.h.b16 %v26
  %v273 = vunpack.c.l.b16 %v27
  %v274 = vunpack.c.h.b16 %v27
  %v275 = vunpack.c.l.b16 %v28
  %v276 = vunpack.c.h.b16 %v28
  %v277 = vunpack.c.l.b16 %v29
  %v278 = vunpack.c.l.b16 %v30
  %v279 = vunpack.c.h.b16 %v30
  %v280 = vunpack.c.l.b16 %v31
  %v281 = vunpack.c.h.b16 %v31
  %v282 = vunpack.c.l.b16 %v32
  %v283 = vunpack.c.h.b16 %v32
  %v284 = vunpack.c.l.b16 %v33
  %v285 = vunpack.c.l.b16 %v34
  %v286 = vunpack.c.h.b16 %v34
  %v287 = vunpack.c.l.b16 %v35
  %v288 = vunpack.c.h.b16 %v35
  %v289 = vunpack.c.l.b16 %v36
  %v290 = vunpack.c.h.b16 %v36
  %v291 = vunpack.c.l.b16 %v37
  %v292 = vunpack.c.l.b16 %v38
  %v293 = vunpack.c.h.b16 %v38
  %v294 = vunpack.c.l.b16 %v39
  %v295 = vunpack.c.h.b16 %v39
  %v296 = vunpack.c.l.b16 %v40
  %v297 = vunpack.c.h.b16 %v40
  %v298 = vunpack.c.l.b16 %v41
  %v299 = vunpack.c.l.b16 %v42
  %v300 = vunpack.c.h.b16 %v42
  %v301 = vunpack.c.l.b16 %v43
  %v302 = vunpack.c.h.b16 %v43
  %v303 = vunpack.c.l.b16 %v44
  %v304 = vunpack.c.h.b16 %v44
  %v305 = vunpack.c.l.b16 %v45
  %v306 = vunpack.c.l.b16 %v46
  %v307 = vunpack.c.h.b16 %v46
  %v308 = vunpack.c.l.b16 %v47
  %v309 = vunpack.c.h.b16 %v47
  %v310 = vunpack.c.l.b16 %v48
  %v311 = vunpack.c.h.b16 %v48
  %v312 = vunpack.c.l.b16 %v49
  %v313 = vunpack.c.l.b16 %v50
  %v314 = vunpack.c.h.b16 %v50
  %v315 = vunpack.c.l.b16 %v51
  %v316 = vunpack.c.h.b16 %v51
  %v317 = vunpack.c.l.b16 %v52
  %v318 = vunpack.c.h.b16 %v52
  %v319 = vunpack.c.l.b16 %v53
  %v320 = vunpack.c.l.b16 %v54
  %v321 = vunpack.c.h.b16 %v54
  %v322 = vunpack.c.l.b16 %v55
  %v323 = vunpack.c.h.b16 %v55
  %v324 = vunpack.c.l.b16 %v56
  %v325 = vunpack.c.h.b16 %v56
  %v326 = vunpack.c.l.b16 %v57
  %v327 = vunpack.c.l.b16 %v58
  %v328 = vunpack.c.h.b16 %v58
  %v329 = vunpack.c.l.b16 %v59
  %v330 = vunpack.c.h.b16 %v59
  %v331 = vunpack.c.l.b16 %v60
  %v332 = vunpack.c.h.b16 %v60
  %v333 = vunpack.c.l.b16 %v61
  %v334 = vunpack.c.l.b16 %v62
  %v335 = vunpack.c.h.b16 %v62
  %v336 = vunpack.c.l.b16 %v63
  %v337 = vunpack.c.h.b16 %v63
  %v338 = vunpack.c.l.b16 %v64
  %v339 = vunpack.c.h.b16 %v64
  %v340 = vunpack.c.l.b16 %v65
  %v341 = vunpack.c.l.b16 %v66
  %v342 = vunpack.c.h.b16 %v66
  %v343 = vunpack.c.l.b16 %v67
  %v344 = vunpack.c.h.b16 %v67
  %v345 = vunpack.c.l.b16 %v68
  %v346 = vunpack.c.h.b16 %v68
  %v347 = vunpack.c.l.b16 %v69
  %v348 = vunpack.c.l.b16 %v70
  %v349 = vunpack.c.h.b16 %v70
  %v350 = vunpack.c.l.b16 %v71
  %v351 = vunpack.c.h.b16 %v71
  %v352 = vunpack.c.l.b16 %v72
  %v353 = vunpack.c.h.b16 %v72
  %v354 = vunpack.c.l.b16 %v73
  %v355 = vunpack.c.l.b16 %v74
  %v356 = vunpack.c.h.b16 %v74
  %v357 = vunpack.c.l.b16 %v75
  %v358 = vunpack.c.h.b16 %v75
  %v359 = vunpack.c.l.b16 %v76
  %v360 = vunpack.c.h.b16 %v76
  %v361 = vunpack.c.l.b16 %v77
  %v362 = vpack.c.b16 %v257, %v250
  %v363 = vpack.c.b16 %v258, %v251
  %v364 = vpack.c.b16 %v259, %v252
  %v365 = vpack.c.b16 %v260, %v253
  %v366 = vpack.c.b16 %v261, %v254
  %v367 = vpack.c.b16 %v262, %v255
  %v368 = vpack.c.b16 %v263, %v256
  %v369 = vpack.c.b16 %v271, %v264
  %v370 = vpack.c.b16 %v272, %v265
  %v371 = vpack.c.b16 %v273, %v266
  %v372 = vpack.c.b16 %v274, %v267
  %v373 = vpack.c.b16 %v275, %v268
  %v374 = vpack.c.b16 %v276, %v269
  %v375 = vpack.c.b16 %v277, %v270
  %v376 = vpack.c.b16 %v285, %v278
  %v377 = vpack.c.b16 %v286, %v279
  %v378 = vpack.c.b16 %v287, %v280
  %v379 = vpack.c.b16 %v288, %v281
  %v380 = vpack.c.b16 %v289, %v282
  %v381 = vpack.c.b16 %v290, %v283
  %v382 = vpack.c.b16 %v291, %v284
  %v383 = vpack.c.b16 %v299, %v292
  %v384 = vpack.c.b16 %v300, %v293
  %v385 = vpack.c.b16 %v301, %v294
  %v386 = vpack.c.b16 %v302, %v295
  %v387 = vpack.c.b16 %v303, %v296
  %v388 = vpack.c.b16 %v304, %v297
  %v389 = vpack.c.b16 %v305, %v298
  %v390 = vpack.c.b16 %v313, %v306
  %v391 = vpack.c.b16 %v314, %v307
  %v392 = vpack.c.b16 %v315, %v308
  %v393 = vpack.c.b16 %v316, %v309
  %v394 = vpack.c.b16 %v317, %v310
  %v395 = vpack.c.b16 %v318, %v311
  %v396 = vpack.c.b16 %v319, %v312
  %v397 = vpack.c.b16 %v327, %v320
  %v398 = vpack.c.b16 %v328, %v321
  %v399 = vpack.c.b16 %v329, %v322
  %v400 = vpack.c.b16 %v330, %v323
  %v401 = vpack.c.b16 %v331, %v324
  %v402 = vpack.c.b16 %v332, %v325
  %v403 = vpack.c.b16 %v333, %v326
  %v404 = vpack.c.b16 %v341, %v334
  %v405 = vpack.c.b16 %v342, %v335
  %v406 = vpack.c.b16 %v343, %v336
  %v407 = vpack.c.b16 %v344, %v337
  %v408 = vpack.c.b16 %v345, %v338
  %v409 = vpack.c.b16 %v346, %v339
  %v410 = vpack.c.b16 %v347, %v340
  %v411 = vpack.c.b16 %v355, %v348
  %v412 = vpack.c.b16 %v356, %v349
  %v413 = vpack.c.b16 %v357, %v350
  %v414 = vpack.c.b16 %v358, %v351
  %v415 = vpack.c.b16 %v359, %v352
  %v416 = vpack.c.b16 %v360, %v353
  %v417 = vpack.c.b16 %v361, %v354
  %v574 = vunpack.c.l.b16 %v78
  %v575 = vunpack.c.l.b16 %v79
  %v576 = vunpack.c.l.b16 %v80
  %v577 = vunpack.c.l.b16 %v81
  %v578 = vunpack.c.l.b16 %v82
  %v579 = vunpack.c.l.b16 %v83
  %v580 = vunpack.c.l.b16 %v84
  %v581 = vunpack.c.l.b16 %v85
  %v582 = vunpack.c.l.b16 %v86
  %v583 = vunpack.c.l.b16 %v87
  %v584 = vunpack.c.l.b16 %v88
  %v585 = vunpack.c.l.b16 %v89
  %v586 = vunpack.c.l.b16 %v90
  %v587 = vunpack.c.l.b16 %v91
  %v588 = vunpack.c.l.b16 %v92
  %v589 = vunpack.c.l.b16 %v93
  %v590 = vunpack.c.l.b16 %v94
  %v591 = vunpack.c.l.b16 %v95
  %v592 = vunpack.c.l.b16 %v96
  %v593 = vunpack.c.l.b16 %v97
  %v594 = vunpack.c.l.b16 %v98
  %v595 = vunpack.c.l.b16 %v99
  %v596 = vunpack.c.l.b16 %v100
  %v597 = vunpack.c.l.b16 %v101
  %v598 = vunpack.c.l.b16 %v102
  %v599 = vunpack.c.l.b16 %v103
  %v600 = vunpack.c.l.b16 %v104
  %v601 = vunpack.c.l.b16 %v105
  %v602 = vunpack.c.l.b16 %v106
  %v603 = vunpack.c.l.b16 %v107
  %v604 = vunpack.c.l.b16 %v108
  %v605 = vunpack.c.l.b16 %v109
  %v606 = vunpack.c.l.b16 %v110
  %v607 = vunpack.c.l.b16 %v111
  %v608 = vunpack.c.l.b16 %v112
  %v609 = vunpack.c.l.b16 %v113
  %v610 = vunpack.c.l.b16 %v114
  %v611 = vunpack.c.l.b16 %v115
  %v612 = vunpack.c.l.b16 %v116
  %v613 = vunpack.c.l.b16 %v117
  %v614 = vunpack.c.l.b16 %v118
  %v615 = vunpack.c.l.b16 %v119
  %v616 = vunpack.c.l.b16 %v120
  %v617 = vunpack.c.l.b16 %v121
  %v618 = vunpack.c.l.b16 %v122
  %v619 = vunpack.c.l.b16 %v123
  %v620 = vunpack.c.l.b16 %v124
  %v621 = vunpack.c.l.b16 %v125
  %v622 = vunpack.c.l.b16 %v126
  %v623 = vunpack.c.l.b16 %v127
  %v624 = vunpack.c.l.b16 %v128
  %v625 = vunpack.c.l.b16 %v129
  %v626 = vunpack.c.l.b16 %v130
  %v627 = vunpack.c.l.b16 %v131
  %v628 = vunpack.c.l.b16 %v132
  %v629 = vunpack.c.l.b16 %v133
  %v630 = vunpack.c.l.b16 %v134
  %v631 = vunpack.c.l.b16 %v135
  %v632 = vunpack.c.l.b16 %v136
  %v633 = vunpack.c.l.b16 %v137
  %v634 = vunpack.c.l.b16 %v138
  %v635 = vunpack.c.l.b16 %v139
  %v636 = vunpack.c.l.b16 %v140
  %v637 = vunpack.c.l.b16 %v141
  %v638 = vunpack.c.l.b16 %v142
  %v639 = vunpack.c.l.b16 %v143
  %v640 = vunpack.c.l.b16 %v144
  %v641 = vunpack.c.l.b16 %v145
  %v642 = vunpack.c.l.b16 %v146
  %v643 = vunpack.c.l.b16 %v147
  %v644 = vunpack.c.l.b16 %v148
  %v645 = vunpack.c.l.b16 %v149
  %v646 = vunpack.c.l.b16 %v150
  %v647 = vunpack.c.l.b16 %v151
  %v648 = vunpack.c.l.b16 %v152
  %v649 = vunpack.c.l.b16 %v153
  %v650 = vunpack.c.l.b16 %v154
  %v651 = vunpack.c.l.b16 %v155
  %v652 = vunpack.c.l.b16 %v156
  %v653 = vunpack.c.l.b16 %v157
  %v654 = vunpack.c.l.b16 %v158
  %v655 = vunpack.c.l.b16 %v159
  %v656 = vunpack.c.l.b16 %v160
  %v657 = vunpack.c.l.b16 %v161
  %v658 = vunpack.c.l.b16 %v162
  %v659 = vunpack.c.l.b16 %v163
  %v660 = vunpack.c.l.b16 %v164
  %v661 = vunpack.c.l.b16 %v165
  %v662 = vunpack.c.l.b16 %v166
  %v663 = vunpack.c.l.b16 %v167
  %v664 = vunpack.c.l.b16 %v168
  %v665 = vunpack.c.l.b16 %v169
  %v666 = vunpack.c.l.b16 %v170
  %v667 = vunpack.c.l.b16 %v171
  %v668 = vunpack.c.l.b16 %v172
  %v669 = vunpack.c.l.b16 %v173
  %v670 = vunpack.c.l.b16 %v174
  %v671 = vunpack.c.l.b16 %v175
  %v672 = vunpack.c.l.b16 %v176
  %v673 = vunpack.c.l.b16 %v177
  %v674 = vunpack.c.l.b16 %v178
  %v675 = vunpack.c.l.b16 %v179
  %v676 = vunpack.c.l.b16 %v180
  %v677 = vunpack.c.l.b16 %v181
  %v678 = vunpack.c.l.b16 %v182
  %v679 = vunpack.c.l.b16 %v183
  %v680 = vunpack.c.l.b16 %v184
  %v681 = vunpack.c.l.b16 %v185
  %v682 = vpack.c.b16 %v575, %v574
  %v683 = vpack.c.b16 %v577, %v576
  %v684 = vpack.c.b16 %v579, %v578
  %v685 = vpack.c.b16 %v581, %v580
  %v686 = vpack.c.b16 %v583, %v582
  %v687 = vpack.c.b16 %v585, %v584
  %v688 = vpack.c.b16 %v587, %v586
  %v689 = vpack.c.b16 %v589, %v588
  %v690 = vpack.c.b16 %v591, %v590
  %v691 = vpack.c.b16 %v593, %v592
  %v692 = vpack.c.b16 %v595, %v594
  %v693 = vpack.c.b16 %v597, %v596
  %v694 = vpack.c.b16 %v599, %v598
  %v695 = vpack.c.b16 %v601, %v600
  %v696 = vpack.c.b16 %v603, %v602
  %v697 = vpack.c.b16 %v605, %v604
  %v698 = vpack.c.b16 %v607, %v606
  %v699 = vpack.c.b16 %v609, %v608
  %v700 = vpack.c.b16 %v611, %v610
  %v701 = vpack.c.b16 %v613, %v612
  %v702 = vpack.c.b16 %v615, %v614
  %v703 = vpack.c.b16 %v617, %v616
  %v704 = vpack.c.b16 %v619, %v618
  %v705 = vpack.c.b16 %v621, %v620
  %v706 = vpack.c.b16 %v623, %v622
  %v707 = vpack.c.b16 %v625, %v624
  %v708 = vpack.c.b16 %v627, %v626
  %v709 = vpack.c.b16 %v629, %v628
  %v710 = vpack.c.b16 %v631, %v630
  %v711 = vpack.c.b16 %v633, %v632
  %v712 = vpack.c.b16 %v635, %v634
  %v713 = vpack.c.b16 %v637, %v636
  %v714 = vpack.c.b16 %v639, %v638
  %v715 = vpack.c.b16 %v641, %v640
  %v716 = vpack.c.b16 %v643, %v642
  %v717 = vpack.c.b16 %v645, %v644
  %v718 = vpack.c.b16 %v647, %v646
  %v719 = vpack.c.b16 %v649, %v648
  %v720 = vpack.c.b16 %v651, %v650
  %v721 = vpack.c.b16 %v653, %v652
  %v722 = vpack.c.b16 %v655, %v654
  %v723 = vpack.c.b16 %v657, %v656
  %v724 = vpack.c.b16 %v659, %v658
  %v725 = vpack.c.b16 %v661, %v660
  %v726 = vpack.c.b16 %v663, %v662
  %v727 = vpack.c.b16 %v665, %v664
  %v728 = vpack.c.b16 %v667, %v666
  %v729 = vpack.c.b16 %v669, %v668
  %v730 = vpack.c.b16 %v671, %v670
  %v731 = vpack.c.b16 %v673, %v672
  %v732 = vpack.c.b16 %v675, %v674
  %v733 = vpack.c.b16 %v677, %v676
  %v734 = vpack.c.b16 %v679, %v678
  %v735 = vpack.c.b16 %v681, %v680
  %vm790 = vcmask 785408
  %v792 = vsel %vm790, %v368, 0
  %v795 = vsel %vm790, %v375, 0
  %v798 = vsel %vm790, %v382, 0
  %v801 = vsel %vm790, %v389, 0
  %v804 = vsel %vm790, %v396, 0
  %v807 = vsel %vm790, %v403, 0
  %v810 = vsel %vm790, %v410, 0
  %v813 = vsel %vm790, %v417, 0
  %815 = vmatprep.subr.bf16.mxu0 0
  %816 = vmatpush1.bf16.msra.mxu0 %v682
  %817 = vmatprep.subr.bf16.mxu0 0
  %818 = vmatpush1.bf16.msra.mxu0 %v683
  %819 = vmatprep.subr.bf16.mxu0 0
  %820 = vmatpush1.bf16.msra.mxu0 %v684
  %821 = vmatprep.subr.bf16.mxu0 0
  %822 = vmatpush1.bf16.msra.mxu0 %v685
  %823 = vmatprep.subr.bf16.mxu0 0
  %824 = vmatpush1.bf16.msra.mxu0 %v686
  %825 = vmatprep.subr.bf16.mxu0 0
  %826 = vmatpush1.bf16.msra.mxu0 %v687
  %827 = vmatprep.subr.bf16.mxu0 0
  %828 = vmatpush1.bf16.msra.mxu0 %v688
  %829 = vmatprep.subr.bf16.mxu0 0
  %830 = vmatpush1.bf16.msra.mxu0 %v689
  %831 = vmatprep.subr.bf16.mxu0 0
  %832 = vmatpush1.bf16.msra.mxu0 %v690
  %833 = vmatprep.subr.bf16.mxu0 0
  %834 = vmatpush1.bf16.msra.mxu0 %v691
  %835 = vmatprep.subr.bf16.mxu0 0
  %836 = vmatpush1.bf16.msra.mxu0 %v692
  %837 = vmatprep.subr.bf16.mxu0 0
  %838 = vmatpush1.bf16.msra.mxu0 %v693
  %839 = vmatprep.subr.bf16.mxu0 0
  %840 = vmatpush1.bf16.msra.mxu0 %v694
  %841 = vmatprep.subr.bf16.mxu0 0
  %842 = vmatpush1.bf16.msra.mxu0 %v695
  %843 = vmatprep.subr.bf16.mxu0 0
  %844 = vmatpush1.bf16.msra.mxu0 %v696
  %845 = vmatprep.subr.bf16.mxu0 0
  %846 = vmatpush1.bf16.msra.mxu0 %v697
  %847 = vmatprep.mubr.bf16.mxu0 %v363
  %848 = vmatmul.mubr.bf16.gmra.mrb[0].mxu0 %v362
  %v849 = vpop.f32.mrb[0].mxu0
  %v850 = vadd.f32 0.0, %v849
  %v851 = vpop.f32.mrb[0].mxu0
  %v852 = vpop.f32.mrb[0].mxu0
  %v853 = vadd.f32 0.0, %v852
  %v854 = vpop.f32.mrb[0].mxu0
  %855 = vmatprep.mubr.bf16.mxu0 %v370
  %856 = vmatmul.mubr.bf16.gmra.mrb[0].mxu0 %v369
  %v857 = vpop.f32.mrb[0].mxu0
  %v858 = vadd.f32 0.0, %v857
  %v859 = vpop.f32.mrb[0].mxu0
  %v860 = vpop.f32.mrb[0].mxu0
  %v861 = vadd.f32 0.0, %v860
  %v862 = vpop.f32.mrb[0].mxu0
  %863 = vmatprep.mubr.bf16.mxu0 %v377
  %864 = vmatmul.mubr.bf16.gmra.mrb[0].mxu0 %v376
  %v865 = vpop.f32.mrb[0].mxu0
  %v866 = vadd.f32 0.0, %v865
  %v867 = vpop.f32.mrb[0].mxu0
  %v868 = vpop.f32.mrb[0].mxu0
  %v869 = vadd.f32 0.0, %v868
  %v870 = vpop.f32.mrb[0].mxu0
  %871 = vmatprep.mubr.bf16.mxu0 %v384
  %872 = vmatmul.mubr.bf16.gmra.mrb[0].mxu0 %v383
  %v873 = vpop.f32.mrb[0].mxu0
  %v874 = vadd.f32 0.0, %v873
  %v875 = vpop.f32.mrb[0].mxu0
  %v876 = vpop.f32.mrb[0].mxu0
  %v877 = vadd.f32 0.0, %v876
  %v878 = vpop.f32.mrb[0].mxu0
  %879 = vmatprep.mubr.bf16.mxu0 %v391
  %880 = vmatmul.mubr.bf16.gmra.mrb[0].mxu0 %v390
  %v881 = vpop.f32.mrb[0].mxu0
  %v882 = vadd.f32 0.0, %v881
  %v883 = vpop.f32.mrb[0].mxu0
  %v884 = vpop.f32.mrb[0].mxu0
  %v885 = vadd.f32 0.0, %v884
  %v886 = vpop.f32.mrb[0].mxu0
  %887 = vmatprep.mubr.bf16.mxu0 %v398
  %888 = vmatmul.mubr.bf16.gmra.mrb[0].mxu0 %v397
  %v889 = vpop.f32.mrb[0].mxu0
  %v890 = vadd.f32 0.0, %v889
  %v891 = vpop.f32.mrb[0].mxu0
  %v892 = vpop.f32.mrb[0].mxu0
  %v893 = vadd.f32 0.0, %v892
  %v894 = vpop.f32.mrb[0].mxu0
  %895 = vmatprep.mubr.bf16.mxu0 %v405
  %896 = vmatmul.mubr.bf16.gmra.mrb[0].mxu0 %v404
  %v897 = vpop.f32.mrb[0].mxu0
  %v898 = vadd.f32 0.0, %v897
  %v899 = vpop.f32.mrb[0].mxu0
  %v900 = vpop.f32.mrb[0].mxu0
  %v901 = vadd.f32 0.0, %v900
  %v902 = vpop.f32.mrb[0].mxu0
  %903 = vmatprep.mubr.bf16.mxu0 %v412
  %904 = vmatmul.mubr.bf16.gmra.mrb[0].mxu0 %v411
  %v905 = vpop.f32.mrb[0].mxu0
  %v906 = vadd.f32 0.0, %v905
  %v907 = vpop.f32.mrb[0].mxu0
  %v908 = vpop.f32.mrb[0].mxu0
  %v909 = vadd.f32 0.0, %v908
  %v910 = vpop.f32.mrb[0].mxu0
  %911 = vdwg.mxu0
  %912 = vmatprep.subr.bf16.mxu0 0
  %913 = vmatpush1.bf16.msra.mxu0 %v698
  %914 = vmatprep.subr.bf16.mxu0 0
  %915 = vmatpush1.bf16.msra.mxu0 %v699
  %916 = vmatprep.subr.bf16.mxu0 0
  %917 = vmatpush1.bf16.msra.mxu0 %v700
  %918 = vmatprep.subr.bf16.mxu0 0
  %919 = vmatpush1.bf16.msra.mxu0 %v701
  %920 = vmatprep.subr.bf16.mxu0 0
  %921 = vmatpush1.bf16.msra.mxu0 %v702
  %922 = vmatprep.subr.bf16.mxu0 0
  %923 = vmatpush1.bf16.msra.mxu0 %v703
  %924 = vmatprep.subr.bf16.mxu0 0
  %925 = vmatpush1.bf16.msra.mxu0 %v704
  %926 = vmatprep.subr.bf16.mxu0 0
  %927 = vmatpush1.bf16.msra.mxu0 %v705
  %928 = vmatprep.subr.bf16.mxu0 0
  %929 = vmatpush1.bf16.msra.mxu0 %v706
  %930 = vmatprep.subr.bf16.mxu0 0
  %931 = vmatpush1.bf16.msra.mxu0 %v707
  %932 = vmatprep.subr.bf16.mxu0 0
  %933 = vmatpush1.bf16.msra.mxu0 %v708
  %934 = vmatprep.subr.bf16.mxu0 0
  %935 = vmatpush1.bf16.msra.mxu0 %v709
  %936 = vmatprep.subr.bf16.mxu0 0
  %937 = vmatpush1.bf16.msra.mxu0 %v710
  %938 = vmatprep.subr.bf16.mxu0 0
  %939 = vmatpush1.bf16.msra.mxu0 %v711
  %940 = vmatprep.subr.bf16.mxu0 0
  %941 = vmatpush1.bf16.msra.mxu0 %v712
  %942 = vmatprep.subr.bf16.mxu0 0
  %943 = vmatpush1.bf16.msra.mxu0 %v713
  %944 = vmatprep.mubr.bf16.mxu0 %v365
  %945 = vmatmul.mubr.bf16.gmra.mrb[0].mxu0 %v364
  %v946 = vpop.f32.mrb[0].mxu0
  %v947 = vadd.f32 %v850, %v946
  %v948 = vpop.f32.mrb[0].mxu0
  %v949 = vpop.f32.mrb[0].mxu0
  %v950 = vadd.f32 %v853, %v949
  %v951 = vpop.f32.mrb[0].mxu0
  %952 = vmatprep.mubr.bf16.mxu0 %v372
  %953 = vmatmul.mubr.bf16.gmra.mrb[0].mxu0 %v371
  %v954 = vpop.f32.mrb[0].mxu0
  %v955 = vadd.f32 %v858, %v954
  %v956 = vpop.f32.mrb[0].mxu0
  %v957 = vpop.f32.mrb[0].mxu0
  %v958 = vadd.f32 %v861, %v957
  %v959 = vpop.f32.mrb[0].mxu0
  %960 = vmatprep.mubr.bf16.mxu0 %v379
  %961 = vmatmul.mubr.bf16.gmra.mrb[0].mxu0 %v378
  %v962 = vpop.f32.mrb[0].mxu0
  %v963 = vadd.f32 %v866, %v962
  %v964 = vpop.f32.mrb[0].mxu0
  %v965 = vpop.f32.mrb[0].mxu0
  %v966 = vadd.f32 %v869, %v965
  %v967 = vpop.f32.mrb[0].mxu0
  %968 = vmatprep.mubr.bf16.mxu0 %v386
  %969 = vmatmul.mubr.bf16.gmra.mrb[0].mxu0 %v385
  %v970 = vpop.f32.mrb[0].mxu0
  %v971 = vadd.f32 %v874, %v970
  %v972 = vpop.f32.mrb[0].mxu0
  %v973 = vpop.f32.mrb[0].mxu0
  %v974 = vadd.f32 %v877, %v973
  %v975 = vpop.f32.mrb[0].mxu0
  %976 = vmatprep.mubr.bf16.mxu0 %v393
  %977 = vmatmul.mubr.bf16.gmra.mrb[0].mxu0 %v392
  %v978 = vpop.f32.mrb[0].mxu0
  %v979 = vadd.f32 %v882, %v978
  %v980 = vpop.f32.mrb[0].mxu0
  %v981 = vpop.f32.mrb[0].mxu0
  %v982 = vadd.f32 %v885, %v981
  %v983 = vpop.f32.mrb[0].mxu0
  %984 = vmatprep.mubr.bf16.mxu0 %v400
  %985 = vmatmul.mubr.bf16.gmra.mrb[0].mxu0 %v399
  %v986 = vpop.f32.mrb[0].mxu0
  %v987 = vadd.f32 %v890, %v986
  %v988 = vpop.f32.mrb[0].mxu0
  %v989 = vpop.f32.mrb[0].mxu0
  %v990 = vadd.f32 %v893, %v989
  %v991 = vpop.f32.mrb[0].mxu0
  %992 = vmatprep.mubr.bf16.mxu0 %v407
  %993 = vmatmul.mubr.bf16.gmra.mrb[0].mxu0 %v406
  %v994 = vpop.f32.mrb[0].mxu0
  %v995 = vadd.f32 %v898, %v994
  %v996 = vpop.f32.mrb[0].mxu0
  %v997 = vpop.f32.mrb[0].mxu0
  %v998 = vadd.f32 %v901, %v997
  %v999 = vpop.f32.mrb[0].mxu0
  %1000 = vmatprep.mubr.bf16.mxu0 %v414
  %1001 = vmatmul.mubr.bf16.gmra.mrb[0].mxu0 %v413
  %v1002 = vpop.f32.mrb[0].mxu0
  %v1003 = vadd.f32 %v906, %v1002
  %v1004 = vpop.f32.mrb[0].mxu0
  %v1005 = vpop.f32.mrb[0].mxu0
  %v1006 = vadd.f32 %v909, %v1005
  %v1007 = vpop.f32.mrb[0].mxu0
  %1008 = vdwg.mxu0
  %1009 = vmatprep.subr.bf16.mxu0 0
  %1010 = vmatpush1.bf16.msra.mxu0 %v714
  %1011 = vmatprep.subr.bf16.mxu0 0
  %1012 = vmatpush1.bf16.msra.mxu0 %v715
  %1013 = vmatprep.subr.bf16.mxu0 0
  %1014 = vmatpush1.bf16.msra.mxu0 %v716
  %1015 = vmatprep.subr.bf16.mxu0 0
  %1016 = vmatpush1.bf16.msra.mxu0 %v717
  %1017 = vmatprep.subr.bf16.mxu0 0
  %1018 = vmatpush1.bf16.msra.mxu0 %v718
  %1019 = vmatprep.subr.bf16.mxu0 0
  %1020 = vmatpush1.bf16.msra.mxu0 %v719
  %1021 = vmatprep.subr.bf16.mxu0 0
  %1022 = vmatpush1.bf16.msra.mxu0 %v720
  %1023 = vmatprep.subr.bf16.mxu0 0
  %1024 = vmatpush1.bf16.msra.mxu0 %v721
  %1025 = vmatprep.subr.bf16.mxu0 0
  %1026 = vmatpush1.bf16.msra.mxu0 %v722
  %1027 = vmatprep.subr.bf16.mxu0 0
  %1028 = vmatpush1.bf16.msra.mxu0 %v723
  %1029 = vmatprep.subr.bf16.mxu0 0
  %1030 = vmatpush1.bf16.msra.mxu0 %v724
  %1031 = vmatprep.subr.bf16.mxu0 0
  %1032 = vmatpush1.bf16.msra.mxu0 %v725
  %1033 = vmatprep.subr.bf16.mxu0 0
  %1034 = vmatpush1.bf16.msra.mxu0 %v726
  %1035 = vmatprep.subr.bf16.mxu0 0
  %1036 = vmatpush1.bf16.msra.mxu0 %v727
  %1037 = vmatprep.subr.bf16.mxu0 0
  %1038 = vmatpush1.bf16.msra.mxu0 %v728
  %1039 = vmatprep.subr.bf16.mxu0 0
  %1040 = vmatpush1.bf16.msra.mxu0 %v729
  %1041 = vmatprep.mubr.bf16.mxu0 %v367
  %1042 = vmatmul.mubr.bf16.gmra.mrb[0].mxu0 %v366
  %v1043 = vpop.f32.mrb[0].mxu0
  %v1044 = vadd.f32 %v947, %v1043
  %v1045 = vpop.f32.mrb[0].mxu0
  %v1046 = vpop.f32.mrb[0].mxu0
  %v1047 = vadd.f32 %v950, %v1046
  %v1048 = vpop.f32.mrb[0].mxu0
  %1049 = vmatprep.mubr.bf16.mxu0 %v374
  %1050 = vmatmul.mubr.bf16.gmra.mrb[0].mxu0 %v373
  %v1051 = vpop.f32.mrb[0].mxu0
  %v1052 = vadd.f32 %v955, %v1051
  %v1053 = vpop.f32.mrb[0].mxu0
  %v1054 = vpop.f32.mrb[0].mxu0
  %v1055 = vadd.f32 %v958, %v1054
  %v1056 = vpop.f32.mrb[0].mxu0
  %1057 = vmatprep.mubr.bf16.mxu0 %v381
  %1058 = vmatmul.mubr.bf16.gmra.mrb[0].mxu0 %v380
  %v1059 = vpop.f32.mrb[0].mxu0
  %v1060 = vadd.f32 %v963, %v1059
  %v1061 = vpop.f32.mrb[0].mxu0
  %v1062 = vpop.f32.mrb[0].mxu0
  %v1063 = vadd.f32 %v966, %v1062
  %v1064 = vpop.f32.mrb[0].mxu0
  %1065 = vmatprep.mubr.bf16.mxu0 %v388
  %1066 = vmatmul.mubr.bf16.gmra.mrb[0].mxu0 %v387
  %v1067 = vpop.f32.mrb[0].mxu0
  %v1068 = vadd.f32 %v971, %v1067
  %v1069 = vpop.f32.mrb[0].mxu0
  %v1070 = vpop.f32.mrb[0].mxu0
  %v1071 = vadd.f32 %v974, %v1070
  %v1072 = vpop.f32.mrb[0].mxu0
  %1073 = vmatprep.mubr.bf16.mxu0 %v395
  %1074 = vmatmul.mubr.bf16.gmra.mrb[0].mxu0 %v394
  %v1075 = vpop.f32.mrb[0].mxu0
  %v1076 = vadd.f32 %v979, %v1075
  %v1077 = vpop.f32.mrb[0].mxu0
  %v1078 = vpop.f32.mrb[0].mxu0
  %v1079 = vadd.f32 %v982, %v1078
  %v1080 = vpop.f32.mrb[0].mxu0
  %1081 = vmatprep.mubr.bf16.mxu0 %v402
  %1082 = vmatmul.mubr.bf16.gmra.mrb[0].mxu0 %v401
  %v1083 = vpop.f32.mrb[0].mxu0
  %v1084 = vadd.f32 %v987, %v1083
  %v1085 = vpop.f32.mrb[0].mxu0
  %v1086 = vpop.f32.mrb[0].mxu0
  %v1087 = vadd.f32 %v990, %v1086
  %v1088 = vpop.f32.mrb[0].mxu0
  %1089 = vmatprep.mubr.bf16.mxu0 %v409
  %1090 = vmatmul.mubr.bf16.gmra.mrb[0].mxu0 %v408
  %v1091 = vpop.f32.mrb[0].mxu0
  %v1092 = vadd.f32 %v995, %v1091
  %v1093 = vpop.f32.mrb[0].mxu0
  %v1094 = vpop.f32.mrb[0].mxu0
  %v1095 = vadd.f32 %v998, %v1094
  %v1096 = vpop.f32.mrb[0].mxu0
  %1097 = vmatprep.mubr.bf16.mxu0 %v416
  %1098 = vmatmul.mubr.bf16.gmra.mrb[0].mxu0 %v415
  %v1099 = vpop.f32.mrb[0].mxu0
  %v1100 = vadd.f32 %v1003, %v1099
  %v1101 = vpop.f32.mrb[0].mxu0
  %v1102 = vpop.f32.mrb[0].mxu0
  %v1103 = vadd.f32 %v1006, %v1102
  %v1104 = vpop.f32.mrb[0].mxu0
  %1105 = vdwg.mxu0
  %1106 = vmatprep.subr.bf16.mxu0 0
  %1107 = vmatpush1.bf16.msra.mxu0 %v730
  %1108 = vmatprep.subr.bf16.mxu0 0
  %1109 = vmatpush1.bf16.msra.mxu0 %v731
  %1110 = vmatprep.subr.bf16.mxu0 0
  %1111 = vmatpush1.bf16.msra.mxu0 %v732
  %1112 = vmatprep.subr.bf16.mxu0 0
  %1113 = vmatpush1.bf16.msra.mxu0 %v733
  %1114 = vmatprep.subr.bf16.mxu0 0
  %1115 = vmatpush1.bf16.msra.mxu0 %v734
  %1116 = vmatprep.subr.bf16.mxu0 0
  %1117 = vmatpush1.bf16.msra.mxu0 %v735
  %1118 = vmatprep.subr.bf16.mxu0 0
  %1119 = vmatpush1.bf16.msra.mxu0 0
  %1120 = vmatprep.subr.bf16.mxu0 0
  %1121 = vmatpush1.bf16.msra.mxu0 0
  %1122 = vmatprep.subr.bf16.mxu0 0
  %1123 = vmatpush1.bf16.msra.mxu0 0
  %1124 = vmatprep.subr.bf16.mxu0 0
  %1125 = vmatpush1.bf16.msra.mxu0 0
  %1126 = vmatprep.subr.bf16.mxu0 0
  %1127 = vmatpush1.bf16.msra.mxu0 0
  %1128 = vmatprep.subr.bf16.mxu0 0
  %1129 = vmatpush1.bf16.msra.mxu0 0
  %1130 = vmatprep.subr.bf16.mxu0 0
  %1131 = vmatpush1.bf16.msra.mxu0 0
  %1132 = vmatprep.subr.bf16.mxu0 0
  %1133 = vmatpush1.bf16.msra.mxu0 0
  %1134 = vmatprep.subr.bf16.mxu0 0
  %1135 = vmatpush1.bf16.msra.mxu0 0
  %1136 = vmatprep.subr.bf16.mxu0 0
  %1137 = vmatpush1.bf16.msra.mxu0 0
  %1138 = vmatprep.mubr.bf16.mxu0 0
  %1139 = vmatmul.mubr.bf16.gmra.mrb[0].mxu0 %v792
  %v1140 = vpop.f32.mrb[0].mxu0
  %v1141 = vadd.f32 %v1044, %v1140
  %v1142 = vpop.f32.mrb[0].mxu0
  %v1143 = vpop.f32.mrb[0].mxu0
  %v1144 = vadd.f32 %v1047, %v1143
  %v1145 = vpop.f32.mrb[0].mxu0
  %1146 = vmatprep.mubr.bf16.mxu0 0
  %1147 = vmatmul.mubr.bf16.gmra.mrb[0].mxu0 %v795
  %v1148 = vpop.f32.mrb[0].mxu0
  %v1149 = vadd.f32 %v1052, %v1148
  %v1150 = vpop.f32.mrb[0].mxu0
  %v1151 = vpop.f32.mrb[0].mxu0
  %v1152 = vadd.f32 %v1055, %v1151
  %v1153 = vpop.f32.mrb[0].mxu0
  %1154 = vmatprep.mubr.bf16.mxu0 0
  %1155 = vmatmul.mubr.bf16.gmra.mrb[0].mxu0 %v798
  %v1156 = vpop.f32.mrb[0].mxu0
  %v1157 = vadd.f32 %v1060, %v1156
  %v1158 = vpop.f32.mrb[0].mxu0
  %v1159 = vpop.f32.mrb[0].mxu0
  %v1160 = vadd.f32 %v1063, %v1159
  %v1161 = vpop.f32.mrb[0].mxu0
  %1162 = vmatprep.mubr.bf16.mxu0 0
  %1163 = vmatmul.mubr.bf16.gmra.mrb[0].mxu0 %v801
  %v1164 = vpop.f32.mrb[0].mxu0
  %v1165 = vadd.f32 %v1068, %v1164
  %v1166 = vpop.f32.mrb[0].mxu0
  %v1167 = vpop.f32.mrb[0].mxu0
  %v1168 = vadd.f32 %v1071, %v1167
  %v1169 = vpop.f32.mrb[0].mxu0
  %1170 = vmatprep.mubr.bf16.mxu0 0
  %1171 = vmatmul.mubr.bf16.gmra.mrb[0].mxu0 %v804
  %v1172 = vpop.f32.mrb[0].mxu0
  %v1173 = vadd.f32 %v1076, %v1172
  %v1174 = vpop.f32.mrb[0].mxu0
  %v1175 = vpop.f32.mrb[0].mxu0
  %v1176 = vadd.f32 %v1079, %v1175
  %v1177 = vpop.f32.mrb[0].mxu0
  %1178 = vmatprep.mubr.bf16.mxu0 0
  %1179 = vmatmul.mubr.bf16.gmra.mrb[0].mxu0 %v807
  %v1180 = vpop.f32.mrb[0].mxu0
  %v1181 = vadd.f32 %v1084, %v1180
  %v1182 = vpop.f32.mrb[0].mxu0
  %v1183 = vpop.f32.mrb[0].mxu0
  %v1184 = vadd.f32 %v1087, %v1183
  %v1185 = vpop.f32.mrb[0].mxu0
  %1186 = vmatprep.mubr.bf16.mxu0 0
  %1187 = vmatmul.mubr.bf16.gmra.mrb[0].mxu0 %v810
  %v1188 = vpop.f32.mrb[0].mxu0
  %v1189 = vadd.f32 %v1092, %v1188
  %v1190 = vpop.f32.mrb[0].mxu0
  %v1191 = vpop.f32.mrb[0].mxu0
  %v1192 = vadd.f32 %v1095, %v1191
  %v1193 = vpop.f32.mrb[0].mxu0
  %1194 = vmatprep.mubr.bf16.mxu0 0
  %1195 = vmatmul.mubr.bf16.gmra.mrb[0].mxu0 %v813
  %v1196 = vpop.f32.mrb[0].mxu0
  %v1197 = vadd.f32 %v1100, %v1196
  %v1198 = vpop.f32.mrb[0].mxu0
  %v1199 = vpop.f32.mrb[0].mxu0
  %v1200 = vadd.f32 %v1103, %v1199
  %v1201 = vpop.f32.mrb[0].mxu0
  %1202 = vdwg.mxu0
  %vm1203 = vcmask 261120
  %1204 = vst.msk [vmem:[%s2] sm:$0xff] %vm1203, %v1141
  %1205 = vst.msk [vmem:[%s2 + $0x8] sm:$0xff] %vm1203, %v1144
  %1206 = vst.msk [vmem:[%s2 + $0x10] sm:$0xff] %vm1203, %v1149
  %1207 = vst.msk [vmem:[%s2 + $0x18] sm:$0xff] %vm1203, %v1152
  %1208 = vst.msk [vmem:[%s2 + $0x20] sm:$0xff] %vm1203, %v1157
  %1209 = vst.msk [vmem:[%s2 + $0x28] sm:$0xff] %vm1203, %v1160
  %1210 = vst.msk [vmem:[%s2 + $0x30] sm:$0xff] %vm1203, %v1165
  %1211 = vst.msk [vmem:[%s2 + $0x38] sm:$0xff] %vm1203, %v1168
  %1212 = vst.msk [vmem:[%s2 + $0x40] sm:$0xff] %vm1203, %v1173
  %1213 = vst.msk [vmem:[%s2 + $0x48] sm:$0xff] %vm1203, %v1176
  %1214 = vst.msk [vmem:[%s2 + $0x50] sm:$0xff] %vm1203, %v1181
  %1215 = vst.msk [vmem:[%s2 + $0x58] sm:$0xff] %vm1203, %v1184
  %1216 = vst.msk [vmem:[%s2 + $0x60] sm:$0xff] %vm1203, %v1189
  %1217 = vst.msk [vmem:[%s2 + $0x68] sm:$0xff] %vm1203, %v1192
  %1218 = vst.msk [vmem:[%s2 + $0x70] sm:$0xff] %vm1203, %v1197
  %1219 = vst.msk [vmem:[%s2 + $0x78] sm:$0xff] %vm1203, %v1200
  %v1220 = vsel %vm1203, %v1141, 0.0
  %v1221 = vsel %vm1203, %v1144, 0.0
  %v1222 = vadd.f32 %v1220, %v1221
  %v1223 = vsel %vm1203, %v1149, 0.0
  %v1224 = vadd.f32 %v1222, %v1223
  %v1225 = vsel %vm1203, %v1152, 0.0
  %v1226 = vadd.f32 %v1224, %v1225
  %v1227 = vsel %vm1203, %v1157, 0.0
  %v1228 = vadd.f32 %v1226, %v1227
  %v1229 = vsel %vm1203, %v1160, 0.0
  %v1230 = vadd.f32 %v1228, %v1229
  %v1231 = vsel %vm1203, %v1165, 0.0
  %v1232 = vadd.f32 %v1230, %v1231
  %v1233 = vsel %vm1203, %v1168, 0.0
  %v1234 = vadd.f32 %v1232, %v1233
  %v1235 = vsel %vm1203, %v1173, 0.0
  %v1236 = vadd.f32 %v1234, %v1235
  %v1237 = vsel %vm1203, %v1176, 0.0
  %v1238 = vadd.f32 %v1236, %v1237
  %v1239 = vsel %vm1203, %v1181, 0.0
  %v1240 = vadd.f32 %v1238, %v1239
  %v1241 = vsel %vm1203, %v1184, 0.0
  %v1242 = vadd.f32 %v1240, %v1241
  %v1243 = vsel %vm1203, %v1189, 0.0
  %v1244 = vadd.f32 %v1242, %v1243
  %v1245 = vsel %vm1203, %v1192, 0.0
  %v1246 = vadd.f32 %v1244, %v1245
  %v1247 = vsel %vm1203, %v1197, 0.0
  %v1248 = vadd.f32 %v1246, %v1247
  %v1249 = vsel %vm1203, %v1200, 0.0
  %v1250 = vadd.f32 %v1248, %v1249
  %v1251 = vrot.slane %v1250, 4
  %v1252 = vadd.f32 %v1250, %v1251
  %v1253 = vrot.slane %v1252, 2
  %v1254 = vadd.f32 %v1252, %v1253
  %v1255 = vrot.slane %v1254, 1
  %v1256 = vadd.f32 %v1254, %v1255
  %v1257 = vmul.f32 %v1141, %v1141
  %v1258 = vmul.f32 %v1144, %v1144
  %v1259 = vmul.f32 %v1149, %v1149
  %v1260 = vmul.f32 %v1152, %v1152
  %v1261 = vmul.f32 %v1157, %v1157
  %v1262 = vmul.f32 %v1160, %v1160
  %v1263 = vmul.f32 %v1165, %v1165
  %v1264 = vmul.f32 %v1168, %v1168
  %v1265 = vmul.f32 %v1173, %v1173
  %v1266 = vmul.f32 %v1176, %v1176
  %v1267 = vmul.f32 %v1181, %v1181
  %v1268 = vmul.f32 %v1184, %v1184
  %v1269 = vmul.f32 %v1189, %v1189
  %v1270 = vmul.f32 %v1192, %v1192
  %v1271 = vmul.f32 %v1197, %v1197
  %v1272 = vmul.f32 %v1200, %v1200
  %v1273 = vsel %vm1203, %v1257, 0.0
  %v1274 = vsel %vm1203, %v1258, 0.0
  %v1275 = vadd.f32 %v1273, %v1274
  %v1276 = vsel %vm1203, %v1259, 0.0
  %v1277 = vadd.f32 %v1275, %v1276
  %v1278 = vsel %vm1203, %v1260, 0.0
  %v1279 = vadd.f32 %v1277, %v1278
  %v1280 = vsel %vm1203, %v1261, 0.0
  %v1281 = vadd.f32 %v1279, %v1280
  %v1282 = vsel %vm1203, %v1262, 0.0
  %v1283 = vadd.f32 %v1281, %v1282
  %v1284 = vsel %vm1203, %v1263, 0.0
  %v1285 = vadd.f32 %v1283, %v1284
  %v1286 = vsel %vm1203, %v1264, 0.0
  %v1287 = vadd.f32 %v1285, %v1286
  %v1288 = vsel %vm1203, %v1265, 0.0
  %v1289 = vadd.f32 %v1287, %v1288
  %v1290 = vsel %vm1203, %v1266, 0.0
  %v1291 = vadd.f32 %v1289, %v1290
  %v1292 = vsel %vm1203, %v1267, 0.0
  %v1293 = vadd.f32 %v1291, %v1292
  %v1294 = vsel %vm1203, %v1268, 0.0
  %v1295 = vadd.f32 %v1293, %v1294
  %v1296 = vsel %vm1203, %v1269, 0.0
  %v1297 = vadd.f32 %v1295, %v1296
  %v1298 = vsel %vm1203, %v1270, 0.0
  %v1299 = vadd.f32 %v1297, %v1298
  %v1300 = vsel %vm1203, %v1271, 0.0
  %v1301 = vadd.f32 %v1299, %v1300
  %v1302 = vsel %vm1203, %v1272, 0.0
  %v1303 = vadd.f32 %v1301, %v1302
  %v1304 = vrot.slane %v1303, 4
  %v1305 = vadd.f32 %v1303, %v1304
  %v1306 = vrot.slane %v1305, 2
  %v1307 = vadd.f32 %v1305, %v1306
  %v1308 = vrot.slane %v1307, 1
  %v1309 = vadd.f32 %v1307, %v1308
  %vm1310 = vcmask 1040384
  %v1311 = vsel %vm1310, %v1256, %v1309
  %vm1312 = vcmask 254976
  %1313 = vst.msk [vmem:[%s3] sm:$0x3] %vm1312, %v1311
  // Predicated region
  $region10: #{_lambda_.48} parent=0 // pred_check
    _
  $region11: #{_lambda_.48} parent=0 // pred_check_branch
    %1315 = sbr.rel (0) target = $region13
  $region12: #{_lambda_.48} parent=0 // pred_region
    _
  $region13: #{_lambda_.48} parent=0 // pred_fallthru
    _
  // Predicated region
  $region14: #{_lambda_.48} parent=0 // pred_check
    _
  $region15: #{_lambda_.48} parent=0 // pred_check_branch
    %1317 = sbr.rel (0) target = $region17
  $region16: #{_lambda_.48} parent=0 // pred_region
    _
  $region17: #{_lambda_.48} parent=0 // pred_fallthru
    _
  // Predicated region
  $region18: #{_lambda_.48} parent=0 // pred_check
    _
  $region19: #{_lambda_.48} parent=0 // pred_check_branch
    %1319 = sbr.rel (0) target = $region21
  $region20: #{_lambda_.48} parent=0 // pred_region
    _
  $region21: #{_lambda_.48} parent=0 // pred_fallthru
    _
  // Predicated region
  $region22: #{_lambda_.48} parent=0 // pred_check
    _
  $region23: #{_lambda_.48} parent=0 // pred_check_branch
    %1321 = sbr.rel (0) target = $region25
  $region24: #{_lambda_.48} parent=0 // pred_region
    _
  $region25: #{_lambda_.48} parent=0 // pred_fallthru
    _

// kernel: _lambda_.50
$region0: #{_lambda_.50}
  #allocation0 [shape = 'u32[]', space=smem, size = 0x4, offset = 0x4, fixed_abs, tag = 'smem constant byte address 0x4 - core index']
  #allocation1 [shape = 'u32[144,128]{1,0:T(1,128)}', space=vmem, size = 0x12000, scoped, tag = 'internal scratch']
  %s0 = inlined_call_operand.vmem [shape: bf16[128,288], index: 0, kind: input, shape index: {}]
  %s1 = inlined_call_operand.vmem [shape: bf16[288,32], index: 1, kind: input, shape index: {}]
  %s2 = inlined_call_operand.vmem [shape: f32[128,32], index: 2, kind: output, shape index: {0}]
  %s3 = inlined_call_operand.vmem [shape: f32[1,2,32], index: 3, kind: output, shape index: {1}]
  %4 = xla_tuple %s2, %s3
  %s5 = sld [smem:[#allocation0]]
  $region26: #{_lambda_.50} parent=0
    _
  %s7 = ssub.s32 1, %s5
  %s8 = scalar_select 0, %s7, %s5
  // Predicated region
  $region2: #{_lambda_.50} parent=0 // pred_check
    _
  $region3: #{_lambda_.50} parent=0 // pred_check_branch
    %10 = sbr.rel (0) target = $region5
  $region4: #{_lambda_.50} parent=0 // pred_region
    _
  $region5: #{_lambda_.50} parent=0 // pred_fallthru
    _
  // Predicated region
  $region6: #{_lambda_.50} parent=0 // pred_check
    _
  $region7: #{_lambda_.50} parent=0 // pred_check_branch
    %12 = sbr.rel (0) target = $region9
  $region8: #{_lambda_.50} parent=0 // pred_region
    _
  $region9: #{_lambda_.50} parent=0 // pred_fallthru
    _
  %v14 = vld [vmem:[%s0] sm:$0xff]
  %v15 = vld [vmem:[%s0 + $0x8] sm:$0xf]
  %v16 = vld [vmem:[%s0 + $0xc] sm:$0xff]
  %v17 = vld [vmem:[%s0 + $0x14] sm:$0xf]
  %v18 = vld [vmem:[%s0 + $0x18] sm:$0xff]
  %v19 = vld [vmem:[%s0 + $0x20] sm:$0xf]
  %v20 = vld [vmem:[%s0 + $0x24] sm:$0xff]
  %v21 = vld [vmem:[%s0 + $0x2c] sm:$0xf]
  %v22 = vld [vmem:[%s0 + $0x30] sm:$0xff]
  %v23 = vld [vmem:[%s0 + $0x38] sm:$0xf]
  %v24 = vld [vmem:[%s0 + $0x3c] sm:$0xff]
  %v25 = vld [vmem:[%s0 + $0x44] sm:$0xf]
  %v26 = vld [vmem:[%s0 + $0x48] sm:$0xff]
  %v27 = vld [vmem:[%s0 + $0x50] sm:$0xf]
  %v28 = vld [vmem:[%s0 + $0x54] sm:$0xff]
  %v29 = vld [vmem:[%s0 + $0x5c] sm:$0xf]
  %v30 = vld [vmem:[%s0 + $0x60] sm:$0xff]
  %v31 = vld [vmem:[%s0 + $0x68] sm:$0xf]
  %v32 = vld [vmem:[%s0 + $0x6c] sm:$0xff]
  %v33 = vld [vmem:[%s0 + $0x74] sm:$0xf]
  %v34 = vld [vmem:[%s0 + $0x78] sm:$0xff]
  %v35 = vld [vmem:[%s0 + $0x80] sm:$0xf]
  %v36 = vld [vmem:[%s0 + $0x84] sm:$0xff]
  %v37 = vld [vmem:[%s0 + $0x8c] sm:$0xf]
  %v38 = vld [vmem:[%s0 + $0x90] sm:$0xff]
  %v39 = vld [vmem:[%s0 + $0x98] sm:$0xf]
  %v40 = vld [vmem:[%s0 + $0x9c] sm:$0xff]
  %v41 = vld [vmem:[%s0 + $0xa4] sm:$0xf]
  %v42 = vld [vmem:[%s0 + $0xa8] sm:$0xff]
  %v43 = vld [vmem:[%s0 + $0xb0] sm:$0xf]
  %v44 = vld [vmem:[%s0 + $0xb4] sm:$0xff]
  %v45 = vld [vmem:[%s0 + $0xbc] sm:$0xf]
  %v46 = vld [vmem:[%s1] sm:$0xf]
  %v47 = vld [vmem:[%s1 + $0x4] sm:$0xf]
  %v48 = vld [vmem:[%s1 + $0x8] sm:$0xf]
  %v49 = vld [vmem:[%s1 + $0xc] sm:$0xf]
  %v50 = vld [vmem:[%s1 + $0x10] sm:$0xf]
  %v51 = vld [vmem:[%s1 + $0x14] sm:$0xf]
  %v52 = vld [vmem:[%s1 + $0x18] sm:$0xf]
  %v53 = vld [vmem:[%s1 + $0x1c] sm:$0xf]
  %v54 = vld [vmem:[%s1 + $0x20] sm:$0xf]
  %v55 = vld [vmem:[%s1 + $0x24] sm:$0xf]
  %v56 = vld [vmem:[%s1 + $0x28] sm:$0xf]
  %v57 = vld [vmem:[%s1 + $0x2c] sm:$0xf]
  %v58 = vld [vmem:[%s1 + $0x30] sm:$0xf]
  %v59 = vld [vmem:[%s1 + $0x34] sm:$0xf]
  %v60 = vld [vmem:[%s1 + $0x38] sm:$0xf]
  %v61 = vld [vmem:[%s1 + $0x3c] sm:$0xf]
  %v62 = vld [vmem:[%s1 + $0x40] sm:$0xf]
  %v63 = vld [vmem:[%s1 + $0x44] sm:$0xf]
  %v64 = vld [vmem:[%s1 + $0x48] sm:$0xf]
  %v65 = vld [vmem:[%s1 + $0x4c] sm:$0xf]
  %v66 = vld [vmem:[%s1 + $0x50] sm:$0xf]
  %v67 = vld [vmem:[%s1 + $0x54] sm:$0xf]
  %v68 = vld [vmem:[%s1 + $0x58] sm:$0xf]
  %v69 = vld [vmem:[%s1 + $0x5c] sm:$0xf]
  %v70 = vld [vmem:[%s1 + $0x60] sm:$0xf]
  %v71 = vld [vmem:[%s1 + $0x64] sm:$0xf]
  %v72 = vld [vmem:[%s1 + $0x68] sm:$0xf]
  %v73 = vld [vmem:[%s1 + $0x6c] sm:$0xf]
  %v74 = vld [vmem:[%s1 + $0x70] sm:$0xf]
  %v75 = vld [vmem:[%s1 + $0x74] sm:$0xf]
  %v76 = vld [vmem:[%s1 + $0x78] sm:$0xf]
  %v77 = vld [vmem:[%s1 + $0x7c] sm:$0xf]
  %v78 = vld [vmem:[%s1 + $0x80] sm:$0xf]
  %v79 = vld [vmem:[%s1 + $0x84] sm:$0xf]
  %v80 = vld [vmem:[%s1 + $0x88] sm:$0xf]
  %v81 = vld [vmem:[%s1 + $0x8c] sm:$0xf]
  %v114 = vunpack.c.l.b16 %v14
  %v115 = vunpack.c.h.b16 %v14
  %v116 = vunpack.c.l.b16 %v15
  %v117 = vunpack.c.l.b16 %v16
  %v118 = vunpack.c.h.b16 %v16
  %v119 = vunpack.c.l.b16 %v17
  %v120 = vunpack.c.l.b16 %v18
  %v121 = vunpack.c.h.b16 %v18
  %v122 = vunpack.c.l.b16 %v19
  %v123 = vunpack.c.l.b16 %v20
  %v124 = vunpack.c.h.b16 %v20
  %v125 = vunpack.c.l.b16 %v21
  %v126 = vunpack.c.l.b16 %v22
  %v127 = vunpack.c.h.b16 %v22
  %v128 = vunpack.c.l.b16 %v23
  %v129 = vunpack.c.l.b16 %v24
  %v130 = vunpack.c.h.b16 %v24
  %v131 = vunpack.c.l.b16 %v25
  %v132 = vunpack.c.l.b16 %v26
  %v133 = vunpack.c.h.b16 %v26
  %v134 = vunpack.c.l.b16 %v27
  %v135 = vunpack.c.l.b16 %v28
  %v136 = vunpack.c.h.b16 %v28
  %v137 = vunpack.c.l.b16 %v29
  %v138 = vunpack.c.l.b16 %v30
  %v139 = vunpack.c.h.b16 %v30
  %v140 = vunpack.c.l.b16 %v31
  %v141 = vunpack.c.l.b16 %v32
  %v142 = vunpack.c.h.b16 %v32
  %v143 = vunpack.c.l.b16 %v33
  %v144 = vunpack.c.l.b16 %v34
  %v145 = vunpack.c.h.b16 %v34
  %v146 = vunpack.c.l.b16 %v35
  %v147 = vunpack.c.l.b16 %v36
  %v148 = vunpack.c.h.b16 %v36
  %v149 = vunpack.c.l.b16 %v37
  %v150 = vunpack.c.l.b16 %v38
  %v151 = vunpack.c.h.b16 %v38
  %v152 = vunpack.c.l.b16 %v39
  %v153 = vunpack.c.l.b16 %v40
  %v154 = vunpack.c.h.b16 %v40
  %v155 = vunpack.c.l.b16 %v41
  %v156 = vunpack.c.l.b16 %v42
  %v157 = vunpack.c.h.b16 %v42
  %v158 = vunpack.c.l.b16 %v43
  %v159 = vunpack.c.l.b16 %v44
  %v160 = vunpack.c.h.b16 %v44
  %v161 = vunpack.c.l.b16 %v45
  %v162 = vpack.c.b16 %v117, %v114
  %v163 = vpack.c.b16 %v118, %v115
  %v164 = vpack.c.b16 %v119, %v116
  %v165 = vpack.c.b16 %v123, %v120
  %v166 = vpack.c.b16 %v124, %v121
  %v167 = vpack.c.b16 %v125, %v122
  %v168 = vpack.c.b16 %v129, %v126
  %v169 = vpack.c.b16 %v130, %v127
  %v170 = vpack.c.b16 %v131, %v128
  %v171 = vpack.c.b16 %v135, %v132
  %v172 = vpack.c.b16 %v136, %v133
  %v173 = vpack.c.b16 %v137, %v134
  %v174 = vpack.c.b16 %v141, %v138
  %v175 = vpack.c.b16 %v142, %v139
  %v176 = vpack.c.b16 %v143, %v140
  %v177 = vpack.c.b16 %v147, %v144
  %v178 = vpack.c.b16 %v148, %v145
  %v179 = vpack.c.b16 %v149, %v146
  %v180 = vpack.c.b16 %v153, %v150
  %v181 = vpack.c.b16 %v154, %v151
  %v182 = vpack.c.b16 %v155, %v152
  %v183 = vpack.c.b16 %v159, %v156
  %v184 = vpack.c.b16 %v160, %v157
  %v185 = vpack.c.b16 %v161, %v158
  %v238 = vunpack.c.l.b16 %v46
  %v239 = vunpack.c.l.b16 %v47
  %v240 = vunpack.c.l.b16 %v48
  %v241 = vunpack.c.l.b16 %v49
  %v242 = vunpack.c.l.b16 %v50
  %v243 = vunpack.c.l.b16 %v51
  %v244 = vunpack.c.l.b16 %v52
  %v245 = vunpack.c.l.b16 %v53
  %v246 = vunpack.c.l.b16 %v54
  %v247 = vunpack.c.l.b16 %v55
  %v248 = vunpack.c.l.b16 %v56
  %v249 = vunpack.c.l.b16 %v57
  %v250 = vunpack.c.l.b16 %v58
  %v251 = vunpack.c.l.b16 %v59
  %v252 = vunpack.c.l.b16 %v60
  %v253 = vunpack.c.l.b16 %v61
  %v254 = vunpack.c.l.b16 %v62
  %v255 = vunpack.c.l.b16 %v63
  %v256 = vunpack.c.l.b16 %v64
  %v257 = vunpack.c.l.b16 %v65
  %v258 = vunpack.c.l.b16 %v66
  %v259 = vunpack.c.l.b16 %v67
  %v260 = vunpack.c.l.b16 %v68
  %v261 = vunpack.c.l.b16 %v69
  %v262 = vunpack.c.l.b16 %v70
  %v263 = vunpack.c.l.b16 %v71
  %v264 = vunpack.c.l.b16 %v72
  %v265 = vunpack.c.l.b16 %v73
  %v266 = vunpack.c.l.b16 %v74
  %v267 = vunpack.c.l.b16 %v75
  %v268 = vunpack.c.l.b16 %v76
  %v269 = vunpack.c.l.b16 %v77
  %v270 = vunpack.c.l.b16 %v78
  %v271 = vunpack.c.l.b16 %v79
  %v272 = vunpack.c.l.b16 %v80
  %v273 = vunpack.c.l.b16 %v81
  %v274 = vpack.c.b16 %v239, %v238
  %v275 = vpack.c.b16 %v241, %v240
  %v276 = vpack.c.b16 %v243, %v242
  %v277 = vpack.c.b16 %v245, %v244
  %v278 = vpack.c.b16 %v247, %v246
  %v279 = vpack.c.b16 %v249, %v248
  %v280 = vpack.c.b16 %v251, %v250
  %v281 = vpack.c.b16 %v253, %v252
  %v282 = vpack.c.b16 %v255, %v254
  %v283 = vpack.c.b16 %v257, %v256
  %v284 = vpack.c.b16 %v259, %v258
  %v285 = vpack.c.b16 %v261, %v260
  %v286 = vpack.c.b16 %v263, %v262
  %v287 = vpack.c.b16 %v265, %v264
  %v288 = vpack.c.b16 %v267, %v266
  %v289 = vpack.c.b16 %v269, %v268
  %v290 = vpack.c.b16 %v271, %v270
  %v291 = vpack.c.b16 %v273, %v272
  %vm310 = vcmask 261120
  %v312 = vsel %vm310, %v164, 0
  %v315 = vsel %vm310, %v167, 0
  %v318 = vsel %vm310, %v170, 0
  %v321 = vsel %vm310, %v173, 0
  %v324 = vsel %vm310, %v176, 0
  %v327 = vsel %vm310, %v179, 0
  %v330 = vsel %vm310, %v182, 0
  %v333 = vsel %vm310, %v185, 0
  %335 = vmatprep.subr.bf16.mxu0 0
  %336 = vmatpush1.bf16.msra.mxu0 %v274
  %337 = vmatprep.subr.bf16.mxu0 0
  %338 = vmatpush1.bf16.msra.mxu0 %v275
  %339 = vmatprep.subr.bf16.mxu0 0
  %340 = vmatpush1.bf16.msra.mxu0 %v276
  %341 = vmatprep.subr.bf16.mxu0 0
  %342 = vmatpush1.bf16.msra.mxu0 %v277
  %343 = vmatprep.subr.bf16.mxu0 0
  %344 = vmatpush1.bf16.msra.mxu0 %v278
  %345 = vmatprep.subr.bf16.mxu0 0
  %346 = vmatpush1.bf16.msra.mxu0 %v279
  %347 = vmatprep.subr.bf16.mxu0 0
  %348 = vmatpush1.bf16.msra.mxu0 %v280
  %349 = vmatprep.subr.bf16.mxu0 0
  %350 = vmatpush1.bf16.msra.mxu0 %v281
  %351 = vmatprep.subr.bf16.mxu0 0
  %352 = vmatpush1.bf16.msra.mxu0 %v282
  %353 = vmatprep.subr.bf16.mxu0 0
  %354 = vmatpush1.bf16.msra.mxu0 %v283
  %355 = vmatprep.subr.bf16.mxu0 0
  %356 = vmatpush1.bf16.msra.mxu0 %v284
  %357 = vmatprep.subr.bf16.mxu0 0
  %358 = vmatpush1.bf16.msra.mxu0 %v285
  %359 = vmatprep.subr.bf16.mxu0 0
  %360 = vmatpush1.bf16.msra.mxu0 %v286
  %361 = vmatprep.subr.bf16.mxu0 0
  %362 = vmatpush1.bf16.msra.mxu0 %v287
  %363 = vmatprep.subr.bf16.mxu0 0
  %364 = vmatpush1.bf16.msra.mxu0 %v288
  %365 = vmatprep.subr.bf16.mxu0 0
  %366 = vmatpush1.bf16.msra.mxu0 %v289
  %367 = vmatprep.mubr.bf16.mxu0 %v163
  %368 = vmatmul.mubr.bf16.gmra.mrb[0].mxu0 %v162
  %v369 = vpop.f32.mrb[0].mxu0
  %v370 = vadd.f32 0.0, %v369
  %v371 = vpop.f32.mrb[0].mxu0
  %v372 = vpop.f32.mrb[0].mxu0
  %v373 = vadd.f32 0.0, %v372
  %v374 = vpop.f32.mrb[0].mxu0
  %375 = vmatprep.mubr.bf16.mxu0 %v166
  %376 = vmatmul.mubr.bf16.gmra.mrb[0].mxu0 %v165
  %v377 = vpop.f32.mrb[0].mxu0
  %v378 = vadd.f32 0.0, %v377
  %v379 = vpop.f32.mrb[0].mxu0
  %v380 = vpop.f32.mrb[0].mxu0
  %v381 = vadd.f32 0.0, %v380
  %v382 = vpop.f32.mrb[0].mxu0
  %383 = vmatprep.mubr.bf16.mxu0 %v169
  %384 = vmatmul.mubr.bf16.gmra.mrb[0].mxu0 %v168
  %v385 = vpop.f32.mrb[0].mxu0
  %v386 = vadd.f32 0.0, %v385
  %v387 = vpop.f32.mrb[0].mxu0
  %v388 = vpop.f32.mrb[0].mxu0
  %v389 = vadd.f32 0.0, %v388
  %v390 = vpop.f32.mrb[0].mxu0
  %391 = vmatprep.mubr.bf16.mxu0 %v172
  %392 = vmatmul.mubr.bf16.gmra.mrb[0].mxu0 %v171
  %v393 = vpop.f32.mrb[0].mxu0
  %v394 = vadd.f32 0.0, %v393
  %v395 = vpop.f32.mrb[0].mxu0
  %v396 = vpop.f32.mrb[0].mxu0
  %v397 = vadd.f32 0.0, %v396
  %v398 = vpop.f32.mrb[0].mxu0
  %399 = vmatprep.mubr.bf16.mxu0 %v175
  %400 = vmatmul.mubr.bf16.gmra.mrb[0].mxu0 %v174
  %v401 = vpop.f32.mrb[0].mxu0
  %v402 = vadd.f32 0.0, %v401
  %v403 = vpop.f32.mrb[0].mxu0
  %v404 = vpop.f32.mrb[0].mxu0
  %v405 = vadd.f32 0.0, %v404
  %v406 = vpop.f32.mrb[0].mxu0
  %407 = vmatprep.mubr.bf16.mxu0 %v178
  %408 = vmatmul.mubr.bf16.gmra.mrb[0].mxu0 %v177
  %v409 = vpop.f32.mrb[0].mxu0
  %v410 = vadd.f32 0.0, %v409
  %v411 = vpop.f32.mrb[0].mxu0
  %v412 = vpop.f32.mrb[0].mxu0
  %v413 = vadd.f32 0.0, %v412
  %v414 = vpop.f32.mrb[0].mxu0
  %415 = vmatprep.mubr.bf16.mxu0 %v181
  %416 = vmatmul.mubr.bf16.gmra.mrb[0].mxu0 %v180
  %v417 = vpop.f32.mrb[0].mxu0
  %v418 = vadd.f32 0.0, %v417
  %v419 = vpop.f32.mrb[0].mxu0
  %v420 = vpop.f32.mrb[0].mxu0
  %v421 = vadd.f32 0.0, %v420
  %v422 = vpop.f32.mrb[0].mxu0
  %423 = vmatprep.mubr.bf16.mxu0 %v184
  %424 = vmatmul.mubr.bf16.gmra.mrb[0].mxu0 %v183
  %v425 = vpop.f32.mrb[0].mxu0
  %v426 = vadd.f32 0.0, %v425
  %v427 = vpop.f32.mrb[0].mxu0
  %v428 = vpop.f32.mrb[0].mxu0
  %v429 = vadd.f32 0.0, %v428
  %v430 = vpop.f32.mrb[0].mxu0
  %431 = vdwg.mxu0
  %432 = vmatprep.subr.bf16.mxu0 0
  %433 = vmatpush1.bf16.msra.mxu0 %v290
  %434 = vmatprep.subr.bf16.mxu0 0
  %435 = vmatpush1.bf16.msra.mxu0 %v291
  %436 = vmatprep.subr.bf16.mxu0 0
  %437 = vmatpush1.bf16.msra.mxu0 0
  %438 = vmatprep.subr.bf16.mxu0 0
  %439 = vmatpush1.bf16.msra.mxu0 0
  %440 = vmatprep.subr.bf16.mxu0 0
  %441 = vmatpush1.bf16.msra.mxu0 0
  %442 = vmatprep.subr.bf16.mxu0 0
  %443 = vmatpush1.bf16.msra.mxu0 0
  %444 = vmatprep.subr.bf16.mxu0 0
  %445 = vmatpush1.bf16.msra.mxu0 0
  %446 = vmatprep.subr.bf16.mxu0 0
  %447 = vmatpush1.bf16.msra.mxu0 0
  %448 = vmatprep.subr.bf16.mxu0 0
  %449 = vmatpush1.bf16.msra.mxu0 0
  %450 = vmatprep.subr.bf16.mxu0 0
  %451 = vmatpush1.bf16.msra.mxu0 0
  %452 = vmatprep.subr.bf16.mxu0 0
  %453 = vmatpush1.bf16.msra.mxu0 0
  %454 = vmatprep.subr.bf16.mxu0 0
  %455 = vmatpush1.bf16.msra.mxu0 0
  %456 = vmatprep.subr.bf16.mxu0 0
  %457 = vmatpush1.bf16.msra.mxu0 0
  %458 = vmatprep.subr.bf16.mxu0 0
  %459 = vmatpush1.bf16.msra.mxu0 0
  %460 = vmatprep.subr.bf16.mxu0 0
  %461 = vmatpush1.bf16.msra.mxu0 0
  %462 = vmatprep.subr.bf16.mxu0 0
  %463 = vmatpush1.bf16.msra.mxu0 0
  %464 = vmatprep.mubr.bf16.mxu0 0
  %465 = vmatmul.mubr.bf16.gmra.mrb[0].mxu0 %v312
  %v466 = vpop.f32.mrb[0].mxu0
  %v467 = vadd.f32 %v370, %v466
  %v468 = vpop.f32.mrb[0].mxu0
  %v469 = vpop.f32.mrb[0].mxu0
  %v470 = vadd.f32 %v373, %v469
  %v471 = vpop.f32.mrb[0].mxu0
  %472 = vmatprep.mubr.bf16.mxu0 0
  %473 = vmatmul.mubr.bf16.gmra.mrb[0].mxu0 %v315
  %v474 = vpop.f32.mrb[0].mxu0
  %v475 = vadd.f32 %v378, %v474
  %v476 = vpop.f32.mrb[0].mxu0
  %v477 = vpop.f32.mrb[0].mxu0
  %v478 = vadd.f32 %v381, %v477
  %v479 = vpop.f32.mrb[0].mxu0
  %480 = vmatprep.mubr.bf16.mxu0 0
  %481 = vmatmul.mubr.bf16.gmra.mrb[0].mxu0 %v318
  %v482 = vpop.f32.mrb[0].mxu0
  %v483 = vadd.f32 %v386, %v482
  %v484 = vpop.f32.mrb[0].mxu0
  %v485 = vpop.f32.mrb[0].mxu0
  %v486 = vadd.f32 %v389, %v485
  %v487 = vpop.f32.mrb[0].mxu0
  %488 = vmatprep.mubr.bf16.mxu0 0
  %489 = vmatmul.mubr.bf16.gmra.mrb[0].mxu0 %v321
  %v490 = vpop.f32.mrb[0].mxu0
  %v491 = vadd.f32 %v394, %v490
  %v492 = vpop.f32.mrb[0].mxu0
  %v493 = vpop.f32.mrb[0].mxu0
  %v494 = vadd.f32 %v397, %v493
  %v495 = vpop.f32.mrb[0].mxu0
  %496 = vmatprep.mubr.bf16.mxu0 0
  %497 = vmatmul.mubr.bf16.gmra.mrb[0].mxu0 %v324
  %v498 = vpop.f32.mrb[0].mxu0
  %v499 = vadd.f32 %v402, %v498
  %v500 = vpop.f32.mrb[0].mxu0
  %v501 = vpop.f32.mrb[0].mxu0
  %v502 = vadd.f32 %v405, %v501
  %v503 = vpop.f32.mrb[0].mxu0
  %504 = vmatprep.mubr.bf16.mxu0 0
  %505 = vmatmul.mubr.bf16.gmra.mrb[0].mxu0 %v327
  %v506 = vpop.f32.mrb[0].mxu0
  %v507 = vadd.f32 %v410, %v506
  %v508 = vpop.f32.mrb[0].mxu0
  %v509 = vpop.f32.mrb[0].mxu0
  %v510 = vadd.f32 %v413, %v509
  %v511 = vpop.f32.mrb[0].mxu0
  %512 = vmatprep.mubr.bf16.mxu0 0
  %513 = vmatmul.mubr.bf16.gmra.mrb[0].mxu0 %v330
  %v514 = vpop.f32.mrb[0].mxu0
  %v515 = vadd.f32 %v418, %v514
  %v516 = vpop.f32.mrb[0].mxu0
  %v517 = vpop.f32.mrb[0].mxu0
  %v518 = vadd.f32 %v421, %v517
  %v519 = vpop.f32.mrb[0].mxu0
  %520 = vmatprep.mubr.bf16.mxu0 0
  %521 = vmatmul.mubr.bf16.gmra.mrb[0].mxu0 %v333
  %v522 = vpop.f32.mrb[0].mxu0
  %v523 = vadd.f32 %v426, %v522
  %v524 = vpop.f32.mrb[0].mxu0
  %v525 = vpop.f32.mrb[0].mxu0
  %v526 = vadd.f32 %v429, %v525
  %v527 = vpop.f32.mrb[0].mxu0
  %528 = vdwg.mxu0
  %529 = vst.msk [vmem:[%s2] sm:$0xff] %vm310, %v467
  %530 = vst.msk [vmem:[%s2 + $0x8] sm:$0xff] %vm310, %v470
  %531 = vst.msk [vmem:[%s2 + $0x10] sm:$0xff] %vm310, %v475
  %532 = vst.msk [vmem:[%s2 + $0x18] sm:$0xff] %vm310, %v478
  %533 = vst.msk [vmem:[%s2 + $0x20] sm:$0xff] %vm310, %v483
  %534 = vst.msk [vmem:[%s2 + $0x28] sm:$0xff] %vm310, %v486
  %535 = vst.msk [vmem:[%s2 + $0x30] sm:$0xff] %vm310, %v491
  %536 = vst.msk [vmem:[%s2 + $0x38] sm:$0xff] %vm310, %v494
  %537 = vst.msk [vmem:[%s2 + $0x40] sm:$0xff] %vm310, %v499
  %538 = vst.msk [vmem:[%s2 + $0x48] sm:$0xff] %vm310, %v502
  %539 = vst.msk [vmem:[%s2 + $0x50] sm:$0xff] %vm310, %v507
  %540 = vst.msk [vmem:[%s2 + $0x58] sm:$0xff] %vm310, %v510
  %541 = vst.msk [vmem:[%s2 + $0x60] sm:$0xff] %vm310, %v515
  %542 = vst.msk [vmem:[%s2 + $0x68] sm:$0xff] %vm310, %v518
  %543 = vst.msk [vmem:[%s2 + $0x70] sm:$0xff] %vm310, %v523
  %544 = vst.msk [vmem:[%s2 + $0x78] sm:$0xff] %vm310, %v526
  %v545 = vsel %vm310, %v467, 0.0
  %v546 = vsel %vm310, %v470, 0.0
  %v547 = vadd.f32 %v545, %v546
  %v548 = vsel %vm310, %v475, 0.0
  %v549 = vadd.f32 %v547, %v548
  %v550 = vsel %vm310, %v478, 0.0
  %v551 = vadd.f32 %v549, %v550
  %v552 = vsel %vm310, %v483, 0.0
  %v553 = vadd.f32 %v551, %v552
  %v554 = vsel %vm310, %v486, 0.0
  %v555 = vadd.f32 %v553, %v554
  %v556 = vsel %vm310, %v491, 0.0
  %v557 = vadd.f32 %v555, %v556
  %v558 = vsel %vm310, %v494, 0.0
  %v559 = vadd.f32 %v557, %v558
  %v560 = vsel %vm310, %v499, 0.0
  %v561 = vadd.f32 %v559, %v560
  %v562 = vsel %vm310, %v502, 0.0
  %v563 = vadd.f32 %v561, %v562
  %v564 = vsel %vm310, %v507, 0.0
  %v565 = vadd.f32 %v563, %v564
  %v566 = vsel %vm310, %v510, 0.0
  %v567 = vadd.f32 %v565, %v566
  %v568 = vsel %vm310, %v515, 0.0
  %v569 = vadd.f32 %v567, %v568
  %v570 = vsel %vm310, %v518, 0.0
  %v571 = vadd.f32 %v569, %v570
  %v572 = vsel %vm310, %v523, 0.0
  %v573 = vadd.f32 %v571, %v572
  %v574 = vsel %vm310, %v526, 0.0
  %v575 = vadd.f32 %v573, %v574
  %v576 = vrot.slane %v575, 4
  %v577 = vadd.f32 %v575, %v576
  %v578 = vrot.slane %v577, 2
  %v579 = vadd.f32 %v577, %v578
  %v580 = vrot.slane %v579, 1
  %v581 = vadd.f32 %v579, %v580
  %v582 = vmul.f32 %v467, %v467
  %v583 = vmul.f32 %v470, %v470
  %v584 = vmul.f32 %v475, %v475
  %v585 = vmul.f32 %v478, %v478
  %v586 = vmul.f32 %v483, %v483
  %v587 = vmul.f32 %v486, %v486
  %v588 = vmul.f32 %v491, %v491
  %v589 = vmul.f32 %v494, %v494
  %v590 = vmul.f32 %v499, %v499
  %v591 = vmul.f32 %v502, %v502
  %v592 = vmul.f32 %v507, %v507
  %v593 = vmul.f32 %v510, %v510
  %v594 = vmul.f32 %v515, %v515
  %v595 = vmul.f32 %v518, %v518
  %v596 = vmul.f32 %v523, %v523
  %v597 = vmul.f32 %v526, %v526
  %v598 = vsel %vm310, %v582, 0.0
  %v599 = vsel %vm310, %v583, 0.0
  %v600 = vadd.f32 %v598, %v599
  %v601 = vsel %vm310, %v584, 0.0
  %v602 = vadd.f32 %v600, %v601
  %v603 = vsel %vm310, %v585, 0.0
  %v604 = vadd.f32 %v602, %v603
  %v605 = vsel %vm310, %v586, 0.0
  %v606 = vadd.f32 %v604, %v605
  %v607 = vsel %vm310, %v587, 0.0
  %v608 = vadd.f32 %v606, %v607
  %v609 = vsel %vm310, %v588, 0.0
  %v610 = vadd.f32 %v608, %v609
  %v611 = vsel %vm310, %v589, 0.0
  %v612 = vadd.f32 %v610, %v611
  %v613 = vsel %vm310, %v590, 0.0
  %v614 = vadd.f32 %v612, %v613
  %v615 = vsel %vm310, %v591, 0.0
  %v616 = vadd.f32 %v614, %v615
  %v617 = vsel %vm310, %v592, 0.0
  %v618 = vadd.f32 %v616, %v617
  %v619 = vsel %vm310, %v593, 0.0
  %v620 = vadd.f32 %v618, %v619
  %v621 = vsel %vm310, %v594, 0.0
  %v622 = vadd.f32 %v620, %v621
  %v623 = vsel %vm310, %v595, 0.0
  %v624 = vadd.f32 %v622, %v623
  %v625 = vsel %vm310, %v596, 0.0
  %v626 = vadd.f32 %v624, %v625
  %v627 = vsel %vm310, %v597, 0.0
  %v628 = vadd.f32 %v626, %v627
  %v629 = vrot.slane %v628, 4
  %v630 = vadd.f32 %v628, %v629
  %v631 = vrot.slane %v630, 2
  %v632 = vadd.f32 %v630, %v631
  %v633 = vrot.slane %v632, 1
  %v634 = vadd.f32 %v632, %v633
  %vm635 = vcmask 1040384
  %v636 = vsel %vm635, %v581, %v634
  %vm637 = vcmask 254976
  %638 = vst.msk [vmem:[%s3] sm:$0x3] %vm637, %v636
  // Predicated region
  $region10: #{_lambda_.50} parent=0 // pred_check
    _
  $region11: #{_lambda_.50} parent=0 // pred_check_branch
    %640 = sbr.rel (0) target = $region13
  $region12: #{_lambda_.50} parent=0 // pred_region
    _
  $region13: #{_lambda_.50} parent=0 // pred_fallthru
    _
  // Predicated region
  $region14: #{_lambda_.50} parent=0 // pred_check
    _
  $region15: #{_lambda_.50} parent=0 // pred_check_branch
    %642 = sbr.rel (0) target = $region17
  $region16: #{_lambda_.50} parent=0 // pred_region
    _
  $region17: #{_lambda_.50} parent=0 // pred_fallthru
    _
  // Predicated region
  $region18: #{_lambda_.50} parent=0 // pred_check
    _
  $region19: #{_lambda_.50} parent=0 // pred_check_branch
    %644 = sbr.rel (0) target = $region21
  $region20: #{_lambda_.50} parent=0 // pred_region
    _
  $region21: #{_lambda_.50} parent=0 // pred_fallthru
    _
  // Predicated region
  $region22: #{_lambda_.50} parent=0 // pred_check
    _
  $region23: #{_lambda_.50} parent=0 // pred_check_branch
    %646 = sbr.rel (0) target = $region25
  $region24: #{_lambda_.50} parent=0 // pred_region
    _
  $region25: #{_lambda_.50} parent=0 // pred_fallthru
    _

</llo_original>
